<compile_context>
chip_gen: v7x
topology: tpu7x:2x2x1
jax: 0.10.0
libtpu: 0.0.40
codegen_flags: <defaults>
</compile_context>

<pallas_src>
import functools

import jax
import jax.numpy as jnp
from jax.experimental import pallas as pl
from jax.experimental.pallas import tpu as pltpu

EPS = 1e-5  # PyTorch BatchNorm2d default eps


# ---------------------------------------------------------------------------
# Fused kernel: (conv3x3 + BN(train) + ReLU) x2 + residual, all in VMEM
# ---------------------------------------------------------------------------
def _resblock_kernel(xp_ref, w1_ref, w2_ref, g1_ref, bt1_ref, g2_ref, bt2_ref,
                     o_ref, h1p_ref, *, n, h, w, c):
    m = n * h * w

    def conv3x3(src_ref, wmat_ref):
        # src_ref: zero-padded NHWC ref (n, h+2, w+2, c).
        # 9 shifted taps -> 9 accumulating (M, C) @ (C, C) bf16 matmuls (f32 acc).
        acc = jnp.zeros((m, c), jnp.float32)
        t = 0
        for dy in range(3):
            for dx in range(3):
                tap = src_ref[:, dy:dy + h, dx:dx + w, :]
                tap = tap.reshape(m, c).astype(jnp.bfloat16)
                w_t = wmat_ref[t * c:(t + 1) * c, :]          # (C, C) bf16
                acc = acc + jnp.dot(tap, w_t,
                                    preferred_element_type=jnp.float32)
                t += 1
        return acc

    def bn_train(y, g_ref, bt_ref):
        # Training-mode BatchNorm2d with folded affine:
        #   scale = g * rsqrt(var + eps); shift = beta - mean * scale
        mean = jnp.mean(y, axis=0, keepdims=True)                   # (1, C)
        var = jnp.mean((y - mean) ** 2, axis=0, keepdims=True)      # biased
        scale = g_ref[...] * jax.lax.rsqrt(var + EPS)
        shift = bt_ref[...] - mean * scale
        return y * scale + shift

    # ---- stage 1: relu(bn1(conv1(x))) ------------------------------------
    h1 = jnp.maximum(bn_train(conv3x3(xp_ref, w1_ref), g1_ref, bt1_ref), 0.0)

    # ---- stage 2: needs zero-padded h1; build it in VMEM scratch ---------
    h1p_ref[...] = jnp.zeros(h1p_ref.shape, h1p_ref.dtype)
    h1p_ref[:, 1:h + 1, 1:w + 1, :] = h1.reshape(n, h, w, c)

    y2 = bn_train(conv3x3(h1p_ref, w2_ref), g2_ref, bt2_ref)

    # residual = interior of the padded input (== original x), sliced in-kernel
    residual = xp_ref[:, 1:h + 1, 1:w + 1, :].reshape(m, c)
    o_ref[...] = jnp.maximum(y2 + residual, 0.0)


def fused_resblock(xp_nhwc, w1, w2, g1, bt1, g2, bt2):
    n, hp, wp, c = xp_nhwc.shape
    h, w = hp - 2, wp - 2
    m = n * h * w
    kernel = functools.partial(_resblock_kernel, n=n, h=h, w=w, c=c)
    flops = 2 * (2 * m * (9 * c) * c)                     # two 3x3 convs
    bytes_accessed = (xp_nhwc.size * 4 + (w1.size + w2.size) * 2
                      + m * c * 4 + 4 * c * 4)
    return pl.pallas_call(
        kernel,
        out_shape=jax.ShapeDtypeStruct((m, c), jnp.float32),
        grid=(1,),
        in_specs=[
            pl.BlockSpec((n, hp, wp, c), lambda i: (0, 0, 0, 0)),  # padded x (f32)
            pl.BlockSpec((9 * c, c), lambda i: (0, 0)),            # conv1 W (bf16)
            pl.BlockSpec((9 * c, c), lambda i: (0, 0)),            # conv2 W (bf16)
            pl.BlockSpec((1, c), lambda i: (0, 0)),                # bn1 gamma
            pl.BlockSpec((1, c), lambda i: (0, 0)),                # bn1 beta
            pl.BlockSpec((1, c), lambda i: (0, 0)),                # bn2 gamma
            pl.BlockSpec((1, c), lambda i: (0, 0)),                # bn2 beta
        ],
        out_specs=pl.BlockSpec((m, c), lambda i: (0, 0)),
        scratch_shapes=[pltpu.VMEM((n, hp, wp, c), jnp.float32)],  # padded h1
        compiler_params=pltpu.CompilerParams(
            dimension_semantics=("arbitrary",)),
        cost_estimate=pl.CostEstimate(flops=flops, transcendentals=2 * c,
                                      bytes_accessed=bytes_accessed),
    )(xp_nhwc, w1, w2, g1, bt1, g2, bt2)


# ---------------------------------------------------------------------------
# Plain-JAX glue (layout only: NCHW <-> NHWC, pad, weight reshape)
# ---------------------------------------------------------------------------
def _pt_weight_to_mat(w_oihw):
    """PyTorch (Cout, Cin, 3, 3) -> (9*Cin, Cout); rows ordered (dy, dx, cin),
    matching the tap order walked by the kernel."""
    return jnp.transpose(w_oihw, (2, 3, 1, 0)).reshape(-1, w_oihw.shape[0])


@jax.jit
def resblock_forward(x_nchw, params):
    n, c, h, w = x_nchw.shape
    x_nhwc = jnp.transpose(x_nchw, (0, 2, 3, 1)).astype(jnp.float32)
    xp = jnp.pad(x_nhwc, ((0, 0), (1, 1), (1, 1), (0, 0)))
    w1 = _pt_weight_to_mat(params["w1"]).astype(jnp.bfloat16)
    w2 = _pt_weight_to_mat(params["w2"]).astype(jnp.bfloat16)
    # Conv biases intentionally not passed: training-mode BN cancels them.
    out = fused_resblock(xp, w1, w2, params["g1"], params["bt1"],
                         params["g2"], params["bt2"])
    return jnp.transpose(out.reshape(n, h, w, c), (0, 3, 1, 2))


# ---------------------------------------------------------------------------
# Pure-JAX f32 reference (exact PyTorch semantics, incl. conv biases)
# ---------------------------------------------------------------------------
def resblock_reference(x, params):
    def conv(hh, wgt, b):
        y = jax.lax.conv_general_dilated(
            hh, wgt, window_strides=(1, 1), padding=((1, 1), (1, 1)),
            dimension_numbers=("NCHW", "OIHW", "NCHW"))
        return y + b.reshape(1, -1, 1, 1)

    def bn(y, g, bt):
        mean = jnp.mean(y, axis=(0, 2, 3), keepdims=True)
        var = jnp.mean((y - mean) ** 2, axis=(0, 2, 3), keepdims=True)
        return (g.reshape(1, -1, 1, 1) * (y - mean) / jnp.sqrt(var + EPS)
                + bt.reshape(1, -1, 1, 1))

    hid = jax.nn.relu(bn(conv(x, params["w1"], params["b1"]),
                         params["g1"], params["bt1"]))
    hid = bn(conv(hid, params["w2"], params["b2"]), params["g2"], params["bt2"])
    return jax.nn.relu(hid + x)


if __name__ == "__main__":
    num_hidden, N, H, W = 32, 2, 16, 16
    key = jax.random.PRNGKey(0)
    ks = jax.random.split(key, 9)

    fan_in = num_hidden * 9
    bound = 1.0 / (fan_in ** 0.5)
    params = {
        "w1": jax.random.uniform(ks[0], (num_hidden, num_hidden, 3, 3),
                                 jnp.float32, -bound, bound),
        "b1": jax.random.uniform(ks[1], (1, num_hidden), jnp.float32, -bound, bound),
        "g1": 1.0 + 0.1 * jax.random.normal(ks[2], (1, num_hidden), dtype=jnp.float32),
        "bt1": 0.1 * jax.random.normal(ks[3], (1, num_hidden), dtype=jnp.float32),
        "w2": jax.random.uniform(ks[4], (num_hidden, num_hidden, 3, 3),
                                 jnp.float32, -bound, bound),
        "b2": jax.random.uniform(ks[5], (1, num_hidden), jnp.float32, -bound, bound),
        "g2": 1.0 + 0.1 * jax.random.normal(ks[6], (1, num_hidden), dtype=jnp.float32),
        "bt2": 0.1 * jax.random.normal(ks[7], (1, num_hidden), dtype=jnp.float32),
    }
    x = jax.random.normal(ks[8], (N, num_hidden, H, W), dtype=jnp.float32)

    out = jax.block_until_ready(resblock_forward(x, params))
    ref = jax.block_until_ready(resblock_reference(x, params))

    assert out.shape == x.shape and out.dtype == jnp.float32
    max_err = float(jnp.max(jnp.abs(out - ref)))
    if not bool(jnp.allclose(out, ref, atol=2e-2, rtol=2e-2)):
        raise AssertionError(f"Pallas output mismatch vs reference, max|err|={max_err}")
    print("KERNEL_OK")
</pallas_src>

<mosaic_0001>
module attributes {stable_mosaic.version = 11 : i64} {
  func.func @_resblock_kernel(%arg0: i32, %arg1: memref<2x18x18x32xf32, #tpu.memory_space<vmem>>, %arg2: memref<288x32xbf16, #tpu.memory_space<vmem>>, %arg3: memref<288x32xbf16, #tpu.memory_space<vmem>>, %arg4: memref<1x32xf32, #tpu.memory_space<vmem>>, %arg5: memref<1x32xf32, #tpu.memory_space<vmem>>, %arg6: memref<1x32xf32, #tpu.memory_space<vmem>>, %arg7: memref<1x32xf32, #tpu.memory_space<vmem>>, %arg8: memref<512x32xf32, #tpu.memory_space<vmem>>, %arg9: memref<2x18x18x32xf32, #tpu.memory_space<vmem>>) attributes {dimension_semantics = [#tpu.dimension_semantics<arbitrary>], iteration_bounds = array<i64: 1>, scalar_prefetch = 0 : i64, scratch_operands = 1 : i64, tpu.core_type = #tpu.core_type<tc>, window_params = [{pipeline_mode = #tpu.pipeline_mode<synchronous>, transform_indices = @transform_0, window_bounds = array<i64: 2, 18, 18, 32>}, {pipeline_mode = #tpu.pipeline_mode<synchronous>, transform_indices = @transform_1, window_bounds = array<i64: 288, 32>}, {pipeline_mode = #tpu.pipeline_mode<synchronous>, transform_indices = @transform_2, window_bounds = array<i64: 288, 32>}, {pipeline_mode = #tpu.pipeline_mode<synchronous>, transform_indices = @transform_3, window_bounds = array<i64: 1, 32>}, {pipeline_mode = #tpu.pipeline_mode<synchronous>, transform_indices = @transform_4, window_bounds = array<i64: 1, 32>}, {pipeline_mode = #tpu.pipeline_mode<synchronous>, transform_indices = @transform_5, window_bounds = array<i64: 1, 32>}, {pipeline_mode = #tpu.pipeline_mode<synchronous>, transform_indices = @transform_6, window_bounds = array<i64: 1, 32>}, {pipeline_mode = #tpu.pipeline_mode<synchronous>, transform_indices = @transform_7, window_bounds = array<i64: 512, 32>}]} {
    %cst = arith.constant 0.000000e+00 : f32
    %0 = vector.broadcast %cst : f32 to vector<512x32xf32>
    %c0 = arith.constant 0 : index
    %c0_0 = arith.constant 0 : index
    %c0_1 = arith.constant 0 : index
    %c0_2 = arith.constant 0 : index
    %1 = vector.load %arg1[%c0, %c0_0, %c0_1, %c0_2] : memref<2x18x18x32xf32, #tpu.memory_space<vmem>>, vector<2x16x16x32xf32>
    %2 = vector.shape_cast %1 : vector<2x16x16x32xf32> to vector<512x32xf32>
    %3 = arith.truncf %2 : vector<512x32xf32> to vector<512x32xbf16>
    %c0_3 = arith.constant 0 : index
    %c0_4 = arith.constant 0 : index
    %4 = vector.load %arg2[%c0_3, %c0_4] : memref<288x32xbf16, #tpu.memory_space<vmem>>, vector<32x32xbf16>
    %cst_5 = arith.constant dense<0.000000e+00> : vector<512x32xf32>
    %5 = tpu.matmul %3, %4, %cst_5 {dimension_numbers = #tpu.dot_dimension_numbers<[1], [0], [0], [1], [0, 0, 1, 1], [], []>} : vector<512x32xbf16>, vector<32x32xbf16>, vector<512x32xf32> -> vector<512x32xf32>
    %6 = arith.addf %0, %5 : vector<512x32xf32>
    %c0_6 = arith.constant 0 : index
    %c0_7 = arith.constant 0 : index
    %c1 = arith.constant 1 : index
    %c0_8 = arith.constant 0 : index
    %7 = vector.load %arg1[%c0_6, %c0_7, %c1, %c0_8] : memref<2x18x18x32xf32, #tpu.memory_space<vmem>>, vector<2x16x16x32xf32>
    %8 = vector.shape_cast %7 : vector<2x16x16x32xf32> to vector<512x32xf32>
    %9 = arith.truncf %8 : vector<512x32xf32> to vector<512x32xbf16>
    %c32 = arith.constant 32 : index
    %c0_9 = arith.constant 0 : index
    %10 = vector.load %arg2[%c32, %c0_9] : memref<288x32xbf16, #tpu.memory_space<vmem>>, vector<32x32xbf16>
    %cst_10 = arith.constant dense<0.000000e+00> : vector<512x32xf32>
    %11 = tpu.matmul %9, %10, %cst_10 {dimension_numbers = #tpu.dot_dimension_numbers<[1], [0], [0], [1], [0, 0, 1, 1], [], []>} : vector<512x32xbf16>, vector<32x32xbf16>, vector<512x32xf32> -> vector<512x32xf32>
    %12 = arith.addf %6, %11 : vector<512x32xf32>
    %c0_11 = arith.constant 0 : index
    %c0_12 = arith.constant 0 : index
    %c2 = arith.constant 2 : index
    %c0_13 = arith.constant 0 : index
    %13 = vector.load %arg1[%c0_11, %c0_12, %c2, %c0_13] : memref<2x18x18x32xf32, #tpu.memory_space<vmem>>, vector<2x16x16x32xf32>
    %14 = vector.shape_cast %13 : vector<2x16x16x32xf32> to vector<512x32xf32>
    %15 = arith.truncf %14 : vector<512x32xf32> to vector<512x32xbf16>
    %c64 = arith.constant 64 : index
    %c0_14 = arith.constant 0 : index
    %16 = vector.load %arg2[%c64, %c0_14] : memref<288x32xbf16, #tpu.memory_space<vmem>>, vector<32x32xbf16>
    %cst_15 = arith.constant dense<0.000000e+00> : vector<512x32xf32>
    %17 = tpu.matmul %15, %16, %cst_15 {dimension_numbers = #tpu.dot_dimension_numbers<[1], [0], [0], [1], [0, 0, 1, 1], [], []>} : vector<512x32xbf16>, vector<32x32xbf16>, vector<512x32xf32> -> vector<512x32xf32>
    %18 = arith.addf %12, %17 : vector<512x32xf32>
    %c0_16 = arith.constant 0 : index
    %c1_17 = arith.constant 1 : index
    %c0_18 = arith.constant 0 : index
    %c0_19 = arith.constant 0 : index
    %19 = vector.load %arg1[%c0_16, %c1_17, %c0_18, %c0_19] : memref<2x18x18x32xf32, #tpu.memory_space<vmem>>, vector<2x16x16x32xf32>
    %20 = vector.shape_cast %19 : vector<2x16x16x32xf32> to vector<512x32xf32>
    %21 = arith.truncf %20 : vector<512x32xf32> to vector<512x32xbf16>
    %c96 = arith.constant 96 : index
    %c0_20 = arith.constant 0 : index
    %22 = vector.load %arg2[%c96, %c0_20] : memref<288x32xbf16, #tpu.memory_space<vmem>>, vector<32x32xbf16>
    %cst_21 = arith.constant dense<0.000000e+00> : vector<512x32xf32>
    %23 = tpu.matmul %21, %22, %cst_21 {dimension_numbers = #tpu.dot_dimension_numbers<[1], [0], [0], [1], [0, 0, 1, 1], [], []>} : vector<512x32xbf16>, vector<32x32xbf16>, vector<512x32xf32> -> vector<512x32xf32>
    %24 = arith.addf %18, %23 : vector<512x32xf32>
    %c0_22 = arith.constant 0 : index
    %c1_23 = arith.constant 1 : index
    %c1_24 = arith.constant 1 : index
    %c0_25 = arith.constant 0 : index
    %25 = vector.load %arg1[%c0_22, %c1_23, %c1_24, %c0_25] : memref<2x18x18x32xf32, #tpu.memory_space<vmem>>, vector<2x16x16x32xf32>
    %26 = vector.shape_cast %25 : vector<2x16x16x32xf32> to vector<512x32xf32>
    %27 = arith.truncf %26 : vector<512x32xf32> to vector<512x32xbf16>
    %c128 = arith.constant 128 : index
    %c0_26 = arith.constant 0 : index
    %28 = vector.load %arg2[%c128, %c0_26] : memref<288x32xbf16, #tpu.memory_space<vmem>>, vector<32x32xbf16>
    %cst_27 = arith.constant dense<0.000000e+00> : vector<512x32xf32>
    %29 = tpu.matmul %27, %28, %cst_27 {dimension_numbers = #tpu.dot_dimension_numbers<[1], [0], [0], [1], [0, 0, 1, 1], [], []>} : vector<512x32xbf16>, vector<32x32xbf16>, vector<512x32xf32> -> vector<512x32xf32>
    %30 = arith.addf %24, %29 : vector<512x32xf32>
    %c0_28 = arith.constant 0 : index
    %c1_29 = arith.constant 1 : index
    %c2_30 = arith.constant 2 : index
    %c0_31 = arith.constant 0 : index
    %31 = vector.load %arg1[%c0_28, %c1_29, %c2_30, %c0_31] : memref<2x18x18x32xf32, #tpu.memory_space<vmem>>, vector<2x16x16x32xf32>
    %32 = vector.shape_cast %31 : vector<2x16x16x32xf32> to vector<512x32xf32>
    %33 = arith.truncf %32 : vector<512x32xf32> to vector<512x32xbf16>
    %c160 = arith.constant 160 : index
    %c0_32 = arith.constant 0 : index
    %34 = vector.load %arg2[%c160, %c0_32] : memref<288x32xbf16, #tpu.memory_space<vmem>>, vector<32x32xbf16>
    %cst_33 = arith.constant dense<0.000000e+00> : vector<512x32xf32>
    %35 = tpu.matmul %33, %34, %cst_33 {dimension_numbers = #tpu.dot_dimension_numbers<[1], [0], [0], [1], [0, 0, 1, 1], [], []>} : vector<512x32xbf16>, vector<32x32xbf16>, vector<512x32xf32> -> vector<512x32xf32>
    %36 = arith.addf %30, %35 : vector<512x32xf32>
    %c0_34 = arith.constant 0 : index
    %c2_35 = arith.constant 2 : index
    %c0_36 = arith.constant 0 : index
    %c0_37 = arith.constant 0 : index
    %37 = vector.load %arg1[%c0_34, %c2_35, %c0_36, %c0_37] : memref<2x18x18x32xf32, #tpu.memory_space<vmem>>, vector<2x16x16x32xf32>
    %38 = vector.shape_cast %37 : vector<2x16x16x32xf32> to vector<512x32xf32>
    %39 = arith.truncf %38 : vector<512x32xf32> to vector<512x32xbf16>
    %c192 = arith.constant 192 : index
    %c0_38 = arith.constant 0 : index
    %40 = vector.load %arg2[%c192, %c0_38] : memref<288x32xbf16, #tpu.memory_space<vmem>>, vector<32x32xbf16>
    %cst_39 = arith.constant dense<0.000000e+00> : vector<512x32xf32>
    %41 = tpu.matmul %39, %40, %cst_39 {dimension_numbers = #tpu.dot_dimension_numbers<[1], [0], [0], [1], [0, 0, 1, 1], [], []>} : vector<512x32xbf16>, vector<32x32xbf16>, vector<512x32xf32> -> vector<512x32xf32>
    %42 = arith.addf %36, %41 : vector<512x32xf32>
    %c0_40 = arith.constant 0 : index
    %c2_41 = arith.constant 2 : index
    %c1_42 = arith.constant 1 : index
    %c0_43 = arith.constant 0 : index
    %43 = vector.load %arg1[%c0_40, %c2_41, %c1_42, %c0_43] : memref<2x18x18x32xf32, #tpu.memory_space<vmem>>, vector<2x16x16x32xf32>
    %44 = vector.shape_cast %43 : vector<2x16x16x32xf32> to vector<512x32xf32>
    %45 = arith.truncf %44 : vector<512x32xf32> to vector<512x32xbf16>
    %c224 = arith.constant 224 : index
    %c0_44 = arith.constant 0 : index
    %46 = vector.load %arg2[%c224, %c0_44] : memref<288x32xbf16, #tpu.memory_space<vmem>>, vector<32x32xbf16>
    %cst_45 = arith.constant dense<0.000000e+00> : vector<512x32xf32>
    %47 = tpu.matmul %45, %46, %cst_45 {dimension_numbers = #tpu.dot_dimension_numbers<[1], [0], [0], [1], [0, 0, 1, 1], [], []>} : vector<512x32xbf16>, vector<32x32xbf16>, vector<512x32xf32> -> vector<512x32xf32>
    %48 = arith.addf %42, %47 : vector<512x32xf32>
    %c0_46 = arith.constant 0 : index
    %c2_47 = arith.constant 2 : index
    %c2_48 = arith.constant 2 : index
    %c0_49 = arith.constant 0 : index
    %49 = vector.load %arg1[%c0_46, %c2_47, %c2_48, %c0_49] : memref<2x18x18x32xf32, #tpu.memory_space<vmem>>, vector<2x16x16x32xf32>
    %50 = vector.shape_cast %49 : vector<2x16x16x32xf32> to vector<512x32xf32>
    %51 = arith.truncf %50 : vector<512x32xf32> to vector<512x32xbf16>
    %c256 = arith.constant 256 : index
    %c0_50 = arith.constant 0 : index
    %52 = vector.load %arg2[%c256, %c0_50] : memref<288x32xbf16, #tpu.memory_space<vmem>>, vector<32x32xbf16>
    %cst_51 = arith.constant dense<0.000000e+00> : vector<512x32xf32>
    %53 = tpu.matmul %51, %52, %cst_51 {dimension_numbers = #tpu.dot_dimension_numbers<[1], [0], [0], [1], [0, 0, 1, 1], [], []>} : vector<512x32xbf16>, vector<32x32xbf16>, vector<512x32xf32> -> vector<512x32xf32>
    %54 = arith.addf %48, %53 : vector<512x32xf32>
    %cst_52 = arith.constant dense<0.000000e+00> : vector<32xf32>
    %55 = vector.multi_reduction <add>, %54, %cst_52 [0] : vector<512x32xf32> to vector<32xf32>
    %56 = vector.shape_cast %55 : vector<32xf32> to vector<1x32xf32>
    %cst_53 = arith.constant 5.120000e+02 : f32
    %57 = vector.broadcast %cst_53 : f32 to vector<1x32xf32>
    %58 = arith.divf %56, %57 : vector<1x32xf32>
    %59 = vector.broadcast %58 : vector<1x32xf32> to vector<512x32xf32>
    %60 = arith.subf %54, %59 : vector<512x32xf32>
    %61 = arith.mulf %60, %60 : vector<512x32xf32>
    %cst_54 = arith.constant dense<0.000000e+00> : vector<32xf32>
    %62 = vector.multi_reduction <add>, %61, %cst_54 [0] : vector<512x32xf32> to vector<32xf32>
    %63 = vector.shape_cast %62 : vector<32xf32> to vector<1x32xf32>
    %cst_55 = arith.constant 5.120000e+02 : f32
    %64 = vector.broadcast %cst_55 : f32 to vector<1x32xf32>
    %65 = arith.divf %63, %64 : vector<1x32xf32>
    %c0_56 = arith.constant 0 : index
    %c0_57 = arith.constant 0 : index
    %66 = vector.load %arg4[%c0_56, %c0_57] : memref<1x32xf32, #tpu.memory_space<vmem>>, vector<1x32xf32>
    %cst_58 = arith.constant 9.99999974E-6 : f32
    %67 = vector.broadcast %cst_58 : f32 to vector<1x32xf32>
    %68 = arith.addf %65, %67 : vector<1x32xf32>
    %69 = math.rsqrt %68 : vector<1x32xf32>
    %70 = arith.mulf %66, %69 : vector<1x32xf32>
    %c0_59 = arith.constant 0 : index
    %c0_60 = arith.constant 0 : index
    %71 = vector.load %arg5[%c0_59, %c0_60] : memref<1x32xf32, #tpu.memory_space<vmem>>, vector<1x32xf32>
    %72 = arith.mulf %58, %70 : vector<1x32xf32>
    %73 = arith.subf %71, %72 : vector<1x32xf32>
    %74 = vector.broadcast %70 : vector<1x32xf32> to vector<512x32xf32>
    %75 = arith.mulf %54, %74 : vector<512x32xf32>
    %76 = vector.broadcast %73 : vector<1x32xf32> to vector<512x32xf32>
    %77 = arith.addf %75, %76 : vector<512x32xf32>
    %cst_61 = arith.constant 0.000000e+00 : f32
    %78 = vector.broadcast %cst_61 : f32 to vector<512x32xf32>
    %79 = arith.maximumf %77, %78 : vector<512x32xf32>
    %cst_62 = arith.constant 0.000000e+00 : f32
    %80 = vector.broadcast %cst_62 : f32 to vector<2x18x18x32xf32>
    %c0_63 = arith.constant 0 : index
    %c0_64 = arith.constant 0 : index
    %c0_65 = arith.constant 0 : index
    %c0_66 = arith.constant 0 : index
    %81 = vector.load %arg9[%c0_63, %c0_64, %c0_65, %c0_66] : memref<2x18x18x32xf32, #tpu.memory_space<vmem>>, vector<2x18x18x32xf32>
    tpu.vector_store %arg9[%c0_63, %c0_64, %c0_65, %c0_66], %80 {strides = array<i32>} : memref<2x18x18x32xf32, #tpu.memory_space<vmem>>, vector<2x18x18x32xf32>,
    %82 = vector.shape_cast %79 : vector<512x32xf32> to vector<2x16x16x32xf32>
    %c0_67 = arith.constant 0 : index
    %c1_68 = arith.constant 1 : index
    %c1_69 = arith.constant 1 : index
    %c0_70 = arith.constant 0 : index
    %83 = vector.load %arg9[%c0_67, %c1_68, %c1_69, %c0_70] : memref<2x18x18x32xf32, #tpu.memory_space<vmem>>, vector<2x16x16x32xf32>
    tpu.vector_store %arg9[%c0_67, %c1_68, %c1_69, %c0_70], %82 {strides = array<i32>} : memref<2x18x18x32xf32, #tpu.memory_space<vmem>>, vector<2x16x16x32xf32>,
    %cst_71 = arith.constant 0.000000e+00 : f32
    %84 = vector.broadcast %cst_71 : f32 to vector<512x32xf32>
    %c0_72 = arith.constant 0 : index
    %c0_73 = arith.constant 0 : index
    %c0_74 = arith.constant 0 : index
    %c0_75 = arith.constant 0 : index
    %85 = vector.load %arg9[%c0_72, %c0_73, %c0_74, %c0_75] : memref<2x18x18x32xf32, #tpu.memory_space<vmem>>, vector<2x16x16x32xf32>
    %86 = vector.shape_cast %85 : vector<2x16x16x32xf32> to vector<512x32xf32>
    %87 = arith.truncf %86 : vector<512x32xf32> to vector<512x32xbf16>
    %c0_76 = arith.constant 0 : index
    %c0_77 = arith.constant 0 : index
    %88 = vector.load %arg3[%c0_76, %c0_77] : memref<288x32xbf16, #tpu.memory_space<vmem>>, vector<32x32xbf16>
    %cst_78 = arith.constant dense<0.000000e+00> : vector<512x32xf32>
    %89 = tpu.matmul %87, %88, %cst_78 {dimension_numbers = #tpu.dot_dimension_numbers<[1], [0], [0], [1], [0, 0, 1, 1], [], []>} : vector<512x32xbf16>, vector<32x32xbf16>, vector<512x32xf32> -> vector<512x32xf32>
    %90 = arith.addf %84, %89 : vector<512x32xf32>
    %c0_79 = arith.constant 0 : index
    %c0_80 = arith.constant 0 : index
    %c1_81 = arith.constant 1 : index
    %c0_82 = arith.constant 0 : index
    %91 = vector.load %arg9[%c0_79, %c0_80, %c1_81, %c0_82] : memref<2x18x18x32xf32, #tpu.memory_space<vmem>>, vector<2x16x16x32xf32>
    %92 = vector.shape_cast %91 : vector<2x16x16x32xf32> to vector<512x32xf32>
    %93 = arith.truncf %92 : vector<512x32xf32> to vector<512x32xbf16>
    %c32_83 = arith.constant 32 : index
    %c0_84 = arith.constant 0 : index
    %94 = vector.load %arg3[%c32_83, %c0_84] : memref<288x32xbf16, #tpu.memory_space<vmem>>, vector<32x32xbf16>
    %cst_85 = arith.constant dense<0.000000e+00> : vector<512x32xf32>
    %95 = tpu.matmul %93, %94, %cst_85 {dimension_numbers = #tpu.dot_dimension_numbers<[1], [0], [0], [1], [0, 0, 1, 1], [], []>} : vector<512x32xbf16>, vector<32x32xbf16>, vector<512x32xf32> -> vector<512x32xf32>
    %96 = arith.addf %90, %95 : vector<512x32xf32>
    %c0_86 = arith.constant 0 : index
    %c0_87 = arith.constant 0 : index
    %c2_88 = arith.constant 2 : index
    %c0_89 = arith.constant 0 : index
    %97 = vector.load %arg9[%c0_86, %c0_87, %c2_88, %c0_89] : memref<2x18x18x32xf32, #tpu.memory_space<vmem>>, vector<2x16x16x32xf32>
    %98 = vector.shape_cast %97 : vector<2x16x16x32xf32> to vector<512x32xf32>
    %99 = arith.truncf %98 : vector<512x32xf32> to vector<512x32xbf16>
    %c64_90 = arith.constant 64 : index
    %c0_91 = arith.constant 0 : index
    %100 = vector.load %arg3[%c64_90, %c0_91] : memref<288x32xbf16, #tpu.memory_space<vmem>>, vector<32x32xbf16>
    %cst_92 = arith.constant dense<0.000000e+00> : vector<512x32xf32>
    %101 = tpu.matmul %99, %100, %cst_92 {dimension_numbers = #tpu.dot_dimension_numbers<[1], [0], [0], [1], [0, 0, 1, 1], [], []>} : vector<512x32xbf16>, vector<32x32xbf16>, vector<512x32xf32> -> vector<512x32xf32>
    %102 = arith.addf %96, %101 : vector<512x32xf32>
    %c0_93 = arith.constant 0 : index
    %c1_94 = arith.constant 1 : index
    %c0_95 = arith.constant 0 : index
    %c0_96 = arith.constant 0 : index
    %103 = vector.load %arg9[%c0_93, %c1_94, %c0_95, %c0_96] : memref<2x18x18x32xf32, #tpu.memory_space<vmem>>, vector<2x16x16x32xf32>
    %104 = vector.shape_cast %103 : vector<2x16x16x32xf32> to vector<512x32xf32>
    %105 = arith.truncf %104 : vector<512x32xf32> to vector<512x32xbf16>
    %c96_97 = arith.constant 96 : index
    %c0_98 = arith.constant 0 : index
    %106 = vector.load %arg3[%c96_97, %c0_98] : memref<288x32xbf16, #tpu.memory_space<vmem>>, vector<32x32xbf16>
    %cst_99 = arith.constant dense<0.000000e+00> : vector<512x32xf32>
    %107 = tpu.matmul %105, %106, %cst_99 {dimension_numbers = #tpu.dot_dimension_numbers<[1], [0], [0], [1], [0, 0, 1, 1], [], []>} : vector<512x32xbf16>, vector<32x32xbf16>, vector<512x32xf32> -> vector<512x32xf32>
    %108 = arith.addf %102, %107 : vector<512x32xf32>
    %c0_100 = arith.constant 0 : index
    %c1_101 = arith.constant 1 : index
    %c1_102 = arith.constant 1 : index
    %c0_103 = arith.constant 0 : index
    %109 = vector.load %arg9[%c0_100, %c1_101, %c1_102, %c0_103] : memref<2x18x18x32xf32, #tpu.memory_space<vmem>>, vector<2x16x16x32xf32>
    %110 = vector.shape_cast %109 : vector<2x16x16x32xf32> to vector<512x32xf32>
    %111 = arith.truncf %110 : vector<512x32xf32> to vector<512x32xbf16>
    %c128_104 = arith.constant 128 : index
    %c0_105 = arith.constant 0 : index
    %112 = vector.load %arg3[%c128_104, %c0_105] : memref<288x32xbf16, #tpu.memory_space<vmem>>, vector<32x32xbf16>
    %cst_106 = arith.constant dense<0.000000e+00> : vector<512x32xf32>
    %113 = tpu.matmul %111, %112, %cst_106 {dimension_numbers = #tpu.dot_dimension_numbers<[1], [0], [0], [1], [0, 0, 1, 1], [], []>} : vector<512x32xbf16>, vector<32x32xbf16>, vector<512x32xf32> -> vector<512x32xf32>
    %114 = arith.addf %108, %113 : vector<512x32xf32>
    %c0_107 = arith.constant 0 : index
    %c1_108 = arith.constant 1 : index
    %c2_109 = arith.constant 2 : index
    %c0_110 = arith.constant 0 : index
    %115 = vector.load %arg9[%c0_107, %c1_108, %c2_109, %c0_110] : memref<2x18x18x32xf32, #tpu.memory_space<vmem>>, vector<2x16x16x32xf32>
    %116 = vector.shape_cast %115 : vector<2x16x16x32xf32> to vector<512x32xf32>
    %117 = arith.truncf %116 : vector<512x32xf32> to vector<512x32xbf16>
    %c160_111 = arith.constant 160 : index
    %c0_112 = arith.constant 0 : index
    %118 = vector.load %arg3[%c160_111, %c0_112] : memref<288x32xbf16, #tpu.memory_space<vmem>>, vector<32x32xbf16>
    %cst_113 = arith.constant dense<0.000000e+00> : vector<512x32xf32>
    %119 = tpu.matmul %117, %118, %cst_113 {dimension_numbers = #tpu.dot_dimension_numbers<[1], [0], [0], [1], [0, 0, 1, 1], [], []>} : vector<512x32xbf16>, vector<32x32xbf16>, vector<512x32xf32> -> vector<512x32xf32>
    %120 = arith.addf %114, %119 : vector<512x32xf32>
    %c0_114 = arith.constant 0 : index
    %c2_115 = arith.constant 2 : index
    %c0_116 = arith.constant 0 : index
    %c0_117 = arith.constant 0 : index
    %121 = vector.load %arg9[%c0_114, %c2_115, %c0_116, %c0_117] : memref<2x18x18x32xf32, #tpu.memory_space<vmem>>, vector<2x16x16x32xf32>
    %122 = vector.shape_cast %121 : vector<2x16x16x32xf32> to vector<512x32xf32>
    %123 = arith.truncf %122 : vector<512x32xf32> to vector<512x32xbf16>
    %c192_118 = arith.constant 192 : index
    %c0_119 = arith.constant 0 : index
    %124 = vector.load %arg3[%c192_118, %c0_119] : memref<288x32xbf16, #tpu.memory_space<vmem>>, vector<32x32xbf16>
    %cst_120 = arith.constant dense<0.000000e+00> : vector<512x32xf32>
    %125 = tpu.matmul %123, %124, %cst_120 {dimension_numbers = #tpu.dot_dimension_numbers<[1], [0], [0], [1], [0, 0, 1, 1], [], []>} : vector<512x32xbf16>, vector<32x32xbf16>, vector<512x32xf32> -> vector<512x32xf32>
    %126 = arith.addf %120, %125 : vector<512x32xf32>
    %c0_121 = arith.constant 0 : index
    %c2_122 = arith.constant 2 : index
    %c1_123 = arith.constant 1 : index
    %c0_124 = arith.constant 0 : index
    %127 = vector.load %arg9[%c0_121, %c2_122, %c1_123, %c0_124] : memref<2x18x18x32xf32, #tpu.memory_space<vmem>>, vector<2x16x16x32xf32>
    %128 = vector.shape_cast %127 : vector<2x16x16x32xf32> to vector<512x32xf32>
    %129 = arith.truncf %128 : vector<512x32xf32> to vector<512x32xbf16>
    %c224_125 = arith.constant 224 : index
    %c0_126 = arith.constant 0 : index
    %130 = vector.load %arg3[%c224_125, %c0_126] : memref<288x32xbf16, #tpu.memory_space<vmem>>, vector<32x32xbf16>
    %cst_127 = arith.constant dense<0.000000e+00> : vector<512x32xf32>
    %131 = tpu.matmul %129, %130, %cst_127 {dimension_numbers = #tpu.dot_dimension_numbers<[1], [0], [0], [1], [0, 0, 1, 1], [], []>} : vector<512x32xbf16>, vector<32x32xbf16>, vector<512x32xf32> -> vector<512x32xf32>
    %132 = arith.addf %126, %131 : vector<512x32xf32>
    %c0_128 = arith.constant 0 : index
    %c2_129 = arith.constant 2 : index
    %c2_130 = arith.constant 2 : index
    %c0_131 = arith.constant 0 : index
    %133 = vector.load %arg9[%c0_128, %c2_129, %c2_130, %c0_131] : memref<2x18x18x32xf32, #tpu.memory_space<vmem>>, vector<2x16x16x32xf32>
    %134 = vector.shape_cast %133 : vector<2x16x16x32xf32> to vector<512x32xf32>
    %135 = arith.truncf %134 : vector<512x32xf32> to vector<512x32xbf16>
    %c256_132 = arith.constant 256 : index
    %c0_133 = arith.constant 0 : index
    %136 = vector.load %arg3[%c256_132, %c0_133] : memref<288x32xbf16, #tpu.memory_space<vmem>>, vector<32x32xbf16>
    %cst_134 = arith.constant dense<0.000000e+00> : vector<512x32xf32>
    %137 = tpu.matmul %135, %136, %cst_134 {dimension_numbers = #tpu.dot_dimension_numbers<[1], [0], [0], [1], [0, 0, 1, 1], [], []>} : vector<512x32xbf16>, vector<32x32xbf16>, vector<512x32xf32> -> vector<512x32xf32>
    %138 = arith.addf %132, %137 : vector<512x32xf32>
    %cst_135 = arith.constant dense<0.000000e+00> : vector<32xf32>
    %139 = vector.multi_reduction <add>, %138, %cst_135 [0] : vector<512x32xf32> to vector<32xf32>
    %140 = vector.shape_cast %139 : vector<32xf32> to vector<1x32xf32>
    %cst_136 = arith.constant 5.120000e+02 : f32
    %141 = vector.broadcast %cst_136 : f32 to vector<1x32xf32>
    %142 = arith.divf %140, %141 : vector<1x32xf32>
    %143 = vector.broadcast %142 : vector<1x32xf32> to vector<512x32xf32>
    %144 = arith.subf %138, %143 : vector<512x32xf32>
    %145 = arith.mulf %144, %144 : vector<512x32xf32>
    %cst_137 = arith.constant dense<0.000000e+00> : vector<32xf32>
    %146 = vector.multi_reduction <add>, %145, %cst_137 [0] : vector<512x32xf32> to vector<32xf32>
    %147 = vector.shape_cast %146 : vector<32xf32> to vector<1x32xf32>
    %cst_138 = arith.constant 5.120000e+02 : f32
    %148 = vector.broadcast %cst_138 : f32 to vector<1x32xf32>
    %149 = arith.divf %147, %148 : vector<1x32xf32>
    %c0_139 = arith.constant 0 : index
    %c0_140 = arith.constant 0 : index
    %150 = vector.load %arg6[%c0_139, %c0_140] : memref<1x32xf32, #tpu.memory_space<vmem>>, vector<1x32xf32>
    %cst_141 = arith.constant 9.99999974E-6 : f32
    %151 = vector.broadcast %cst_141 : f32 to vector<1x32xf32>
    %152 = arith.addf %149, %151 : vector<1x32xf32>
    %153 = math.rsqrt %152 : vector<1x32xf32>
    %154 = arith.mulf %150, %153 : vector<1x32xf32>
    %c0_142 = arith.constant 0 : index
    %c0_143 = arith.constant 0 : index
    %155 = vector.load %arg7[%c0_142, %c0_143] : memref<1x32xf32, #tpu.memory_space<vmem>>, vector<1x32xf32>
    %156 = arith.mulf %142, %154 : vector<1x32xf32>
    %157 = arith.subf %155, %156 : vector<1x32xf32>
    %158 = vector.broadcast %154 : vector<1x32xf32> to vector<512x32xf32>
    %159 = arith.mulf %138, %158 : vector<512x32xf32>
    %160 = vector.broadcast %157 : vector<1x32xf32> to vector<512x32xf32>
    %161 = arith.addf %159, %160 : vector<512x32xf32>
    %c0_144 = arith.constant 0 : index
    %c1_145 = arith.constant 1 : index
    %c1_146 = arith.constant 1 : index
    %c0_147 = arith.constant 0 : index
    %162 = vector.load %arg1[%c0_144, %c1_145, %c1_146, %c0_147] : memref<2x18x18x32xf32, #tpu.memory_space<vmem>>, vector<2x16x16x32xf32>
    %163 = vector.shape_cast %162 : vector<2x16x16x32xf32> to vector<512x32xf32>
    %164 = arith.addf %161, %163 : vector<512x32xf32>
    %cst_148 = arith.constant 0.000000e+00 : f32
    %165 = vector.broadcast %cst_148 : f32 to vector<512x32xf32>
    %166 = arith.maximumf %164, %165 : vector<512x32xf32>
    %c0_149 = arith.constant 0 : index
    %c0_150 = arith.constant 0 : index
    %167 = vector.load %arg8[%c0_149, %c0_150] : memref<512x32xf32, #tpu.memory_space<vmem>>, vector<512x32xf32>
    tpu.vector_store %arg8[%c0_149, %c0_150], %166 {strides = array<i32>} : memref<512x32xf32, #tpu.memory_space<vmem>>, vector<512x32xf32>,
    return
  }
  func.func @transform_0(%arg0: i32) -> (i32, i32, i32, i32) {
    %c0_i32 = arith.constant 0 : i32
    %c0_i32_0 = arith.constant 0 : i32
    %c0_i32_1 = arith.constant 0 : i32
    %c0_i32_2 = arith.constant 0 : i32
    %c0_i32_3 = arith.constant 0 : i32
    return %c0_i32, %c0_i32_0, %c0_i32_1, %c0_i32_2 : i32, i32, i32, i32
  }
  func.func @transform_1(%arg0: i32) -> (i32, i32) {
    %c0_i32 = arith.constant 0 : i32
    %c0_i32_0 = arith.constant 0 : i32
    %c0_i32_1 = arith.constant 0 : i32
    return %c0_i32, %c0_i32_0 : i32, i32
  }
  func.func @transform_2(%arg0: i32) -> (i32, i32) {
    %c0_i32 = arith.constant 0 : i32
    %c0_i32_0 = arith.constant 0 : i32
    %c0_i32_1 = arith.constant 0 : i32
    return %c0_i32, %c0_i32_0 : i32, i32
  }
  func.func @transform_3(%arg0: i32) -> (i32, i32) {
    %c0_i32 = arith.constant 0 : i32
    %c0_i32_0 = arith.constant 0 : i32
    %c0_i32_1 = arith.constant 0 : i32
    return %c0_i32, %c0_i32_0 : i32, i32
  }
  func.func @transform_4(%arg0: i32) -> (i32, i32) {
    %c0_i32 = arith.constant 0 : i32
    %c0_i32_0 = arith.constant 0 : i32
    %c0_i32_1 = arith.constant 0 : i32
    return %c0_i32, %c0_i32_0 : i32, i32
  }
  func.func @transform_5(%arg0: i32) -> (i32, i32) {
    %c0_i32 = arith.constant 0 : i32
    %c0_i32_0 = arith.constant 0 : i32
    %c0_i32_1 = arith.constant 0 : i32
    return %c0_i32, %c0_i32_0 : i32, i32
  }
  func.func @transform_6(%arg0: i32) -> (i32, i32) {
    %c0_i32 = arith.constant 0 : i32
    %c0_i32_0 = arith.constant 0 : i32
    %c0_i32_1 = arith.constant 0 : i32
    return %c0_i32, %c0_i32_0 : i32, i32
  }
  func.func @transform_7(%arg0: i32) -> (i32, i32) {
    %c0_i32 = arith.constant 0 : i32
    %c0_i32_0 = arith.constant 0 : i32
    %c0_i32_1 = arith.constant 0 : i32
    return %c0_i32, %c0_i32_0 : i32, i32
  }
}

</mosaic_0001>

<llo_original>
// kernel: resblock_forward.1
$region0: #{resblock_forward.1}
  #allocation0 [shape = 'u32[]', space=smem, size = 0x4, offset = 0x4, fixed_abs, tag = 'smem constant byte address 0x4 - core index']
  #allocation1 [shape = 'u32[144,128]{1,0:T(1,128)}', space=vmem, size = 0x12000, scoped, tag = 'internal scratch']
  #allocation2 [shape = 'f32[2,18,18,32]{3,2,1,0:T(8,128)}', space=vmem, size = 0x6c000, scoped, tag = 'scratch operand']
  %s0 = inlined_call_operand.vmem [shape: f32[2,18,18,32], index: 0, kind: input, shape index: {}]
  %s1 = inlined_call_operand.vmem [shape: bf16[288,32], index: 1, kind: input, shape index: {}]
  %s2 = inlined_call_operand.vmem [shape: bf16[288,32], index: 2, kind: input, shape index: {}]
  %s3 = inlined_call_operand.vmem [shape: f32[1,32], index: 3, kind: input, shape index: {}]
  %s4 = inlined_call_operand.vmem [shape: f32[1,32], index: 4, kind: input, shape index: {}]
  %s5 = inlined_call_operand.vmem [shape: f32[1,32], index: 5, kind: input, shape index: {}]
  %s6 = inlined_call_operand.vmem [shape: f32[1,32], index: 6, kind: input, shape index: {}]
  %s7 = inlined_call_operand.hbm [shape: f32[512,32], index: 7, kind: output, shape index: {}]
  %s8 = sld [smem:[#allocation0]]
  $region38: #{resblock_forward.1} parent=0
    _
  %s10 = ssub.s32 1, %s8
  %s11 = scalar_select 0, %s10, %s8
  $region1: #{resblock_forward.1} parent=0
    #allocation3 [shape = 'u8[262144]{0}', space=vmem, size = 0x40000, scoped, tag = 'output window, operand 0, single buffered']
    #allocation4 [shape = 's32[1]{0}', space=sflag, size = 0x4, scoped, tag = 'scoped memory for resblock_forward.1']
    %12 = vsyncpa [#allocation4], 0
    // Predicated region
    $region2: #{resblock_forward.1} parent=1 // pred_check
      _
    $region3: #{resblock_forward.1} parent=1 // pred_check_branch
      %14 = sbr.rel (0) target = $region5
    $region4: #{resblock_forward.1} parent=1 // pred_region
      _
    $region5: #{resblock_forward.1} parent=1 // pred_fallthru
      _
    // Predicated region
    $region6: #{resblock_forward.1} parent=1 // pred_check
      _
    $region7: #{resblock_forward.1} parent=1 // pred_check_branch
      %16 = sbr.rel (0) target = $region9
    $region8: #{resblock_forward.1} parent=1 // pred_region
      _
    $region9: #{resblock_forward.1} parent=1 // pred_fallthru
      _
    // Predicated region
    $region10: #{resblock_forward.1} parent=1 // pred_check
      _
    $region11: #{resblock_forward.1} parent=1 // pred_check_branch
      %18 = sbr.rel (0) target = $region13
    $region12: #{resblock_forward.1} parent=1 // pred_region
      _
    $region13: #{resblock_forward.1} parent=1 // pred_fallthru
      _
    // Predicated region
    $region14: #{resblock_forward.1} parent=1 // pred_check
      _
    $region15: #{resblock_forward.1} parent=1 // pred_check_branch
      %20 = sbr.rel (0) target = $region17
    $region16: #{resblock_forward.1} parent=1 // pred_region
      _
    $region17: #{resblock_forward.1} parent=1 // pred_fallthru
      _
    // Predicated region
    $region18: #{resblock_forward.1} parent=1 // pred_check
      _
    $region19: #{resblock_forward.1} parent=1 // pred_check_branch
      %22 = sbr.rel (0) target = $region21
    $region20: #{resblock_forward.1} parent=1 // pred_region
      _
    $region21: #{resblock_forward.1} parent=1 // pred_fallthru
      _
    // Predicated region
    $region22: #{resblock_forward.1} parent=1 // pred_check
      _
    $region23: #{resblock_forward.1} parent=1 // pred_check_branch
      %24 = sbr.rel (0) target = $region25
    $region24: #{resblock_forward.1} parent=1 // pred_region
      _
    $region25: #{resblock_forward.1} parent=1 // pred_fallthru
      _
    // Predicated region
    $region26: #{resblock_forward.1} parent=1 // pred_check
      _
    $region27: #{resblock_forward.1} parent=1 // pred_check_branch
      %26 = sbr.rel (0) target = $region29
    $region28: #{resblock_forward.1} parent=1 // pred_region
      _
    $region29: #{resblock_forward.1} parent=1 // pred_fallthru
      _
    %v28 = vld [vmem:[%s0] sm:$0xff]
    %v29 = vld [vmem:[%s0 + $0x8] sm:$0xff]
    %v30 = vld [vmem:[%s0 + $0x18] sm:$0xff]
    %v31 = vld [vmem:[%s0 + $0x20] sm:$0xff]
    %v32 = vld [vmem:[%s0 + $0x30] sm:$0xff]
    %v33 = vld [vmem:[%s0 + $0x38] sm:$0xff]
    %v34 = vld [vmem:[%s0 + $0x48] sm:$0xff]
    %v35 = vld [vmem:[%s0 + $0x50] sm:$0xff]
    %v36 = vld [vmem:[%s0 + $0x60] sm:$0xff]
    %v37 = vld [vmem:[%s0 + $0x68] sm:$0xff]
    %v38 = vld [vmem:[%s0 + $0x78] sm:$0xff]
    %v39 = vld [vmem:[%s0 + $0x80] sm:$0xff]
    %v40 = vld [vmem:[%s0 + $0x90] sm:$0xff]
    %v41 = vld [vmem:[%s0 + $0x98] sm:$0xff]
    %v42 = vld [vmem:[%s0 + $0xa8] sm:$0xff]
    %v43 = vld [vmem:[%s0 + $0xb0] sm:$0xff]
    %v44 = vld [vmem:[%s0 + $0xc0] sm:$0xff]
    %v45 = vld [vmem:[%s0 + $0xc8] sm:$0xff]
    %v46 = vld [vmem:[%s0 + $0xd8] sm:$0xff]
    %v47 = vld [vmem:[%s0 + $0xe0] sm:$0xff]
    %v48 = vld [vmem:[%s0 + $0xf0] sm:$0xff]
    %v49 = vld [vmem:[%s0 + $0xf8] sm:$0xff]
    %v50 = vld [vmem:[%s0 + $0x108] sm:$0xff]
    %v51 = vld [vmem:[%s0 + $0x110] sm:$0xff]
    %v52 = vld [vmem:[%s0 + $0x120] sm:$0xff]
    %v53 = vld [vmem:[%s0 + $0x128] sm:$0xff]
    %v54 = vld [vmem:[%s0 + $0x138] sm:$0xff]
    %v55 = vld [vmem:[%s0 + $0x140] sm:$0xff]
    %v56 = vld [vmem:[%s0 + $0x150] sm:$0xff]
    %v57 = vld [vmem:[%s0 + $0x158] sm:$0xff]
    %v58 = vld [vmem:[%s0 + $0x168] sm:$0xff]
    %v59 = vld [vmem:[%s0 + $0x170] sm:$0xff]
    %v60 = vld [vmem:[%s0 + $0x1b0] sm:$0xff]
    %v61 = vld [vmem:[%s0 + $0x1b8] sm:$0xff]
    %v62 = vld [vmem:[%s0 + $0x1c8] sm:$0xff]
    %v63 = vld [vmem:[%s0 + $0x1d0] sm:$0xff]
    %v64 = vld [vmem:[%s0 + $0x1e0] sm:$0xff]
    %v65 = vld [vmem:[%s0 + $0x1e8] sm:$0xff]
    %v66 = vld [vmem:[%s0 + $0x1f8] sm:$0xff]
    %v67 = vld [vmem:[%s0 + $0x200] sm:$0xff]
    %v68 = vld [vmem:[%s0 + $0x210] sm:$0xff]
    %v69 = vld [vmem:[%s0 + $0x218] sm:$0xff]
    %v70 = vld [vmem:[%s0 + $0x228] sm:$0xff]
    %v71 = vld [vmem:[%s0 + $0x230] sm:$0xff]
    %v72 = vld [vmem:[%s0 + $0x240] sm:$0xff]
    %v73 = vld [vmem:[%s0 + $0x248] sm:$0xff]
    %v74 = vld [vmem:[%s0 + $0x258] sm:$0xff]
    %v75 = vld [vmem:[%s0 + $0x260] sm:$0xff]
    %v76 = vld [vmem:[%s0 + $0x270] sm:$0xff]
    %v77 = vld [vmem:[%s0 + $0x278] sm:$0xff]
    %v78 = vld [vmem:[%s0 + $0x288] sm:$0xff]
    %v79 = vld [vmem:[%s0 + $0x290] sm:$0xff]
    %v80 = vld [vmem:[%s0 + $0x2a0] sm:$0xff]
    %v81 = vld [vmem:[%s0 + $0x2a8] sm:$0xff]
    %v82 = vld [vmem:[%s0 + $0x2b8] sm:$0xff]
    %v83 = vld [vmem:[%s0 + $0x2c0] sm:$0xff]
    %v84 = vld [vmem:[%s0 + $0x2d0] sm:$0xff]
    %v85 = vld [vmem:[%s0 + $0x2d8] sm:$0xff]
    %v86 = vld [vmem:[%s0 + $0x2e8] sm:$0xff]
    %v87 = vld [vmem:[%s0 + $0x2f0] sm:$0xff]
    %v88 = vld [vmem:[%s0 + $0x300] sm:$0xff]
    %v89 = vld [vmem:[%s0 + $0x308] sm:$0xff]
    %v90 = vld [vmem:[%s0 + $0x318] sm:$0xff]
    %v91 = vld [vmem:[%s0 + $0x320] sm:$0xff]
    %v92 = vpack.c.bf16 %v29, %v28
    %v93 = vpack.c.bf16 %v31, %v30
    %v94 = vpack.c.bf16 %v33, %v32
    %v95 = vpack.c.bf16 %v35, %v34
    %v96 = vpack.c.bf16 %v37, %v36
    %v97 = vpack.c.bf16 %v39, %v38
    %v98 = vpack.c.bf16 %v41, %v40
    %v99 = vpack.c.bf16 %v43, %v42
    %v100 = vpack.c.bf16 %v45, %v44
    %v101 = vpack.c.bf16 %v47, %v46
    %v102 = vpack.c.bf16 %v49, %v48
    %v103 = vpack.c.bf16 %v51, %v50
    %v104 = vpack.c.bf16 %v53, %v52
    %v105 = vpack.c.bf16 %v55, %v54
    %v106 = vpack.c.bf16 %v57, %v56
    %v107 = vpack.c.bf16 %v59, %v58
    %v108 = vpack.c.bf16 %v61, %v60
    %v109 = vpack.c.bf16 %v63, %v62
    %v110 = vpack.c.bf16 %v65, %v64
    %v111 = vpack.c.bf16 %v67, %v66
    %v112 = vpack.c.bf16 %v69, %v68
    %v113 = vpack.c.bf16 %v71, %v70
    %v114 = vpack.c.bf16 %v73, %v72
    %v115 = vpack.c.bf16 %v75, %v74
    %v116 = vpack.c.bf16 %v77, %v76
    %v117 = vpack.c.bf16 %v79, %v78
    %v118 = vpack.c.bf16 %v81, %v80
    %v119 = vpack.c.bf16 %v83, %v82
    %v120 = vpack.c.bf16 %v85, %v84
    %v121 = vpack.c.bf16 %v87, %v86
    %v122 = vpack.c.bf16 %v89, %v88
    %v123 = vpack.c.bf16 %v91, %v90
    %v124 = vld [vmem:[%s1] sm:$0xf]
    %v125 = vld [vmem:[%s1 + $0x4] sm:$0xf]
    %v126 = vld [vmem:[%s1 + $0x8] sm:$0xf]
    %v127 = vld [vmem:[%s1 + $0xc] sm:$0xf]
    %v128 = vld [vmem:[%s0 + $0x1] sm:$0xff]
    %v129 = vld [vmem:[%s0 + $0x9] sm:$0xff]
    %v130 = vld [vmem:[%s0 + $0x19] sm:$0xff]
    %v131 = vld [vmem:[%s0 + $0x21] sm:$0xff]
    %v132 = vld [vmem:[%s0 + $0x31] sm:$0xff]
    %v133 = vld [vmem:[%s0 + $0x39] sm:$0xff]
    %v134 = vld [vmem:[%s0 + $0x49] sm:$0xff]
    %v135 = vld [vmem:[%s0 + $0x51] sm:$0xff]
    %v136 = vld [vmem:[%s0 + $0x61] sm:$0xff]
    %v137 = vld [vmem:[%s0 + $0x69] sm:$0xff]
    %v138 = vld [vmem:[%s0 + $0x79] sm:$0xff]
    %v139 = vld [vmem:[%s0 + $0x81] sm:$0xff]
    %v140 = vld [vmem:[%s0 + $0x91] sm:$0xff]
    %v141 = vld [vmem:[%s0 + $0x99] sm:$0xff]
    %v142 = vld [vmem:[%s0 + $0xa9] sm:$0xff]
    %v143 = vld [vmem:[%s0 + $0xb1] sm:$0xff]
    %v144 = vld [vmem:[%s0 + $0xc1] sm:$0xff]
    %v145 = vld [vmem:[%s0 + $0xc9] sm:$0xff]
    %v146 = vld [vmem:[%s0 + $0xd9] sm:$0xff]
    %v147 = vld [vmem:[%s0 + $0xe1] sm:$0xff]
    %v148 = vld [vmem:[%s0 + $0xf1] sm:$0xff]
    %v149 = vld [vmem:[%s0 + $0xf9] sm:$0xff]
    %v150 = vld [vmem:[%s0 + $0x109] sm:$0xff]
    %v151 = vld [vmem:[%s0 + $0x111] sm:$0xff]
    %v152 = vld [vmem:[%s0 + $0x121] sm:$0xff]
    %v153 = vld [vmem:[%s0 + $0x129] sm:$0xff]
    %v154 = vld [vmem:[%s0 + $0x139] sm:$0xff]
    %v155 = vld [vmem:[%s0 + $0x141] sm:$0xff]
    %v156 = vld [vmem:[%s0 + $0x151] sm:$0xff]
    %v157 = vld [vmem:[%s0 + $0x159] sm:$0xff]
    %v158 = vld [vmem:[%s0 + $0x169] sm:$0xff]
    %v159 = vld [vmem:[%s0 + $0x171] sm:$0xff]
    %v160 = vld [vmem:[%s0 + $0x1b1] sm:$0xff]
    %v161 = vld [vmem:[%s0 + $0x1b9] sm:$0xff]
    %v162 = vld [vmem:[%s0 + $0x1c9] sm:$0xff]
    %v163 = vld [vmem:[%s0 + $0x1d1] sm:$0xff]
    %v164 = vld [vmem:[%s0 + $0x1e1] sm:$0xff]
    %v165 = vld [vmem:[%s0 + $0x1e9] sm:$0xff]
    %v166 = vld [vmem:[%s0 + $0x1f9] sm:$0xff]
    %v167 = vld [vmem:[%s0 + $0x201] sm:$0xff]
    %v168 = vld [vmem:[%s0 + $0x211] sm:$0xff]
    %v169 = vld [vmem:[%s0 + $0x219] sm:$0xff]
    %v170 = vld [vmem:[%s0 + $0x229] sm:$0xff]
    %v171 = vld [vmem:[%s0 + $0x231] sm:$0xff]
    %v172 = vld [vmem:[%s0 + $0x241] sm:$0xff]
    %v173 = vld [vmem:[%s0 + $0x249] sm:$0xff]
    %v174 = vld [vmem:[%s0 + $0x259] sm:$0xff]
    %v175 = vld [vmem:[%s0 + $0x261] sm:$0xff]
    %v176 = vld [vmem:[%s0 + $0x271] sm:$0xff]
    %v177 = vld [vmem:[%s0 + $0x279] sm:$0xff]
    %v178 = vld [vmem:[%s0 + $0x289] sm:$0xff]
    %v179 = vld [vmem:[%s0 + $0x291] sm:$0xff]
    %v180 = vld [vmem:[%s0 + $0x2a1] sm:$0xff]
    %v181 = vld [vmem:[%s0 + $0x2a9] sm:$0xff]
    %v182 = vld [vmem:[%s0 + $0x2b9] sm:$0xff]
    %v183 = vld [vmem:[%s0 + $0x2c1] sm:$0xff]
    %v184 = vld [vmem:[%s0 + $0x2d1] sm:$0xff]
    %v185 = vld [vmem:[%s0 + $0x2d9] sm:$0xff]
    %v186 = vld [vmem:[%s0 + $0x2e9] sm:$0xff]
    %v187 = vld [vmem:[%s0 + $0x2f1] sm:$0xff]
    %v188 = vld [vmem:[%s0 + $0x301] sm:$0xff]
    %v189 = vld [vmem:[%s0 + $0x309] sm:$0xff]
    %v190 = vld [vmem:[%s0 + $0x319] sm:$0xff]
    %v191 = vld [vmem:[%s0 + $0x321] sm:$0xff]
    %v192 = vpack.c.bf16 %v129, %v128
    %v193 = vpack.c.bf16 %v131, %v130
    %v194 = vpack.c.bf16 %v133, %v132
    %v195 = vpack.c.bf16 %v135, %v134
    %v196 = vpack.c.bf16 %v137, %v136
    %v197 = vpack.c.bf16 %v139, %v138
    %v198 = vpack.c.bf16 %v141, %v140
    %v199 = vpack.c.bf16 %v143, %v142
    %v200 = vpack.c.bf16 %v145, %v144
    %v201 = vpack.c.bf16 %v147, %v146
    %v202 = vpack.c.bf16 %v149, %v148
    %v203 = vpack.c.bf16 %v151, %v150
    %v204 = vpack.c.bf16 %v153, %v152
    %v205 = vpack.c.bf16 %v155, %v154
    %v206 = vpack.c.bf16 %v157, %v156
    %v207 = vpack.c.bf16 %v159, %v158
    %v208 = vpack.c.bf16 %v161, %v160
    %v209 = vpack.c.bf16 %v163, %v162
    %v210 = vpack.c.bf16 %v165, %v164
    %v211 = vpack.c.bf16 %v167, %v166
    %v212 = vpack.c.bf16 %v169, %v168
    %v213 = vpack.c.bf16 %v171, %v170
    %v214 = vpack.c.bf16 %v173, %v172
    %v215 = vpack.c.bf16 %v175, %v174
    %v216 = vpack.c.bf16 %v177, %v176
    %v217 = vpack.c.bf16 %v179, %v178
    %v218 = vpack.c.bf16 %v181, %v180
    %v219 = vpack.c.bf16 %v183, %v182
    %v220 = vpack.c.bf16 %v185, %v184
    %v221 = vpack.c.bf16 %v187, %v186
    %v222 = vpack.c.bf16 %v189, %v188
    %v223 = vpack.c.bf16 %v191, %v190
    %v224 = vld [vmem:[%s1 + $0x10] sm:$0xf]
    %v225 = vld [vmem:[%s1 + $0x14] sm:$0xf]
    %v226 = vld [vmem:[%s1 + $0x18] sm:$0xf]
    %v227 = vld [vmem:[%s1 + $0x1c] sm:$0xf]
    %v232 = vunpack.c.l.b16 %v224
    %v233 = vunpack.c.l.b16 %v225
    %v234 = vunpack.c.l.b16 %v226
    %v235 = vunpack.c.l.b16 %v227
    %v236 = vpack.c.b16 %v233, %v232
    %v237 = vpack.c.b16 %v235, %v234
    %vm240 = vcmask 261120
    %v242 = vsel %vm240, %v192, 0
    %v245 = vsel %vm240, %v193, 0
    %v248 = vsel %vm240, %v194, 0
    %v251 = vsel %vm240, %v195, 0
    %v254 = vsel %vm240, %v196, 0
    %v257 = vsel %vm240, %v197, 0
    %v260 = vsel %vm240, %v198, 0
    %v263 = vsel %vm240, %v199, 0
    %v266 = vsel %vm240, %v200, 0
    %v269 = vsel %vm240, %v201, 0
    %v272 = vsel %vm240, %v202, 0
    %v275 = vsel %vm240, %v203, 0
    %v278 = vsel %vm240, %v204, 0
    %v281 = vsel %vm240, %v205, 0
    %v284 = vsel %vm240, %v206, 0
    %v287 = vsel %vm240, %v207, 0
    %v290 = vsel %vm240, %v208, 0
    %v293 = vsel %vm240, %v209, 0
    %v296 = vsel %vm240, %v210, 0
    %v299 = vsel %vm240, %v211, 0
    %v302 = vsel %vm240, %v212, 0
    %v305 = vsel %vm240, %v213, 0
    %v308 = vsel %vm240, %v214, 0
    %v311 = vsel %vm240, %v215, 0
    %v314 = vsel %vm240, %v216, 0
    %v317 = vsel %vm240, %v217, 0
    %v320 = vsel %vm240, %v218, 0
    %v323 = vsel %vm240, %v219, 0
    %v326 = vsel %vm240, %v220, 0
    %v329 = vsel %vm240, %v221, 0
    %v332 = vsel %vm240, %v222, 0
    %v335 = vsel %vm240, %v223, 0
    %337 = vmatprep.subr.bf16.mxu0 0
    %338 = vmatpush1.bf16.msra.mxu0 %v236
    %339 = vmatprep.subr.bf16.mxu0 0
    %340 = vmatpush1.bf16.msra.mxu0 %v237
    %341 = vmatprep.subr.bf16.mxu0 0
    %342 = vmatpush1.bf16.msra.mxu0 0
    %343 = vmatprep.subr.bf16.mxu0 0
    %344 = vmatpush1.bf16.msra.mxu0 0
    %345 = vmatprep.subr.bf16.mxu0 0
    %346 = vmatpush1.bf16.msra.mxu0 0
    %347 = vmatprep.subr.bf16.mxu0 0
    %348 = vmatpush1.bf16.msra.mxu0 0
    %349 = vmatprep.subr.bf16.mxu0 0
    %350 = vmatpush1.bf16.msra.mxu0 0
    %351 = vmatprep.subr.bf16.mxu0 0
    %352 = vmatpush1.bf16.msra.mxu0 0
    %353 = vmatprep.subr.bf16.mxu0 0
    %354 = vmatpush1.bf16.msra.mxu0 0
    %355 = vmatprep.subr.bf16.mxu0 0
    %356 = vmatpush1.bf16.msra.mxu0 0
    %357 = vmatprep.subr.bf16.mxu0 0
    %358 = vmatpush1.bf16.msra.mxu0 0
    %359 = vmatprep.subr.bf16.mxu0 0
    %360 = vmatpush1.bf16.msra.mxu0 0
    %361 = vmatprep.subr.bf16.mxu0 0
    %362 = vmatpush1.bf16.msra.mxu0 0
    %363 = vmatprep.subr.bf16.mxu0 0
    %364 = vmatpush1.bf16.msra.mxu0 0
    %365 = vmatprep.subr.bf16.mxu0 0
    %366 = vmatpush1.bf16.msra.mxu0 0
    %367 = vmatprep.subr.bf16.mxu0 0
    %368 = vmatpush1.bf16.msra.mxu0 0
    %369 = vmatprep.mubr.bf16.mxu0 0
    %370 = vmatmul.mubr.bf16.gmra.mrb[0].mxu0 %v242
    %v371 = vpop.f32.mrb[0].mxu0
    %v372 = vadd.f32 0.0, %v371
    %v373 = vpop.f32.mrb[0].mxu0
    %v374 = vpop.f32.mrb[0].mxu0
    %v375 = vadd.f32 0.0, %v374
    %v376 = vpop.f32.mrb[0].mxu0
    %377 = vmatprep.mubr.bf16.mxu0 0
    %378 = vmatmul.mubr.bf16.gmra.mrb[0].mxu0 %v245
    %v379 = vpop.f32.mrb[0].mxu0
    %v380 = vadd.f32 0.0, %v379
    %v381 = vpop.f32.mrb[0].mxu0
    %v382 = vpop.f32.mrb[0].mxu0
    %v383 = vadd.f32 0.0, %v382
    %v384 = vpop.f32.mrb[0].mxu0
    %385 = vmatprep.mubr.bf16.mxu0 0
    %386 = vmatmul.mubr.bf16.gmra.mrb[0].mxu0 %v248
    %v387 = vpop.f32.mrb[0].mxu0
    %v388 = vadd.f32 0.0, %v387
    %v389 = vpop.f32.mrb[0].mxu0
    %v390 = vpop.f32.mrb[0].mxu0
    %v391 = vadd.f32 0.0, %v390
    %v392 = vpop.f32.mrb[0].mxu0
    %393 = vmatprep.mubr.bf16.mxu0 0
    %394 = vmatmul.mubr.bf16.gmra.mrb[0].mxu0 %v251
    %v395 = vpop.f32.mrb[0].mxu0
    %v396 = vadd.f32 0.0, %v395
    %v397 = vpop.f32.mrb[0].mxu0
    %v398 = vpop.f32.mrb[0].mxu0
    %v399 = vadd.f32 0.0, %v398
    %v400 = vpop.f32.mrb[0].mxu0
    %401 = vmatprep.mubr.bf16.mxu0 0
    %402 = vmatmul.mubr.bf16.gmra.mrb[0].mxu0 %v254
    %v403 = vpop.f32.mrb[0].mxu0
    %v404 = vadd.f32 0.0, %v403
    %v405 = vpop.f32.mrb[0].mxu0
    %v406 = vpop.f32.mrb[0].mxu0
    %v407 = vadd.f32 0.0, %v406
    %v408 = vpop.f32.mrb[0].mxu0
    %409 = vmatprep.mubr.bf16.mxu0 0
    %410 = vmatmul.mubr.bf16.gmra.mrb[0].mxu0 %v257
    %v411 = vpop.f32.mrb[0].mxu0
    %v412 = vadd.f32 0.0, %v411
    %v413 = vpop.f32.mrb[0].mxu0
    %v414 = vpop.f32.mrb[0].mxu0
    %v415 = vadd.f32 0.0, %v414
    %v416 = vpop.f32.mrb[0].mxu0
    %417 = vmatprep.mubr.bf16.mxu0 0
    %418 = vmatmul.mubr.bf16.gmra.mrb[0].mxu0 %v260
    %v419 = vpop.f32.mrb[0].mxu0
    %v420 = vadd.f32 0.0, %v419
    %v421 = vpop.f32.mrb[0].mxu0
    %v422 = vpop.f32.mrb[0].mxu0
    %v423 = vadd.f32 0.0, %v422
    %v424 = vpop.f32.mrb[0].mxu0
    %425 = vmatprep.mubr.bf16.mxu0 0
    %426 = vmatmul.mubr.bf16.gmra.mrb[0].mxu0 %v263
    %v427 = vpop.f32.mrb[0].mxu0
    %v428 = vadd.f32 0.0, %v427
    %v429 = vpop.f32.mrb[0].mxu0
    %v430 = vpop.f32.mrb[0].mxu0
    %v431 = vadd.f32 0.0, %v430
    %v432 = vpop.f32.mrb[0].mxu0
    %433 = vmatprep.mubr.bf16.mxu0 0
    %434 = vmatmul.mubr.bf16.gmra.mrb[0].mxu0 %v266
    %v435 = vpop.f32.mrb[0].mxu0
    %v436 = vadd.f32 0.0, %v435
    %v437 = vpop.f32.mrb[0].mxu0
    %v438 = vpop.f32.mrb[0].mxu0
    %v439 = vadd.f32 0.0, %v438
    %v440 = vpop.f32.mrb[0].mxu0
    %441 = vmatprep.mubr.bf16.mxu0 0
    %442 = vmatmul.mubr.bf16.gmra.mrb[0].mxu0 %v269
    %v443 = vpop.f32.mrb[0].mxu0
    %v444 = vadd.f32 0.0, %v443
    %v445 = vpop.f32.mrb[0].mxu0
    %v446 = vpop.f32.mrb[0].mxu0
    %v447 = vadd.f32 0.0, %v446
    %v448 = vpop.f32.mrb[0].mxu0
    %449 = vmatprep.mubr.bf16.mxu0 0
    %450 = vmatmul.mubr.bf16.gmra.mrb[0].mxu0 %v272
    %v451 = vpop.f32.mrb[0].mxu0
    %v452 = vadd.f32 0.0, %v451
    %v453 = vpop.f32.mrb[0].mxu0
    %v454 = vpop.f32.mrb[0].mxu0
    %v455 = vadd.f32 0.0, %v454
    %v456 = vpop.f32.mrb[0].mxu0
    %457 = vmatprep.mubr.bf16.mxu0 0
    %458 = vmatmul.mubr.bf16.gmra.mrb[0].mxu0 %v275
    %v459 = vpop.f32.mrb[0].mxu0
    %v460 = vadd.f32 0.0, %v459
    %v461 = vpop.f32.mrb[0].mxu0
    %v462 = vpop.f32.mrb[0].mxu0
    %v463 = vadd.f32 0.0, %v462
    %v464 = vpop.f32.mrb[0].mxu0
    %465 = vmatprep.mubr.bf16.mxu0 0
    %466 = vmatmul.mubr.bf16.gmra.mrb[0].mxu0 %v278
    %v467 = vpop.f32.mrb[0].mxu0
    %v468 = vadd.f32 0.0, %v467
    %v469 = vpop.f32.mrb[0].mxu0
    %v470 = vpop.f32.mrb[0].mxu0
    %v471 = vadd.f32 0.0, %v470
    %v472 = vpop.f32.mrb[0].mxu0
    %473 = vmatprep.mubr.bf16.mxu0 0
    %474 = vmatmul.mubr.bf16.gmra.mrb[0].mxu0 %v281
    %v475 = vpop.f32.mrb[0].mxu0
    %v476 = vadd.f32 0.0, %v475
    %v477 = vpop.f32.mrb[0].mxu0
    %v478 = vpop.f32.mrb[0].mxu0
    %v479 = vadd.f32 0.0, %v478
    %v480 = vpop.f32.mrb[0].mxu0
    %481 = vmatprep.mubr.bf16.mxu0 0
    %482 = vmatmul.mubr.bf16.gmra.mrb[0].mxu0 %v284
    %v483 = vpop.f32.mrb[0].mxu0
    %v484 = vadd.f32 0.0, %v483
    %v485 = vpop.f32.mrb[0].mxu0
    %v486 = vpop.f32.mrb[0].mxu0
    %v487 = vadd.f32 0.0, %v486
    %v488 = vpop.f32.mrb[0].mxu0
    %489 = vmatprep.mubr.bf16.mxu0 0
    %490 = vmatmul.mubr.bf16.gmra.mrb[0].mxu0 %v287
    %v491 = vpop.f32.mrb[0].mxu0
    %v492 = vadd.f32 0.0, %v491
    %v493 = vpop.f32.mrb[0].mxu0
    %v494 = vpop.f32.mrb[0].mxu0
    %v495 = vadd.f32 0.0, %v494
    %v496 = vpop.f32.mrb[0].mxu0
    %497 = vmatprep.mubr.bf16.mxu0 0
    %498 = vmatmul.mubr.bf16.gmra.mrb[0].mxu0 %v290
    %v499 = vpop.f32.mrb[0].mxu0
    %v500 = vadd.f32 0.0, %v499
    %v501 = vpop.f32.mrb[0].mxu0
    %v502 = vpop.f32.mrb[0].mxu0
    %v503 = vadd.f32 0.0, %v502
    %v504 = vpop.f32.mrb[0].mxu0
    %505 = vmatprep.mubr.bf16.mxu0 0
    %506 = vmatmul.mubr.bf16.gmra.mrb[0].mxu0 %v293
    %v507 = vpop.f32.mrb[0].mxu0
    %v508 = vadd.f32 0.0, %v507
    %v509 = vpop.f32.mrb[0].mxu0
    %v510 = vpop.f32.mrb[0].mxu0
    %v511 = vadd.f32 0.0, %v510
    %v512 = vpop.f32.mrb[0].mxu0
    %513 = vmatprep.mubr.bf16.mxu0 0
    %514 = vmatmul.mubr.bf16.gmra.mrb[0].mxu0 %v296
    %v515 = vpop.f32.mrb[0].mxu0
    %v516 = vadd.f32 0.0, %v515
    %v517 = vpop.f32.mrb[0].mxu0
    %v518 = vpop.f32.mrb[0].mxu0
    %v519 = vadd.f32 0.0, %v518
    %v520 = vpop.f32.mrb[0].mxu0
    %521 = vmatprep.mubr.bf16.mxu0 0
    %522 = vmatmul.mubr.bf16.gmra.mrb[0].mxu0 %v299
    %v523 = vpop.f32.mrb[0].mxu0
    %v524 = vadd.f32 0.0, %v523
    %v525 = vpop.f32.mrb[0].mxu0
    %v526 = vpop.f32.mrb[0].mxu0
    %v527 = vadd.f32 0.0, %v526
    %v528 = vpop.f32.mrb[0].mxu0
    %529 = vmatprep.mubr.bf16.mxu0 0
    %530 = vmatmul.mubr.bf16.gmra.mrb[0].mxu0 %v302
    %v531 = vpop.f32.mrb[0].mxu0
    %v532 = vadd.f32 0.0, %v531
    %v533 = vpop.f32.mrb[0].mxu0
    %v534 = vpop.f32.mrb[0].mxu0
    %v535 = vadd.f32 0.0, %v534
    %v536 = vpop.f32.mrb[0].mxu0
    %537 = vmatprep.mubr.bf16.mxu0 0
    %538 = vmatmul.mubr.bf16.gmra.mrb[0].mxu0 %v305
    %v539 = vpop.f32.mrb[0].mxu0
    %v540 = vadd.f32 0.0, %v539
    %v541 = vpop.f32.mrb[0].mxu0
    %v542 = vpop.f32.mrb[0].mxu0
    %v543 = vadd.f32 0.0, %v542
    %v544 = vpop.f32.mrb[0].mxu0
    %545 = vmatprep.mubr.bf16.mxu0 0
    %546 = vmatmul.mubr.bf16.gmra.mrb[0].mxu0 %v308
    %v547 = vpop.f32.mrb[0].mxu0
    %v548 = vadd.f32 0.0, %v547
    %v549 = vpop.f32.mrb[0].mxu0
    %v550 = vpop.f32.mrb[0].mxu0
    %v551 = vadd.f32 0.0, %v550
    %v552 = vpop.f32.mrb[0].mxu0
    %553 = vmatprep.mubr.bf16.mxu0 0
    %554 = vmatmul.mubr.bf16.gmra.mrb[0].mxu0 %v311
    %v555 = vpop.f32.mrb[0].mxu0
    %v556 = vadd.f32 0.0, %v555
    %v557 = vpop.f32.mrb[0].mxu0
    %v558 = vpop.f32.mrb[0].mxu0
    %v559 = vadd.f32 0.0, %v558
    %v560 = vpop.f32.mrb[0].mxu0
    %561 = vmatprep.mubr.bf16.mxu0 0
    %562 = vmatmul.mubr.bf16.gmra.mrb[0].mxu0 %v314
    %v563 = vpop.f32.mrb[0].mxu0
    %v564 = vadd.f32 0.0, %v563
    %v565 = vpop.f32.mrb[0].mxu0
    %v566 = vpop.f32.mrb[0].mxu0
    %v567 = vadd.f32 0.0, %v566
    %v568 = vpop.f32.mrb[0].mxu0
    %569 = vmatprep.mubr.bf16.mxu0 0
    %570 = vmatmul.mubr.bf16.gmra.mrb[0].mxu0 %v317
    %v571 = vpop.f32.mrb[0].mxu0
    %v572 = vadd.f32 0.0, %v571
    %v573 = vpop.f32.mrb[0].mxu0
    %v574 = vpop.f32.mrb[0].mxu0
    %v575 = vadd.f32 0.0, %v574
    %v576 = vpop.f32.mrb[0].mxu0
    %577 = vmatprep.mubr.bf16.mxu0 0
    %578 = vmatmul.mubr.bf16.gmra.mrb[0].mxu0 %v320
    %v579 = vpop.f32.mrb[0].mxu0
    %v580 = vadd.f32 0.0, %v579
    %v581 = vpop.f32.mrb[0].mxu0
    %v582 = vpop.f32.mrb[0].mxu0
    %v583 = vadd.f32 0.0, %v582
    %v584 = vpop.f32.mrb[0].mxu0
    %585 = vmatprep.mubr.bf16.mxu0 0
    %586 = vmatmul.mubr.bf16.gmra.mrb[0].mxu0 %v323
    %v587 = vpop.f32.mrb[0].mxu0
    %v588 = vadd.f32 0.0, %v587
    %v589 = vpop.f32.mrb[0].mxu0
    %v590 = vpop.f32.mrb[0].mxu0
    %v591 = vadd.f32 0.0, %v590
    %v592 = vpop.f32.mrb[0].mxu0
    %593 = vmatprep.mubr.bf16.mxu0 0
    %594 = vmatmul.mubr.bf16.gmra.mrb[0].mxu0 %v326
    %v595 = vpop.f32.mrb[0].mxu0
    %v596 = vadd.f32 0.0, %v595
    %v597 = vpop.f32.mrb[0].mxu0
    %v598 = vpop.f32.mrb[0].mxu0
    %v599 = vadd.f32 0.0, %v598
    %v600 = vpop.f32.mrb[0].mxu0
    %601 = vmatprep.mubr.bf16.mxu0 0
    %602 = vmatmul.mubr.bf16.gmra.mrb[0].mxu0 %v329
    %v603 = vpop.f32.mrb[0].mxu0
    %v604 = vadd.f32 0.0, %v603
    %v605 = vpop.f32.mrb[0].mxu0
    %v606 = vpop.f32.mrb[0].mxu0
    %v607 = vadd.f32 0.0, %v606
    %v608 = vpop.f32.mrb[0].mxu0
    %609 = vmatprep.mubr.bf16.mxu0 0
    %610 = vmatmul.mubr.bf16.gmra.mrb[0].mxu0 %v332
    %v611 = vpop.f32.mrb[0].mxu0
    %v612 = vadd.f32 0.0, %v611
    %v613 = vpop.f32.mrb[0].mxu0
    %v614 = vpop.f32.mrb[0].mxu0
    %v615 = vadd.f32 0.0, %v614
    %v616 = vpop.f32.mrb[0].mxu0
    %617 = vmatprep.mubr.bf16.mxu0 0
    %618 = vmatmul.mubr.bf16.gmra.mrb[0].mxu0 %v335
    %v619 = vpop.f32.mrb[0].mxu0
    %v620 = vadd.f32 0.0, %v619
    %v621 = vpop.f32.mrb[0].mxu0
    %v622 = vpop.f32.mrb[0].mxu0
    %v623 = vadd.f32 0.0, %v622
    %v624 = vpop.f32.mrb[0].mxu0
    %625 = vdwg.mxu0
    %v630 = vunpack.c.l.b16 %v124
    %v631 = vunpack.c.l.b16 %v125
    %v632 = vunpack.c.l.b16 %v126
    %v633 = vunpack.c.l.b16 %v127
    %v634 = vpack.c.b16 %v631, %v630
    %v635 = vpack.c.b16 %v633, %v632
    %v639 = vsel %vm240, %v92, 0
    %v642 = vsel %vm240, %v93, 0
    %v645 = vsel %vm240, %v94, 0
    %v648 = vsel %vm240, %v95, 0
    %v651 = vsel %vm240, %v96, 0
    %v654 = vsel %vm240, %v97, 0
    %v657 = vsel %vm240, %v98, 0
    %v660 = vsel %vm240, %v99, 0
    %v663 = vsel %vm240, %v100, 0
    %v666 = vsel %vm240, %v101, 0
    %v669 = vsel %vm240, %v102, 0
    %v672 = vsel %vm240, %v103, 0
    %v675 = vsel %vm240, %v104, 0
    %v678 = vsel %vm240, %v105, 0
    %v681 = vsel %vm240, %v106, 0
    %v684 = vsel %vm240, %v107, 0
    %v687 = vsel %vm240, %v108, 0
    %v690 = vsel %vm240, %v109, 0
    %v693 = vsel %vm240, %v110, 0
    %v696 = vsel %vm240, %v111, 0
    %v699 = vsel %vm240, %v112, 0
    %v702 = vsel %vm240, %v113, 0
    %v705 = vsel %vm240, %v114, 0
    %v708 = vsel %vm240, %v115, 0
    %v711 = vsel %vm240, %v116, 0
    %v714 = vsel %vm240, %v117, 0
    %v717 = vsel %vm240, %v118, 0
    %v720 = vsel %vm240, %v119, 0
    %v723 = vsel %vm240, %v120, 0
    %v726 = vsel %vm240, %v121, 0
    %v729 = vsel %vm240, %v122, 0
    %v732 = vsel %vm240, %v123, 0
    %734 = vmatprep.subr.bf16.mxu0 0
    %735 = vmatpush1.bf16.msra.mxu0 %v634
    %736 = vmatprep.subr.bf16.mxu0 0
    %737 = vmatpush1.bf16.msra.mxu0 %v635
    %738 = vmatprep.subr.bf16.mxu0 0
    %739 = vmatpush1.bf16.msra.mxu0 0
    %740 = vmatprep.subr.bf16.mxu0 0
    %741 = vmatpush1.bf16.msra.mxu0 0
    %742 = vmatprep.subr.bf16.mxu0 0
    %743 = vmatpush1.bf16.msra.mxu0 0
    %744 = vmatprep.subr.bf16.mxu0 0
    %745 = vmatpush1.bf16.msra.mxu0 0
    %746 = vmatprep.subr.bf16.mxu0 0
    %747 = vmatpush1.bf16.msra.mxu0 0
    %748 = vmatprep.subr.bf16.mxu0 0
    %749 = vmatpush1.bf16.msra.mxu0 0
    %750 = vmatprep.subr.bf16.mxu0 0
    %751 = vmatpush1.bf16.msra.mxu0 0
    %752 = vmatprep.subr.bf16.mxu0 0
    %753 = vmatpush1.bf16.msra.mxu0 0
    %754 = vmatprep.subr.bf16.mxu0 0
    %755 = vmatpush1.bf16.msra.mxu0 0
    %756 = vmatprep.subr.bf16.mxu0 0
    %757 = vmatpush1.bf16.msra.mxu0 0
    %758 = vmatprep.subr.bf16.mxu0 0
    %759 = vmatpush1.bf16.msra.mxu0 0
    %760 = vmatprep.subr.bf16.mxu0 0
    %761 = vmatpush1.bf16.msra.mxu0 0
    %762 = vmatprep.subr.bf16.mxu0 0
    %763 = vmatpush1.bf16.msra.mxu0 0
    %764 = vmatprep.subr.bf16.mxu0 0
    %765 = vmatpush1.bf16.msra.mxu0 0
    %766 = vmatprep.mubr.bf16.mxu0 0
    %767 = vmatmul.mubr.bf16.gmra.mrb[0].mxu0 %v639
    %v768 = vpop.f32.mrb[0].mxu0
    %v769 = vadd.f32 %v372, %v768
    %v770 = vpop.f32.mrb[0].mxu0
    %v771 = vpop.f32.mrb[0].mxu0
    %v772 = vadd.f32 %v375, %v771
    %v773 = vpop.f32.mrb[0].mxu0
    %774 = vmatprep.mubr.bf16.mxu0 0
    %775 = vmatmul.mubr.bf16.gmra.mrb[0].mxu0 %v642
    %v776 = vpop.f32.mrb[0].mxu0
    %v777 = vadd.f32 %v380, %v776
    %v778 = vpop.f32.mrb[0].mxu0
    %v779 = vpop.f32.mrb[0].mxu0
    %v780 = vadd.f32 %v383, %v779
    %v781 = vpop.f32.mrb[0].mxu0
    %782 = vmatprep.mubr.bf16.mxu0 0
    %783 = vmatmul.mubr.bf16.gmra.mrb[0].mxu0 %v645
    %v784 = vpop.f32.mrb[0].mxu0
    %v785 = vadd.f32 %v388, %v784
    %v786 = vpop.f32.mrb[0].mxu0
    %v787 = vpop.f32.mrb[0].mxu0
    %v788 = vadd.f32 %v391, %v787
    %v789 = vpop.f32.mrb[0].mxu0
    %790 = vmatprep.mubr.bf16.mxu0 0
    %791 = vmatmul.mubr.bf16.gmra.mrb[0].mxu0 %v648
    %v792 = vpop.f32.mrb[0].mxu0
    %v793 = vadd.f32 %v396, %v792
    %v794 = vpop.f32.mrb[0].mxu0
    %v795 = vpop.f32.mrb[0].mxu0
    %v796 = vadd.f32 %v399, %v795
    %v797 = vpop.f32.mrb[0].mxu0
    %798 = vmatprep.mubr.bf16.mxu0 0
    %799 = vmatmul.mubr.bf16.gmra.mrb[0].mxu0 %v651
    %v800 = vpop.f32.mrb[0].mxu0
    %v801 = vadd.f32 %v404, %v800
    %v802 = vpop.f32.mrb[0].mxu0
    %v803 = vpop.f32.mrb[0].mxu0
    %v804 = vadd.f32 %v407, %v803
    %v805 = vpop.f32.mrb[0].mxu0
    %806 = vmatprep.mubr.bf16.mxu0 0
    %807 = vmatmul.mubr.bf16.gmra.mrb[0].mxu0 %v654
    %v808 = vpop.f32.mrb[0].mxu0
    %v809 = vadd.f32 %v412, %v808
    %v810 = vpop.f32.mrb[0].mxu0
    %v811 = vpop.f32.mrb[0].mxu0
    %v812 = vadd.f32 %v415, %v811
    %v813 = vpop.f32.mrb[0].mxu0
    %814 = vmatprep.mubr.bf16.mxu0 0
    %815 = vmatmul.mubr.bf16.gmra.mrb[0].mxu0 %v657
    %v816 = vpop.f32.mrb[0].mxu0
    %v817 = vadd.f32 %v420, %v816
    %v818 = vpop.f32.mrb[0].mxu0
    %v819 = vpop.f32.mrb[0].mxu0
    %v820 = vadd.f32 %v423, %v819
    %v821 = vpop.f32.mrb[0].mxu0
    %822 = vmatprep.mubr.bf16.mxu0 0
    %823 = vmatmul.mubr.bf16.gmra.mrb[0].mxu0 %v660
    %v824 = vpop.f32.mrb[0].mxu0
    %v825 = vadd.f32 %v428, %v824
    %v826 = vpop.f32.mrb[0].mxu0
    %v827 = vpop.f32.mrb[0].mxu0
    %v828 = vadd.f32 %v431, %v827
    %v829 = vpop.f32.mrb[0].mxu0
    %830 = vmatprep.mubr.bf16.mxu0 0
    %831 = vmatmul.mubr.bf16.gmra.mrb[0].mxu0 %v663
    %v832 = vpop.f32.mrb[0].mxu0
    %v833 = vadd.f32 %v436, %v832
    %v834 = vpop.f32.mrb[0].mxu0
    %v835 = vpop.f32.mrb[0].mxu0
    %v836 = vadd.f32 %v439, %v835
    %v837 = vpop.f32.mrb[0].mxu0
    %838 = vmatprep.mubr.bf16.mxu0 0
    %839 = vmatmul.mubr.bf16.gmra.mrb[0].mxu0 %v666
    %v840 = vpop.f32.mrb[0].mxu0
    %v841 = vadd.f32 %v444, %v840
    %v842 = vpop.f32.mrb[0].mxu0
    %v843 = vpop.f32.mrb[0].mxu0
    %v844 = vadd.f32 %v447, %v843
    %v845 = vpop.f32.mrb[0].mxu0
    %846 = vmatprep.mubr.bf16.mxu0 0
    %847 = vmatmul.mubr.bf16.gmra.mrb[0].mxu0 %v669
    %v848 = vpop.f32.mrb[0].mxu0
    %v849 = vadd.f32 %v452, %v848
    %v850 = vpop.f32.mrb[0].mxu0
    %v851 = vpop.f32.mrb[0].mxu0
    %v852 = vadd.f32 %v455, %v851
    %v853 = vpop.f32.mrb[0].mxu0
    %854 = vmatprep.mubr.bf16.mxu0 0
    %855 = vmatmul.mubr.bf16.gmra.mrb[0].mxu0 %v672
    %v856 = vpop.f32.mrb[0].mxu0
    %v857 = vadd.f32 %v460, %v856
    %v858 = vpop.f32.mrb[0].mxu0
    %v859 = vpop.f32.mrb[0].mxu0
    %v860 = vadd.f32 %v463, %v859
    %v861 = vpop.f32.mrb[0].mxu0
    %862 = vmatprep.mubr.bf16.mxu0 0
    %863 = vmatmul.mubr.bf16.gmra.mrb[0].mxu0 %v675
    %v864 = vpop.f32.mrb[0].mxu0
    %v865 = vadd.f32 %v468, %v864
    %v866 = vpop.f32.mrb[0].mxu0
    %v867 = vpop.f32.mrb[0].mxu0
    %v868 = vadd.f32 %v471, %v867
    %v869 = vpop.f32.mrb[0].mxu0
    %870 = vmatprep.mubr.bf16.mxu0 0
    %871 = vmatmul.mubr.bf16.gmra.mrb[0].mxu0 %v678
    %v872 = vpop.f32.mrb[0].mxu0
    %v873 = vadd.f32 %v476, %v872
    %v874 = vpop.f32.mrb[0].mxu0
    %v875 = vpop.f32.mrb[0].mxu0
    %v876 = vadd.f32 %v479, %v875
    %v877 = vpop.f32.mrb[0].mxu0
    %878 = vmatprep.mubr.bf16.mxu0 0
    %879 = vmatmul.mubr.bf16.gmra.mrb[0].mxu0 %v681
    %v880 = vpop.f32.mrb[0].mxu0
    %v881 = vadd.f32 %v484, %v880
    %v882 = vpop.f32.mrb[0].mxu0
    %v883 = vpop.f32.mrb[0].mxu0
    %v884 = vadd.f32 %v487, %v883
    %v885 = vpop.f32.mrb[0].mxu0
    %886 = vmatprep.mubr.bf16.mxu0 0
    %887 = vmatmul.mubr.bf16.gmra.mrb[0].mxu0 %v684
    %v888 = vpop.f32.mrb[0].mxu0
    %v889 = vadd.f32 %v492, %v888
    %v890 = vpop.f32.mrb[0].mxu0
    %v891 = vpop.f32.mrb[0].mxu0
    %v892 = vadd.f32 %v495, %v891
    %v893 = vpop.f32.mrb[0].mxu0
    %894 = vmatprep.mubr.bf16.mxu0 0
    %895 = vmatmul.mubr.bf16.gmra.mrb[0].mxu0 %v687
    %v896 = vpop.f32.mrb[0].mxu0
    %v897 = vadd.f32 %v500, %v896
    %v898 = vpop.f32.mrb[0].mxu0
    %v899 = vpop.f32.mrb[0].mxu0
    %v900 = vadd.f32 %v503, %v899
    %v901 = vpop.f32.mrb[0].mxu0
    %902 = vmatprep.mubr.bf16.mxu0 0
    %903 = vmatmul.mubr.bf16.gmra.mrb[0].mxu0 %v690
    %v904 = vpop.f32.mrb[0].mxu0
    %v905 = vadd.f32 %v508, %v904
    %v906 = vpop.f32.mrb[0].mxu0
    %v907 = vpop.f32.mrb[0].mxu0
    %v908 = vadd.f32 %v511, %v907
    %v909 = vpop.f32.mrb[0].mxu0
    %910 = vmatprep.mubr.bf16.mxu0 0
    %911 = vmatmul.mubr.bf16.gmra.mrb[0].mxu0 %v693
    %v912 = vpop.f32.mrb[0].mxu0
    %v913 = vadd.f32 %v516, %v912
    %v914 = vpop.f32.mrb[0].mxu0
    %v915 = vpop.f32.mrb[0].mxu0
    %v916 = vadd.f32 %v519, %v915
    %v917 = vpop.f32.mrb[0].mxu0
    %918 = vmatprep.mubr.bf16.mxu0 0
    %919 = vmatmul.mubr.bf16.gmra.mrb[0].mxu0 %v696
    %v920 = vpop.f32.mrb[0].mxu0
    %v921 = vadd.f32 %v524, %v920
    %v922 = vpop.f32.mrb[0].mxu0
    %v923 = vpop.f32.mrb[0].mxu0
    %v924 = vadd.f32 %v527, %v923
    %v925 = vpop.f32.mrb[0].mxu0
    %926 = vmatprep.mubr.bf16.mxu0 0
    %927 = vmatmul.mubr.bf16.gmra.mrb[0].mxu0 %v699
    %v928 = vpop.f32.mrb[0].mxu0
    %v929 = vadd.f32 %v532, %v928
    %v930 = vpop.f32.mrb[0].mxu0
    %v931 = vpop.f32.mrb[0].mxu0
    %v932 = vadd.f32 %v535, %v931
    %v933 = vpop.f32.mrb[0].mxu0
    %934 = vmatprep.mubr.bf16.mxu0 0
    %935 = vmatmul.mubr.bf16.gmra.mrb[0].mxu0 %v702
    %v936 = vpop.f32.mrb[0].mxu0
    %v937 = vadd.f32 %v540, %v936
    %v938 = vpop.f32.mrb[0].mxu0
    %v939 = vpop.f32.mrb[0].mxu0
    %v940 = vadd.f32 %v543, %v939
    %v941 = vpop.f32.mrb[0].mxu0
    %942 = vmatprep.mubr.bf16.mxu0 0
    %943 = vmatmul.mubr.bf16.gmra.mrb[0].mxu0 %v705
    %v944 = vpop.f32.mrb[0].mxu0
    %v945 = vadd.f32 %v548, %v944
    %v946 = vpop.f32.mrb[0].mxu0
    %v947 = vpop.f32.mrb[0].mxu0
    %v948 = vadd.f32 %v551, %v947
    %v949 = vpop.f32.mrb[0].mxu0
    %950 = vmatprep.mubr.bf16.mxu0 0
    %951 = vmatmul.mubr.bf16.gmra.mrb[0].mxu0 %v708
    %v952 = vpop.f32.mrb[0].mxu0
    %v953 = vadd.f32 %v556, %v952
    %v954 = vpop.f32.mrb[0].mxu0
    %v955 = vpop.f32.mrb[0].mxu0
    %v956 = vadd.f32 %v559, %v955
    %v957 = vpop.f32.mrb[0].mxu0
    %958 = vmatprep.mubr.bf16.mxu0 0
    %959 = vmatmul.mubr.bf16.gmra.mrb[0].mxu0 %v711
    %v960 = vpop.f32.mrb[0].mxu0
    %v961 = vadd.f32 %v564, %v960
    %v962 = vpop.f32.mrb[0].mxu0
    %v963 = vpop.f32.mrb[0].mxu0
    %v964 = vadd.f32 %v567, %v963
    %v965 = vpop.f32.mrb[0].mxu0
    %966 = vmatprep.mubr.bf16.mxu0 0
    %967 = vmatmul.mubr.bf16.gmra.mrb[0].mxu0 %v714
    %v968 = vpop.f32.mrb[0].mxu0
    %v969 = vadd.f32 %v572, %v968
    %v970 = vpop.f32.mrb[0].mxu0
    %v971 = vpop.f32.mrb[0].mxu0
    %v972 = vadd.f32 %v575, %v971
    %v973 = vpop.f32.mrb[0].mxu0
    %974 = vmatprep.mubr.bf16.mxu0 0
    %975 = vmatmul.mubr.bf16.gmra.mrb[0].mxu0 %v717
    %v976 = vpop.f32.mrb[0].mxu0
    %v977 = vadd.f32 %v580, %v976
    %v978 = vpop.f32.mrb[0].mxu0
    %v979 = vpop.f32.mrb[0].mxu0
    %v980 = vadd.f32 %v583, %v979
    %v981 = vpop.f32.mrb[0].mxu0
    %982 = vmatprep.mubr.bf16.mxu0 0
    %983 = vmatmul.mubr.bf16.gmra.mrb[0].mxu0 %v720
    %v984 = vpop.f32.mrb[0].mxu0
    %v985 = vadd.f32 %v588, %v984
    %v986 = vpop.f32.mrb[0].mxu0
    %v987 = vpop.f32.mrb[0].mxu0
    %v988 = vadd.f32 %v591, %v987
    %v989 = vpop.f32.mrb[0].mxu0
    %990 = vmatprep.mubr.bf16.mxu0 0
    %991 = vmatmul.mubr.bf16.gmra.mrb[0].mxu0 %v723
    %v992 = vpop.f32.mrb[0].mxu0
    %v993 = vadd.f32 %v596, %v992
    %v994 = vpop.f32.mrb[0].mxu0
    %v995 = vpop.f32.mrb[0].mxu0
    %v996 = vadd.f32 %v599, %v995
    %v997 = vpop.f32.mrb[0].mxu0
    %998 = vmatprep.mubr.bf16.mxu0 0
    %999 = vmatmul.mubr.bf16.gmra.mrb[0].mxu0 %v726
    %v1000 = vpop.f32.mrb[0].mxu0
    %v1001 = vadd.f32 %v604, %v1000
    %v1002 = vpop.f32.mrb[0].mxu0
    %v1003 = vpop.f32.mrb[0].mxu0
    %v1004 = vadd.f32 %v607, %v1003
    %v1005 = vpop.f32.mrb[0].mxu0
    %1006 = vmatprep.mubr.bf16.mxu0 0
    %1007 = vmatmul.mubr.bf16.gmra.mrb[0].mxu0 %v729
    %v1008 = vpop.f32.mrb[0].mxu0
    %v1009 = vadd.f32 %v612, %v1008
    %v1010 = vpop.f32.mrb[0].mxu0
    %v1011 = vpop.f32.mrb[0].mxu0
    %v1012 = vadd.f32 %v615, %v1011
    %v1013 = vpop.f32.mrb[0].mxu0
    %1014 = vmatprep.mubr.bf16.mxu0 0
    %1015 = vmatmul.mubr.bf16.gmra.mrb[0].mxu0 %v732
    %v1016 = vpop.f32.mrb[0].mxu0
    %v1017 = vadd.f32 %v620, %v1016
    %v1018 = vpop.f32.mrb[0].mxu0
    %v1019 = vpop.f32.mrb[0].mxu0
    %v1020 = vadd.f32 %v623, %v1019
    %v1021 = vpop.f32.mrb[0].mxu0
    %1022 = vdwg.mxu0
    %v1023 = vld [vmem:[%s0 + $0x2] sm:$0xff]
    %v1024 = vld [vmem:[%s0 + $0xa] sm:$0xff]
    %v1025 = vld [vmem:[%s0 + $0x1a] sm:$0xff]
    %v1026 = vld [vmem:[%s0 + $0x22] sm:$0xff]
    %v1027 = vld [vmem:[%s0 + $0x32] sm:$0xff]
    %v1028 = vld [vmem:[%s0 + $0x3a] sm:$0xff]
    %v1029 = vld [vmem:[%s0 + $0x4a] sm:$0xff]
    %v1030 = vld [vmem:[%s0 + $0x52] sm:$0xff]
    %v1031 = vld [vmem:[%s0 + $0x62] sm:$0xff]
    %v1032 = vld [vmem:[%s0 + $0x6a] sm:$0xff]
    %v1033 = vld [vmem:[%s0 + $0x7a] sm:$0xff]
    %v1034 = vld [vmem:[%s0 + $0x82] sm:$0xff]
    %v1035 = vld [vmem:[%s0 + $0x92] sm:$0xff]
    %v1036 = vld [vmem:[%s0 + $0x9a] sm:$0xff]
    %v1037 = vld [vmem:[%s0 + $0xaa] sm:$0xff]
    %v1038 = vld [vmem:[%s0 + $0xb2] sm:$0xff]
    %v1039 = vld [vmem:[%s0 + $0xc2] sm:$0xff]
    %v1040 = vld [vmem:[%s0 + $0xca] sm:$0xff]
    %v1041 = vld [vmem:[%s0 + $0xda] sm:$0xff]
    %v1042 = vld [vmem:[%s0 + $0xe2] sm:$0xff]
    %v1043 = vld [vmem:[%s0 + $0xf2] sm:$0xff]
    %v1044 = vld [vmem:[%s0 + $0xfa] sm:$0xff]
    %v1045 = vld [vmem:[%s0 + $0x10a] sm:$0xff]
    %v1046 = vld [vmem:[%s0 + $0x112] sm:$0xff]
    %v1047 = vld [vmem:[%s0 + $0x122] sm:$0xff]
    %v1048 = vld [vmem:[%s0 + $0x12a] sm:$0xff]
    %v1049 = vld [vmem:[%s0 + $0x13a] sm:$0xff]
    %v1050 = vld [vmem:[%s0 + $0x142] sm:$0xff]
    %v1051 = vld [vmem:[%s0 + $0x152] sm:$0xff]
    %v1052 = vld [vmem:[%s0 + $0x15a] sm:$0xff]
    %v1053 = vld [vmem:[%s0 + $0x16a] sm:$0xff]
    %v1054 = vld [vmem:[%s0 + $0x172] sm:$0xff]
    %v1055 = vld [vmem:[%s0 + $0x1b2] sm:$0xff]
    %v1056 = vld [vmem:[%s0 + $0x1ba] sm:$0xff]
    %v1057 = vld [vmem:[%s0 + $0x1ca] sm:$0xff]
    %v1058 = vld [vmem:[%s0 + $0x1d2] sm:$0xff]
    %v1059 = vld [vmem:[%s0 + $0x1e2] sm:$0xff]
    %v1060 = vld [vmem:[%s0 + $0x1ea] sm:$0xff]
    %v1061 = vld [vmem:[%s0 + $0x1fa] sm:$0xff]
    %v1062 = vld [vmem:[%s0 + $0x202] sm:$0xff]
    %v1063 = vld [vmem:[%s0 + $0x212] sm:$0xff]
    %v1064 = vld [vmem:[%s0 + $0x21a] sm:$0xff]
    %v1065 = vld [vmem:[%s0 + $0x22a] sm:$0xff]
    %v1066 = vld [vmem:[%s0 + $0x232] sm:$0xff]
    %v1067 = vld [vmem:[%s0 + $0x242] sm:$0xff]
    %v1068 = vld [vmem:[%s0 + $0x24a] sm:$0xff]
    %v1069 = vld [vmem:[%s0 + $0x25a] sm:$0xff]
    %v1070 = vld [vmem:[%s0 + $0x262] sm:$0xff]
    %v1071 = vld [vmem:[%s0 + $0x272] sm:$0xff]
    %v1072 = vld [vmem:[%s0 + $0x27a] sm:$0xff]
    %v1073 = vld [vmem:[%s0 + $0x28a] sm:$0xff]
    %v1074 = vld [vmem:[%s0 + $0x292] sm:$0xff]
    %v1075 = vld [vmem:[%s0 + $0x2a2] sm:$0xff]
    %v1076 = vld [vmem:[%s0 + $0x2aa] sm:$0xff]
    %v1077 = vld [vmem:[%s0 + $0x2ba] sm:$0xff]
    %v1078 = vld [vmem:[%s0 + $0x2c2] sm:$0xff]
    %v1079 = vld [vmem:[%s0 + $0x2d2] sm:$0xff]
    %v1080 = vld [vmem:[%s0 + $0x2da] sm:$0xff]
    %v1081 = vld [vmem:[%s0 + $0x2ea] sm:$0xff]
    %v1082 = vld [vmem:[%s0 + $0x2f2] sm:$0xff]
    %v1083 = vld [vmem:[%s0 + $0x302] sm:$0xff]
    %v1084 = vld [vmem:[%s0 + $0x30a] sm:$0xff]
    %v1085 = vld [vmem:[%s0 + $0x31a] sm:$0xff]
    %v1086 = vld [vmem:[%s0 + $0x322] sm:$0xff]
    %v1087 = vpack.c.bf16 %v1024, %v1023
    %v1088 = vpack.c.bf16 %v1026, %v1025
    %v1089 = vpack.c.bf16 %v1028, %v1027
    %v1090 = vpack.c.bf16 %v1030, %v1029
    %v1091 = vpack.c.bf16 %v1032, %v1031
    %v1092 = vpack.c.bf16 %v1034, %v1033
    %v1093 = vpack.c.bf16 %v1036, %v1035
    %v1094 = vpack.c.bf16 %v1038, %v1037
    %v1095 = vpack.c.bf16 %v1040, %v1039
    %v1096 = vpack.c.bf16 %v1042, %v1041
    %v1097 = vpack.c.bf16 %v1044, %v1043
    %v1098 = vpack.c.bf16 %v1046, %v1045
    %v1099 = vpack.c.bf16 %v1048, %v1047
    %v1100 = vpack.c.bf16 %v1050, %v1049
    %v1101 = vpack.c.bf16 %v1052, %v1051
    %v1102 = vpack.c.bf16 %v1054, %v1053
    %v1103 = vpack.c.bf16 %v1056, %v1055
    %v1104 = vpack.c.bf16 %v1058, %v1057
    %v1105 = vpack.c.bf16 %v1060, %v1059
    %v1106 = vpack.c.bf16 %v1062, %v1061
    %v1107 = vpack.c.bf16 %v1064, %v1063
    %v1108 = vpack.c.bf16 %v1066, %v1065
    %v1109 = vpack.c.bf16 %v1068, %v1067
    %v1110 = vpack.c.bf16 %v1070, %v1069
    %v1111 = vpack.c.bf16 %v1072, %v1071
    %v1112 = vpack.c.bf16 %v1074, %v1073
    %v1113 = vpack.c.bf16 %v1076, %v1075
    %v1114 = vpack.c.bf16 %v1078, %v1077
    %v1115 = vpack.c.bf16 %v1080, %v1079
    %v1116 = vpack.c.bf16 %v1082, %v1081
    %v1117 = vpack.c.bf16 %v1084, %v1083
    %v1118 = vpack.c.bf16 %v1086, %v1085
    %v1119 = vld [vmem:[%s1 + $0x20] sm:$0xf]
    %v1120 = vld [vmem:[%s1 + $0x24] sm:$0xf]
    %v1121 = vld [vmem:[%s1 + $0x28] sm:$0xf]
    %v1122 = vld [vmem:[%s1 + $0x2c] sm:$0xf]
    %v1127 = vunpack.c.l.b16 %v1119
    %v1128 = vunpack.c.l.b16 %v1120
    %v1129 = vunpack.c.l.b16 %v1121
    %v1130 = vunpack.c.l.b16 %v1122
    %v1131 = vpack.c.b16 %v1128, %v1127
    %v1132 = vpack.c.b16 %v1130, %v1129
    %v1136 = vsel %vm240, %v1087, 0
    %v1139 = vsel %vm240, %v1088, 0
    %v1142 = vsel %vm240, %v1089, 0
    %v1145 = vsel %vm240, %v1090, 0
    %v1148 = vsel %vm240, %v1091, 0
    %v1151 = vsel %vm240, %v1092, 0
    %v1154 = vsel %vm240, %v1093, 0
    %v1157 = vsel %vm240, %v1094, 0
    %v1160 = vsel %vm240, %v1095, 0
    %v1163 = vsel %vm240, %v1096, 0
    %v1166 = vsel %vm240, %v1097, 0
    %v1169 = vsel %vm240, %v1098, 0
    %v1172 = vsel %vm240, %v1099, 0
    %v1175 = vsel %vm240, %v1100, 0
    %v1178 = vsel %vm240, %v1101, 0
    %v1181 = vsel %vm240, %v1102, 0
    %v1184 = vsel %vm240, %v1103, 0
    %v1187 = vsel %vm240, %v1104, 0
    %v1190 = vsel %vm240, %v1105, 0
    %v1193 = vsel %vm240, %v1106, 0
    %v1196 = vsel %vm240, %v1107, 0
    %v1199 = vsel %vm240, %v1108, 0
    %v1202 = vsel %vm240, %v1109, 0
    %v1205 = vsel %vm240, %v1110, 0
    %v1208 = vsel %vm240, %v1111, 0
    %v1211 = vsel %vm240, %v1112, 0
    %v1214 = vsel %vm240, %v1113, 0
    %v1217 = vsel %vm240, %v1114, 0
    %v1220 = vsel %vm240, %v1115, 0
    %v1223 = vsel %vm240, %v1116, 0
    %v1226 = vsel %vm240, %v1117, 0
    %v1229 = vsel %vm240, %v1118, 0
    %1231 = vmatprep.subr.bf16.mxu0 0
    %1232 = vmatpush1.bf16.msra.mxu0 %v1131
    %1233 = vmatprep.subr.bf16.mxu0 0
    %1234 = vmatpush1.bf16.msra.mxu0 %v1132
    %1235 = vmatprep.subr.bf16.mxu0 0
    %1236 = vmatpush1.bf16.msra.mxu0 0
    %1237 = vmatprep.subr.bf16.mxu0 0
    %1238 = vmatpush1.bf16.msra.mxu0 0
    %1239 = vmatprep.subr.bf16.mxu0 0
    %1240 = vmatpush1.bf16.msra.mxu0 0
    %1241 = vmatprep.subr.bf16.mxu0 0
    %1242 = vmatpush1.bf16.msra.mxu0 0
    %1243 = vmatprep.subr.bf16.mxu0 0
    %1244 = vmatpush1.bf16.msra.mxu0 0
    %1245 = vmatprep.subr.bf16.mxu0 0
    %1246 = vmatpush1.bf16.msra.mxu0 0
    %1247 = vmatprep.subr.bf16.mxu0 0
    %1248 = vmatpush1.bf16.msra.mxu0 0
    %1249 = vmatprep.subr.bf16.mxu0 0
    %1250 = vmatpush1.bf16.msra.mxu0 0
    %1251 = vmatprep.subr.bf16.mxu0 0
    %1252 = vmatpush1.bf16.msra.mxu0 0
    %1253 = vmatprep.subr.bf16.mxu0 0
    %1254 = vmatpush1.bf16.msra.mxu0 0
    %1255 = vmatprep.subr.bf16.mxu0 0
    %1256 = vmatpush1.bf16.msra.mxu0 0
    %1257 = vmatprep.subr.bf16.mxu0 0
    %1258 = vmatpush1.bf16.msra.mxu0 0
    %1259 = vmatprep.subr.bf16.mxu0 0
    %1260 = vmatpush1.bf16.msra.mxu0 0
    %1261 = vmatprep.subr.bf16.mxu0 0
    %1262 = vmatpush1.bf16.msra.mxu0 0
    %1263 = vmatprep.mubr.bf16.mxu0 0
    %1264 = vmatmul.mubr.bf16.gmra.mrb[0].mxu0 %v1136
    %v1265 = vpop.f32.mrb[0].mxu0
    %v1266 = vadd.f32 0.0, %v1265
    %v1267 = vpop.f32.mrb[0].mxu0
    %v1268 = vpop.f32.mrb[0].mxu0
    %v1269 = vadd.f32 0.0, %v1268
    %v1270 = vpop.f32.mrb[0].mxu0
    %1271 = vmatprep.mubr.bf16.mxu0 0
    %1272 = vmatmul.mubr.bf16.gmra.mrb[0].mxu0 %v1139
    %v1273 = vpop.f32.mrb[0].mxu0
    %v1274 = vadd.f32 0.0, %v1273
    %v1275 = vpop.f32.mrb[0].mxu0
    %v1276 = vpop.f32.mrb[0].mxu0
    %v1277 = vadd.f32 0.0, %v1276
    %v1278 = vpop.f32.mrb[0].mxu0
    %1279 = vmatprep.mubr.bf16.mxu0 0
    %1280 = vmatmul.mubr.bf16.gmra.mrb[0].mxu0 %v1142
    %v1281 = vpop.f32.mrb[0].mxu0
    %v1282 = vadd.f32 0.0, %v1281
    %v1283 = vpop.f32.mrb[0].mxu0
    %v1284 = vpop.f32.mrb[0].mxu0
    %v1285 = vadd.f32 0.0, %v1284
    %v1286 = vpop.f32.mrb[0].mxu0
    %1287 = vmatprep.mubr.bf16.mxu0 0
    %1288 = vmatmul.mubr.bf16.gmra.mrb[0].mxu0 %v1145
    %v1289 = vpop.f32.mrb[0].mxu0
    %v1290 = vadd.f32 0.0, %v1289
    %v1291 = vpop.f32.mrb[0].mxu0
    %v1292 = vpop.f32.mrb[0].mxu0
    %v1293 = vadd.f32 0.0, %v1292
    %v1294 = vpop.f32.mrb[0].mxu0
    %1295 = vmatprep.mubr.bf16.mxu0 0
    %1296 = vmatmul.mubr.bf16.gmra.mrb[0].mxu0 %v1148
    %v1297 = vpop.f32.mrb[0].mxu0
    %v1298 = vadd.f32 0.0, %v1297
    %v1299 = vpop.f32.mrb[0].mxu0
    %v1300 = vpop.f32.mrb[0].mxu0
    %v1301 = vadd.f32 0.0, %v1300
    %v1302 = vpop.f32.mrb[0].mxu0
    %1303 = vmatprep.mubr.bf16.mxu0 0
    %1304 = vmatmul.mubr.bf16.gmra.mrb[0].mxu0 %v1151
    %v1305 = vpop.f32.mrb[0].mxu0
    %v1306 = vadd.f32 0.0, %v1305
    %v1307 = vpop.f32.mrb[0].mxu0
    %v1308 = vpop.f32.mrb[0].mxu0
    %v1309 = vadd.f32 0.0, %v1308
    %v1310 = vpop.f32.mrb[0].mxu0
    %1311 = vmatprep.mubr.bf16.mxu0 0
    %1312 = vmatmul.mubr.bf16.gmra.mrb[0].mxu0 %v1154
    %v1313 = vpop.f32.mrb[0].mxu0
    %v1314 = vadd.f32 0.0, %v1313
    %v1315 = vpop.f32.mrb[0].mxu0
    %v1316 = vpop.f32.mrb[0].mxu0
    %v1317 = vadd.f32 0.0, %v1316
    %v1318 = vpop.f32.mrb[0].mxu0
    %1319 = vmatprep.mubr.bf16.mxu0 0
    %1320 = vmatmul.mubr.bf16.gmra.mrb[0].mxu0 %v1157
    %v1321 = vpop.f32.mrb[0].mxu0
    %v1322 = vadd.f32 0.0, %v1321
    %v1323 = vpop.f32.mrb[0].mxu0
    %v1324 = vpop.f32.mrb[0].mxu0
    %v1325 = vadd.f32 0.0, %v1324
    %v1326 = vpop.f32.mrb[0].mxu0
    %1327 = vmatprep.mubr.bf16.mxu0 0
    %1328 = vmatmul.mubr.bf16.gmra.mrb[0].mxu0 %v1160
    %v1329 = vpop.f32.mrb[0].mxu0
    %v1330 = vadd.f32 0.0, %v1329
    %v1331 = vpop.f32.mrb[0].mxu0
    %v1332 = vpop.f32.mrb[0].mxu0
    %v1333 = vadd.f32 0.0, %v1332
    %v1334 = vpop.f32.mrb[0].mxu0
    %1335 = vmatprep.mubr.bf16.mxu0 0
    %1336 = vmatmul.mubr.bf16.gmra.mrb[0].mxu0 %v1163
    %v1337 = vpop.f32.mrb[0].mxu0
    %v1338 = vadd.f32 0.0, %v1337
    %v1339 = vpop.f32.mrb[0].mxu0
    %v1340 = vpop.f32.mrb[0].mxu0
    %v1341 = vadd.f32 0.0, %v1340
    %v1342 = vpop.f32.mrb[0].mxu0
    %1343 = vmatprep.mubr.bf16.mxu0 0
    %1344 = vmatmul.mubr.bf16.gmra.mrb[0].mxu0 %v1166
    %v1345 = vpop.f32.mrb[0].mxu0
    %v1346 = vadd.f32 0.0, %v1345
    %v1347 = vpop.f32.mrb[0].mxu0
    %v1348 = vpop.f32.mrb[0].mxu0
    %v1349 = vadd.f32 0.0, %v1348
    %v1350 = vpop.f32.mrb[0].mxu0
    %1351 = vmatprep.mubr.bf16.mxu0 0
    %1352 = vmatmul.mubr.bf16.gmra.mrb[0].mxu0 %v1169
    %v1353 = vpop.f32.mrb[0].mxu0
    %v1354 = vadd.f32 0.0, %v1353
    %v1355 = vpop.f32.mrb[0].mxu0
    %v1356 = vpop.f32.mrb[0].mxu0
    %v1357 = vadd.f32 0.0, %v1356
    %v1358 = vpop.f32.mrb[0].mxu0
    %1359 = vmatprep.mubr.bf16.mxu0 0
    %1360 = vmatmul.mubr.bf16.gmra.mrb[0].mxu0 %v1172
    %v1361 = vpop.f32.mrb[0].mxu0
    %v1362 = vadd.f32 0.0, %v1361
    %v1363 = vpop.f32.mrb[0].mxu0
    %v1364 = vpop.f32.mrb[0].mxu0
    %v1365 = vadd.f32 0.0, %v1364
    %v1366 = vpop.f32.mrb[0].mxu0
    %1367 = vmatprep.mubr.bf16.mxu0 0
    %1368 = vmatmul.mubr.bf16.gmra.mrb[0].mxu0 %v1175
    %v1369 = vpop.f32.mrb[0].mxu0
    %v1370 = vadd.f32 0.0, %v1369
    %v1371 = vpop.f32.mrb[0].mxu0
    %v1372 = vpop.f32.mrb[0].mxu0
    %v1373 = vadd.f32 0.0, %v1372
    %v1374 = vpop.f32.mrb[0].mxu0
    %1375 = vmatprep.mubr.bf16.mxu0 0
    %1376 = vmatmul.mubr.bf16.gmra.mrb[0].mxu0 %v1178
    %v1377 = vpop.f32.mrb[0].mxu0
    %v1378 = vadd.f32 0.0, %v1377
    %v1379 = vpop.f32.mrb[0].mxu0
    %v1380 = vpop.f32.mrb[0].mxu0
    %v1381 = vadd.f32 0.0, %v1380
    %v1382 = vpop.f32.mrb[0].mxu0
    %1383 = vmatprep.mubr.bf16.mxu0 0
    %1384 = vmatmul.mubr.bf16.gmra.mrb[0].mxu0 %v1181
    %v1385 = vpop.f32.mrb[0].mxu0
    %v1386 = vadd.f32 0.0, %v1385
    %v1387 = vpop.f32.mrb[0].mxu0
    %v1388 = vpop.f32.mrb[0].mxu0
    %v1389 = vadd.f32 0.0, %v1388
    %v1390 = vpop.f32.mrb[0].mxu0
    %1391 = vmatprep.mubr.bf16.mxu0 0
    %1392 = vmatmul.mubr.bf16.gmra.mrb[0].mxu0 %v1184
    %v1393 = vpop.f32.mrb[0].mxu0
    %v1394 = vadd.f32 0.0, %v1393
    %v1395 = vpop.f32.mrb[0].mxu0
    %v1396 = vpop.f32.mrb[0].mxu0
    %v1397 = vadd.f32 0.0, %v1396
    %v1398 = vpop.f32.mrb[0].mxu0
    %1399 = vmatprep.mubr.bf16.mxu0 0
    %1400 = vmatmul.mubr.bf16.gmra.mrb[0].mxu0 %v1187
    %v1401 = vpop.f32.mrb[0].mxu0
    %v1402 = vadd.f32 0.0, %v1401
    %v1403 = vpop.f32.mrb[0].mxu0
    %v1404 = vpop.f32.mrb[0].mxu0
    %v1405 = vadd.f32 0.0, %v1404
    %v1406 = vpop.f32.mrb[0].mxu0
    %1407 = vmatprep.mubr.bf16.mxu0 0
    %1408 = vmatmul.mubr.bf16.gmra.mrb[0].mxu0 %v1190
    %v1409 = vpop.f32.mrb[0].mxu0
    %v1410 = vadd.f32 0.0, %v1409
    %v1411 = vpop.f32.mrb[0].mxu0
    %v1412 = vpop.f32.mrb[0].mxu0
    %v1413 = vadd.f32 0.0, %v1412
    %v1414 = vpop.f32.mrb[0].mxu0
    %1415 = vmatprep.mubr.bf16.mxu0 0
    %1416 = vmatmul.mubr.bf16.gmra.mrb[0].mxu0 %v1193
    %v1417 = vpop.f32.mrb[0].mxu0
    %v1418 = vadd.f32 0.0, %v1417
    %v1419 = vpop.f32.mrb[0].mxu0
    %v1420 = vpop.f32.mrb[0].mxu0
    %v1421 = vadd.f32 0.0, %v1420
    %v1422 = vpop.f32.mrb[0].mxu0
    %1423 = vmatprep.mubr.bf16.mxu0 0
    %1424 = vmatmul.mubr.bf16.gmra.mrb[0].mxu0 %v1196
    %v1425 = vpop.f32.mrb[0].mxu0
    %v1426 = vadd.f32 0.0, %v1425
    %v1427 = vpop.f32.mrb[0].mxu0
    %v1428 = vpop.f32.mrb[0].mxu0
    %v1429 = vadd.f32 0.0, %v1428
    %v1430 = vpop.f32.mrb[0].mxu0
    %1431 = vmatprep.mubr.bf16.mxu0 0
    %1432 = vmatmul.mubr.bf16.gmra.mrb[0].mxu0 %v1199
    %v1433 = vpop.f32.mrb[0].mxu0
    %v1434 = vadd.f32 0.0, %v1433
    %v1435 = vpop.f32.mrb[0].mxu0
    %v1436 = vpop.f32.mrb[0].mxu0
    %v1437 = vadd.f32 0.0, %v1436
    %v1438 = vpop.f32.mrb[0].mxu0
    %1439 = vmatprep.mubr.bf16.mxu0 0
    %1440 = vmatmul.mubr.bf16.gmra.mrb[0].mxu0 %v1202
    %v1441 = vpop.f32.mrb[0].mxu0
    %v1442 = vadd.f32 0.0, %v1441
    %v1443 = vpop.f32.mrb[0].mxu0
    %v1444 = vpop.f32.mrb[0].mxu0
    %v1445 = vadd.f32 0.0, %v1444
    %v1446 = vpop.f32.mrb[0].mxu0
    %1447 = vmatprep.mubr.bf16.mxu0 0
    %1448 = vmatmul.mubr.bf16.gmra.mrb[0].mxu0 %v1205
    %v1449 = vpop.f32.mrb[0].mxu0
    %v1450 = vadd.f32 0.0, %v1449
    %v1451 = vpop.f32.mrb[0].mxu0
    %v1452 = vpop.f32.mrb[0].mxu0
    %v1453 = vadd.f32 0.0, %v1452
    %v1454 = vpop.f32.mrb[0].mxu0
    %1455 = vmatprep.mubr.bf16.mxu0 0
    %1456 = vmatmul.mubr.bf16.gmra.mrb[0].mxu0 %v1208
    %v1457 = vpop.f32.mrb[0].mxu0
    %v1458 = vadd.f32 0.0, %v1457
    %v1459 = vpop.f32.mrb[0].mxu0
    %v1460 = vpop.f32.mrb[0].mxu0
    %v1461 = vadd.f32 0.0, %v1460
    %v1462 = vpop.f32.mrb[0].mxu0
    %1463 = vmatprep.mubr.bf16.mxu0 0
    %1464 = vmatmul.mubr.bf16.gmra.mrb[0].mxu0 %v1211
    %v1465 = vpop.f32.mrb[0].mxu0
    %v1466 = vadd.f32 0.0, %v1465
    %v1467 = vpop.f32.mrb[0].mxu0
    %v1468 = vpop.f32.mrb[0].mxu0
    %v1469 = vadd.f32 0.0, %v1468
    %v1470 = vpop.f32.mrb[0].mxu0
    %1471 = vmatprep.mubr.bf16.mxu0 0
    %1472 = vmatmul.mubr.bf16.gmra.mrb[0].mxu0 %v1214
    %v1473 = vpop.f32.mrb[0].mxu0
    %v1474 = vadd.f32 0.0, %v1473
    %v1475 = vpop.f32.mrb[0].mxu0
    %v1476 = vpop.f32.mrb[0].mxu0
    %v1477 = vadd.f32 0.0, %v1476
    %v1478 = vpop.f32.mrb[0].mxu0
    %1479 = vmatprep.mubr.bf16.mxu0 0
    %1480 = vmatmul.mubr.bf16.gmra.mrb[0].mxu0 %v1217
    %v1481 = vpop.f32.mrb[0].mxu0
    %v1482 = vadd.f32 0.0, %v1481
    %v1483 = vpop.f32.mrb[0].mxu0
    %v1484 = vpop.f32.mrb[0].mxu0
    %v1485 = vadd.f32 0.0, %v1484
    %v1486 = vpop.f32.mrb[0].mxu0
    %1487 = vmatprep.mubr.bf16.mxu0 0
    %1488 = vmatmul.mubr.bf16.gmra.mrb[0].mxu0 %v1220
    %v1489 = vpop.f32.mrb[0].mxu0
    %v1490 = vadd.f32 0.0, %v1489
    %v1491 = vpop.f32.mrb[0].mxu0
    %v1492 = vpop.f32.mrb[0].mxu0
    %v1493 = vadd.f32 0.0, %v1492
    %v1494 = vpop.f32.mrb[0].mxu0
    %1495 = vmatprep.mubr.bf16.mxu0 0
    %1496 = vmatmul.mubr.bf16.gmra.mrb[0].mxu0 %v1223
    %v1497 = vpop.f32.mrb[0].mxu0
    %v1498 = vadd.f32 0.0, %v1497
    %v1499 = vpop.f32.mrb[0].mxu0
    %v1500 = vpop.f32.mrb[0].mxu0
    %v1501 = vadd.f32 0.0, %v1500
    %v1502 = vpop.f32.mrb[0].mxu0
    %1503 = vmatprep.mubr.bf16.mxu0 0
    %1504 = vmatmul.mubr.bf16.gmra.mrb[0].mxu0 %v1226
    %v1505 = vpop.f32.mrb[0].mxu0
    %v1506 = vadd.f32 0.0, %v1505
    %v1507 = vpop.f32.mrb[0].mxu0
    %v1508 = vpop.f32.mrb[0].mxu0
    %v1509 = vadd.f32 0.0, %v1508
    %v1510 = vpop.f32.mrb[0].mxu0
    %1511 = vmatprep.mubr.bf16.mxu0 0
    %1512 = vmatmul.mubr.bf16.gmra.mrb[0].mxu0 %v1229
    %v1513 = vpop.f32.mrb[0].mxu0
    %v1514 = vadd.f32 0.0, %v1513
    %v1515 = vpop.f32.mrb[0].mxu0
    %v1516 = vpop.f32.mrb[0].mxu0
    %v1517 = vadd.f32 0.0, %v1516
    %v1518 = vpop.f32.mrb[0].mxu0
    %1519 = vdwg.mxu0
    %v1520 = vadd.f32 %v769, %v1266
    %v1521 = vadd.f32 %v772, %v1269
    %v1522 = vadd.f32 %v777, %v1274
    %v1523 = vadd.f32 %v780, %v1277
    %v1524 = vadd.f32 %v785, %v1282
    %v1525 = vadd.f32 %v788, %v1285
    %v1526 = vadd.f32 %v793, %v1290
    %v1527 = vadd.f32 %v796, %v1293
    %v1528 = vadd.f32 %v801, %v1298
    %v1529 = vadd.f32 %v804, %v1301
    %v1530 = vadd.f32 %v809, %v1306
    %v1531 = vadd.f32 %v812, %v1309
    %v1532 = vadd.f32 %v817, %v1314
    %v1533 = vadd.f32 %v820, %v1317
    %v1534 = vadd.f32 %v825, %v1322
    %v1535 = vadd.f32 %v828, %v1325
    %v1536 = vadd.f32 %v833, %v1330
    %v1537 = vadd.f32 %v836, %v1333
    %v1538 = vadd.f32 %v841, %v1338
    %v1539 = vadd.f32 %v844, %v1341
    %v1540 = vadd.f32 %v849, %v1346
    %v1541 = vadd.f32 %v852, %v1349
    %v1542 = vadd.f32 %v857, %v1354
    %v1543 = vadd.f32 %v860, %v1357
    %v1544 = vadd.f32 %v865, %v1362
    %v1545 = vadd.f32 %v868, %v1365
    %v1546 = vadd.f32 %v873, %v1370
    %v1547 = vadd.f32 %v876, %v1373
    %v1548 = vadd.f32 %v881, %v1378
    %v1549 = vadd.f32 %v884, %v1381
    %v1550 = vadd.f32 %v889, %v1386
    %v1551 = vadd.f32 %v892, %v1389
    %v1552 = vadd.f32 %v897, %v1394
    %v1553 = vadd.f32 %v900, %v1397
    %v1554 = vadd.f32 %v905, %v1402
    %v1555 = vadd.f32 %v908, %v1405
    %v1556 = vadd.f32 %v913, %v1410
    %v1557 = vadd.f32 %v916, %v1413
    %v1558 = vadd.f32 %v921, %v1418
    %v1559 = vadd.f32 %v924, %v1421
    %v1560 = vadd.f32 %v929, %v1426
    %v1561 = vadd.f32 %v932, %v1429
    %v1562 = vadd.f32 %v937, %v1434
    %v1563 = vadd.f32 %v940, %v1437
    %v1564 = vadd.f32 %v945, %v1442
    %v1565 = vadd.f32 %v948, %v1445
    %v1566 = vadd.f32 %v953, %v1450
    %v1567 = vadd.f32 %v956, %v1453
    %v1568 = vadd.f32 %v961, %v1458
    %v1569 = vadd.f32 %v964, %v1461
    %v1570 = vadd.f32 %v969, %v1466
    %v1571 = vadd.f32 %v972, %v1469
    %v1572 = vadd.f32 %v977, %v1474
    %v1573 = vadd.f32 %v980, %v1477
    %v1574 = vadd.f32 %v985, %v1482
    %v1575 = vadd.f32 %v988, %v1485
    %v1576 = vadd.f32 %v993, %v1490
    %v1577 = vadd.f32 %v996, %v1493
    %v1578 = vadd.f32 %v1001, %v1498
    %v1579 = vadd.f32 %v1004, %v1501
    %v1580 = vadd.f32 %v1009, %v1506
    %v1581 = vadd.f32 %v1012, %v1509
    %v1582 = vadd.f32 %v1017, %v1514
    %v1583 = vadd.f32 %v1020, %v1517
    %s1584 = scalar_lea.vmem %s0, 24
    %v1585 = vld [vmem:[%s1584] sm:$0xff]
    %v1586 = vld [vmem:[%s1584 + $0x8] sm:$0xff]
    %v1587 = vld [vmem:[%s1584 + $0x18] sm:$0xff]
    %v1588 = vld [vmem:[%s1584 + $0x20] sm:$0xff]
    %v1589 = vld [vmem:[%s1584 + $0x30] sm:$0xff]
    %v1590 = vld [vmem:[%s1584 + $0x38] sm:$0xff]
    %v1591 = vld [vmem:[%s1584 + $0x48] sm:$0xff]
    %v1592 = vld [vmem:[%s1584 + $0x50] sm:$0xff]
    %v1593 = vld [vmem:[%s1584 + $0x60] sm:$0xff]
    %v1594 = vld [vmem:[%s1584 + $0x68] sm:$0xff]
    %v1595 = vld [vmem:[%s1584 + $0x78] sm:$0xff]
    %v1596 = vld [vmem:[%s1584 + $0x80] sm:$0xff]
    %v1597 = vld [vmem:[%s1584 + $0x90] sm:$0xff]
    %v1598 = vld [vmem:[%s1584 + $0x98] sm:$0xff]
    %v1599 = vld [vmem:[%s1584 + $0xa8] sm:$0xff]
    %v1600 = vld [vmem:[%s1584 + $0xb0] sm:$0xff]
    %v1601 = vld [vmem:[%s1584 + $0xc0] sm:$0xff]
    %v1602 = vld [vmem:[%s1584 + $0xc8] sm:$0xff]
    %v1603 = vld [vmem:[%s1584 + $0xd8] sm:$0xff]
    %v1604 = vld [vmem:[%s1584 + $0xe0] sm:$0xff]
    %v1605 = vld [vmem:[%s1584 + $0xf0] sm:$0xff]
    %v1606 = vld [vmem:[%s1584 + $0xf8] sm:$0xff]
    %v1607 = vld [vmem:[%s1584 + $0x108] sm:$0xff]
    %v1608 = vld [vmem:[%s1584 + $0x110] sm:$0xff]
    %v1609 = vld [vmem:[%s1584 + $0x120] sm:$0xff]
    %v1610 = vld [vmem:[%s1584 + $0x128] sm:$0xff]
    %v1611 = vld [vmem:[%s1584 + $0x138] sm:$0xff]
    %v1612 = vld [vmem:[%s1584 + $0x140] sm:$0xff]
    %v1613 = vld [vmem:[%s1584 + $0x150] sm:$0xff]
    %v1614 = vld [vmem:[%s1584 + $0x158] sm:$0xff]
    %v1615 = vld [vmem:[%s1584 + $0x168] sm:$0xff]
    %v1616 = vld [vmem:[%s1584 + $0x170] sm:$0xff]
    %v1617 = vld [vmem:[%s1584 + $0x1b0] sm:$0xff]
    %v1618 = vld [vmem:[%s1584 + $0x1b8] sm:$0xff]
    %v1619 = vld [vmem:[%s1584 + $0x1c8] sm:$0xff]
    %v1620 = vld [vmem:[%s1584 + $0x1d0] sm:$0xff]
    %v1621 = vld [vmem:[%s1584 + $0x1e0] sm:$0xff]
    %v1622 = vld [vmem:[%s1584 + $0x1e8] sm:$0xff]
    %v1623 = vld [vmem:[%s1584 + $0x1f8] sm:$0xff]
    %v1624 = vld [vmem:[%s1584 + $0x200] sm:$0xff]
    %v1625 = vld [vmem:[%s1584 + $0x210] sm:$0xff]
    %v1626 = vld [vmem:[%s1584 + $0x218] sm:$0xff]
    %v1627 = vld [vmem:[%s1584 + $0x228] sm:$0xff]
    %v1628 = vld [vmem:[%s1584 + $0x230] sm:$0xff]
    %v1629 = vld [vmem:[%s1584 + $0x240] sm:$0xff]
    %v1630 = vld [vmem:[%s1584 + $0x248] sm:$0xff]
    %v1631 = vld [vmem:[%s1584 + $0x258] sm:$0xff]
    %v1632 = vld [vmem:[%s1584 + $0x260] sm:$0xff]
    %v1633 = vld [vmem:[%s1584 + $0x270] sm:$0xff]
    %v1634 = vld [vmem:[%s1584 + $0x278] sm:$0xff]
    %v1635 = vld [vmem:[%s1584 + $0x288] sm:$0xff]
    %v1636 = vld [vmem:[%s1584 + $0x290] sm:$0xff]
    %v1637 = vld [vmem:[%s1584 + $0x2a0] sm:$0xff]
    %v1638 = vld [vmem:[%s1584 + $0x2a8] sm:$0xff]
    %v1639 = vld [vmem:[%s1584 + $0x2b8] sm:$0xff]
    %v1640 = vld [vmem:[%s1584 + $0x2c0] sm:$0xff]
    %v1641 = vld [vmem:[%s1584 + $0x2d0] sm:$0xff]
    %v1642 = vld [vmem:[%s1584 + $0x2d8] sm:$0xff]
    %v1643 = vld [vmem:[%s1584 + $0x2e8] sm:$0xff]
    %v1644 = vld [vmem:[%s1584 + $0x2f0] sm:$0xff]
    %v1645 = vld [vmem:[%s1584 + $0x300] sm:$0xff]
    %v1646 = vld [vmem:[%s1584 + $0x308] sm:$0xff]
    %v1647 = vld [vmem:[%s1584 + $0x318] sm:$0xff]
    %v1648 = vld [vmem:[%s1584 + $0x320] sm:$0xff]
    %v1649 = vpack.c.bf16 %v1586, %v1585
    %v1650 = vpack.c.bf16 %v1588, %v1587
    %v1651 = vpack.c.bf16 %v1590, %v1589
    %v1652 = vpack.c.bf16 %v1592, %v1591
    %v1653 = vpack.c.bf16 %v1594, %v1593
    %v1654 = vpack.c.bf16 %v1596, %v1595
    %v1655 = vpack.c.bf16 %v1598, %v1597
    %v1656 = vpack.c.bf16 %v1600, %v1599
    %v1657 = vpack.c.bf16 %v1602, %v1601
    %v1658 = vpack.c.bf16 %v1604, %v1603
    %v1659 = vpack.c.bf16 %v1606, %v1605
    %v1660 = vpack.c.bf16 %v1608, %v1607
    %v1661 = vpack.c.bf16 %v1610, %v1609
    %v1662 = vpack.c.bf16 %v1612, %v1611
    %v1663 = vpack.c.bf16 %v1614, %v1613
    %v1664 = vpack.c.bf16 %v1616, %v1615
    %v1665 = vpack.c.bf16 %v1618, %v1617
    %v1666 = vpack.c.bf16 %v1620, %v1619
    %v1667 = vpack.c.bf16 %v1622, %v1621
    %v1668 = vpack.c.bf16 %v1624, %v1623
    %v1669 = vpack.c.bf16 %v1626, %v1625
    %v1670 = vpack.c.bf16 %v1628, %v1627
    %v1671 = vpack.c.bf16 %v1630, %v1629
    %v1672 = vpack.c.bf16 %v1632, %v1631
    %v1673 = vpack.c.bf16 %v1634, %v1633
    %v1674 = vpack.c.bf16 %v1636, %v1635
    %v1675 = vpack.c.bf16 %v1638, %v1637
    %v1676 = vpack.c.bf16 %v1640, %v1639
    %v1677 = vpack.c.bf16 %v1642, %v1641
    %v1678 = vpack.c.bf16 %v1644, %v1643
    %v1679 = vpack.c.bf16 %v1646, %v1645
    %v1680 = vpack.c.bf16 %v1648, %v1647
    %v1681 = vld [vmem:[%s1 + $0x30] sm:$0xf]
    %v1682 = vld [vmem:[%s1 + $0x34] sm:$0xf]
    %v1683 = vld [vmem:[%s1 + $0x38] sm:$0xf]
    %v1684 = vld [vmem:[%s1 + $0x3c] sm:$0xf]
    %v1689 = vunpack.c.l.b16 %v1681
    %v1690 = vunpack.c.l.b16 %v1682
    %v1691 = vunpack.c.l.b16 %v1683
    %v1692 = vunpack.c.l.b16 %v1684
    %v1693 = vpack.c.b16 %v1690, %v1689
    %v1694 = vpack.c.b16 %v1692, %v1691
    %v1698 = vsel %vm240, %v1649, 0
    %v1701 = vsel %vm240, %v1650, 0
    %v1704 = vsel %vm240, %v1651, 0
    %v1707 = vsel %vm240, %v1652, 0
    %v1710 = vsel %vm240, %v1653, 0
    %v1713 = vsel %vm240, %v1654, 0
    %v1716 = vsel %vm240, %v1655, 0
    %v1719 = vsel %vm240, %v1656, 0
    %v1722 = vsel %vm240, %v1657, 0
    %v1725 = vsel %vm240, %v1658, 0
    %v1728 = vsel %vm240, %v1659, 0
    %v1731 = vsel %vm240, %v1660, 0
    %v1734 = vsel %vm240, %v1661, 0
    %v1737 = vsel %vm240, %v1662, 0
    %v1740 = vsel %vm240, %v1663, 0
    %v1743 = vsel %vm240, %v1664, 0
    %v1746 = vsel %vm240, %v1665, 0
    %v1749 = vsel %vm240, %v1666, 0
    %v1752 = vsel %vm240, %v1667, 0
    %v1755 = vsel %vm240, %v1668, 0
    %v1758 = vsel %vm240, %v1669, 0
    %v1761 = vsel %vm240, %v1670, 0
    %v1764 = vsel %vm240, %v1671, 0
    %v1767 = vsel %vm240, %v1672, 0
    %v1770 = vsel %vm240, %v1673, 0
    %v1773 = vsel %vm240, %v1674, 0
    %v1776 = vsel %vm240, %v1675, 0
    %v1779 = vsel %vm240, %v1676, 0
    %v1782 = vsel %vm240, %v1677, 0
    %v1785 = vsel %vm240, %v1678, 0
    %v1788 = vsel %vm240, %v1679, 0
    %v1791 = vsel %vm240, %v1680, 0
    %1793 = vmatprep.subr.bf16.mxu0 0
    %1794 = vmatpush1.bf16.msra.mxu0 %v1693
    %1795 = vmatprep.subr.bf16.mxu0 0
    %1796 = vmatpush1.bf16.msra.mxu0 %v1694
    %1797 = vmatprep.subr.bf16.mxu0 0
    %1798 = vmatpush1.bf16.msra.mxu0 0
    %1799 = vmatprep.subr.bf16.mxu0 0
    %1800 = vmatpush1.bf16.msra.mxu0 0
    %1801 = vmatprep.subr.bf16.mxu0 0
    %1802 = vmatpush1.bf16.msra.mxu0 0
    %1803 = vmatprep.subr.bf16.mxu0 0
    %1804 = vmatpush1.bf16.msra.mxu0 0
    %1805 = vmatprep.subr.bf16.mxu0 0
    %1806 = vmatpush1.bf16.msra.mxu0 0
    %1807 = vmatprep.subr.bf16.mxu0 0
    %1808 = vmatpush1.bf16.msra.mxu0 0
    %1809 = vmatprep.subr.bf16.mxu0 0
    %1810 = vmatpush1.bf16.msra.mxu0 0
    %1811 = vmatprep.subr.bf16.mxu0 0
    %1812 = vmatpush1.bf16.msra.mxu0 0
    %1813 = vmatprep.subr.bf16.mxu0 0
    %1814 = vmatpush1.bf16.msra.mxu0 0
    %1815 = vmatprep.subr.bf16.mxu0 0
    %1816 = vmatpush1.bf16.msra.mxu0 0
    %1817 = vmatprep.subr.bf16.mxu0 0
    %1818 = vmatpush1.bf16.msra.mxu0 0
    %1819 = vmatprep.subr.bf16.mxu0 0
    %1820 = vmatpush1.bf16.msra.mxu0 0
    %1821 = vmatprep.subr.bf16.mxu0 0
    %1822 = vmatpush1.bf16.msra.mxu0 0
    %1823 = vmatprep.subr.bf16.mxu0 0
    %1824 = vmatpush1.bf16.msra.mxu0 0
    %1825 = vmatprep.mubr.bf16.mxu0 0
    %1826 = vmatmul.mubr.bf16.gmra.mrb[0].mxu0 %v1698
    %v1827 = vpop.f32.mrb[0].mxu0
    %v1828 = vadd.f32 0.0, %v1827
    %v1829 = vpop.f32.mrb[0].mxu0
    %v1830 = vpop.f32.mrb[0].mxu0
    %v1831 = vadd.f32 0.0, %v1830
    %v1832 = vpop.f32.mrb[0].mxu0
    %1833 = vmatprep.mubr.bf16.mxu0 0
    %1834 = vmatmul.mubr.bf16.gmra.mrb[0].mxu0 %v1701
    %v1835 = vpop.f32.mrb[0].mxu0
    %v1836 = vadd.f32 0.0, %v1835
    %v1837 = vpop.f32.mrb[0].mxu0
    %v1838 = vpop.f32.mrb[0].mxu0
    %v1839 = vadd.f32 0.0, %v1838
    %v1840 = vpop.f32.mrb[0].mxu0
    %1841 = vmatprep.mubr.bf16.mxu0 0
    %1842 = vmatmul.mubr.bf16.gmra.mrb[0].mxu0 %v1704
    %v1843 = vpop.f32.mrb[0].mxu0
    %v1844 = vadd.f32 0.0, %v1843
    %v1845 = vpop.f32.mrb[0].mxu0
    %v1846 = vpop.f32.mrb[0].mxu0
    %v1847 = vadd.f32 0.0, %v1846
    %v1848 = vpop.f32.mrb[0].mxu0
    %1849 = vmatprep.mubr.bf16.mxu0 0
    %1850 = vmatmul.mubr.bf16.gmra.mrb[0].mxu0 %v1707
    %v1851 = vpop.f32.mrb[0].mxu0
    %v1852 = vadd.f32 0.0, %v1851
    %v1853 = vpop.f32.mrb[0].mxu0
    %v1854 = vpop.f32.mrb[0].mxu0
    %v1855 = vadd.f32 0.0, %v1854
    %v1856 = vpop.f32.mrb[0].mxu0
    %1857 = vmatprep.mubr.bf16.mxu0 0
    %1858 = vmatmul.mubr.bf16.gmra.mrb[0].mxu0 %v1710
    %v1859 = vpop.f32.mrb[0].mxu0
    %v1860 = vadd.f32 0.0, %v1859
    %v1861 = vpop.f32.mrb[0].mxu0
    %v1862 = vpop.f32.mrb[0].mxu0
    %v1863 = vadd.f32 0.0, %v1862
    %v1864 = vpop.f32.mrb[0].mxu0
    %1865 = vmatprep.mubr.bf16.mxu0 0
    %1866 = vmatmul.mubr.bf16.gmra.mrb[0].mxu0 %v1713
    %v1867 = vpop.f32.mrb[0].mxu0
    %v1868 = vadd.f32 0.0, %v1867
    %v1869 = vpop.f32.mrb[0].mxu0
    %v1870 = vpop.f32.mrb[0].mxu0
    %v1871 = vadd.f32 0.0, %v1870
    %v1872 = vpop.f32.mrb[0].mxu0
    %1873 = vmatprep.mubr.bf16.mxu0 0
    %1874 = vmatmul.mubr.bf16.gmra.mrb[0].mxu0 %v1716
    %v1875 = vpop.f32.mrb[0].mxu0
    %v1876 = vadd.f32 0.0, %v1875
    %v1877 = vpop.f32.mrb[0].mxu0
    %v1878 = vpop.f32.mrb[0].mxu0
    %v1879 = vadd.f32 0.0, %v1878
    %v1880 = vpop.f32.mrb[0].mxu0
    %1881 = vmatprep.mubr.bf16.mxu0 0
    %1882 = vmatmul.mubr.bf16.gmra.mrb[0].mxu0 %v1719
    %v1883 = vpop.f32.mrb[0].mxu0
    %v1884 = vadd.f32 0.0, %v1883
    %v1885 = vpop.f32.mrb[0].mxu0
    %v1886 = vpop.f32.mrb[0].mxu0
    %v1887 = vadd.f32 0.0, %v1886
    %v1888 = vpop.f32.mrb[0].mxu0
    %1889 = vmatprep.mubr.bf16.mxu0 0
    %1890 = vmatmul.mubr.bf16.gmra.mrb[0].mxu0 %v1722
    %v1891 = vpop.f32.mrb[0].mxu0
    %v1892 = vadd.f32 0.0, %v1891
    %v1893 = vpop.f32.mrb[0].mxu0
    %v1894 = vpop.f32.mrb[0].mxu0
    %v1895 = vadd.f32 0.0, %v1894
    %v1896 = vpop.f32.mrb[0].mxu0
    %1897 = vmatprep.mubr.bf16.mxu0 0
    %1898 = vmatmul.mubr.bf16.gmra.mrb[0].mxu0 %v1725
    %v1899 = vpop.f32.mrb[0].mxu0
    %v1900 = vadd.f32 0.0, %v1899
    %v1901 = vpop.f32.mrb[0].mxu0
    %v1902 = vpop.f32.mrb[0].mxu0
    %v1903 = vadd.f32 0.0, %v1902
    %v1904 = vpop.f32.mrb[0].mxu0
    %1905 = vmatprep.mubr.bf16.mxu0 0
    %1906 = vmatmul.mubr.bf16.gmra.mrb[0].mxu0 %v1728
    %v1907 = vpop.f32.mrb[0].mxu0
    %v1908 = vadd.f32 0.0, %v1907
    %v1909 = vpop.f32.mrb[0].mxu0
    %v1910 = vpop.f32.mrb[0].mxu0
    %v1911 = vadd.f32 0.0, %v1910
    %v1912 = vpop.f32.mrb[0].mxu0
    %1913 = vmatprep.mubr.bf16.mxu0 0
    %1914 = vmatmul.mubr.bf16.gmra.mrb[0].mxu0 %v1731
    %v1915 = vpop.f32.mrb[0].mxu0
    %v1916 = vadd.f32 0.0, %v1915
    %v1917 = vpop.f32.mrb[0].mxu0
    %v1918 = vpop.f32.mrb[0].mxu0
    %v1919 = vadd.f32 0.0, %v1918
    %v1920 = vpop.f32.mrb[0].mxu0
    %1921 = vmatprep.mubr.bf16.mxu0 0
    %1922 = vmatmul.mubr.bf16.gmra.mrb[0].mxu0 %v1734
    %v1923 = vpop.f32.mrb[0].mxu0
    %v1924 = vadd.f32 0.0, %v1923
    %v1925 = vpop.f32.mrb[0].mxu0
    %v1926 = vpop.f32.mrb[0].mxu0
    %v1927 = vadd.f32 0.0, %v1926
    %v1928 = vpop.f32.mrb[0].mxu0
    %1929 = vmatprep.mubr.bf16.mxu0 0
    %1930 = vmatmul.mubr.bf16.gmra.mrb[0].mxu0 %v1737
    %v1931 = vpop.f32.mrb[0].mxu0
    %v1932 = vadd.f32 0.0, %v1931
    %v1933 = vpop.f32.mrb[0].mxu0
    %v1934 = vpop.f32.mrb[0].mxu0
    %v1935 = vadd.f32 0.0, %v1934
    %v1936 = vpop.f32.mrb[0].mxu0
    %1937 = vmatprep.mubr.bf16.mxu0 0
    %1938 = vmatmul.mubr.bf16.gmra.mrb[0].mxu0 %v1740
    %v1939 = vpop.f32.mrb[0].mxu0
    %v1940 = vadd.f32 0.0, %v1939
    %v1941 = vpop.f32.mrb[0].mxu0
    %v1942 = vpop.f32.mrb[0].mxu0
    %v1943 = vadd.f32 0.0, %v1942
    %v1944 = vpop.f32.mrb[0].mxu0
    %1945 = vmatprep.mubr.bf16.mxu0 0
    %1946 = vmatmul.mubr.bf16.gmra.mrb[0].mxu0 %v1743
    %v1947 = vpop.f32.mrb[0].mxu0
    %v1948 = vadd.f32 0.0, %v1947
    %v1949 = vpop.f32.mrb[0].mxu0
    %v1950 = vpop.f32.mrb[0].mxu0
    %v1951 = vadd.f32 0.0, %v1950
    %v1952 = vpop.f32.mrb[0].mxu0
    %1953 = vmatprep.mubr.bf16.mxu0 0
    %1954 = vmatmul.mubr.bf16.gmra.mrb[0].mxu0 %v1746
    %v1955 = vpop.f32.mrb[0].mxu0
    %v1956 = vadd.f32 0.0, %v1955
    %v1957 = vpop.f32.mrb[0].mxu0
    %v1958 = vpop.f32.mrb[0].mxu0
    %v1959 = vadd.f32 0.0, %v1958
    %v1960 = vpop.f32.mrb[0].mxu0
    %1961 = vmatprep.mubr.bf16.mxu0 0
    %1962 = vmatmul.mubr.bf16.gmra.mrb[0].mxu0 %v1749
    %v1963 = vpop.f32.mrb[0].mxu0
    %v1964 = vadd.f32 0.0, %v1963
    %v1965 = vpop.f32.mrb[0].mxu0
    %v1966 = vpop.f32.mrb[0].mxu0
    %v1967 = vadd.f32 0.0, %v1966
    %v1968 = vpop.f32.mrb[0].mxu0
    %1969 = vmatprep.mubr.bf16.mxu0 0
    %1970 = vmatmul.mubr.bf16.gmra.mrb[0].mxu0 %v1752
    %v1971 = vpop.f32.mrb[0].mxu0
    %v1972 = vadd.f32 0.0, %v1971
    %v1973 = vpop.f32.mrb[0].mxu0
    %v1974 = vpop.f32.mrb[0].mxu0
    %v1975 = vadd.f32 0.0, %v1974
    %v1976 = vpop.f32.mrb[0].mxu0
    %1977 = vmatprep.mubr.bf16.mxu0 0
    %1978 = vmatmul.mubr.bf16.gmra.mrb[0].mxu0 %v1755
    %v1979 = vpop.f32.mrb[0].mxu0
    %v1980 = vadd.f32 0.0, %v1979
    %v1981 = vpop.f32.mrb[0].mxu0
    %v1982 = vpop.f32.mrb[0].mxu0
    %v1983 = vadd.f32 0.0, %v1982
    %v1984 = vpop.f32.mrb[0].mxu0
    %1985 = vmatprep.mubr.bf16.mxu0 0
    %1986 = vmatmul.mubr.bf16.gmra.mrb[0].mxu0 %v1758
    %v1987 = vpop.f32.mrb[0].mxu0
    %v1988 = vadd.f32 0.0, %v1987
    %v1989 = vpop.f32.mrb[0].mxu0
    %v1990 = vpop.f32.mrb[0].mxu0
    %v1991 = vadd.f32 0.0, %v1990
    %v1992 = vpop.f32.mrb[0].mxu0
    %1993 = vmatprep.mubr.bf16.mxu0 0
    %1994 = vmatmul.mubr.bf16.gmra.mrb[0].mxu0 %v1761
    %v1995 = vpop.f32.mrb[0].mxu0
    %v1996 = vadd.f32 0.0, %v1995
    %v1997 = vpop.f32.mrb[0].mxu0
    %v1998 = vpop.f32.mrb[0].mxu0
    %v1999 = vadd.f32 0.0, %v1998
    %v2000 = vpop.f32.mrb[0].mxu0
    %2001 = vmatprep.mubr.bf16.mxu0 0
    %2002 = vmatmul.mubr.bf16.gmra.mrb[0].mxu0 %v1764
    %v2003 = vpop.f32.mrb[0].mxu0
    %v2004 = vadd.f32 0.0, %v2003
    %v2005 = vpop.f32.mrb[0].mxu0
    %v2006 = vpop.f32.mrb[0].mxu0
    %v2007 = vadd.f32 0.0, %v2006
    %v2008 = vpop.f32.mrb[0].mxu0
    %2009 = vmatprep.mubr.bf16.mxu0 0
    %2010 = vmatmul.mubr.bf16.gmra.mrb[0].mxu0 %v1767
    %v2011 = vpop.f32.mrb[0].mxu0
    %v2012 = vadd.f32 0.0, %v2011
    %v2013 = vpop.f32.mrb[0].mxu0
    %v2014 = vpop.f32.mrb[0].mxu0
    %v2015 = vadd.f32 0.0, %v2014
    %v2016 = vpop.f32.mrb[0].mxu0
    %2017 = vmatprep.mubr.bf16.mxu0 0
    %2018 = vmatmul.mubr.bf16.gmra.mrb[0].mxu0 %v1770
    %v2019 = vpop.f32.mrb[0].mxu0
    %v2020 = vadd.f32 0.0, %v2019
    %v2021 = vpop.f32.mrb[0].mxu0
    %v2022 = vpop.f32.mrb[0].mxu0
    %v2023 = vadd.f32 0.0, %v2022
    %v2024 = vpop.f32.mrb[0].mxu0
    %2025 = vmatprep.mubr.bf16.mxu0 0
    %2026 = vmatmul.mubr.bf16.gmra.mrb[0].mxu0 %v1773
    %v2027 = vpop.f32.mrb[0].mxu0
    %v2028 = vadd.f32 0.0, %v2027
    %v2029 = vpop.f32.mrb[0].mxu0
    %v2030 = vpop.f32.mrb[0].mxu0
    %v2031 = vadd.f32 0.0, %v2030
    %v2032 = vpop.f32.mrb[0].mxu0
    %2033 = vmatprep.mubr.bf16.mxu0 0
    %2034 = vmatmul.mubr.bf16.gmra.mrb[0].mxu0 %v1776
    %v2035 = vpop.f32.mrb[0].mxu0
    %v2036 = vadd.f32 0.0, %v2035
    %v2037 = vpop.f32.mrb[0].mxu0
    %v2038 = vpop.f32.mrb[0].mxu0
    %v2039 = vadd.f32 0.0, %v2038
    %v2040 = vpop.f32.mrb[0].mxu0
    %2041 = vmatprep.mubr.bf16.mxu0 0
    %2042 = vmatmul.mubr.bf16.gmra.mrb[0].mxu0 %v1779
    %v2043 = vpop.f32.mrb[0].mxu0
    %v2044 = vadd.f32 0.0, %v2043
    %v2045 = vpop.f32.mrb[0].mxu0
    %v2046 = vpop.f32.mrb[0].mxu0
    %v2047 = vadd.f32 0.0, %v2046
    %v2048 = vpop.f32.mrb[0].mxu0
    %2049 = vmatprep.mubr.bf16.mxu0 0
    %2050 = vmatmul.mubr.bf16.gmra.mrb[0].mxu0 %v1782
    %v2051 = vpop.f32.mrb[0].mxu0
    %v2052 = vadd.f32 0.0, %v2051
    %v2053 = vpop.f32.mrb[0].mxu0
    %v2054 = vpop.f32.mrb[0].mxu0
    %v2055 = vadd.f32 0.0, %v2054
    %v2056 = vpop.f32.mrb[0].mxu0
    %2057 = vmatprep.mubr.bf16.mxu0 0
    %2058 = vmatmul.mubr.bf16.gmra.mrb[0].mxu0 %v1785
    %v2059 = vpop.f32.mrb[0].mxu0
    %v2060 = vadd.f32 0.0, %v2059
    %v2061 = vpop.f32.mrb[0].mxu0
    %v2062 = vpop.f32.mrb[0].mxu0
    %v2063 = vadd.f32 0.0, %v2062
    %v2064 = vpop.f32.mrb[0].mxu0
    %2065 = vmatprep.mubr.bf16.mxu0 0
    %2066 = vmatmul.mubr.bf16.gmra.mrb[0].mxu0 %v1788
    %v2067 = vpop.f32.mrb[0].mxu0
    %v2068 = vadd.f32 0.0, %v2067
    %v2069 = vpop.f32.mrb[0].mxu0
    %v2070 = vpop.f32.mrb[0].mxu0
    %v2071 = vadd.f32 0.0, %v2070
    %v2072 = vpop.f32.mrb[0].mxu0
    %2073 = vmatprep.mubr.bf16.mxu0 0
    %2074 = vmatmul.mubr.bf16.gmra.mrb[0].mxu0 %v1791
    %v2075 = vpop.f32.mrb[0].mxu0
    %v2076 = vadd.f32 0.0, %v2075
    %v2077 = vpop.f32.mrb[0].mxu0
    %v2078 = vpop.f32.mrb[0].mxu0
    %v2079 = vadd.f32 0.0, %v2078
    %v2080 = vpop.f32.mrb[0].mxu0
    %2081 = vdwg.mxu0
    %v2082 = vadd.f32 %v1520, %v1828
    %v2083 = vadd.f32 %v1521, %v1831
    %v2084 = vadd.f32 %v1522, %v1836
    %v2085 = vadd.f32 %v1523, %v1839
    %v2086 = vadd.f32 %v1524, %v1844
    %v2087 = vadd.f32 %v1525, %v1847
    %v2088 = vadd.f32 %v1526, %v1852
    %v2089 = vadd.f32 %v1527, %v1855
    %v2090 = vadd.f32 %v1528, %v1860
    %v2091 = vadd.f32 %v1529, %v1863
    %v2092 = vadd.f32 %v1530, %v1868
    %v2093 = vadd.f32 %v1531, %v1871
    %v2094 = vadd.f32 %v1532, %v1876
    %v2095 = vadd.f32 %v1533, %v1879
    %v2096 = vadd.f32 %v1534, %v1884
    %v2097 = vadd.f32 %v1535, %v1887
    %v2098 = vadd.f32 %v1536, %v1892
    %v2099 = vadd.f32 %v1537, %v1895
    %v2100 = vadd.f32 %v1538, %v1900
    %v2101 = vadd.f32 %v1539, %v1903
    %v2102 = vadd.f32 %v1540, %v1908
    %v2103 = vadd.f32 %v1541, %v1911
    %v2104 = vadd.f32 %v1542, %v1916
    %v2105 = vadd.f32 %v1543, %v1919
    %v2106 = vadd.f32 %v1544, %v1924
    %v2107 = vadd.f32 %v1545, %v1927
    %v2108 = vadd.f32 %v1546, %v1932
    %v2109 = vadd.f32 %v1547, %v1935
    %v2110 = vadd.f32 %v1548, %v1940
    %v2111 = vadd.f32 %v1549, %v1943
    %v2112 = vadd.f32 %v1550, %v1948
    %v2113 = vadd.f32 %v1551, %v1951
    %v2114 = vadd.f32 %v1552, %v1956
    %v2115 = vadd.f32 %v1553, %v1959
    %v2116 = vadd.f32 %v1554, %v1964
    %v2117 = vadd.f32 %v1555, %v1967
    %v2118 = vadd.f32 %v1556, %v1972
    %v2119 = vadd.f32 %v1557, %v1975
    %v2120 = vadd.f32 %v1558, %v1980
    %v2121 = vadd.f32 %v1559, %v1983
    %v2122 = vadd.f32 %v1560, %v1988
    %v2123 = vadd.f32 %v1561, %v1991
    %v2124 = vadd.f32 %v1562, %v1996
    %v2125 = vadd.f32 %v1563, %v1999
    %v2126 = vadd.f32 %v1564, %v2004
    %v2127 = vadd.f32 %v1565, %v2007
    %v2128 = vadd.f32 %v1566, %v2012
    %v2129 = vadd.f32 %v1567, %v2015
    %v2130 = vadd.f32 %v1568, %v2020
    %v2131 = vadd.f32 %v1569, %v2023
    %v2132 = vadd.f32 %v1570, %v2028
    %v2133 = vadd.f32 %v1571, %v2031
    %v2134 = vadd.f32 %v1572, %v2036
    %v2135 = vadd.f32 %v1573, %v2039
    %v2136 = vadd.f32 %v1574, %v2044
    %v2137 = vadd.f32 %v1575, %v2047
    %v2138 = vadd.f32 %v1576, %v2052
    %v2139 = vadd.f32 %v1577, %v2055
    %v2140 = vadd.f32 %v1578, %v2060
    %v2141 = vadd.f32 %v1579, %v2063
    %v2142 = vadd.f32 %v1580, %v2068
    %v2143 = vadd.f32 %v1581, %v2071
    %v2144 = vadd.f32 %v1582, %v2076
    %v2145 = vadd.f32 %v1583, %v2079
    %v2146 = vld [vmem:[%s1584 + $0x1] sm:$0xff]
    %v2147 = vld [vmem:[%s1584 + $0x9] sm:$0xff]
    %v2148 = vld [vmem:[%s1584 + $0x19] sm:$0xff]
    %v2149 = vld [vmem:[%s1584 + $0x21] sm:$0xff]
    %v2150 = vld [vmem:[%s1584 + $0x31] sm:$0xff]
    %v2151 = vld [vmem:[%s1584 + $0x39] sm:$0xff]
    %v2152 = vld [vmem:[%s1584 + $0x49] sm:$0xff]
    %v2153 = vld [vmem:[%s1584 + $0x51] sm:$0xff]
    %v2154 = vld [vmem:[%s1584 + $0x61] sm:$0xff]
    %v2155 = vld [vmem:[%s1584 + $0x69] sm:$0xff]
    %v2156 = vld [vmem:[%s1584 + $0x79] sm:$0xff]
    %v2157 = vld [vmem:[%s1584 + $0x81] sm:$0xff]
    %v2158 = vld [vmem:[%s1584 + $0x91] sm:$0xff]
    %v2159 = vld [vmem:[%s1584 + $0x99] sm:$0xff]
    %v2160 = vld [vmem:[%s1584 + $0xa9] sm:$0xff]
    %v2161 = vld [vmem:[%s1584 + $0xb1] sm:$0xff]
    %v2162 = vld [vmem:[%s1584 + $0xc1] sm:$0xff]
    %v2163 = vld [vmem:[%s1584 + $0xc9] sm:$0xff]
    %v2164 = vld [vmem:[%s1584 + $0xd9] sm:$0xff]
    %v2165 = vld [vmem:[%s1584 + $0xe1] sm:$0xff]
    %v2166 = vld [vmem:[%s1584 + $0xf1] sm:$0xff]
    %v2167 = vld [vmem:[%s1584 + $0xf9] sm:$0xff]
    %v2168 = vld [vmem:[%s1584 + $0x109] sm:$0xff]
    %v2169 = vld [vmem:[%s1584 + $0x111] sm:$0xff]
    %v2170 = vld [vmem:[%s1584 + $0x121] sm:$0xff]
    %v2171 = vld [vmem:[%s1584 + $0x129] sm:$0xff]
    %v2172 = vld [vmem:[%s1584 + $0x139] sm:$0xff]
    %v2173 = vld [vmem:[%s1584 + $0x141] sm:$0xff]
    %v2174 = vld [vmem:[%s1584 + $0x151] sm:$0xff]
    %v2175 = vld [vmem:[%s1584 + $0x159] sm:$0xff]
    %v2176 = vld [vmem:[%s1584 + $0x169] sm:$0xff]
    %v2177 = vld [vmem:[%s1584 + $0x171] sm:$0xff]
    %v2178 = vld [vmem:[%s1584 + $0x1b1] sm:$0xff]
    %v2179 = vld [vmem:[%s1584 + $0x1b9] sm:$0xff]
    %v2180 = vld [vmem:[%s1584 + $0x1c9] sm:$0xff]
    %v2181 = vld [vmem:[%s1584 + $0x1d1] sm:$0xff]
    %v2182 = vld [vmem:[%s1584 + $0x1e1] sm:$0xff]
    %v2183 = vld [vmem:[%s1584 + $0x1e9] sm:$0xff]
    %v2184 = vld [vmem:[%s1584 + $0x1f9] sm:$0xff]
    %v2185 = vld [vmem:[%s1584 + $0x201] sm:$0xff]
    %v2186 = vld [vmem:[%s1584 + $0x211] sm:$0xff]
    %v2187 = vld [vmem:[%s1584 + $0x219] sm:$0xff]
    %v2188 = vld [vmem:[%s1584 + $0x229] sm:$0xff]
    %v2189 = vld [vmem:[%s1584 + $0x231] sm:$0xff]
    %v2190 = vld [vmem:[%s1584 + $0x241] sm:$0xff]
    %v2191 = vld [vmem:[%s1584 + $0x249] sm:$0xff]
    %v2192 = vld [vmem:[%s1584 + $0x259] sm:$0xff]
    %v2193 = vld [vmem:[%s1584 + $0x261] sm:$0xff]
    %v2194 = vld [vmem:[%s1584 + $0x271] sm:$0xff]
    %v2195 = vld [vmem:[%s1584 + $0x279] sm:$0xff]
    %v2196 = vld [vmem:[%s1584 + $0x289] sm:$0xff]
    %v2197 = vld [vmem:[%s1584 + $0x291] sm:$0xff]
    %v2198 = vld [vmem:[%s1584 + $0x2a1] sm:$0xff]
    %v2199 = vld [vmem:[%s1584 + $0x2a9] sm:$0xff]
    %v2200 = vld [vmem:[%s1584 + $0x2b9] sm:$0xff]
    %v2201 = vld [vmem:[%s1584 + $0x2c1] sm:$0xff]
    %v2202 = vld [vmem:[%s1584 + $0x2d1] sm:$0xff]
    %v2203 = vld [vmem:[%s1584 + $0x2d9] sm:$0xff]
    %v2204 = vld [vmem:[%s1584 + $0x2e9] sm:$0xff]
    %v2205 = vld [vmem:[%s1584 + $0x2f1] sm:$0xff]
    %v2206 = vld [vmem:[%s1584 + $0x301] sm:$0xff]
    %v2207 = vld [vmem:[%s1584 + $0x309] sm:$0xff]
    %v2208 = vld [vmem:[%s1584 + $0x319] sm:$0xff]
    %v2209 = vld [vmem:[%s1584 + $0x321] sm:$0xff]
    %v2210 = vpack.c.bf16 %v2147, %v2146
    %v2211 = vpack.c.bf16 %v2149, %v2148
    %v2212 = vpack.c.bf16 %v2151, %v2150
    %v2213 = vpack.c.bf16 %v2153, %v2152
    %v2214 = vpack.c.bf16 %v2155, %v2154
    %v2215 = vpack.c.bf16 %v2157, %v2156
    %v2216 = vpack.c.bf16 %v2159, %v2158
    %v2217 = vpack.c.bf16 %v2161, %v2160
    %v2218 = vpack.c.bf16 %v2163, %v2162
    %v2219 = vpack.c.bf16 %v2165, %v2164
    %v2220 = vpack.c.bf16 %v2167, %v2166
    %v2221 = vpack.c.bf16 %v2169, %v2168
    %v2222 = vpack.c.bf16 %v2171, %v2170
    %v2223 = vpack.c.bf16 %v2173, %v2172
    %v2224 = vpack.c.bf16 %v2175, %v2174
    %v2225 = vpack.c.bf16 %v2177, %v2176
    %v2226 = vpack.c.bf16 %v2179, %v2178
    %v2227 = vpack.c.bf16 %v2181, %v2180
    %v2228 = vpack.c.bf16 %v2183, %v2182
    %v2229 = vpack.c.bf16 %v2185, %v2184
    %v2230 = vpack.c.bf16 %v2187, %v2186
    %v2231 = vpack.c.bf16 %v2189, %v2188
    %v2232 = vpack.c.bf16 %v2191, %v2190
    %v2233 = vpack.c.bf16 %v2193, %v2192
    %v2234 = vpack.c.bf16 %v2195, %v2194
    %v2235 = vpack.c.bf16 %v2197, %v2196
    %v2236 = vpack.c.bf16 %v2199, %v2198
    %v2237 = vpack.c.bf16 %v2201, %v2200
    %v2238 = vpack.c.bf16 %v2203, %v2202
    %v2239 = vpack.c.bf16 %v2205, %v2204
    %v2240 = vpack.c.bf16 %v2207, %v2206
    %v2241 = vpack.c.bf16 %v2209, %v2208
    %v2242 = vld [vmem:[%s1 + $0x40] sm:$0xf]
    %v2243 = vld [vmem:[%s1 + $0x44] sm:$0xf]
    %v2244 = vld [vmem:[%s1 + $0x48] sm:$0xf]
    %v2245 = vld [vmem:[%s1 + $0x4c] sm:$0xf]
    %v2250 = vunpack.c.l.b16 %v2242
    %v2251 = vunpack.c.l.b16 %v2243
    %v2252 = vunpack.c.l.b16 %v2244
    %v2253 = vunpack.c.l.b16 %v2245
    %v2254 = vpack.c.b16 %v2251, %v2250
    %v2255 = vpack.c.b16 %v2253, %v2252
    %v2259 = vsel %vm240, %v2210, 0
    %v2262 = vsel %vm240, %v2211, 0
    %v2265 = vsel %vm240, %v2212, 0
    %v2268 = vsel %vm240, %v2213, 0
    %v2271 = vsel %vm240, %v2214, 0
    %v2274 = vsel %vm240, %v2215, 0
    %v2277 = vsel %vm240, %v2216, 0
    %v2280 = vsel %vm240, %v2217, 0
    %v2283 = vsel %vm240, %v2218, 0
    %v2286 = vsel %vm240, %v2219, 0
    %v2289 = vsel %vm240, %v2220, 0
    %v2292 = vsel %vm240, %v2221, 0
    %v2295 = vsel %vm240, %v2222, 0
    %v2298 = vsel %vm240, %v2223, 0
    %v2301 = vsel %vm240, %v2224, 0
    %v2304 = vsel %vm240, %v2225, 0
    %v2307 = vsel %vm240, %v2226, 0
    %v2310 = vsel %vm240, %v2227, 0
    %v2313 = vsel %vm240, %v2228, 0
    %v2316 = vsel %vm240, %v2229, 0
    %v2319 = vsel %vm240, %v2230, 0
    %v2322 = vsel %vm240, %v2231, 0
    %v2325 = vsel %vm240, %v2232, 0
    %v2328 = vsel %vm240, %v2233, 0
    %v2331 = vsel %vm240, %v2234, 0
    %v2334 = vsel %vm240, %v2235, 0
    %v2337 = vsel %vm240, %v2236, 0
    %v2340 = vsel %vm240, %v2237, 0
    %v2343 = vsel %vm240, %v2238, 0
    %v2346 = vsel %vm240, %v2239, 0
    %v2349 = vsel %vm240, %v2240, 0
    %v2352 = vsel %vm240, %v2241, 0
    %2354 = vmatprep.subr.bf16.mxu0 0
    %2355 = vmatpush1.bf16.msra.mxu0 %v2254
    %2356 = vmatprep.subr.bf16.mxu0 0
    %2357 = vmatpush1.bf16.msra.mxu0 %v2255
    %2358 = vmatprep.subr.bf16.mxu0 0
    %2359 = vmatpush1.bf16.msra.mxu0 0
    %2360 = vmatprep.subr.bf16.mxu0 0
    %2361 = vmatpush1.bf16.msra.mxu0 0
    %2362 = vmatprep.subr.bf16.mxu0 0
    %2363 = vmatpush1.bf16.msra.mxu0 0
    %2364 = vmatprep.subr.bf16.mxu0 0
    %2365 = vmatpush1.bf16.msra.mxu0 0
    %2366 = vmatprep.subr.bf16.mxu0 0
    %2367 = vmatpush1.bf16.msra.mxu0 0
    %2368 = vmatprep.subr.bf16.mxu0 0
    %2369 = vmatpush1.bf16.msra.mxu0 0
    %2370 = vmatprep.subr.bf16.mxu0 0
    %2371 = vmatpush1.bf16.msra.mxu0 0
    %2372 = vmatprep.subr.bf16.mxu0 0
    %2373 = vmatpush1.bf16.msra.mxu0 0
    %2374 = vmatprep.subr.bf16.mxu0 0
    %2375 = vmatpush1.bf16.msra.mxu0 0
    %2376 = vmatprep.subr.bf16.mxu0 0
    %2377 = vmatpush1.bf16.msra.mxu0 0
    %2378 = vmatprep.subr.bf16.mxu0 0
    %2379 = vmatpush1.bf16.msra.mxu0 0
    %2380 = vmatprep.subr.bf16.mxu0 0
    %2381 = vmatpush1.bf16.msra.mxu0 0
    %2382 = vmatprep.subr.bf16.mxu0 0
    %2383 = vmatpush1.bf16.msra.mxu0 0
    %2384 = vmatprep.subr.bf16.mxu0 0
    %2385 = vmatpush1.bf16.msra.mxu0 0
    %2386 = vmatprep.mubr.bf16.mxu0 0
    %2387 = vmatmul.mubr.bf16.gmra.mrb[0].mxu0 %v2259
    %v2388 = vpop.f32.mrb[0].mxu0
    %v2389 = vadd.f32 0.0, %v2388
    %v2390 = vpop.f32.mrb[0].mxu0
    %v2391 = vpop.f32.mrb[0].mxu0
    %v2392 = vadd.f32 0.0, %v2391
    %v2393 = vpop.f32.mrb[0].mxu0
    %2394 = vmatprep.mubr.bf16.mxu0 0
    %2395 = vmatmul.mubr.bf16.gmra.mrb[0].mxu0 %v2262
    %v2396 = vpop.f32.mrb[0].mxu0
    %v2397 = vadd.f32 0.0, %v2396
    %v2398 = vpop.f32.mrb[0].mxu0
    %v2399 = vpop.f32.mrb[0].mxu0
    %v2400 = vadd.f32 0.0, %v2399
    %v2401 = vpop.f32.mrb[0].mxu0
    %2402 = vmatprep.mubr.bf16.mxu0 0
    %2403 = vmatmul.mubr.bf16.gmra.mrb[0].mxu0 %v2265
    %v2404 = vpop.f32.mrb[0].mxu0
    %v2405 = vadd.f32 0.0, %v2404
    %v2406 = vpop.f32.mrb[0].mxu0
    %v2407 = vpop.f32.mrb[0].mxu0
    %v2408 = vadd.f32 0.0, %v2407
    %v2409 = vpop.f32.mrb[0].mxu0
    %2410 = vmatprep.mubr.bf16.mxu0 0
    %2411 = vmatmul.mubr.bf16.gmra.mrb[0].mxu0 %v2268
    %v2412 = vpop.f32.mrb[0].mxu0
    %v2413 = vadd.f32 0.0, %v2412
    %v2414 = vpop.f32.mrb[0].mxu0
    %v2415 = vpop.f32.mrb[0].mxu0
    %v2416 = vadd.f32 0.0, %v2415
    %v2417 = vpop.f32.mrb[0].mxu0
    %2418 = vmatprep.mubr.bf16.mxu0 0
    %2419 = vmatmul.mubr.bf16.gmra.mrb[0].mxu0 %v2271
    %v2420 = vpop.f32.mrb[0].mxu0
    %v2421 = vadd.f32 0.0, %v2420
    %v2422 = vpop.f32.mrb[0].mxu0
    %v2423 = vpop.f32.mrb[0].mxu0
    %v2424 = vadd.f32 0.0, %v2423
    %v2425 = vpop.f32.mrb[0].mxu0
    %2426 = vmatprep.mubr.bf16.mxu0 0
    %2427 = vmatmul.mubr.bf16.gmra.mrb[0].mxu0 %v2274
    %v2428 = vpop.f32.mrb[0].mxu0
    %v2429 = vadd.f32 0.0, %v2428
    %v2430 = vpop.f32.mrb[0].mxu0
    %v2431 = vpop.f32.mrb[0].mxu0
    %v2432 = vadd.f32 0.0, %v2431
    %v2433 = vpop.f32.mrb[0].mxu0
    %2434 = vmatprep.mubr.bf16.mxu0 0
    %2435 = vmatmul.mubr.bf16.gmra.mrb[0].mxu0 %v2277
    %v2436 = vpop.f32.mrb[0].mxu0
    %v2437 = vadd.f32 0.0, %v2436
    %v2438 = vpop.f32.mrb[0].mxu0
    %v2439 = vpop.f32.mrb[0].mxu0
    %v2440 = vadd.f32 0.0, %v2439
    %v2441 = vpop.f32.mrb[0].mxu0
    %2442 = vmatprep.mubr.bf16.mxu0 0
    %2443 = vmatmul.mubr.bf16.gmra.mrb[0].mxu0 %v2280
    %v2444 = vpop.f32.mrb[0].mxu0
    %v2445 = vadd.f32 0.0, %v2444
    %v2446 = vpop.f32.mrb[0].mxu0
    %v2447 = vpop.f32.mrb[0].mxu0
    %v2448 = vadd.f32 0.0, %v2447
    %v2449 = vpop.f32.mrb[0].mxu0
    %2450 = vmatprep.mubr.bf16.mxu0 0
    %2451 = vmatmul.mubr.bf16.gmra.mrb[0].mxu0 %v2283
    %v2452 = vpop.f32.mrb[0].mxu0
    %v2453 = vadd.f32 0.0, %v2452
    %v2454 = vpop.f32.mrb[0].mxu0
    %v2455 = vpop.f32.mrb[0].mxu0
    %v2456 = vadd.f32 0.0, %v2455
    %v2457 = vpop.f32.mrb[0].mxu0
    %2458 = vmatprep.mubr.bf16.mxu0 0
    %2459 = vmatmul.mubr.bf16.gmra.mrb[0].mxu0 %v2286
    %v2460 = vpop.f32.mrb[0].mxu0
    %v2461 = vadd.f32 0.0, %v2460
    %v2462 = vpop.f32.mrb[0].mxu0
    %v2463 = vpop.f32.mrb[0].mxu0
    %v2464 = vadd.f32 0.0, %v2463
    %v2465 = vpop.f32.mrb[0].mxu0
    %2466 = vmatprep.mubr.bf16.mxu0 0
    %2467 = vmatmul.mubr.bf16.gmra.mrb[0].mxu0 %v2289
    %v2468 = vpop.f32.mrb[0].mxu0
    %v2469 = vadd.f32 0.0, %v2468
    %v2470 = vpop.f32.mrb[0].mxu0
    %v2471 = vpop.f32.mrb[0].mxu0
    %v2472 = vadd.f32 0.0, %v2471
    %v2473 = vpop.f32.mrb[0].mxu0
    %2474 = vmatprep.mubr.bf16.mxu0 0
    %2475 = vmatmul.mubr.bf16.gmra.mrb[0].mxu0 %v2292
    %v2476 = vpop.f32.mrb[0].mxu0
    %v2477 = vadd.f32 0.0, %v2476
    %v2478 = vpop.f32.mrb[0].mxu0
    %v2479 = vpop.f32.mrb[0].mxu0
    %v2480 = vadd.f32 0.0, %v2479
    %v2481 = vpop.f32.mrb[0].mxu0
    %2482 = vmatprep.mubr.bf16.mxu0 0
    %2483 = vmatmul.mubr.bf16.gmra.mrb[0].mxu0 %v2295
    %v2484 = vpop.f32.mrb[0].mxu0
    %v2485 = vadd.f32 0.0, %v2484
    %v2486 = vpop.f32.mrb[0].mxu0
    %v2487 = vpop.f32.mrb[0].mxu0
    %v2488 = vadd.f32 0.0, %v2487
    %v2489 = vpop.f32.mrb[0].mxu0
    %2490 = vmatprep.mubr.bf16.mxu0 0
    %2491 = vmatmul.mubr.bf16.gmra.mrb[0].mxu0 %v2298
    %v2492 = vpop.f32.mrb[0].mxu0
    %v2493 = vadd.f32 0.0, %v2492
    %v2494 = vpop.f32.mrb[0].mxu0
    %v2495 = vpop.f32.mrb[0].mxu0
    %v2496 = vadd.f32 0.0, %v2495
    %v2497 = vpop.f32.mrb[0].mxu0
    %2498 = vmatprep.mubr.bf16.mxu0 0
    %2499 = vmatmul.mubr.bf16.gmra.mrb[0].mxu0 %v2301
    %v2500 = vpop.f32.mrb[0].mxu0
    %v2501 = vadd.f32 0.0, %v2500
    %v2502 = vpop.f32.mrb[0].mxu0
    %v2503 = vpop.f32.mrb[0].mxu0
    %v2504 = vadd.f32 0.0, %v2503
    %v2505 = vpop.f32.mrb[0].mxu0
    %2506 = vmatprep.mubr.bf16.mxu0 0
    %2507 = vmatmul.mubr.bf16.gmra.mrb[0].mxu0 %v2304
    %v2508 = vpop.f32.mrb[0].mxu0
    %v2509 = vadd.f32 0.0, %v2508
    %v2510 = vpop.f32.mrb[0].mxu0
    %v2511 = vpop.f32.mrb[0].mxu0
    %v2512 = vadd.f32 0.0, %v2511
    %v2513 = vpop.f32.mrb[0].mxu0
    %2514 = vmatprep.mubr.bf16.mxu0 0
    %2515 = vmatmul.mubr.bf16.gmra.mrb[0].mxu0 %v2307
    %v2516 = vpop.f32.mrb[0].mxu0
    %v2517 = vadd.f32 0.0, %v2516
    %v2518 = vpop.f32.mrb[0].mxu0
    %v2519 = vpop.f32.mrb[0].mxu0
    %v2520 = vadd.f32 0.0, %v2519
    %v2521 = vpop.f32.mrb[0].mxu0
    %2522 = vmatprep.mubr.bf16.mxu0 0
    %2523 = vmatmul.mubr.bf16.gmra.mrb[0].mxu0 %v2310
    %v2524 = vpop.f32.mrb[0].mxu0
    %v2525 = vadd.f32 0.0, %v2524
    %v2526 = vpop.f32.mrb[0].mxu0
    %v2527 = vpop.f32.mrb[0].mxu0
    %v2528 = vadd.f32 0.0, %v2527
    %v2529 = vpop.f32.mrb[0].mxu0
    %2530 = vmatprep.mubr.bf16.mxu0 0
    %2531 = vmatmul.mubr.bf16.gmra.mrb[0].mxu0 %v2313
    %v2532 = vpop.f32.mrb[0].mxu0
    %v2533 = vadd.f32 0.0, %v2532
    %v2534 = vpop.f32.mrb[0].mxu0
    %v2535 = vpop.f32.mrb[0].mxu0
    %v2536 = vadd.f32 0.0, %v2535
    %v2537 = vpop.f32.mrb[0].mxu0
    %2538 = vmatprep.mubr.bf16.mxu0 0
    %2539 = vmatmul.mubr.bf16.gmra.mrb[0].mxu0 %v2316
    %v2540 = vpop.f32.mrb[0].mxu0
    %v2541 = vadd.f32 0.0, %v2540
    %v2542 = vpop.f32.mrb[0].mxu0
    %v2543 = vpop.f32.mrb[0].mxu0
    %v2544 = vadd.f32 0.0, %v2543
    %v2545 = vpop.f32.mrb[0].mxu0
    %2546 = vmatprep.mubr.bf16.mxu0 0
    %2547 = vmatmul.mubr.bf16.gmra.mrb[0].mxu0 %v2319
    %v2548 = vpop.f32.mrb[0].mxu0
    %v2549 = vadd.f32 0.0, %v2548
    %v2550 = vpop.f32.mrb[0].mxu0
    %v2551 = vpop.f32.mrb[0].mxu0
    %v2552 = vadd.f32 0.0, %v2551
    %v2553 = vpop.f32.mrb[0].mxu0
    %2554 = vmatprep.mubr.bf16.mxu0 0
    %2555 = vmatmul.mubr.bf16.gmra.mrb[0].mxu0 %v2322
    %v2556 = vpop.f32.mrb[0].mxu0
    %v2557 = vadd.f32 0.0, %v2556
    %v2558 = vpop.f32.mrb[0].mxu0
    %v2559 = vpop.f32.mrb[0].mxu0
    %v2560 = vadd.f32 0.0, %v2559
    %v2561 = vpop.f32.mrb[0].mxu0
    %2562 = vmatprep.mubr.bf16.mxu0 0
    %2563 = vmatmul.mubr.bf16.gmra.mrb[0].mxu0 %v2325
    %v2564 = vpop.f32.mrb[0].mxu0
    %v2565 = vadd.f32 0.0, %v2564
    %v2566 = vpop.f32.mrb[0].mxu0
    %v2567 = vpop.f32.mrb[0].mxu0
    %v2568 = vadd.f32 0.0, %v2567
    %v2569 = vpop.f32.mrb[0].mxu0
    %2570 = vmatprep.mubr.bf16.mxu0 0
    %2571 = vmatmul.mubr.bf16.gmra.mrb[0].mxu0 %v2328
    %v2572 = vpop.f32.mrb[0].mxu0
    %v2573 = vadd.f32 0.0, %v2572
    %v2574 = vpop.f32.mrb[0].mxu0
    %v2575 = vpop.f32.mrb[0].mxu0
    %v2576 = vadd.f32 0.0, %v2575
    %v2577 = vpop.f32.mrb[0].mxu0
    %2578 = vmatprep.mubr.bf16.mxu0 0
    %2579 = vmatmul.mubr.bf16.gmra.mrb[0].mxu0 %v2331
    %v2580 = vpop.f32.mrb[0].mxu0
    %v2581 = vadd.f32 0.0, %v2580
    %v2582 = vpop.f32.mrb[0].mxu0
    %v2583 = vpop.f32.mrb[0].mxu0
    %v2584 = vadd.f32 0.0, %v2583
    %v2585 = vpop.f32.mrb[0].mxu0
    %2586 = vmatprep.mubr.bf16.mxu0 0
    %2587 = vmatmul.mubr.bf16.gmra.mrb[0].mxu0 %v2334
    %v2588 = vpop.f32.mrb[0].mxu0
    %v2589 = vadd.f32 0.0, %v2588
    %v2590 = vpop.f32.mrb[0].mxu0
    %v2591 = vpop.f32.mrb[0].mxu0
    %v2592 = vadd.f32 0.0, %v2591
    %v2593 = vpop.f32.mrb[0].mxu0
    %2594 = vmatprep.mubr.bf16.mxu0 0
    %2595 = vmatmul.mubr.bf16.gmra.mrb[0].mxu0 %v2337
    %v2596 = vpop.f32.mrb[0].mxu0
    %v2597 = vadd.f32 0.0, %v2596
    %v2598 = vpop.f32.mrb[0].mxu0
    %v2599 = vpop.f32.mrb[0].mxu0
    %v2600 = vadd.f32 0.0, %v2599
    %v2601 = vpop.f32.mrb[0].mxu0
    %2602 = vmatprep.mubr.bf16.mxu0 0
    %2603 = vmatmul.mubr.bf16.gmra.mrb[0].mxu0 %v2340
    %v2604 = vpop.f32.mrb[0].mxu0
    %v2605 = vadd.f32 0.0, %v2604
    %v2606 = vpop.f32.mrb[0].mxu0
    %v2607 = vpop.f32.mrb[0].mxu0
    %v2608 = vadd.f32 0.0, %v2607
    %v2609 = vpop.f32.mrb[0].mxu0
    %2610 = vmatprep.mubr.bf16.mxu0 0
    %2611 = vmatmul.mubr.bf16.gmra.mrb[0].mxu0 %v2343
    %v2612 = vpop.f32.mrb[0].mxu0
    %v2613 = vadd.f32 0.0, %v2612
    %v2614 = vpop.f32.mrb[0].mxu0
    %v2615 = vpop.f32.mrb[0].mxu0
    %v2616 = vadd.f32 0.0, %v2615
    %v2617 = vpop.f32.mrb[0].mxu0
    %2618 = vmatprep.mubr.bf16.mxu0 0
    %2619 = vmatmul.mubr.bf16.gmra.mrb[0].mxu0 %v2346
    %v2620 = vpop.f32.mrb[0].mxu0
    %v2621 = vadd.f32 0.0, %v2620
    %v2622 = vpop.f32.mrb[0].mxu0
    %v2623 = vpop.f32.mrb[0].mxu0
    %v2624 = vadd.f32 0.0, %v2623
    %v2625 = vpop.f32.mrb[0].mxu0
    %2626 = vmatprep.mubr.bf16.mxu0 0
    %2627 = vmatmul.mubr.bf16.gmra.mrb[0].mxu0 %v2349
    %v2628 = vpop.f32.mrb[0].mxu0
    %v2629 = vadd.f32 0.0, %v2628
    %v2630 = vpop.f32.mrb[0].mxu0
    %v2631 = vpop.f32.mrb[0].mxu0
    %v2632 = vadd.f32 0.0, %v2631
    %v2633 = vpop.f32.mrb[0].mxu0
    %2634 = vmatprep.mubr.bf16.mxu0 0
    %2635 = vmatmul.mubr.bf16.gmra.mrb[0].mxu0 %v2352
    %v2636 = vpop.f32.mrb[0].mxu0
    %v2637 = vadd.f32 0.0, %v2636
    %v2638 = vpop.f32.mrb[0].mxu0
    %v2639 = vpop.f32.mrb[0].mxu0
    %v2640 = vadd.f32 0.0, %v2639
    %v2641 = vpop.f32.mrb[0].mxu0
    %2642 = vdwg.mxu0
    %v2643 = vadd.f32 %v2082, %v2389
    %v2644 = vadd.f32 %v2083, %v2392
    %v2645 = vadd.f32 %v2084, %v2397
    %v2646 = vadd.f32 %v2085, %v2400
    %v2647 = vadd.f32 %v2086, %v2405
    %v2648 = vadd.f32 %v2087, %v2408
    %v2649 = vadd.f32 %v2088, %v2413
    %v2650 = vadd.f32 %v2089, %v2416
    %v2651 = vadd.f32 %v2090, %v2421
    %v2652 = vadd.f32 %v2091, %v2424
    %v2653 = vadd.f32 %v2092, %v2429
    %v2654 = vadd.f32 %v2093, %v2432
    %v2655 = vadd.f32 %v2094, %v2437
    %v2656 = vadd.f32 %v2095, %v2440
    %v2657 = vadd.f32 %v2096, %v2445
    %v2658 = vadd.f32 %v2097, %v2448
    %v2659 = vadd.f32 %v2098, %v2453
    %v2660 = vadd.f32 %v2099, %v2456
    %v2661 = vadd.f32 %v2100, %v2461
    %v2662 = vadd.f32 %v2101, %v2464
    %v2663 = vadd.f32 %v2102, %v2469
    %v2664 = vadd.f32 %v2103, %v2472
    %v2665 = vadd.f32 %v2104, %v2477
    %v2666 = vadd.f32 %v2105, %v2480
    %v2667 = vadd.f32 %v2106, %v2485
    %v2668 = vadd.f32 %v2107, %v2488
    %v2669 = vadd.f32 %v2108, %v2493
    %v2670 = vadd.f32 %v2109, %v2496
    %v2671 = vadd.f32 %v2110, %v2501
    %v2672 = vadd.f32 %v2111, %v2504
    %v2673 = vadd.f32 %v2112, %v2509
    %v2674 = vadd.f32 %v2113, %v2512
    %v2675 = vadd.f32 %v2114, %v2517
    %v2676 = vadd.f32 %v2115, %v2520
    %v2677 = vadd.f32 %v2116, %v2525
    %v2678 = vadd.f32 %v2117, %v2528
    %v2679 = vadd.f32 %v2118, %v2533
    %v2680 = vadd.f32 %v2119, %v2536
    %v2681 = vadd.f32 %v2120, %v2541
    %v2682 = vadd.f32 %v2121, %v2544
    %v2683 = vadd.f32 %v2122, %v2549
    %v2684 = vadd.f32 %v2123, %v2552
    %v2685 = vadd.f32 %v2124, %v2557
    %v2686 = vadd.f32 %v2125, %v2560
    %v2687 = vadd.f32 %v2126, %v2565
    %v2688 = vadd.f32 %v2127, %v2568
    %v2689 = vadd.f32 %v2128, %v2573
    %v2690 = vadd.f32 %v2129, %v2576
    %v2691 = vadd.f32 %v2130, %v2581
    %v2692 = vadd.f32 %v2131, %v2584
    %v2693 = vadd.f32 %v2132, %v2589
    %v2694 = vadd.f32 %v2133, %v2592
    %v2695 = vadd.f32 %v2134, %v2597
    %v2696 = vadd.f32 %v2135, %v2600
    %v2697 = vadd.f32 %v2136, %v2605
    %v2698 = vadd.f32 %v2137, %v2608
    %v2699 = vadd.f32 %v2138, %v2613
    %v2700 = vadd.f32 %v2139, %v2616
    %v2701 = vadd.f32 %v2140, %v2621
    %v2702 = vadd.f32 %v2141, %v2624
    %v2703 = vadd.f32 %v2142, %v2629
    %v2704 = vadd.f32 %v2143, %v2632
    %v2705 = vadd.f32 %v2144, %v2637
    %v2706 = vadd.f32 %v2145, %v2640
    %v2707 = vld [vmem:[%s1584 + $0x2] sm:$0xff]
    %v2708 = vld [vmem:[%s1584 + $0xa] sm:$0xff]
    %v2709 = vld [vmem:[%s1584 + $0x1a] sm:$0xff]
    %v2710 = vld [vmem:[%s1584 + $0x22] sm:$0xff]
    %v2711 = vld [vmem:[%s1584 + $0x32] sm:$0xff]
    %v2712 = vld [vmem:[%s1584 + $0x3a] sm:$0xff]
    %v2713 = vld [vmem:[%s1584 + $0x4a] sm:$0xff]
    %v2714 = vld [vmem:[%s1584 + $0x52] sm:$0xff]
    %v2715 = vld [vmem:[%s1584 + $0x62] sm:$0xff]
    %v2716 = vld [vmem:[%s1584 + $0x6a] sm:$0xff]
    %v2717 = vld [vmem:[%s1584 + $0x7a] sm:$0xff]
    %v2718 = vld [vmem:[%s1584 + $0x82] sm:$0xff]
    %v2719 = vld [vmem:[%s1584 + $0x92] sm:$0xff]
    %v2720 = vld [vmem:[%s1584 + $0x9a] sm:$0xff]
    %v2721 = vld [vmem:[%s1584 + $0xaa] sm:$0xff]
    %v2722 = vld [vmem:[%s1584 + $0xb2] sm:$0xff]
    %v2723 = vld [vmem:[%s1584 + $0xc2] sm:$0xff]
    %v2724 = vld [vmem:[%s1584 + $0xca] sm:$0xff]
    %v2725 = vld [vmem:[%s1584 + $0xda] sm:$0xff]
    %v2726 = vld [vmem:[%s1584 + $0xe2] sm:$0xff]
    %v2727 = vld [vmem:[%s1584 + $0xf2] sm:$0xff]
    %v2728 = vld [vmem:[%s1584 + $0xfa] sm:$0xff]
    %v2729 = vld [vmem:[%s1584 + $0x10a] sm:$0xff]
    %v2730 = vld [vmem:[%s1584 + $0x112] sm:$0xff]
    %v2731 = vld [vmem:[%s1584 + $0x122] sm:$0xff]
    %v2732 = vld [vmem:[%s1584 + $0x12a] sm:$0xff]
    %v2733 = vld [vmem:[%s1584 + $0x13a] sm:$0xff]
    %v2734 = vld [vmem:[%s1584 + $0x142] sm:$0xff]
    %v2735 = vld [vmem:[%s1584 + $0x152] sm:$0xff]
    %v2736 = vld [vmem:[%s1584 + $0x15a] sm:$0xff]
    %v2737 = vld [vmem:[%s1584 + $0x16a] sm:$0xff]
    %v2738 = vld [vmem:[%s1584 + $0x172] sm:$0xff]
    %v2739 = vld [vmem:[%s1584 + $0x1b2] sm:$0xff]
    %v2740 = vld [vmem:[%s1584 + $0x1ba] sm:$0xff]
    %v2741 = vld [vmem:[%s1584 + $0x1ca] sm:$0xff]
    %v2742 = vld [vmem:[%s1584 + $0x1d2] sm:$0xff]
    %v2743 = vld [vmem:[%s1584 + $0x1e2] sm:$0xff]
    %v2744 = vld [vmem:[%s1584 + $0x1ea] sm:$0xff]
    %v2745 = vld [vmem:[%s1584 + $0x1fa] sm:$0xff]
    %v2746 = vld [vmem:[%s1584 + $0x202] sm:$0xff]
    %v2747 = vld [vmem:[%s1584 + $0x212] sm:$0xff]
    %v2748 = vld [vmem:[%s1584 + $0x21a] sm:$0xff]
    %v2749 = vld [vmem:[%s1584 + $0x22a] sm:$0xff]
    %v2750 = vld [vmem:[%s1584 + $0x232] sm:$0xff]
    %v2751 = vld [vmem:[%s1584 + $0x242] sm:$0xff]
    %v2752 = vld [vmem:[%s1584 + $0x24a] sm:$0xff]
    %v2753 = vld [vmem:[%s1584 + $0x25a] sm:$0xff]
    %v2754 = vld [vmem:[%s1584 + $0x262] sm:$0xff]
    %v2755 = vld [vmem:[%s1584 + $0x272] sm:$0xff]
    %v2756 = vld [vmem:[%s1584 + $0x27a] sm:$0xff]
    %v2757 = vld [vmem:[%s1584 + $0x28a] sm:$0xff]
    %v2758 = vld [vmem:[%s1584 + $0x292] sm:$0xff]
    %v2759 = vld [vmem:[%s1584 + $0x2a2] sm:$0xff]
    %v2760 = vld [vmem:[%s1584 + $0x2aa] sm:$0xff]
    %v2761 = vld [vmem:[%s1584 + $0x2ba] sm:$0xff]
    %v2762 = vld [vmem:[%s1584 + $0x2c2] sm:$0xff]
    %v2763 = vld [vmem:[%s1584 + $0x2d2] sm:$0xff]
    %v2764 = vld [vmem:[%s1584 + $0x2da] sm:$0xff]
    %v2765 = vld [vmem:[%s1584 + $0x2ea] sm:$0xff]
    %v2766 = vld [vmem:[%s1584 + $0x2f2] sm:$0xff]
    %v2767 = vld [vmem:[%s1584 + $0x302] sm:$0xff]
    %v2768 = vld [vmem:[%s1584 + $0x30a] sm:$0xff]
    %v2769 = vld [vmem:[%s1584 + $0x31a] sm:$0xff]
    %v2770 = vld [vmem:[%s1584 + $0x322] sm:$0xff]
    %v2771 = vpack.c.bf16 %v2708, %v2707
    %v2772 = vpack.c.bf16 %v2710, %v2709
    %v2773 = vpack.c.bf16 %v2712, %v2711
    %v2774 = vpack.c.bf16 %v2714, %v2713
    %v2775 = vpack.c.bf16 %v2716, %v2715
    %v2776 = vpack.c.bf16 %v2718, %v2717
    %v2777 = vpack.c.bf16 %v2720, %v2719
    %v2778 = vpack.c.bf16 %v2722, %v2721
    %v2779 = vpack.c.bf16 %v2724, %v2723
    %v2780 = vpack.c.bf16 %v2726, %v2725
    %v2781 = vpack.c.bf16 %v2728, %v2727
    %v2782 = vpack.c.bf16 %v2730, %v2729
    %v2783 = vpack.c.bf16 %v2732, %v2731
    %v2784 = vpack.c.bf16 %v2734, %v2733
    %v2785 = vpack.c.bf16 %v2736, %v2735
    %v2786 = vpack.c.bf16 %v2738, %v2737
    %v2787 = vpack.c.bf16 %v2740, %v2739
    %v2788 = vpack.c.bf16 %v2742, %v2741
    %v2789 = vpack.c.bf16 %v2744, %v2743
    %v2790 = vpack.c.bf16 %v2746, %v2745
    %v2791 = vpack.c.bf16 %v2748, %v2747
    %v2792 = vpack.c.bf16 %v2750, %v2749
    %v2793 = vpack.c.bf16 %v2752, %v2751
    %v2794 = vpack.c.bf16 %v2754, %v2753
    %v2795 = vpack.c.bf16 %v2756, %v2755
    %v2796 = vpack.c.bf16 %v2758, %v2757
    %v2797 = vpack.c.bf16 %v2760, %v2759
    %v2798 = vpack.c.bf16 %v2762, %v2761
    %v2799 = vpack.c.bf16 %v2764, %v2763
    %v2800 = vpack.c.bf16 %v2766, %v2765
    %v2801 = vpack.c.bf16 %v2768, %v2767
    %v2802 = vpack.c.bf16 %v2770, %v2769
    %v2803 = vld [vmem:[%s1 + $0x50] sm:$0xf]
    %v2804 = vld [vmem:[%s1 + $0x54] sm:$0xf]
    %v2805 = vld [vmem:[%s1 + $0x58] sm:$0xf]
    %v2806 = vld [vmem:[%s1 + $0x5c] sm:$0xf]
    %v2811 = vunpack.c.l.b16 %v2803
    %v2812 = vunpack.c.l.b16 %v2804
    %v2813 = vunpack.c.l.b16 %v2805
    %v2814 = vunpack.c.l.b16 %v2806
    %v2815 = vpack.c.b16 %v2812, %v2811
    %v2816 = vpack.c.b16 %v2814, %v2813
    %v2820 = vsel %vm240, %v2771, 0
    %v2823 = vsel %vm240, %v2772, 0
    %v2826 = vsel %vm240, %v2773, 0
    %v2829 = vsel %vm240, %v2774, 0
    %v2832 = vsel %vm240, %v2775, 0
    %v2835 = vsel %vm240, %v2776, 0
    %v2838 = vsel %vm240, %v2777, 0
    %v2841 = vsel %vm240, %v2778, 0
    %v2844 = vsel %vm240, %v2779, 0
    %v2847 = vsel %vm240, %v2780, 0
    %v2850 = vsel %vm240, %v2781, 0
    %v2853 = vsel %vm240, %v2782, 0
    %v2856 = vsel %vm240, %v2783, 0
    %v2859 = vsel %vm240, %v2784, 0
    %v2862 = vsel %vm240, %v2785, 0
    %v2865 = vsel %vm240, %v2786, 0
    %v2868 = vsel %vm240, %v2787, 0
    %v2871 = vsel %vm240, %v2788, 0
    %v2874 = vsel %vm240, %v2789, 0
    %v2877 = vsel %vm240, %v2790, 0
    %v2880 = vsel %vm240, %v2791, 0
    %v2883 = vsel %vm240, %v2792, 0
    %v2886 = vsel %vm240, %v2793, 0
    %v2889 = vsel %vm240, %v2794, 0
    %v2892 = vsel %vm240, %v2795, 0
    %v2895 = vsel %vm240, %v2796, 0
    %v2898 = vsel %vm240, %v2797, 0
    %v2901 = vsel %vm240, %v2798, 0
    %v2904 = vsel %vm240, %v2799, 0
    %v2907 = vsel %vm240, %v2800, 0
    %v2910 = vsel %vm240, %v2801, 0
    %v2913 = vsel %vm240, %v2802, 0
    %2915 = vmatprep.subr.bf16.mxu0 0
    %2916 = vmatpush1.bf16.msra.mxu0 %v2815
    %2917 = vmatprep.subr.bf16.mxu0 0
    %2918 = vmatpush1.bf16.msra.mxu0 %v2816
    %2919 = vmatprep.subr.bf16.mxu0 0
    %2920 = vmatpush1.bf16.msra.mxu0 0
    %2921 = vmatprep.subr.bf16.mxu0 0
    %2922 = vmatpush1.bf16.msra.mxu0 0
    %2923 = vmatprep.subr.bf16.mxu0 0
    %2924 = vmatpush1.bf16.msra.mxu0 0
    %2925 = vmatprep.subr.bf16.mxu0 0
    %2926 = vmatpush1.bf16.msra.mxu0 0
    %2927 = vmatprep.subr.bf16.mxu0 0
    %2928 = vmatpush1.bf16.msra.mxu0 0
    %2929 = vmatprep.subr.bf16.mxu0 0
    %2930 = vmatpush1.bf16.msra.mxu0 0
    %2931 = vmatprep.subr.bf16.mxu0 0
    %2932 = vmatpush1.bf16.msra.mxu0 0
    %2933 = vmatprep.subr.bf16.mxu0 0
    %2934 = vmatpush1.bf16.msra.mxu0 0
    %2935 = vmatprep.subr.bf16.mxu0 0
    %2936 = vmatpush1.bf16.msra.mxu0 0
    %2937 = vmatprep.subr.bf16.mxu0 0
    %2938 = vmatpush1.bf16.msra.mxu0 0
    %2939 = vmatprep.subr.bf16.mxu0 0
    %2940 = vmatpush1.bf16.msra.mxu0 0
    %2941 = vmatprep.subr.bf16.mxu0 0
    %2942 = vmatpush1.bf16.msra.mxu0 0
    %2943 = vmatprep.subr.bf16.mxu0 0
    %2944 = vmatpush1.bf16.msra.mxu0 0
    %2945 = vmatprep.subr.bf16.mxu0 0
    %2946 = vmatpush1.bf16.msra.mxu0 0
    %2947 = vmatprep.mubr.bf16.mxu0 0
    %2948 = vmatmul.mubr.bf16.gmra.mrb[0].mxu0 %v2820
    %v2949 = vpop.f32.mrb[0].mxu0
    %v2950 = vadd.f32 0.0, %v2949
    %v2951 = vpop.f32.mrb[0].mxu0
    %v2952 = vpop.f32.mrb[0].mxu0
    %v2953 = vadd.f32 0.0, %v2952
    %v2954 = vpop.f32.mrb[0].mxu0
    %2955 = vmatprep.mubr.bf16.mxu0 0
    %2956 = vmatmul.mubr.bf16.gmra.mrb[0].mxu0 %v2823
    %v2957 = vpop.f32.mrb[0].mxu0
    %v2958 = vadd.f32 0.0, %v2957
    %v2959 = vpop.f32.mrb[0].mxu0
    %v2960 = vpop.f32.mrb[0].mxu0
    %v2961 = vadd.f32 0.0, %v2960
    %v2962 = vpop.f32.mrb[0].mxu0
    %2963 = vmatprep.mubr.bf16.mxu0 0
    %2964 = vmatmul.mubr.bf16.gmra.mrb[0].mxu0 %v2826
    %v2965 = vpop.f32.mrb[0].mxu0
    %v2966 = vadd.f32 0.0, %v2965
    %v2967 = vpop.f32.mrb[0].mxu0
    %v2968 = vpop.f32.mrb[0].mxu0
    %v2969 = vadd.f32 0.0, %v2968
    %v2970 = vpop.f32.mrb[0].mxu0
    %2971 = vmatprep.mubr.bf16.mxu0 0
    %2972 = vmatmul.mubr.bf16.gmra.mrb[0].mxu0 %v2829
    %v2973 = vpop.f32.mrb[0].mxu0
    %v2974 = vadd.f32 0.0, %v2973
    %v2975 = vpop.f32.mrb[0].mxu0
    %v2976 = vpop.f32.mrb[0].mxu0
    %v2977 = vadd.f32 0.0, %v2976
    %v2978 = vpop.f32.mrb[0].mxu0
    %2979 = vmatprep.mubr.bf16.mxu0 0
    %2980 = vmatmul.mubr.bf16.gmra.mrb[0].mxu0 %v2832
    %v2981 = vpop.f32.mrb[0].mxu0
    %v2982 = vadd.f32 0.0, %v2981
    %v2983 = vpop.f32.mrb[0].mxu0
    %v2984 = vpop.f32.mrb[0].mxu0
    %v2985 = vadd.f32 0.0, %v2984
    %v2986 = vpop.f32.mrb[0].mxu0
    %2987 = vmatprep.mubr.bf16.mxu0 0
    %2988 = vmatmul.mubr.bf16.gmra.mrb[0].mxu0 %v2835
    %v2989 = vpop.f32.mrb[0].mxu0
    %v2990 = vadd.f32 0.0, %v2989
    %v2991 = vpop.f32.mrb[0].mxu0
    %v2992 = vpop.f32.mrb[0].mxu0
    %v2993 = vadd.f32 0.0, %v2992
    %v2994 = vpop.f32.mrb[0].mxu0
    %2995 = vmatprep.mubr.bf16.mxu0 0
    %2996 = vmatmul.mubr.bf16.gmra.mrb[0].mxu0 %v2838
    %v2997 = vpop.f32.mrb[0].mxu0
    %v2998 = vadd.f32 0.0, %v2997
    %v2999 = vpop.f32.mrb[0].mxu0
    %v3000 = vpop.f32.mrb[0].mxu0
    %v3001 = vadd.f32 0.0, %v3000
    %v3002 = vpop.f32.mrb[0].mxu0
    %3003 = vmatprep.mubr.bf16.mxu0 0
    %3004 = vmatmul.mubr.bf16.gmra.mrb[0].mxu0 %v2841
    %v3005 = vpop.f32.mrb[0].mxu0
    %v3006 = vadd.f32 0.0, %v3005
    %v3007 = vpop.f32.mrb[0].mxu0
    %v3008 = vpop.f32.mrb[0].mxu0
    %v3009 = vadd.f32 0.0, %v3008
    %v3010 = vpop.f32.mrb[0].mxu0
    %3011 = vmatprep.mubr.bf16.mxu0 0
    %3012 = vmatmul.mubr.bf16.gmra.mrb[0].mxu0 %v2844
    %v3013 = vpop.f32.mrb[0].mxu0
    %v3014 = vadd.f32 0.0, %v3013
    %v3015 = vpop.f32.mrb[0].mxu0
    %v3016 = vpop.f32.mrb[0].mxu0
    %v3017 = vadd.f32 0.0, %v3016
    %v3018 = vpop.f32.mrb[0].mxu0
    %3019 = vmatprep.mubr.bf16.mxu0 0
    %3020 = vmatmul.mubr.bf16.gmra.mrb[0].mxu0 %v2847
    %v3021 = vpop.f32.mrb[0].mxu0
    %v3022 = vadd.f32 0.0, %v3021
    %v3023 = vpop.f32.mrb[0].mxu0
    %v3024 = vpop.f32.mrb[0].mxu0
    %v3025 = vadd.f32 0.0, %v3024
    %v3026 = vpop.f32.mrb[0].mxu0
    %3027 = vmatprep.mubr.bf16.mxu0 0
    %3028 = vmatmul.mubr.bf16.gmra.mrb[0].mxu0 %v2850
    %v3029 = vpop.f32.mrb[0].mxu0
    %v3030 = vadd.f32 0.0, %v3029
    %v3031 = vpop.f32.mrb[0].mxu0
    %v3032 = vpop.f32.mrb[0].mxu0
    %v3033 = vadd.f32 0.0, %v3032
    %v3034 = vpop.f32.mrb[0].mxu0
    %3035 = vmatprep.mubr.bf16.mxu0 0
    %3036 = vmatmul.mubr.bf16.gmra.mrb[0].mxu0 %v2853
    %v3037 = vpop.f32.mrb[0].mxu0
    %v3038 = vadd.f32 0.0, %v3037
    %v3039 = vpop.f32.mrb[0].mxu0
    %v3040 = vpop.f32.mrb[0].mxu0
    %v3041 = vadd.f32 0.0, %v3040
    %v3042 = vpop.f32.mrb[0].mxu0
    %3043 = vmatprep.mubr.bf16.mxu0 0
    %3044 = vmatmul.mubr.bf16.gmra.mrb[0].mxu0 %v2856
    %v3045 = vpop.f32.mrb[0].mxu0
    %v3046 = vadd.f32 0.0, %v3045
    %v3047 = vpop.f32.mrb[0].mxu0
    %v3048 = vpop.f32.mrb[0].mxu0
    %v3049 = vadd.f32 0.0, %v3048
    %v3050 = vpop.f32.mrb[0].mxu0
    %3051 = vmatprep.mubr.bf16.mxu0 0
    %3052 = vmatmul.mubr.bf16.gmra.mrb[0].mxu0 %v2859
    %v3053 = vpop.f32.mrb[0].mxu0
    %v3054 = vadd.f32 0.0, %v3053
    %v3055 = vpop.f32.mrb[0].mxu0
    %v3056 = vpop.f32.mrb[0].mxu0
    %v3057 = vadd.f32 0.0, %v3056
    %v3058 = vpop.f32.mrb[0].mxu0
    %3059 = vmatprep.mubr.bf16.mxu0 0
    %3060 = vmatmul.mubr.bf16.gmra.mrb[0].mxu0 %v2862
    %v3061 = vpop.f32.mrb[0].mxu0
    %v3062 = vadd.f32 0.0, %v3061
    %v3063 = vpop.f32.mrb[0].mxu0
    %v3064 = vpop.f32.mrb[0].mxu0
    %v3065 = vadd.f32 0.0, %v3064
    %v3066 = vpop.f32.mrb[0].mxu0
    %3067 = vmatprep.mubr.bf16.mxu0 0
    %3068 = vmatmul.mubr.bf16.gmra.mrb[0].mxu0 %v2865
    %v3069 = vpop.f32.mrb[0].mxu0
    %v3070 = vadd.f32 0.0, %v3069
    %v3071 = vpop.f32.mrb[0].mxu0
    %v3072 = vpop.f32.mrb[0].mxu0
    %v3073 = vadd.f32 0.0, %v3072
    %v3074 = vpop.f32.mrb[0].mxu0
    %3075 = vmatprep.mubr.bf16.mxu0 0
    %3076 = vmatmul.mubr.bf16.gmra.mrb[0].mxu0 %v2868
    %v3077 = vpop.f32.mrb[0].mxu0
    %v3078 = vadd.f32 0.0, %v3077
    %v3079 = vpop.f32.mrb[0].mxu0
    %v3080 = vpop.f32.mrb[0].mxu0
    %v3081 = vadd.f32 0.0, %v3080
    %v3082 = vpop.f32.mrb[0].mxu0
    %3083 = vmatprep.mubr.bf16.mxu0 0
    %3084 = vmatmul.mubr.bf16.gmra.mrb[0].mxu0 %v2871
    %v3085 = vpop.f32.mrb[0].mxu0
    %v3086 = vadd.f32 0.0, %v3085
    %v3087 = vpop.f32.mrb[0].mxu0
    %v3088 = vpop.f32.mrb[0].mxu0
    %v3089 = vadd.f32 0.0, %v3088
    %v3090 = vpop.f32.mrb[0].mxu0
    %3091 = vmatprep.mubr.bf16.mxu0 0
    %3092 = vmatmul.mubr.bf16.gmra.mrb[0].mxu0 %v2874
    %v3093 = vpop.f32.mrb[0].mxu0
    %v3094 = vadd.f32 0.0, %v3093
    %v3095 = vpop.f32.mrb[0].mxu0
    %v3096 = vpop.f32.mrb[0].mxu0
    %v3097 = vadd.f32 0.0, %v3096
    %v3098 = vpop.f32.mrb[0].mxu0
    %3099 = vmatprep.mubr.bf16.mxu0 0
    %3100 = vmatmul.mubr.bf16.gmra.mrb[0].mxu0 %v2877
    %v3101 = vpop.f32.mrb[0].mxu0
    %v3102 = vadd.f32 0.0, %v3101
    %v3103 = vpop.f32.mrb[0].mxu0
    %v3104 = vpop.f32.mrb[0].mxu0
    %v3105 = vadd.f32 0.0, %v3104
    %v3106 = vpop.f32.mrb[0].mxu0
    %3107 = vmatprep.mubr.bf16.mxu0 0
    %3108 = vmatmul.mubr.bf16.gmra.mrb[0].mxu0 %v2880
    %v3109 = vpop.f32.mrb[0].mxu0
    %v3110 = vadd.f32 0.0, %v3109
    %v3111 = vpop.f32.mrb[0].mxu0
    %v3112 = vpop.f32.mrb[0].mxu0
    %v3113 = vadd.f32 0.0, %v3112
    %v3114 = vpop.f32.mrb[0].mxu0
    %3115 = vmatprep.mubr.bf16.mxu0 0
    %3116 = vmatmul.mubr.bf16.gmra.mrb[0].mxu0 %v2883
    %v3117 = vpop.f32.mrb[0].mxu0
    %v3118 = vadd.f32 0.0, %v3117
    %v3119 = vpop.f32.mrb[0].mxu0
    %v3120 = vpop.f32.mrb[0].mxu0
    %v3121 = vadd.f32 0.0, %v3120
    %v3122 = vpop.f32.mrb[0].mxu0
    %3123 = vmatprep.mubr.bf16.mxu0 0
    %3124 = vmatmul.mubr.bf16.gmra.mrb[0].mxu0 %v2886
    %v3125 = vpop.f32.mrb[0].mxu0
    %v3126 = vadd.f32 0.0, %v3125
    %v3127 = vpop.f32.mrb[0].mxu0
    %v3128 = vpop.f32.mrb[0].mxu0
    %v3129 = vadd.f32 0.0, %v3128
    %v3130 = vpop.f32.mrb[0].mxu0
    %3131 = vmatprep.mubr.bf16.mxu0 0
    %3132 = vmatmul.mubr.bf16.gmra.mrb[0].mxu0 %v2889
    %v3133 = vpop.f32.mrb[0].mxu0
    %v3134 = vadd.f32 0.0, %v3133
    %v3135 = vpop.f32.mrb[0].mxu0
    %v3136 = vpop.f32.mrb[0].mxu0
    %v3137 = vadd.f32 0.0, %v3136
    %v3138 = vpop.f32.mrb[0].mxu0
    %3139 = vmatprep.mubr.bf16.mxu0 0
    %3140 = vmatmul.mubr.bf16.gmra.mrb[0].mxu0 %v2892
    %v3141 = vpop.f32.mrb[0].mxu0
    %v3142 = vadd.f32 0.0, %v3141
    %v3143 = vpop.f32.mrb[0].mxu0
    %v3144 = vpop.f32.mrb[0].mxu0
    %v3145 = vadd.f32 0.0, %v3144
    %v3146 = vpop.f32.mrb[0].mxu0
    %3147 = vmatprep.mubr.bf16.mxu0 0
    %3148 = vmatmul.mubr.bf16.gmra.mrb[0].mxu0 %v2895
    %v3149 = vpop.f32.mrb[0].mxu0
    %v3150 = vadd.f32 0.0, %v3149
    %v3151 = vpop.f32.mrb[0].mxu0
    %v3152 = vpop.f32.mrb[0].mxu0
    %v3153 = vadd.f32 0.0, %v3152
    %v3154 = vpop.f32.mrb[0].mxu0
    %3155 = vmatprep.mubr.bf16.mxu0 0
    %3156 = vmatmul.mubr.bf16.gmra.mrb[0].mxu0 %v2898
    %v3157 = vpop.f32.mrb[0].mxu0
    %v3158 = vadd.f32 0.0, %v3157
    %v3159 = vpop.f32.mrb[0].mxu0
    %v3160 = vpop.f32.mrb[0].mxu0
    %v3161 = vadd.f32 0.0, %v3160
    %v3162 = vpop.f32.mrb[0].mxu0
    %3163 = vmatprep.mubr.bf16.mxu0 0
    %3164 = vmatmul.mubr.bf16.gmra.mrb[0].mxu0 %v2901
    %v3165 = vpop.f32.mrb[0].mxu0
    %v3166 = vadd.f32 0.0, %v3165
    %v3167 = vpop.f32.mrb[0].mxu0
    %v3168 = vpop.f32.mrb[0].mxu0
    %v3169 = vadd.f32 0.0, %v3168
    %v3170 = vpop.f32.mrb[0].mxu0
    %3171 = vmatprep.mubr.bf16.mxu0 0
    %3172 = vmatmul.mubr.bf16.gmra.mrb[0].mxu0 %v2904
    %v3173 = vpop.f32.mrb[0].mxu0
    %v3174 = vadd.f32 0.0, %v3173
    %v3175 = vpop.f32.mrb[0].mxu0
    %v3176 = vpop.f32.mrb[0].mxu0
    %v3177 = vadd.f32 0.0, %v3176
    %v3178 = vpop.f32.mrb[0].mxu0
    %3179 = vmatprep.mubr.bf16.mxu0 0
    %3180 = vmatmul.mubr.bf16.gmra.mrb[0].mxu0 %v2907
    %v3181 = vpop.f32.mrb[0].mxu0
    %v3182 = vadd.f32 0.0, %v3181
    %v3183 = vpop.f32.mrb[0].mxu0
    %v3184 = vpop.f32.mrb[0].mxu0
    %v3185 = vadd.f32 0.0, %v3184
    %v3186 = vpop.f32.mrb[0].mxu0
    %3187 = vmatprep.mubr.bf16.mxu0 0
    %3188 = vmatmul.mubr.bf16.gmra.mrb[0].mxu0 %v2910
    %v3189 = vpop.f32.mrb[0].mxu0
    %v3190 = vadd.f32 0.0, %v3189
    %v3191 = vpop.f32.mrb[0].mxu0
    %v3192 = vpop.f32.mrb[0].mxu0
    %v3193 = vadd.f32 0.0, %v3192
    %v3194 = vpop.f32.mrb[0].mxu0
    %3195 = vmatprep.mubr.bf16.mxu0 0
    %3196 = vmatmul.mubr.bf16.gmra.mrb[0].mxu0 %v2913
    %v3197 = vpop.f32.mrb[0].mxu0
    %v3198 = vadd.f32 0.0, %v3197
    %v3199 = vpop.f32.mrb[0].mxu0
    %v3200 = vpop.f32.mrb[0].mxu0
    %v3201 = vadd.f32 0.0, %v3200
    %v3202 = vpop.f32.mrb[0].mxu0
    %3203 = vdwg.mxu0
    %v3204 = vadd.f32 %v2643, %v2950
    %v3205 = vadd.f32 %v2644, %v2953
    %v3206 = vadd.f32 %v2645, %v2958
    %v3207 = vadd.f32 %v2646, %v2961
    %v3208 = vadd.f32 %v2647, %v2966
    %v3209 = vadd.f32 %v2648, %v2969
    %v3210 = vadd.f32 %v2649, %v2974
    %v3211 = vadd.f32 %v2650, %v2977
    %v3212 = vadd.f32 %v2651, %v2982
    %v3213 = vadd.f32 %v2652, %v2985
    %v3214 = vadd.f32 %v2653, %v2990
    %v3215 = vadd.f32 %v2654, %v2993
    %v3216 = vadd.f32 %v2655, %v2998
    %v3217 = vadd.f32 %v2656, %v3001
    %v3218 = vadd.f32 %v2657, %v3006
    %v3219 = vadd.f32 %v2658, %v3009
    %v3220 = vadd.f32 %v2659, %v3014
    %v3221 = vadd.f32 %v2660, %v3017
    %v3222 = vadd.f32 %v2661, %v3022
    %v3223 = vadd.f32 %v2662, %v3025
    %v3224 = vadd.f32 %v2663, %v3030
    %v3225 = vadd.f32 %v2664, %v3033
    %v3226 = vadd.f32 %v2665, %v3038
    %v3227 = vadd.f32 %v2666, %v3041
    %v3228 = vadd.f32 %v2667, %v3046
    %v3229 = vadd.f32 %v2668, %v3049
    %v3230 = vadd.f32 %v2669, %v3054
    %v3231 = vadd.f32 %v2670, %v3057
    %v3232 = vadd.f32 %v2671, %v3062
    %v3233 = vadd.f32 %v2672, %v3065
    %v3234 = vadd.f32 %v2673, %v3070
    %v3235 = vadd.f32 %v2674, %v3073
    %v3236 = vadd.f32 %v2675, %v3078
    %v3237 = vadd.f32 %v2676, %v3081
    %v3238 = vadd.f32 %v2677, %v3086
    %v3239 = vadd.f32 %v2678, %v3089
    %v3240 = vadd.f32 %v2679, %v3094
    %v3241 = vadd.f32 %v2680, %v3097
    %v3242 = vadd.f32 %v2681, %v3102
    %v3243 = vadd.f32 %v2682, %v3105
    %v3244 = vadd.f32 %v2683, %v3110
    %v3245 = vadd.f32 %v2684, %v3113
    %v3246 = vadd.f32 %v2685, %v3118
    %v3247 = vadd.f32 %v2686, %v3121
    %v3248 = vadd.f32 %v2687, %v3126
    %v3249 = vadd.f32 %v2688, %v3129
    %v3250 = vadd.f32 %v2689, %v3134
    %v3251 = vadd.f32 %v2690, %v3137
    %v3252 = vadd.f32 %v2691, %v3142
    %v3253 = vadd.f32 %v2692, %v3145
    %v3254 = vadd.f32 %v2693, %v3150
    %v3255 = vadd.f32 %v2694, %v3153
    %v3256 = vadd.f32 %v2695, %v3158
    %v3257 = vadd.f32 %v2696, %v3161
    %v3258 = vadd.f32 %v2697, %v3166
    %v3259 = vadd.f32 %v2698, %v3169
    %v3260 = vadd.f32 %v2699, %v3174
    %v3261 = vadd.f32 %v2700, %v3177
    %v3262 = vadd.f32 %v2701, %v3182
    %v3263 = vadd.f32 %v2702, %v3185
    %v3264 = vadd.f32 %v2703, %v3190
    %v3265 = vadd.f32 %v2704, %v3193
    %v3266 = vadd.f32 %v2705, %v3198
    %v3267 = vadd.f32 %v2706, %v3201
    %s3268 = scalar_lea.vmem %s0, 48
    %v3269 = vld [vmem:[%s3268] sm:$0xff]
    %v3270 = vld [vmem:[%s3268 + $0x8] sm:$0xff]
    %v3271 = vld [vmem:[%s3268 + $0x18] sm:$0xff]
    %v3272 = vld [vmem:[%s3268 + $0x20] sm:$0xff]
    %v3273 = vld [vmem:[%s3268 + $0x30] sm:$0xff]
    %v3274 = vld [vmem:[%s3268 + $0x38] sm:$0xff]
    %v3275 = vld [vmem:[%s3268 + $0x48] sm:$0xff]
    %v3276 = vld [vmem:[%s3268 + $0x50] sm:$0xff]
    %v3277 = vld [vmem:[%s3268 + $0x60] sm:$0xff]
    %v3278 = vld [vmem:[%s3268 + $0x68] sm:$0xff]
    %v3279 = vld [vmem:[%s3268 + $0x78] sm:$0xff]
    %v3280 = vld [vmem:[%s3268 + $0x80] sm:$0xff]
    %v3281 = vld [vmem:[%s3268 + $0x90] sm:$0xff]
    %v3282 = vld [vmem:[%s3268 + $0x98] sm:$0xff]
    %v3283 = vld [vmem:[%s3268 + $0xa8] sm:$0xff]
    %v3284 = vld [vmem:[%s3268 + $0xb0] sm:$0xff]
    %v3285 = vld [vmem:[%s3268 + $0xc0] sm:$0xff]
    %v3286 = vld [vmem:[%s3268 + $0xc8] sm:$0xff]
    %v3287 = vld [vmem:[%s3268 + $0xd8] sm:$0xff]
    %v3288 = vld [vmem:[%s3268 + $0xe0] sm:$0xff]
    %v3289 = vld [vmem:[%s3268 + $0xf0] sm:$0xff]
    %v3290 = vld [vmem:[%s3268 + $0xf8] sm:$0xff]
    %v3291 = vld [vmem:[%s3268 + $0x108] sm:$0xff]
    %v3292 = vld [vmem:[%s3268 + $0x110] sm:$0xff]
    %v3293 = vld [vmem:[%s3268 + $0x120] sm:$0xff]
    %v3294 = vld [vmem:[%s3268 + $0x128] sm:$0xff]
    %v3295 = vld [vmem:[%s3268 + $0x138] sm:$0xff]
    %v3296 = vld [vmem:[%s3268 + $0x140] sm:$0xff]
    %v3297 = vld [vmem:[%s3268 + $0x150] sm:$0xff]
    %v3298 = vld [vmem:[%s3268 + $0x158] sm:$0xff]
    %v3299 = vld [vmem:[%s3268 + $0x168] sm:$0xff]
    %v3300 = vld [vmem:[%s3268 + $0x170] sm:$0xff]
    %v3301 = vld [vmem:[%s3268 + $0x1b0] sm:$0xff]
    %v3302 = vld [vmem:[%s3268 + $0x1b8] sm:$0xff]
    %v3303 = vld [vmem:[%s3268 + $0x1c8] sm:$0xff]
    %v3304 = vld [vmem:[%s3268 + $0x1d0] sm:$0xff]
    %v3305 = vld [vmem:[%s3268 + $0x1e0] sm:$0xff]
    %v3306 = vld [vmem:[%s3268 + $0x1e8] sm:$0xff]
    %v3307 = vld [vmem:[%s3268 + $0x1f8] sm:$0xff]
    %v3308 = vld [vmem:[%s3268 + $0x200] sm:$0xff]
    %v3309 = vld [vmem:[%s3268 + $0x210] sm:$0xff]
    %v3310 = vld [vmem:[%s3268 + $0x218] sm:$0xff]
    %v3311 = vld [vmem:[%s3268 + $0x228] sm:$0xff]
    %v3312 = vld [vmem:[%s3268 + $0x230] sm:$0xff]
    %v3313 = vld [vmem:[%s3268 + $0x240] sm:$0xff]
    %v3314 = vld [vmem:[%s3268 + $0x248] sm:$0xff]
    %v3315 = vld [vmem:[%s3268 + $0x258] sm:$0xff]
    %v3316 = vld [vmem:[%s3268 + $0x260] sm:$0xff]
    %v3317 = vld [vmem:[%s3268 + $0x270] sm:$0xff]
    %v3318 = vld [vmem:[%s3268 + $0x278] sm:$0xff]
    %v3319 = vld [vmem:[%s3268 + $0x288] sm:$0xff]
    %v3320 = vld [vmem:[%s3268 + $0x290] sm:$0xff]
    %v3321 = vld [vmem:[%s3268 + $0x2a0] sm:$0xff]
    %v3322 = vld [vmem:[%s3268 + $0x2a8] sm:$0xff]
    %v3323 = vld [vmem:[%s3268 + $0x2b8] sm:$0xff]
    %v3324 = vld [vmem:[%s3268 + $0x2c0] sm:$0xff]
    %v3325 = vld [vmem:[%s3268 + $0x2d0] sm:$0xff]
    %v3326 = vld [vmem:[%s3268 + $0x2d8] sm:$0xff]
    %v3327 = vld [vmem:[%s3268 + $0x2e8] sm:$0xff]
    %v3328 = vld [vmem:[%s3268 + $0x2f0] sm:$0xff]
    %v3329 = vld [vmem:[%s3268 + $0x300] sm:$0xff]
    %v3330 = vld [vmem:[%s3268 + $0x308] sm:$0xff]
    %v3331 = vld [vmem:[%s3268 + $0x318] sm:$0xff]
    %v3332 = vld [vmem:[%s3268 + $0x320] sm:$0xff]
    %v3333 = vpack.c.bf16 %v3270, %v3269
    %v3334 = vpack.c.bf16 %v3272, %v3271
    %v3335 = vpack.c.bf16 %v3274, %v3273
    %v3336 = vpack.c.bf16 %v3276, %v3275
    %v3337 = vpack.c.bf16 %v3278, %v3277
    %v3338 = vpack.c.bf16 %v3280, %v3279
    %v3339 = vpack.c.bf16 %v3282, %v3281
    %v3340 = vpack.c.bf16 %v3284, %v3283
    %v3341 = vpack.c.bf16 %v3286, %v3285
    %v3342 = vpack.c.bf16 %v3288, %v3287
    %v3343 = vpack.c.bf16 %v3290, %v3289
    %v3344 = vpack.c.bf16 %v3292, %v3291
    %v3345 = vpack.c.bf16 %v3294, %v3293
    %v3346 = vpack.c.bf16 %v3296, %v3295
    %v3347 = vpack.c.bf16 %v3298, %v3297
    %v3348 = vpack.c.bf16 %v3300, %v3299
    %v3349 = vpack.c.bf16 %v3302, %v3301
    %v3350 = vpack.c.bf16 %v3304, %v3303
    %v3351 = vpack.c.bf16 %v3306, %v3305
    %v3352 = vpack.c.bf16 %v3308, %v3307
    %v3353 = vpack.c.bf16 %v3310, %v3309
    %v3354 = vpack.c.bf16 %v3312, %v3311
    %v3355 = vpack.c.bf16 %v3314, %v3313
    %v3356 = vpack.c.bf16 %v3316, %v3315
    %v3357 = vpack.c.bf16 %v3318, %v3317
    %v3358 = vpack.c.bf16 %v3320, %v3319
    %v3359 = vpack.c.bf16 %v3322, %v3321
    %v3360 = vpack.c.bf16 %v3324, %v3323
    %v3361 = vpack.c.bf16 %v3326, %v3325
    %v3362 = vpack.c.bf16 %v3328, %v3327
    %v3363 = vpack.c.bf16 %v3330, %v3329
    %v3364 = vpack.c.bf16 %v3332, %v3331
    %v3365 = vld [vmem:[%s1 + $0x60] sm:$0xf]
    %v3366 = vld [vmem:[%s1 + $0x64] sm:$0xf]
    %v3367 = vld [vmem:[%s1 + $0x68] sm:$0xf]
    %v3368 = vld [vmem:[%s1 + $0x6c] sm:$0xf]
    %v3373 = vunpack.c.l.b16 %v3365
    %v3374 = vunpack.c.l.b16 %v3366
    %v3375 = vunpack.c.l.b16 %v3367
    %v3376 = vunpack.c.l.b16 %v3368
    %v3377 = vpack.c.b16 %v3374, %v3373
    %v3378 = vpack.c.b16 %v3376, %v3375
    %v3382 = vsel %vm240, %v3333, 0
    %v3385 = vsel %vm240, %v3334, 0
    %v3388 = vsel %vm240, %v3335, 0
    %v3391 = vsel %vm240, %v3336, 0
    %v3394 = vsel %vm240, %v3337, 0
    %v3397 = vsel %vm240, %v3338, 0
    %v3400 = vsel %vm240, %v3339, 0
    %v3403 = vsel %vm240, %v3340, 0
    %v3406 = vsel %vm240, %v3341, 0
    %v3409 = vsel %vm240, %v3342, 0
    %v3412 = vsel %vm240, %v3343, 0
    %v3415 = vsel %vm240, %v3344, 0
    %v3418 = vsel %vm240, %v3345, 0
    %v3421 = vsel %vm240, %v3346, 0
    %v3424 = vsel %vm240, %v3347, 0
    %v3427 = vsel %vm240, %v3348, 0
    %v3430 = vsel %vm240, %v3349, 0
    %v3433 = vsel %vm240, %v3350, 0
    %v3436 = vsel %vm240, %v3351, 0
    %v3439 = vsel %vm240, %v3352, 0
    %v3442 = vsel %vm240, %v3353, 0
    %v3445 = vsel %vm240, %v3354, 0
    %v3448 = vsel %vm240, %v3355, 0
    %v3451 = vsel %vm240, %v3356, 0
    %v3454 = vsel %vm240, %v3357, 0
    %v3457 = vsel %vm240, %v3358, 0
    %v3460 = vsel %vm240, %v3359, 0
    %v3463 = vsel %vm240, %v3360, 0
    %v3466 = vsel %vm240, %v3361, 0
    %v3469 = vsel %vm240, %v3362, 0
    %v3472 = vsel %vm240, %v3363, 0
    %v3475 = vsel %vm240, %v3364, 0
    %3477 = vmatprep.subr.bf16.mxu0 0
    %3478 = vmatpush1.bf16.msra.mxu0 %v3377
    %3479 = vmatprep.subr.bf16.mxu0 0
    %3480 = vmatpush1.bf16.msra.mxu0 %v3378
    %3481 = vmatprep.subr.bf16.mxu0 0
    %3482 = vmatpush1.bf16.msra.mxu0 0
    %3483 = vmatprep.subr.bf16.mxu0 0
    %3484 = vmatpush1.bf16.msra.mxu0 0
    %3485 = vmatprep.subr.bf16.mxu0 0
    %3486 = vmatpush1.bf16.msra.mxu0 0
    %3487 = vmatprep.subr.bf16.mxu0 0
    %3488 = vmatpush1.bf16.msra.mxu0 0
    %3489 = vmatprep.subr.bf16.mxu0 0
    %3490 = vmatpush1.bf16.msra.mxu0 0
    %3491 = vmatprep.subr.bf16.mxu0 0
    %3492 = vmatpush1.bf16.msra.mxu0 0
    %3493 = vmatprep.subr.bf16.mxu0 0
    %3494 = vmatpush1.bf16.msra.mxu0 0
    %3495 = vmatprep.subr.bf16.mxu0 0
    %3496 = vmatpush1.bf16.msra.mxu0 0
    %3497 = vmatprep.subr.bf16.mxu0 0
    %3498 = vmatpush1.bf16.msra.mxu0 0
    %3499 = vmatprep.subr.bf16.mxu0 0
    %3500 = vmatpush1.bf16.msra.mxu0 0
    %3501 = vmatprep.subr.bf16.mxu0 0
    %3502 = vmatpush1.bf16.msra.mxu0 0
    %3503 = vmatprep.subr.bf16.mxu0 0
    %3504 = vmatpush1.bf16.msra.mxu0 0
    %3505 = vmatprep.subr.bf16.mxu0 0
    %3506 = vmatpush1.bf16.msra.mxu0 0
    %3507 = vmatprep.subr.bf16.mxu0 0
    %3508 = vmatpush1.bf16.msra.mxu0 0
    %3509 = vmatprep.mubr.bf16.mxu0 0
    %3510 = vmatmul.mubr.bf16.gmra.mrb[0].mxu0 %v3382
    %v3511 = vpop.f32.mrb[0].mxu0
    %v3512 = vadd.f32 0.0, %v3511
    %v3513 = vpop.f32.mrb[0].mxu0
    %v3514 = vpop.f32.mrb[0].mxu0
    %v3515 = vadd.f32 0.0, %v3514
    %v3516 = vpop.f32.mrb[0].mxu0
    %3517 = vmatprep.mubr.bf16.mxu0 0
    %3518 = vmatmul.mubr.bf16.gmra.mrb[0].mxu0 %v3385
    %v3519 = vpop.f32.mrb[0].mxu0
    %v3520 = vadd.f32 0.0, %v3519
    %v3521 = vpop.f32.mrb[0].mxu0
    %v3522 = vpop.f32.mrb[0].mxu0
    %v3523 = vadd.f32 0.0, %v3522
    %v3524 = vpop.f32.mrb[0].mxu0
    %3525 = vmatprep.mubr.bf16.mxu0 0
    %3526 = vmatmul.mubr.bf16.gmra.mrb[0].mxu0 %v3388
    %v3527 = vpop.f32.mrb[0].mxu0
    %v3528 = vadd.f32 0.0, %v3527
    %v3529 = vpop.f32.mrb[0].mxu0
    %v3530 = vpop.f32.mrb[0].mxu0
    %v3531 = vadd.f32 0.0, %v3530
    %v3532 = vpop.f32.mrb[0].mxu0
    %3533 = vmatprep.mubr.bf16.mxu0 0
    %3534 = vmatmul.mubr.bf16.gmra.mrb[0].mxu0 %v3391
    %v3535 = vpop.f32.mrb[0].mxu0
    %v3536 = vadd.f32 0.0, %v3535
    %v3537 = vpop.f32.mrb[0].mxu0
    %v3538 = vpop.f32.mrb[0].mxu0
    %v3539 = vadd.f32 0.0, %v3538
    %v3540 = vpop.f32.mrb[0].mxu0
    %3541 = vmatprep.mubr.bf16.mxu0 0
    %3542 = vmatmul.mubr.bf16.gmra.mrb[0].mxu0 %v3394
    %v3543 = vpop.f32.mrb[0].mxu0
    %v3544 = vadd.f32 0.0, %v3543
    %v3545 = vpop.f32.mrb[0].mxu0
    %v3546 = vpop.f32.mrb[0].mxu0
    %v3547 = vadd.f32 0.0, %v3546
    %v3548 = vpop.f32.mrb[0].mxu0
    %3549 = vmatprep.mubr.bf16.mxu0 0
    %3550 = vmatmul.mubr.bf16.gmra.mrb[0].mxu0 %v3397
    %v3551 = vpop.f32.mrb[0].mxu0
    %v3552 = vadd.f32 0.0, %v3551
    %v3553 = vpop.f32.mrb[0].mxu0
    %v3554 = vpop.f32.mrb[0].mxu0
    %v3555 = vadd.f32 0.0, %v3554
    %v3556 = vpop.f32.mrb[0].mxu0
    %3557 = vmatprep.mubr.bf16.mxu0 0
    %3558 = vmatmul.mubr.bf16.gmra.mrb[0].mxu0 %v3400
    %v3559 = vpop.f32.mrb[0].mxu0
    %v3560 = vadd.f32 0.0, %v3559
    %v3561 = vpop.f32.mrb[0].mxu0
    %v3562 = vpop.f32.mrb[0].mxu0
    %v3563 = vadd.f32 0.0, %v3562
    %v3564 = vpop.f32.mrb[0].mxu0
    %3565 = vmatprep.mubr.bf16.mxu0 0
    %3566 = vmatmul.mubr.bf16.gmra.mrb[0].mxu0 %v3403
    %v3567 = vpop.f32.mrb[0].mxu0
    %v3568 = vadd.f32 0.0, %v3567
    %v3569 = vpop.f32.mrb[0].mxu0
    %v3570 = vpop.f32.mrb[0].mxu0
    %v3571 = vadd.f32 0.0, %v3570
    %v3572 = vpop.f32.mrb[0].mxu0
    %3573 = vmatprep.mubr.bf16.mxu0 0
    %3574 = vmatmul.mubr.bf16.gmra.mrb[0].mxu0 %v3406
    %v3575 = vpop.f32.mrb[0].mxu0
    %v3576 = vadd.f32 0.0, %v3575
    %v3577 = vpop.f32.mrb[0].mxu0
    %v3578 = vpop.f32.mrb[0].mxu0
    %v3579 = vadd.f32 0.0, %v3578
    %v3580 = vpop.f32.mrb[0].mxu0
    %3581 = vmatprep.mubr.bf16.mxu0 0
    %3582 = vmatmul.mubr.bf16.gmra.mrb[0].mxu0 %v3409
    %v3583 = vpop.f32.mrb[0].mxu0
    %v3584 = vadd.f32 0.0, %v3583
    %v3585 = vpop.f32.mrb[0].mxu0
    %v3586 = vpop.f32.mrb[0].mxu0
    %v3587 = vadd.f32 0.0, %v3586
    %v3588 = vpop.f32.mrb[0].mxu0
    %3589 = vmatprep.mubr.bf16.mxu0 0
    %3590 = vmatmul.mubr.bf16.gmra.mrb[0].mxu0 %v3412
    %v3591 = vpop.f32.mrb[0].mxu0
    %v3592 = vadd.f32 0.0, %v3591
    %v3593 = vpop.f32.mrb[0].mxu0
    %v3594 = vpop.f32.mrb[0].mxu0
    %v3595 = vadd.f32 0.0, %v3594
    %v3596 = vpop.f32.mrb[0].mxu0
    %3597 = vmatprep.mubr.bf16.mxu0 0
    %3598 = vmatmul.mubr.bf16.gmra.mrb[0].mxu0 %v3415
    %v3599 = vpop.f32.mrb[0].mxu0
    %v3600 = vadd.f32 0.0, %v3599
    %v3601 = vpop.f32.mrb[0].mxu0
    %v3602 = vpop.f32.mrb[0].mxu0
    %v3603 = vadd.f32 0.0, %v3602
    %v3604 = vpop.f32.mrb[0].mxu0
    %3605 = vmatprep.mubr.bf16.mxu0 0
    %3606 = vmatmul.mubr.bf16.gmra.mrb[0].mxu0 %v3418
    %v3607 = vpop.f32.mrb[0].mxu0
    %v3608 = vadd.f32 0.0, %v3607
    %v3609 = vpop.f32.mrb[0].mxu0
    %v3610 = vpop.f32.mrb[0].mxu0
    %v3611 = vadd.f32 0.0, %v3610
    %v3612 = vpop.f32.mrb[0].mxu0
    %3613 = vmatprep.mubr.bf16.mxu0 0
    %3614 = vmatmul.mubr.bf16.gmra.mrb[0].mxu0 %v3421
    %v3615 = vpop.f32.mrb[0].mxu0
    %v3616 = vadd.f32 0.0, %v3615
    %v3617 = vpop.f32.mrb[0].mxu0
    %v3618 = vpop.f32.mrb[0].mxu0
    %v3619 = vadd.f32 0.0, %v3618
    %v3620 = vpop.f32.mrb[0].mxu0
    %3621 = vmatprep.mubr.bf16.mxu0 0
    %3622 = vmatmul.mubr.bf16.gmra.mrb[0].mxu0 %v3424
    %v3623 = vpop.f32.mrb[0].mxu0
    %v3624 = vadd.f32 0.0, %v3623
    %v3625 = vpop.f32.mrb[0].mxu0
    %v3626 = vpop.f32.mrb[0].mxu0
    %v3627 = vadd.f32 0.0, %v3626
    %v3628 = vpop.f32.mrb[0].mxu0
    %3629 = vmatprep.mubr.bf16.mxu0 0
    %3630 = vmatmul.mubr.bf16.gmra.mrb[0].mxu0 %v3427
    %v3631 = vpop.f32.mrb[0].mxu0
    %v3632 = vadd.f32 0.0, %v3631
    %v3633 = vpop.f32.mrb[0].mxu0
    %v3634 = vpop.f32.mrb[0].mxu0
    %v3635 = vadd.f32 0.0, %v3634
    %v3636 = vpop.f32.mrb[0].mxu0
    %3637 = vmatprep.mubr.bf16.mxu0 0
    %3638 = vmatmul.mubr.bf16.gmra.mrb[0].mxu0 %v3430
    %v3639 = vpop.f32.mrb[0].mxu0
    %v3640 = vadd.f32 0.0, %v3639
    %v3641 = vpop.f32.mrb[0].mxu0
    %v3642 = vpop.f32.mrb[0].mxu0
    %v3643 = vadd.f32 0.0, %v3642
    %v3644 = vpop.f32.mrb[0].mxu0
    %3645 = vmatprep.mubr.bf16.mxu0 0
    %3646 = vmatmul.mubr.bf16.gmra.mrb[0].mxu0 %v3433
    %v3647 = vpop.f32.mrb[0].mxu0
    %v3648 = vadd.f32 0.0, %v3647
    %v3649 = vpop.f32.mrb[0].mxu0
    %v3650 = vpop.f32.mrb[0].mxu0
    %v3651 = vadd.f32 0.0, %v3650
    %v3652 = vpop.f32.mrb[0].mxu0
    %3653 = vmatprep.mubr.bf16.mxu0 0
    %3654 = vmatmul.mubr.bf16.gmra.mrb[0].mxu0 %v3436
    %v3655 = vpop.f32.mrb[0].mxu0
    %v3656 = vadd.f32 0.0, %v3655
    %v3657 = vpop.f32.mrb[0].mxu0
    %v3658 = vpop.f32.mrb[0].mxu0
    %v3659 = vadd.f32 0.0, %v3658
    %v3660 = vpop.f32.mrb[0].mxu0
    %3661 = vmatprep.mubr.bf16.mxu0 0
    %3662 = vmatmul.mubr.bf16.gmra.mrb[0].mxu0 %v3439
    %v3663 = vpop.f32.mrb[0].mxu0
    %v3664 = vadd.f32 0.0, %v3663
    %v3665 = vpop.f32.mrb[0].mxu0
    %v3666 = vpop.f32.mrb[0].mxu0
    %v3667 = vadd.f32 0.0, %v3666
    %v3668 = vpop.f32.mrb[0].mxu0
    %3669 = vmatprep.mubr.bf16.mxu0 0
    %3670 = vmatmul.mubr.bf16.gmra.mrb[0].mxu0 %v3442
    %v3671 = vpop.f32.mrb[0].mxu0
    %v3672 = vadd.f32 0.0, %v3671
    %v3673 = vpop.f32.mrb[0].mxu0
    %v3674 = vpop.f32.mrb[0].mxu0
    %v3675 = vadd.f32 0.0, %v3674
    %v3676 = vpop.f32.mrb[0].mxu0
    %3677 = vmatprep.mubr.bf16.mxu0 0
    %3678 = vmatmul.mubr.bf16.gmra.mrb[0].mxu0 %v3445
    %v3679 = vpop.f32.mrb[0].mxu0
    %v3680 = vadd.f32 0.0, %v3679
    %v3681 = vpop.f32.mrb[0].mxu0
    %v3682 = vpop.f32.mrb[0].mxu0
    %v3683 = vadd.f32 0.0, %v3682
    %v3684 = vpop.f32.mrb[0].mxu0
    %3685 = vmatprep.mubr.bf16.mxu0 0
    %3686 = vmatmul.mubr.bf16.gmra.mrb[0].mxu0 %v3448
    %v3687 = vpop.f32.mrb[0].mxu0
    %v3688 = vadd.f32 0.0, %v3687
    %v3689 = vpop.f32.mrb[0].mxu0
    %v3690 = vpop.f32.mrb[0].mxu0
    %v3691 = vadd.f32 0.0, %v3690
    %v3692 = vpop.f32.mrb[0].mxu0
    %3693 = vmatprep.mubr.bf16.mxu0 0
    %3694 = vmatmul.mubr.bf16.gmra.mrb[0].mxu0 %v3451
    %v3695 = vpop.f32.mrb[0].mxu0
    %v3696 = vadd.f32 0.0, %v3695
    %v3697 = vpop.f32.mrb[0].mxu0
    %v3698 = vpop.f32.mrb[0].mxu0
    %v3699 = vadd.f32 0.0, %v3698
    %v3700 = vpop.f32.mrb[0].mxu0
    %3701 = vmatprep.mubr.bf16.mxu0 0
    %3702 = vmatmul.mubr.bf16.gmra.mrb[0].mxu0 %v3454
    %v3703 = vpop.f32.mrb[0].mxu0
    %v3704 = vadd.f32 0.0, %v3703
    %v3705 = vpop.f32.mrb[0].mxu0
    %v3706 = vpop.f32.mrb[0].mxu0
    %v3707 = vadd.f32 0.0, %v3706
    %v3708 = vpop.f32.mrb[0].mxu0
    %3709 = vmatprep.mubr.bf16.mxu0 0
    %3710 = vmatmul.mubr.bf16.gmra.mrb[0].mxu0 %v3457
    %v3711 = vpop.f32.mrb[0].mxu0
    %v3712 = vadd.f32 0.0, %v3711
    %v3713 = vpop.f32.mrb[0].mxu0
    %v3714 = vpop.f32.mrb[0].mxu0
    %v3715 = vadd.f32 0.0, %v3714
    %v3716 = vpop.f32.mrb[0].mxu0
    %3717 = vmatprep.mubr.bf16.mxu0 0
    %3718 = vmatmul.mubr.bf16.gmra.mrb[0].mxu0 %v3460
    %v3719 = vpop.f32.mrb[0].mxu0
    %v3720 = vadd.f32 0.0, %v3719
    %v3721 = vpop.f32.mrb[0].mxu0
    %v3722 = vpop.f32.mrb[0].mxu0
    %v3723 = vadd.f32 0.0, %v3722
    %v3724 = vpop.f32.mrb[0].mxu0
    %3725 = vmatprep.mubr.bf16.mxu0 0
    %3726 = vmatmul.mubr.bf16.gmra.mrb[0].mxu0 %v3463
    %v3727 = vpop.f32.mrb[0].mxu0
    %v3728 = vadd.f32 0.0, %v3727
    %v3729 = vpop.f32.mrb[0].mxu0
    %v3730 = vpop.f32.mrb[0].mxu0
    %v3731 = vadd.f32 0.0, %v3730
    %v3732 = vpop.f32.mrb[0].mxu0
    %3733 = vmatprep.mubr.bf16.mxu0 0
    %3734 = vmatmul.mubr.bf16.gmra.mrb[0].mxu0 %v3466
    %v3735 = vpop.f32.mrb[0].mxu0
    %v3736 = vadd.f32 0.0, %v3735
    %v3737 = vpop.f32.mrb[0].mxu0
    %v3738 = vpop.f32.mrb[0].mxu0
    %v3739 = vadd.f32 0.0, %v3738
    %v3740 = vpop.f32.mrb[0].mxu0
    %3741 = vmatprep.mubr.bf16.mxu0 0
    %3742 = vmatmul.mubr.bf16.gmra.mrb[0].mxu0 %v3469
    %v3743 = vpop.f32.mrb[0].mxu0
    %v3744 = vadd.f32 0.0, %v3743
    %v3745 = vpop.f32.mrb[0].mxu0
    %v3746 = vpop.f32.mrb[0].mxu0
    %v3747 = vadd.f32 0.0, %v3746
    %v3748 = vpop.f32.mrb[0].mxu0
    %3749 = vmatprep.mubr.bf16.mxu0 0
    %3750 = vmatmul.mubr.bf16.gmra.mrb[0].mxu0 %v3472
    %v3751 = vpop.f32.mrb[0].mxu0
    %v3752 = vadd.f32 0.0, %v3751
    %v3753 = vpop.f32.mrb[0].mxu0
    %v3754 = vpop.f32.mrb[0].mxu0
    %v3755 = vadd.f32 0.0, %v3754
    %v3756 = vpop.f32.mrb[0].mxu0
    %3757 = vmatprep.mubr.bf16.mxu0 0
    %3758 = vmatmul.mubr.bf16.gmra.mrb[0].mxu0 %v3475
    %v3759 = vpop.f32.mrb[0].mxu0
    %v3760 = vadd.f32 0.0, %v3759
    %v3761 = vpop.f32.mrb[0].mxu0
    %v3762 = vpop.f32.mrb[0].mxu0
    %v3763 = vadd.f32 0.0, %v3762
    %v3764 = vpop.f32.mrb[0].mxu0
    %3765 = vdwg.mxu0
    %v3766 = vadd.f32 %v3204, %v3512
    %v3767 = vadd.f32 %v3205, %v3515
    %v3768 = vadd.f32 %v3206, %v3520
    %v3769 = vadd.f32 %v3207, %v3523
    %v3770 = vadd.f32 %v3208, %v3528
    %v3771 = vadd.f32 %v3209, %v3531
    %v3772 = vadd.f32 %v3210, %v3536
    %v3773 = vadd.f32 %v3211, %v3539
    %v3774 = vadd.f32 %v3212, %v3544
    %v3775 = vadd.f32 %v3213, %v3547
    %v3776 = vadd.f32 %v3214, %v3552
    %v3777 = vadd.f32 %v3215, %v3555
    %v3778 = vadd.f32 %v3216, %v3560
    %v3779 = vadd.f32 %v3217, %v3563
    %v3780 = vadd.f32 %v3218, %v3568
    %v3781 = vadd.f32 %v3219, %v3571
    %v3782 = vadd.f32 %v3220, %v3576
    %v3783 = vadd.f32 %v3221, %v3579
    %v3784 = vadd.f32 %v3222, %v3584
    %v3785 = vadd.f32 %v3223, %v3587
    %v3786 = vadd.f32 %v3224, %v3592
    %v3787 = vadd.f32 %v3225, %v3595
    %v3788 = vadd.f32 %v3226, %v3600
    %v3789 = vadd.f32 %v3227, %v3603
    %v3790 = vadd.f32 %v3228, %v3608
    %v3791 = vadd.f32 %v3229, %v3611
    %v3792 = vadd.f32 %v3230, %v3616
    %v3793 = vadd.f32 %v3231, %v3619
    %v3794 = vadd.f32 %v3232, %v3624
    %v3795 = vadd.f32 %v3233, %v3627
    %v3796 = vadd.f32 %v3234, %v3632
    %v3797 = vadd.f32 %v3235, %v3635
    %v3798 = vadd.f32 %v3236, %v3640
    %v3799 = vadd.f32 %v3237, %v3643
    %v3800 = vadd.f32 %v3238, %v3648
    %v3801 = vadd.f32 %v3239, %v3651
    %v3802 = vadd.f32 %v3240, %v3656
    %v3803 = vadd.f32 %v3241, %v3659
    %v3804 = vadd.f32 %v3242, %v3664
    %v3805 = vadd.f32 %v3243, %v3667
    %v3806 = vadd.f32 %v3244, %v3672
    %v3807 = vadd.f32 %v3245, %v3675
    %v3808 = vadd.f32 %v3246, %v3680
    %v3809 = vadd.f32 %v3247, %v3683
    %v3810 = vadd.f32 %v3248, %v3688
    %v3811 = vadd.f32 %v3249, %v3691
    %v3812 = vadd.f32 %v3250, %v3696
    %v3813 = vadd.f32 %v3251, %v3699
    %v3814 = vadd.f32 %v3252, %v3704
    %v3815 = vadd.f32 %v3253, %v3707
    %v3816 = vadd.f32 %v3254, %v3712
    %v3817 = vadd.f32 %v3255, %v3715
    %v3818 = vadd.f32 %v3256, %v3720
    %v3819 = vadd.f32 %v3257, %v3723
    %v3820 = vadd.f32 %v3258, %v3728
    %v3821 = vadd.f32 %v3259, %v3731
    %v3822 = vadd.f32 %v3260, %v3736
    %v3823 = vadd.f32 %v3261, %v3739
    %v3824 = vadd.f32 %v3262, %v3744
    %v3825 = vadd.f32 %v3263, %v3747
    %v3826 = vadd.f32 %v3264, %v3752
    %v3827 = vadd.f32 %v3265, %v3755
    %v3828 = vadd.f32 %v3266, %v3760
    %v3829 = vadd.f32 %v3267, %v3763
    %v3830 = vld [vmem:[%s3268 + $0x1] sm:$0xff]
    %v3831 = vld [vmem:[%s3268 + $0x9] sm:$0xff]
    %v3832 = vld [vmem:[%s3268 + $0x19] sm:$0xff]
    %v3833 = vld [vmem:[%s3268 + $0x21] sm:$0xff]
    %v3834 = vld [vmem:[%s3268 + $0x31] sm:$0xff]
    %v3835 = vld [vmem:[%s3268 + $0x39] sm:$0xff]
    %v3836 = vld [vmem:[%s3268 + $0x49] sm:$0xff]
    %v3837 = vld [vmem:[%s3268 + $0x51] sm:$0xff]
    %v3838 = vld [vmem:[%s3268 + $0x61] sm:$0xff]
    %v3839 = vld [vmem:[%s3268 + $0x69] sm:$0xff]
    %v3840 = vld [vmem:[%s3268 + $0x79] sm:$0xff]
    %v3841 = vld [vmem:[%s3268 + $0x81] sm:$0xff]
    %v3842 = vld [vmem:[%s3268 + $0x91] sm:$0xff]
    %v3843 = vld [vmem:[%s3268 + $0x99] sm:$0xff]
    %v3844 = vld [vmem:[%s3268 + $0xa9] sm:$0xff]
    %v3845 = vld [vmem:[%s3268 + $0xb1] sm:$0xff]
    %v3846 = vld [vmem:[%s3268 + $0xc1] sm:$0xff]
    %v3847 = vld [vmem:[%s3268 + $0xc9] sm:$0xff]
    %v3848 = vld [vmem:[%s3268 + $0xd9] sm:$0xff]
    %v3849 = vld [vmem:[%s3268 + $0xe1] sm:$0xff]
    %v3850 = vld [vmem:[%s3268 + $0xf1] sm:$0xff]
    %v3851 = vld [vmem:[%s3268 + $0xf9] sm:$0xff]
    %v3852 = vld [vmem:[%s3268 + $0x109] sm:$0xff]
    %v3853 = vld [vmem:[%s3268 + $0x111] sm:$0xff]
    %v3854 = vld [vmem:[%s3268 + $0x121] sm:$0xff]
    %v3855 = vld [vmem:[%s3268 + $0x129] sm:$0xff]
    %v3856 = vld [vmem:[%s3268 + $0x139] sm:$0xff]
    %v3857 = vld [vmem:[%s3268 + $0x141] sm:$0xff]
    %v3858 = vld [vmem:[%s3268 + $0x151] sm:$0xff]
    %v3859 = vld [vmem:[%s3268 + $0x159] sm:$0xff]
    %v3860 = vld [vmem:[%s3268 + $0x169] sm:$0xff]
    %v3861 = vld [vmem:[%s3268 + $0x171] sm:$0xff]
    %v3862 = vld [vmem:[%s3268 + $0x1b1] sm:$0xff]
    %v3863 = vld [vmem:[%s3268 + $0x1b9] sm:$0xff]
    %v3864 = vld [vmem:[%s3268 + $0x1c9] sm:$0xff]
    %v3865 = vld [vmem:[%s3268 + $0x1d1] sm:$0xff]
    %v3866 = vld [vmem:[%s3268 + $0x1e1] sm:$0xff]
    %v3867 = vld [vmem:[%s3268 + $0x1e9] sm:$0xff]
    %v3868 = vld [vmem:[%s3268 + $0x1f9] sm:$0xff]
    %v3869 = vld [vmem:[%s3268 + $0x201] sm:$0xff]
    %v3870 = vld [vmem:[%s3268 + $0x211] sm:$0xff]
    %v3871 = vld [vmem:[%s3268 + $0x219] sm:$0xff]
    %v3872 = vld [vmem:[%s3268 + $0x229] sm:$0xff]
    %v3873 = vld [vmem:[%s3268 + $0x231] sm:$0xff]
    %v3874 = vld [vmem:[%s3268 + $0x241] sm:$0xff]
    %v3875 = vld [vmem:[%s3268 + $0x249] sm:$0xff]
    %v3876 = vld [vmem:[%s3268 + $0x259] sm:$0xff]
    %v3877 = vld [vmem:[%s3268 + $0x261] sm:$0xff]
    %v3878 = vld [vmem:[%s3268 + $0x271] sm:$0xff]
    %v3879 = vld [vmem:[%s3268 + $0x279] sm:$0xff]
    %v3880 = vld [vmem:[%s3268 + $0x289] sm:$0xff]
    %v3881 = vld [vmem:[%s3268 + $0x291] sm:$0xff]
    %v3882 = vld [vmem:[%s3268 + $0x2a1] sm:$0xff]
    %v3883 = vld [vmem:[%s3268 + $0x2a9] sm:$0xff]
    %v3884 = vld [vmem:[%s3268 + $0x2b9] sm:$0xff]
    %v3885 = vld [vmem:[%s3268 + $0x2c1] sm:$0xff]
    %v3886 = vld [vmem:[%s3268 + $0x2d1] sm:$0xff]
    %v3887 = vld [vmem:[%s3268 + $0x2d9] sm:$0xff]
    %v3888 = vld [vmem:[%s3268 + $0x2e9] sm:$0xff]
    %v3889 = vld [vmem:[%s3268 + $0x2f1] sm:$0xff]
    %v3890 = vld [vmem:[%s3268 + $0x301] sm:$0xff]
    %v3891 = vld [vmem:[%s3268 + $0x309] sm:$0xff]
    %v3892 = vld [vmem:[%s3268 + $0x319] sm:$0xff]
    %v3893 = vld [vmem:[%s3268 + $0x321] sm:$0xff]
    %v3894 = vpack.c.bf16 %v3831, %v3830
    %v3895 = vpack.c.bf16 %v3833, %v3832
    %v3896 = vpack.c.bf16 %v3835, %v3834
    %v3897 = vpack.c.bf16 %v3837, %v3836
    %v3898 = vpack.c.bf16 %v3839, %v3838
    %v3899 = vpack.c.bf16 %v3841, %v3840
    %v3900 = vpack.c.bf16 %v3843, %v3842
    %v3901 = vpack.c.bf16 %v3845, %v3844
    %v3902 = vpack.c.bf16 %v3847, %v3846
    %v3903 = vpack.c.bf16 %v3849, %v3848
    %v3904 = vpack.c.bf16 %v3851, %v3850
    %v3905 = vpack.c.bf16 %v3853, %v3852
    %v3906 = vpack.c.bf16 %v3855, %v3854
    %v3907 = vpack.c.bf16 %v3857, %v3856
    %v3908 = vpack.c.bf16 %v3859, %v3858
    %v3909 = vpack.c.bf16 %v3861, %v3860
    %v3910 = vpack.c.bf16 %v3863, %v3862
    %v3911 = vpack.c.bf16 %v3865, %v3864
    %v3912 = vpack.c.bf16 %v3867, %v3866
    %v3913 = vpack.c.bf16 %v3869, %v3868
    %v3914 = vpack.c.bf16 %v3871, %v3870
    %v3915 = vpack.c.bf16 %v3873, %v3872
    %v3916 = vpack.c.bf16 %v3875, %v3874
    %v3917 = vpack.c.bf16 %v3877, %v3876
    %v3918 = vpack.c.bf16 %v3879, %v3878
    %v3919 = vpack.c.bf16 %v3881, %v3880
    %v3920 = vpack.c.bf16 %v3883, %v3882
    %v3921 = vpack.c.bf16 %v3885, %v3884
    %v3922 = vpack.c.bf16 %v3887, %v3886
    %v3923 = vpack.c.bf16 %v3889, %v3888
    %v3924 = vpack.c.bf16 %v3891, %v3890
    %v3925 = vpack.c.bf16 %v3893, %v3892
    %v3926 = vld [vmem:[%s1 + $0x70] sm:$0xf]
    %v3927 = vld [vmem:[%s1 + $0x74] sm:$0xf]
    %v3928 = vld [vmem:[%s1 + $0x78] sm:$0xf]
    %v3929 = vld [vmem:[%s1 + $0x7c] sm:$0xf]
    %v3934 = vunpack.c.l.b16 %v3926
    %v3935 = vunpack.c.l.b16 %v3927
    %v3936 = vunpack.c.l.b16 %v3928
    %v3937 = vunpack.c.l.b16 %v3929
    %v3938 = vpack.c.b16 %v3935, %v3934
    %v3939 = vpack.c.b16 %v3937, %v3936
    %v3943 = vsel %vm240, %v3894, 0
    %v3946 = vsel %vm240, %v3895, 0
    %v3949 = vsel %vm240, %v3896, 0
    %v3952 = vsel %vm240, %v3897, 0
    %v3955 = vsel %vm240, %v3898, 0
    %v3958 = vsel %vm240, %v3899, 0
    %v3961 = vsel %vm240, %v3900, 0
    %v3964 = vsel %vm240, %v3901, 0
    %v3967 = vsel %vm240, %v3902, 0
    %v3970 = vsel %vm240, %v3903, 0
    %v3973 = vsel %vm240, %v3904, 0
    %v3976 = vsel %vm240, %v3905, 0
    %v3979 = vsel %vm240, %v3906, 0
    %v3982 = vsel %vm240, %v3907, 0
    %v3985 = vsel %vm240, %v3908, 0
    %v3988 = vsel %vm240, %v3909, 0
    %v3991 = vsel %vm240, %v3910, 0
    %v3994 = vsel %vm240, %v3911, 0
    %v3997 = vsel %vm240, %v3912, 0
    %v4000 = vsel %vm240, %v3913, 0
    %v4003 = vsel %vm240, %v3914, 0
    %v4006 = vsel %vm240, %v3915, 0
    %v4009 = vsel %vm240, %v3916, 0
    %v4012 = vsel %vm240, %v3917, 0
    %v4015 = vsel %vm240, %v3918, 0
    %v4018 = vsel %vm240, %v3919, 0
    %v4021 = vsel %vm240, %v3920, 0
    %v4024 = vsel %vm240, %v3921, 0
    %v4027 = vsel %vm240, %v3922, 0
    %v4030 = vsel %vm240, %v3923, 0
    %v4033 = vsel %vm240, %v3924, 0
    %v4036 = vsel %vm240, %v3925, 0
    %4038 = vmatprep.subr.bf16.mxu0 0
    %4039 = vmatpush1.bf16.msra.mxu0 %v3938
    %4040 = vmatprep.subr.bf16.mxu0 0
    %4041 = vmatpush1.bf16.msra.mxu0 %v3939
    %4042 = vmatprep.subr.bf16.mxu0 0
    %4043 = vmatpush1.bf16.msra.mxu0 0
    %4044 = vmatprep.subr.bf16.mxu0 0
    %4045 = vmatpush1.bf16.msra.mxu0 0
    %4046 = vmatprep.subr.bf16.mxu0 0
    %4047 = vmatpush1.bf16.msra.mxu0 0
    %4048 = vmatprep.subr.bf16.mxu0 0
    %4049 = vmatpush1.bf16.msra.mxu0 0
    %4050 = vmatprep.subr.bf16.mxu0 0
    %4051 = vmatpush1.bf16.msra.mxu0 0
    %4052 = vmatprep.subr.bf16.mxu0 0
    %4053 = vmatpush1.bf16.msra.mxu0 0
    %4054 = vmatprep.subr.bf16.mxu0 0
    %4055 = vmatpush1.bf16.msra.mxu0 0
    %4056 = vmatprep.subr.bf16.mxu0 0
    %4057 = vmatpush1.bf16.msra.mxu0 0
    %4058 = vmatprep.subr.bf16.mxu0 0
    %4059 = vmatpush1.bf16.msra.mxu0 0
    %4060 = vmatprep.subr.bf16.mxu0 0
    %4061 = vmatpush1.bf16.msra.mxu0 0
    %4062 = vmatprep.subr.bf16.mxu0 0
    %4063 = vmatpush1.bf16.msra.mxu0 0
    %4064 = vmatprep.subr.bf16.mxu0 0
    %4065 = vmatpush1.bf16.msra.mxu0 0
    %4066 = vmatprep.subr.bf16.mxu0 0
    %4067 = vmatpush1.bf16.msra.mxu0 0
    %4068 = vmatprep.subr.bf16.mxu0 0
    %4069 = vmatpush1.bf16.msra.mxu0 0
    %4070 = vmatprep.mubr.bf16.mxu0 0
    %4071 = vmatmul.mubr.bf16.gmra.mrb[0].mxu0 %v3943
    %v4072 = vpop.f32.mrb[0].mxu0
    %v4073 = vadd.f32 0.0, %v4072
    %v4074 = vpop.f32.mrb[0].mxu0
    %v4075 = vpop.f32.mrb[0].mxu0
    %v4076 = vadd.f32 0.0, %v4075
    %v4077 = vpop.f32.mrb[0].mxu0
    %4078 = vmatprep.mubr.bf16.mxu0 0
    %4079 = vmatmul.mubr.bf16.gmra.mrb[0].mxu0 %v3946
    %v4080 = vpop.f32.mrb[0].mxu0
    %v4081 = vadd.f32 0.0, %v4080
    %v4082 = vpop.f32.mrb[0].mxu0
    %v4083 = vpop.f32.mrb[0].mxu0
    %v4084 = vadd.f32 0.0, %v4083
    %v4085 = vpop.f32.mrb[0].mxu0
    %4086 = vmatprep.mubr.bf16.mxu0 0
    %4087 = vmatmul.mubr.bf16.gmra.mrb[0].mxu0 %v3949
    %v4088 = vpop.f32.mrb[0].mxu0
    %v4089 = vadd.f32 0.0, %v4088
    %v4090 = vpop.f32.mrb[0].mxu0
    %v4091 = vpop.f32.mrb[0].mxu0
    %v4092 = vadd.f32 0.0, %v4091
    %v4093 = vpop.f32.mrb[0].mxu0
    %4094 = vmatprep.mubr.bf16.mxu0 0
    %4095 = vmatmul.mubr.bf16.gmra.mrb[0].mxu0 %v3952
    %v4096 = vpop.f32.mrb[0].mxu0
    %v4097 = vadd.f32 0.0, %v4096
    %v4098 = vpop.f32.mrb[0].mxu0
    %v4099 = vpop.f32.mrb[0].mxu0
    %v4100 = vadd.f32 0.0, %v4099
    %v4101 = vpop.f32.mrb[0].mxu0
    %4102 = vmatprep.mubr.bf16.mxu0 0
    %4103 = vmatmul.mubr.bf16.gmra.mrb[0].mxu0 %v3955
    %v4104 = vpop.f32.mrb[0].mxu0
    %v4105 = vadd.f32 0.0, %v4104
    %v4106 = vpop.f32.mrb[0].mxu0
    %v4107 = vpop.f32.mrb[0].mxu0
    %v4108 = vadd.f32 0.0, %v4107
    %v4109 = vpop.f32.mrb[0].mxu0
    %4110 = vmatprep.mubr.bf16.mxu0 0
    %4111 = vmatmul.mubr.bf16.gmra.mrb[0].mxu0 %v3958
    %v4112 = vpop.f32.mrb[0].mxu0
    %v4113 = vadd.f32 0.0, %v4112
    %v4114 = vpop.f32.mrb[0].mxu0
    %v4115 = vpop.f32.mrb[0].mxu0
    %v4116 = vadd.f32 0.0, %v4115
    %v4117 = vpop.f32.mrb[0].mxu0
    %4118 = vmatprep.mubr.bf16.mxu0 0
    %4119 = vmatmul.mubr.bf16.gmra.mrb[0].mxu0 %v3961
    %v4120 = vpop.f32.mrb[0].mxu0
    %v4121 = vadd.f32 0.0, %v4120
    %v4122 = vpop.f32.mrb[0].mxu0
    %v4123 = vpop.f32.mrb[0].mxu0
    %v4124 = vadd.f32 0.0, %v4123
    %v4125 = vpop.f32.mrb[0].mxu0
    %4126 = vmatprep.mubr.bf16.mxu0 0
    %4127 = vmatmul.mubr.bf16.gmra.mrb[0].mxu0 %v3964
    %v4128 = vpop.f32.mrb[0].mxu0
    %v4129 = vadd.f32 0.0, %v4128
    %v4130 = vpop.f32.mrb[0].mxu0
    %v4131 = vpop.f32.mrb[0].mxu0
    %v4132 = vadd.f32 0.0, %v4131
    %v4133 = vpop.f32.mrb[0].mxu0
    %4134 = vmatprep.mubr.bf16.mxu0 0
    %4135 = vmatmul.mubr.bf16.gmra.mrb[0].mxu0 %v3967
    %v4136 = vpop.f32.mrb[0].mxu0
    %v4137 = vadd.f32 0.0, %v4136
    %v4138 = vpop.f32.mrb[0].mxu0
    %v4139 = vpop.f32.mrb[0].mxu0
    %v4140 = vadd.f32 0.0, %v4139
    %v4141 = vpop.f32.mrb[0].mxu0
    %4142 = vmatprep.mubr.bf16.mxu0 0
    %4143 = vmatmul.mubr.bf16.gmra.mrb[0].mxu0 %v3970
    %v4144 = vpop.f32.mrb[0].mxu0
    %v4145 = vadd.f32 0.0, %v4144
    %v4146 = vpop.f32.mrb[0].mxu0
    %v4147 = vpop.f32.mrb[0].mxu0
    %v4148 = vadd.f32 0.0, %v4147
    %v4149 = vpop.f32.mrb[0].mxu0
    %4150 = vmatprep.mubr.bf16.mxu0 0
    %4151 = vmatmul.mubr.bf16.gmra.mrb[0].mxu0 %v3973
    %v4152 = vpop.f32.mrb[0].mxu0
    %v4153 = vadd.f32 0.0, %v4152
    %v4154 = vpop.f32.mrb[0].mxu0
    %v4155 = vpop.f32.mrb[0].mxu0
    %v4156 = vadd.f32 0.0, %v4155
    %v4157 = vpop.f32.mrb[0].mxu0
    %4158 = vmatprep.mubr.bf16.mxu0 0
    %4159 = vmatmul.mubr.bf16.gmra.mrb[0].mxu0 %v3976
    %v4160 = vpop.f32.mrb[0].mxu0
    %v4161 = vadd.f32 0.0, %v4160
    %v4162 = vpop.f32.mrb[0].mxu0
    %v4163 = vpop.f32.mrb[0].mxu0
    %v4164 = vadd.f32 0.0, %v4163
    %v4165 = vpop.f32.mrb[0].mxu0
    %4166 = vmatprep.mubr.bf16.mxu0 0
    %4167 = vmatmul.mubr.bf16.gmra.mrb[0].mxu0 %v3979
    %v4168 = vpop.f32.mrb[0].mxu0
    %v4169 = vadd.f32 0.0, %v4168
    %v4170 = vpop.f32.mrb[0].mxu0
    %v4171 = vpop.f32.mrb[0].mxu0
    %v4172 = vadd.f32 0.0, %v4171
    %v4173 = vpop.f32.mrb[0].mxu0
    %4174 = vmatprep.mubr.bf16.mxu0 0
    %4175 = vmatmul.mubr.bf16.gmra.mrb[0].mxu0 %v3982
    %v4176 = vpop.f32.mrb[0].mxu0
    %v4177 = vadd.f32 0.0, %v4176
    %v4178 = vpop.f32.mrb[0].mxu0
    %v4179 = vpop.f32.mrb[0].mxu0
    %v4180 = vadd.f32 0.0, %v4179
    %v4181 = vpop.f32.mrb[0].mxu0
    %4182 = vmatprep.mubr.bf16.mxu0 0
    %4183 = vmatmul.mubr.bf16.gmra.mrb[0].mxu0 %v3985
    %v4184 = vpop.f32.mrb[0].mxu0
    %v4185 = vadd.f32 0.0, %v4184
    %v4186 = vpop.f32.mrb[0].mxu0
    %v4187 = vpop.f32.mrb[0].mxu0
    %v4188 = vadd.f32 0.0, %v4187
    %v4189 = vpop.f32.mrb[0].mxu0
    %4190 = vmatprep.mubr.bf16.mxu0 0
    %4191 = vmatmul.mubr.bf16.gmra.mrb[0].mxu0 %v3988
    %v4192 = vpop.f32.mrb[0].mxu0
    %v4193 = vadd.f32 0.0, %v4192
    %v4194 = vpop.f32.mrb[0].mxu0
    %v4195 = vpop.f32.mrb[0].mxu0
    %v4196 = vadd.f32 0.0, %v4195
    %v4197 = vpop.f32.mrb[0].mxu0
    %4198 = vmatprep.mubr.bf16.mxu0 0
    %4199 = vmatmul.mubr.bf16.gmra.mrb[0].mxu0 %v3991
    %v4200 = vpop.f32.mrb[0].mxu0
    %v4201 = vadd.f32 0.0, %v4200
    %v4202 = vpop.f32.mrb[0].mxu0
    %v4203 = vpop.f32.mrb[0].mxu0
    %v4204 = vadd.f32 0.0, %v4203
    %v4205 = vpop.f32.mrb[0].mxu0
    %4206 = vmatprep.mubr.bf16.mxu0 0
    %4207 = vmatmul.mubr.bf16.gmra.mrb[0].mxu0 %v3994
    %v4208 = vpop.f32.mrb[0].mxu0
    %v4209 = vadd.f32 0.0, %v4208
    %v4210 = vpop.f32.mrb[0].mxu0
    %v4211 = vpop.f32.mrb[0].mxu0
    %v4212 = vadd.f32 0.0, %v4211
    %v4213 = vpop.f32.mrb[0].mxu0
    %4214 = vmatprep.mubr.bf16.mxu0 0
    %4215 = vmatmul.mubr.bf16.gmra.mrb[0].mxu0 %v3997
    %v4216 = vpop.f32.mrb[0].mxu0
    %v4217 = vadd.f32 0.0, %v4216
    %v4218 = vpop.f32.mrb[0].mxu0
    %v4219 = vpop.f32.mrb[0].mxu0
    %v4220 = vadd.f32 0.0, %v4219
    %v4221 = vpop.f32.mrb[0].mxu0
    %4222 = vmatprep.mubr.bf16.mxu0 0
    %4223 = vmatmul.mubr.bf16.gmra.mrb[0].mxu0 %v4000
    %v4224 = vpop.f32.mrb[0].mxu0
    %v4225 = vadd.f32 0.0, %v4224
    %v4226 = vpop.f32.mrb[0].mxu0
    %v4227 = vpop.f32.mrb[0].mxu0
    %v4228 = vadd.f32 0.0, %v4227
    %v4229 = vpop.f32.mrb[0].mxu0
    %4230 = vmatprep.mubr.bf16.mxu0 0
    %4231 = vmatmul.mubr.bf16.gmra.mrb[0].mxu0 %v4003
    %v4232 = vpop.f32.mrb[0].mxu0
    %v4233 = vadd.f32 0.0, %v4232
    %v4234 = vpop.f32.mrb[0].mxu0
    %v4235 = vpop.f32.mrb[0].mxu0
    %v4236 = vadd.f32 0.0, %v4235
    %v4237 = vpop.f32.mrb[0].mxu0
    %4238 = vmatprep.mubr.bf16.mxu0 0
    %4239 = vmatmul.mubr.bf16.gmra.mrb[0].mxu0 %v4006
    %v4240 = vpop.f32.mrb[0].mxu0
    %v4241 = vadd.f32 0.0, %v4240
    %v4242 = vpop.f32.mrb[0].mxu0
    %v4243 = vpop.f32.mrb[0].mxu0
    %v4244 = vadd.f32 0.0, %v4243
    %v4245 = vpop.f32.mrb[0].mxu0
    %4246 = vmatprep.mubr.bf16.mxu0 0
    %4247 = vmatmul.mubr.bf16.gmra.mrb[0].mxu0 %v4009
    %v4248 = vpop.f32.mrb[0].mxu0
    %v4249 = vadd.f32 0.0, %v4248
    %v4250 = vpop.f32.mrb[0].mxu0
    %v4251 = vpop.f32.mrb[0].mxu0
    %v4252 = vadd.f32 0.0, %v4251
    %v4253 = vpop.f32.mrb[0].mxu0
    %4254 = vmatprep.mubr.bf16.mxu0 0
    %4255 = vmatmul.mubr.bf16.gmra.mrb[0].mxu0 %v4012
    %v4256 = vpop.f32.mrb[0].mxu0
    %v4257 = vadd.f32 0.0, %v4256
    %v4258 = vpop.f32.mrb[0].mxu0
    %v4259 = vpop.f32.mrb[0].mxu0
    %v4260 = vadd.f32 0.0, %v4259
    %v4261 = vpop.f32.mrb[0].mxu0
    %4262 = vmatprep.mubr.bf16.mxu0 0
    %4263 = vmatmul.mubr.bf16.gmra.mrb[0].mxu0 %v4015
    %v4264 = vpop.f32.mrb[0].mxu0
    %v4265 = vadd.f32 0.0, %v4264
    %v4266 = vpop.f32.mrb[0].mxu0
    %v4267 = vpop.f32.mrb[0].mxu0
    %v4268 = vadd.f32 0.0, %v4267
    %v4269 = vpop.f32.mrb[0].mxu0
    %4270 = vmatprep.mubr.bf16.mxu0 0
    %4271 = vmatmul.mubr.bf16.gmra.mrb[0].mxu0 %v4018
    %v4272 = vpop.f32.mrb[0].mxu0
    %v4273 = vadd.f32 0.0, %v4272
    %v4274 = vpop.f32.mrb[0].mxu0
    %v4275 = vpop.f32.mrb[0].mxu0
    %v4276 = vadd.f32 0.0, %v4275
    %v4277 = vpop.f32.mrb[0].mxu0
    %4278 = vmatprep.mubr.bf16.mxu0 0
    %4279 = vmatmul.mubr.bf16.gmra.mrb[0].mxu0 %v4021
    %v4280 = vpop.f32.mrb[0].mxu0
    %v4281 = vadd.f32 0.0, %v4280
    %v4282 = vpop.f32.mrb[0].mxu0
    %v4283 = vpop.f32.mrb[0].mxu0
    %v4284 = vadd.f32 0.0, %v4283
    %v4285 = vpop.f32.mrb[0].mxu0
    %4286 = vmatprep.mubr.bf16.mxu0 0
    %4287 = vmatmul.mubr.bf16.gmra.mrb[0].mxu0 %v4024
    %v4288 = vpop.f32.mrb[0].mxu0
    %v4289 = vadd.f32 0.0, %v4288
    %v4290 = vpop.f32.mrb[0].mxu0
    %v4291 = vpop.f32.mrb[0].mxu0
    %v4292 = vadd.f32 0.0, %v4291
    %v4293 = vpop.f32.mrb[0].mxu0
    %4294 = vmatprep.mubr.bf16.mxu0 0
    %4295 = vmatmul.mubr.bf16.gmra.mrb[0].mxu0 %v4027
    %v4296 = vpop.f32.mrb[0].mxu0
    %v4297 = vadd.f32 0.0, %v4296
    %v4298 = vpop.f32.mrb[0].mxu0
    %v4299 = vpop.f32.mrb[0].mxu0
    %v4300 = vadd.f32 0.0, %v4299
    %v4301 = vpop.f32.mrb[0].mxu0
    %4302 = vmatprep.mubr.bf16.mxu0 0
    %4303 = vmatmul.mubr.bf16.gmra.mrb[0].mxu0 %v4030
    %v4304 = vpop.f32.mrb[0].mxu0
    %v4305 = vadd.f32 0.0, %v4304
    %v4306 = vpop.f32.mrb[0].mxu0
    %v4307 = vpop.f32.mrb[0].mxu0
    %v4308 = vadd.f32 0.0, %v4307
    %v4309 = vpop.f32.mrb[0].mxu0
    %4310 = vmatprep.mubr.bf16.mxu0 0
    %4311 = vmatmul.mubr.bf16.gmra.mrb[0].mxu0 %v4033
    %v4312 = vpop.f32.mrb[0].mxu0
    %v4313 = vadd.f32 0.0, %v4312
    %v4314 = vpop.f32.mrb[0].mxu0
    %v4315 = vpop.f32.mrb[0].mxu0
    %v4316 = vadd.f32 0.0, %v4315
    %v4317 = vpop.f32.mrb[0].mxu0
    %4318 = vmatprep.mubr.bf16.mxu0 0
    %4319 = vmatmul.mubr.bf16.gmra.mrb[0].mxu0 %v4036
    %v4320 = vpop.f32.mrb[0].mxu0
    %v4321 = vadd.f32 0.0, %v4320
    %v4322 = vpop.f32.mrb[0].mxu0
    %v4323 = vpop.f32.mrb[0].mxu0
    %v4324 = vadd.f32 0.0, %v4323
    %v4325 = vpop.f32.mrb[0].mxu0
    %4326 = vdwg.mxu0
    %v4327 = vadd.f32 %v3766, %v4073
    %v4328 = vadd.f32 %v3767, %v4076
    %v4329 = vadd.f32 %v3768, %v4081
    %v4330 = vadd.f32 %v3769, %v4084
    %v4331 = vadd.f32 %v3770, %v4089
    %v4332 = vadd.f32 %v3771, %v4092
    %v4333 = vadd.f32 %v3772, %v4097
    %v4334 = vadd.f32 %v3773, %v4100
    %v4335 = vadd.f32 %v3774, %v4105
    %v4336 = vadd.f32 %v3775, %v4108
    %v4337 = vadd.f32 %v3776, %v4113
    %v4338 = vadd.f32 %v3777, %v4116
    %v4339 = vadd.f32 %v3778, %v4121
    %v4340 = vadd.f32 %v3779, %v4124
    %v4341 = vadd.f32 %v3780, %v4129
    %v4342 = vadd.f32 %v3781, %v4132
    %v4343 = vadd.f32 %v3782, %v4137
    %v4344 = vadd.f32 %v3783, %v4140
    %v4345 = vadd.f32 %v3784, %v4145
    %v4346 = vadd.f32 %v3785, %v4148
    %v4347 = vadd.f32 %v3786, %v4153
    %v4348 = vadd.f32 %v3787, %v4156
    %v4349 = vadd.f32 %v3788, %v4161
    %v4350 = vadd.f32 %v3789, %v4164
    %v4351 = vadd.f32 %v3790, %v4169
    %v4352 = vadd.f32 %v3791, %v4172
    %v4353 = vadd.f32 %v3792, %v4177
    %v4354 = vadd.f32 %v3793, %v4180
    %v4355 = vadd.f32 %v3794, %v4185
    %v4356 = vadd.f32 %v3795, %v4188
    %v4357 = vadd.f32 %v3796, %v4193
    %v4358 = vadd.f32 %v3797, %v4196
    %v4359 = vadd.f32 %v3798, %v4201
    %v4360 = vadd.f32 %v3799, %v4204
    %v4361 = vadd.f32 %v3800, %v4209
    %v4362 = vadd.f32 %v3801, %v4212
    %v4363 = vadd.f32 %v3802, %v4217
    %v4364 = vadd.f32 %v3803, %v4220
    %v4365 = vadd.f32 %v3804, %v4225
    %v4366 = vadd.f32 %v3805, %v4228
    %v4367 = vadd.f32 %v3806, %v4233
    %v4368 = vadd.f32 %v3807, %v4236
    %v4369 = vadd.f32 %v3808, %v4241
    %v4370 = vadd.f32 %v3809, %v4244
    %v4371 = vadd.f32 %v3810, %v4249
    %v4372 = vadd.f32 %v3811, %v4252
    %v4373 = vadd.f32 %v3812, %v4257
    %v4374 = vadd.f32 %v3813, %v4260
    %v4375 = vadd.f32 %v3814, %v4265
    %v4376 = vadd.f32 %v3815, %v4268
    %v4377 = vadd.f32 %v3816, %v4273
    %v4378 = vadd.f32 %v3817, %v4276
    %v4379 = vadd.f32 %v3818, %v4281
    %v4380 = vadd.f32 %v3819, %v4284
    %v4381 = vadd.f32 %v3820, %v4289
    %v4382 = vadd.f32 %v3821, %v4292
    %v4383 = vadd.f32 %v3822, %v4297
    %v4384 = vadd.f32 %v3823, %v4300
    %v4385 = vadd.f32 %v3824, %v4305
    %v4386 = vadd.f32 %v3825, %v4308
    %v4387 = vadd.f32 %v3826, %v4313
    %v4388 = vadd.f32 %v3827, %v4316
    %v4389 = vadd.f32 %v3828, %v4321
    %v4390 = vadd.f32 %v3829, %v4324
    %v4391 = vld [vmem:[%s3268 + $0x2] sm:$0xff]
    %v4392 = vld [vmem:[%s3268 + $0xa] sm:$0xff]
    %v4393 = vld [vmem:[%s3268 + $0x1a] sm:$0xff]
    %v4394 = vld [vmem:[%s3268 + $0x22] sm:$0xff]
    %v4395 = vld [vmem:[%s3268 + $0x32] sm:$0xff]
    %v4396 = vld [vmem:[%s3268 + $0x3a] sm:$0xff]
    %v4397 = vld [vmem:[%s3268 + $0x4a] sm:$0xff]
    %v4398 = vld [vmem:[%s3268 + $0x52] sm:$0xff]
    %v4399 = vld [vmem:[%s3268 + $0x62] sm:$0xff]
    %v4400 = vld [vmem:[%s3268 + $0x6a] sm:$0xff]
    %v4401 = vld [vmem:[%s3268 + $0x7a] sm:$0xff]
    %v4402 = vld [vmem:[%s3268 + $0x82] sm:$0xff]
    %v4403 = vld [vmem:[%s3268 + $0x92] sm:$0xff]
    %v4404 = vld [vmem:[%s3268 + $0x9a] sm:$0xff]
    %v4405 = vld [vmem:[%s3268 + $0xaa] sm:$0xff]
    %v4406 = vld [vmem:[%s3268 + $0xb2] sm:$0xff]
    %v4407 = vld [vmem:[%s3268 + $0xc2] sm:$0xff]
    %v4408 = vld [vmem:[%s3268 + $0xca] sm:$0xff]
    %v4409 = vld [vmem:[%s3268 + $0xda] sm:$0xff]
    %v4410 = vld [vmem:[%s3268 + $0xe2] sm:$0xff]
    %v4411 = vld [vmem:[%s3268 + $0xf2] sm:$0xff]
    %v4412 = vld [vmem:[%s3268 + $0xfa] sm:$0xff]
    %v4413 = vld [vmem:[%s3268 + $0x10a] sm:$0xff]
    %v4414 = vld [vmem:[%s3268 + $0x112] sm:$0xff]
    %v4415 = vld [vmem:[%s3268 + $0x122] sm:$0xff]
    %v4416 = vld [vmem:[%s3268 + $0x12a] sm:$0xff]
    %v4417 = vld [vmem:[%s3268 + $0x13a] sm:$0xff]
    %v4418 = vld [vmem:[%s3268 + $0x142] sm:$0xff]
    %v4419 = vld [vmem:[%s3268 + $0x152] sm:$0xff]
    %v4420 = vld [vmem:[%s3268 + $0x15a] sm:$0xff]
    %v4421 = vld [vmem:[%s3268 + $0x16a] sm:$0xff]
    %v4422 = vld [vmem:[%s3268 + $0x172] sm:$0xff]
    %v4423 = vld [vmem:[%s3268 + $0x1b2] sm:$0xff]
    %v4424 = vld [vmem:[%s3268 + $0x1ba] sm:$0xff]
    %v4425 = vld [vmem:[%s3268 + $0x1ca] sm:$0xff]
    %v4426 = vld [vmem:[%s3268 + $0x1d2] sm:$0xff]
    %v4427 = vld [vmem:[%s3268 + $0x1e2] sm:$0xff]
    %v4428 = vld [vmem:[%s3268 + $0x1ea] sm:$0xff]
    %v4429 = vld [vmem:[%s3268 + $0x1fa] sm:$0xff]
    %v4430 = vld [vmem:[%s3268 + $0x202] sm:$0xff]
    %v4431 = vld [vmem:[%s3268 + $0x212] sm:$0xff]
    %v4432 = vld [vmem:[%s3268 + $0x21a] sm:$0xff]
    %v4433 = vld [vmem:[%s3268 + $0x22a] sm:$0xff]
    %v4434 = vld [vmem:[%s3268 + $0x232] sm:$0xff]
    %v4435 = vld [vmem:[%s3268 + $0x242] sm:$0xff]
    %v4436 = vld [vmem:[%s3268 + $0x24a] sm:$0xff]
    %v4437 = vld [vmem:[%s3268 + $0x25a] sm:$0xff]
    %v4438 = vld [vmem:[%s3268 + $0x262] sm:$0xff]
    %v4439 = vld [vmem:[%s3268 + $0x272] sm:$0xff]
    %v4440 = vld [vmem:[%s3268 + $0x27a] sm:$0xff]
    %v4441 = vld [vmem:[%s3268 + $0x28a] sm:$0xff]
    %v4442 = vld [vmem:[%s3268 + $0x292] sm:$0xff]
    %v4443 = vld [vmem:[%s3268 + $0x2a2] sm:$0xff]
    %v4444 = vld [vmem:[%s3268 + $0x2aa] sm:$0xff]
    %v4445 = vld [vmem:[%s3268 + $0x2ba] sm:$0xff]
    %v4446 = vld [vmem:[%s3268 + $0x2c2] sm:$0xff]
    %v4447 = vld [vmem:[%s3268 + $0x2d2] sm:$0xff]
    %v4448 = vld [vmem:[%s3268 + $0x2da] sm:$0xff]
    %v4449 = vld [vmem:[%s3268 + $0x2ea] sm:$0xff]
    %v4450 = vld [vmem:[%s3268 + $0x2f2] sm:$0xff]
    %v4451 = vld [vmem:[%s3268 + $0x302] sm:$0xff]
    %v4452 = vld [vmem:[%s3268 + $0x30a] sm:$0xff]
    %v4453 = vld [vmem:[%s3268 + $0x31a] sm:$0xff]
    %v4454 = vld [vmem:[%s3268 + $0x322] sm:$0xff]
    %v4455 = vpack.c.bf16 %v4392, %v4391
    %v4456 = vpack.c.bf16 %v4394, %v4393
    %v4457 = vpack.c.bf16 %v4396, %v4395
    %v4458 = vpack.c.bf16 %v4398, %v4397
    %v4459 = vpack.c.bf16 %v4400, %v4399
    %v4460 = vpack.c.bf16 %v4402, %v4401
    %v4461 = vpack.c.bf16 %v4404, %v4403
    %v4462 = vpack.c.bf16 %v4406, %v4405
    %v4463 = vpack.c.bf16 %v4408, %v4407
    %v4464 = vpack.c.bf16 %v4410, %v4409
    %v4465 = vpack.c.bf16 %v4412, %v4411
    %v4466 = vpack.c.bf16 %v4414, %v4413
    %v4467 = vpack.c.bf16 %v4416, %v4415
    %v4468 = vpack.c.bf16 %v4418, %v4417
    %v4469 = vpack.c.bf16 %v4420, %v4419
    %v4470 = vpack.c.bf16 %v4422, %v4421
    %v4471 = vpack.c.bf16 %v4424, %v4423
    %v4472 = vpack.c.bf16 %v4426, %v4425
    %v4473 = vpack.c.bf16 %v4428, %v4427
    %v4474 = vpack.c.bf16 %v4430, %v4429
    %v4475 = vpack.c.bf16 %v4432, %v4431
    %v4476 = vpack.c.bf16 %v4434, %v4433
    %v4477 = vpack.c.bf16 %v4436, %v4435
    %v4478 = vpack.c.bf16 %v4438, %v4437
    %v4479 = vpack.c.bf16 %v4440, %v4439
    %v4480 = vpack.c.bf16 %v4442, %v4441
    %v4481 = vpack.c.bf16 %v4444, %v4443
    %v4482 = vpack.c.bf16 %v4446, %v4445
    %v4483 = vpack.c.bf16 %v4448, %v4447
    %v4484 = vpack.c.bf16 %v4450, %v4449
    %v4485 = vpack.c.bf16 %v4452, %v4451
    %v4486 = vpack.c.bf16 %v4454, %v4453
    %v4487 = vld [vmem:[%s1 + $0x80] sm:$0xf]
    %v4488 = vld [vmem:[%s1 + $0x84] sm:$0xf]
    %v4489 = vld [vmem:[%s1 + $0x88] sm:$0xf]
    %v4490 = vld [vmem:[%s1 + $0x8c] sm:$0xf]
    %v4495 = vunpack.c.l.b16 %v4487
    %v4496 = vunpack.c.l.b16 %v4488
    %v4497 = vunpack.c.l.b16 %v4489
    %v4498 = vunpack.c.l.b16 %v4490
    %v4499 = vpack.c.b16 %v4496, %v4495
    %v4500 = vpack.c.b16 %v4498, %v4497
    %v4504 = vsel %vm240, %v4455, 0
    %v4507 = vsel %vm240, %v4456, 0
    %v4510 = vsel %vm240, %v4457, 0
    %v4513 = vsel %vm240, %v4458, 0
    %v4516 = vsel %vm240, %v4459, 0
    %v4519 = vsel %vm240, %v4460, 0
    %v4522 = vsel %vm240, %v4461, 0
    %v4525 = vsel %vm240, %v4462, 0
    %v4528 = vsel %vm240, %v4463, 0
    %v4531 = vsel %vm240, %v4464, 0
    %v4534 = vsel %vm240, %v4465, 0
    %v4537 = vsel %vm240, %v4466, 0
    %v4540 = vsel %vm240, %v4467, 0
    %v4543 = vsel %vm240, %v4468, 0
    %v4546 = vsel %vm240, %v4469, 0
    %v4549 = vsel %vm240, %v4470, 0
    %v4552 = vsel %vm240, %v4471, 0
    %v4555 = vsel %vm240, %v4472, 0
    %v4558 = vsel %vm240, %v4473, 0
    %v4561 = vsel %vm240, %v4474, 0
    %v4564 = vsel %vm240, %v4475, 0
    %v4567 = vsel %vm240, %v4476, 0
    %v4570 = vsel %vm240, %v4477, 0
    %v4573 = vsel %vm240, %v4478, 0
    %v4576 = vsel %vm240, %v4479, 0
    %v4579 = vsel %vm240, %v4480, 0
    %v4582 = vsel %vm240, %v4481, 0
    %v4585 = vsel %vm240, %v4482, 0
    %v4588 = vsel %vm240, %v4483, 0
    %v4591 = vsel %vm240, %v4484, 0
    %v4594 = vsel %vm240, %v4485, 0
    %v4597 = vsel %vm240, %v4486, 0
    %4599 = vmatprep.subr.bf16.mxu0 0
    %4600 = vmatpush1.bf16.msra.mxu0 %v4499
    %4601 = vmatprep.subr.bf16.mxu0 0
    %4602 = vmatpush1.bf16.msra.mxu0 %v4500
    %4603 = vmatprep.subr.bf16.mxu0 0
    %4604 = vmatpush1.bf16.msra.mxu0 0
    %4605 = vmatprep.subr.bf16.mxu0 0
    %4606 = vmatpush1.bf16.msra.mxu0 0
    %4607 = vmatprep.subr.bf16.mxu0 0
    %4608 = vmatpush1.bf16.msra.mxu0 0
    %4609 = vmatprep.subr.bf16.mxu0 0
    %4610 = vmatpush1.bf16.msra.mxu0 0
    %4611 = vmatprep.subr.bf16.mxu0 0
    %4612 = vmatpush1.bf16.msra.mxu0 0
    %4613 = vmatprep.subr.bf16.mxu0 0
    %4614 = vmatpush1.bf16.msra.mxu0 0
    %4615 = vmatprep.subr.bf16.mxu0 0
    %4616 = vmatpush1.bf16.msra.mxu0 0
    %4617 = vmatprep.subr.bf16.mxu0 0
    %4618 = vmatpush1.bf16.msra.mxu0 0
    %4619 = vmatprep.subr.bf16.mxu0 0
    %4620 = vmatpush1.bf16.msra.mxu0 0
    %4621 = vmatprep.subr.bf16.mxu0 0
    %4622 = vmatpush1.bf16.msra.mxu0 0
    %4623 = vmatprep.subr.bf16.mxu0 0
    %4624 = vmatpush1.bf16.msra.mxu0 0
    %4625 = vmatprep.subr.bf16.mxu0 0
    %4626 = vmatpush1.bf16.msra.mxu0 0
    %4627 = vmatprep.subr.bf16.mxu0 0
    %4628 = vmatpush1.bf16.msra.mxu0 0
    %4629 = vmatprep.subr.bf16.mxu0 0
    %4630 = vmatpush1.bf16.msra.mxu0 0
    %4631 = vmatprep.mubr.bf16.mxu0 0
    %4632 = vmatmul.mubr.bf16.gmra.mrb[0].mxu0 %v4504
    %v4633 = vpop.f32.mrb[0].mxu0
    %v4634 = vadd.f32 0.0, %v4633
    %v4635 = vpop.f32.mrb[0].mxu0
    %v4636 = vpop.f32.mrb[0].mxu0
    %v4637 = vadd.f32 0.0, %v4636
    %v4638 = vpop.f32.mrb[0].mxu0
    %4639 = vmatprep.mubr.bf16.mxu0 0
    %4640 = vmatmul.mubr.bf16.gmra.mrb[0].mxu0 %v4507
    %v4641 = vpop.f32.mrb[0].mxu0
    %v4642 = vadd.f32 0.0, %v4641
    %v4643 = vpop.f32.mrb[0].mxu0
    %v4644 = vpop.f32.mrb[0].mxu0
    %v4645 = vadd.f32 0.0, %v4644
    %v4646 = vpop.f32.mrb[0].mxu0
    %4647 = vmatprep.mubr.bf16.mxu0 0
    %4648 = vmatmul.mubr.bf16.gmra.mrb[0].mxu0 %v4510
    %v4649 = vpop.f32.mrb[0].mxu0
    %v4650 = vadd.f32 0.0, %v4649
    %v4651 = vpop.f32.mrb[0].mxu0
    %v4652 = vpop.f32.mrb[0].mxu0
    %v4653 = vadd.f32 0.0, %v4652
    %v4654 = vpop.f32.mrb[0].mxu0
    %4655 = vmatprep.mubr.bf16.mxu0 0
    %4656 = vmatmul.mubr.bf16.gmra.mrb[0].mxu0 %v4513
    %v4657 = vpop.f32.mrb[0].mxu0
    %v4658 = vadd.f32 0.0, %v4657
    %v4659 = vpop.f32.mrb[0].mxu0
    %v4660 = vpop.f32.mrb[0].mxu0
    %v4661 = vadd.f32 0.0, %v4660
    %v4662 = vpop.f32.mrb[0].mxu0
    %4663 = vmatprep.mubr.bf16.mxu0 0
    %4664 = vmatmul.mubr.bf16.gmra.mrb[0].mxu0 %v4516
    %v4665 = vpop.f32.mrb[0].mxu0
    %v4666 = vadd.f32 0.0, %v4665
    %v4667 = vpop.f32.mrb[0].mxu0
    %v4668 = vpop.f32.mrb[0].mxu0
    %v4669 = vadd.f32 0.0, %v4668
    %v4670 = vpop.f32.mrb[0].mxu0
    %4671 = vmatprep.mubr.bf16.mxu0 0
    %4672 = vmatmul.mubr.bf16.gmra.mrb[0].mxu0 %v4519
    %v4673 = vpop.f32.mrb[0].mxu0
    %v4674 = vadd.f32 0.0, %v4673
    %v4675 = vpop.f32.mrb[0].mxu0
    %v4676 = vpop.f32.mrb[0].mxu0
    %v4677 = vadd.f32 0.0, %v4676
    %v4678 = vpop.f32.mrb[0].mxu0
    %4679 = vmatprep.mubr.bf16.mxu0 0
    %4680 = vmatmul.mubr.bf16.gmra.mrb[0].mxu0 %v4522
    %v4681 = vpop.f32.mrb[0].mxu0
    %v4682 = vadd.f32 0.0, %v4681
    %v4683 = vpop.f32.mrb[0].mxu0
    %v4684 = vpop.f32.mrb[0].mxu0
    %v4685 = vadd.f32 0.0, %v4684
    %v4686 = vpop.f32.mrb[0].mxu0
    %4687 = vmatprep.mubr.bf16.mxu0 0
    %4688 = vmatmul.mubr.bf16.gmra.mrb[0].mxu0 %v4525
    %v4689 = vpop.f32.mrb[0].mxu0
    %v4690 = vadd.f32 0.0, %v4689
    %v4691 = vpop.f32.mrb[0].mxu0
    %v4692 = vpop.f32.mrb[0].mxu0
    %v4693 = vadd.f32 0.0, %v4692
    %v4694 = vpop.f32.mrb[0].mxu0
    %4695 = vmatprep.mubr.bf16.mxu0 0
    %4696 = vmatmul.mubr.bf16.gmra.mrb[0].mxu0 %v4528
    %v4697 = vpop.f32.mrb[0].mxu0
    %v4698 = vadd.f32 0.0, %v4697
    %v4699 = vpop.f32.mrb[0].mxu0
    %v4700 = vpop.f32.mrb[0].mxu0
    %v4701 = vadd.f32 0.0, %v4700
    %v4702 = vpop.f32.mrb[0].mxu0
    %4703 = vmatprep.mubr.bf16.mxu0 0
    %4704 = vmatmul.mubr.bf16.gmra.mrb[0].mxu0 %v4531
    %v4705 = vpop.f32.mrb[0].mxu0
    %v4706 = vadd.f32 0.0, %v4705
    %v4707 = vpop.f32.mrb[0].mxu0
    %v4708 = vpop.f32.mrb[0].mxu0
    %v4709 = vadd.f32 0.0, %v4708
    %v4710 = vpop.f32.mrb[0].mxu0
    %4711 = vmatprep.mubr.bf16.mxu0 0
    %4712 = vmatmul.mubr.bf16.gmra.mrb[0].mxu0 %v4534
    %v4713 = vpop.f32.mrb[0].mxu0
    %v4714 = vadd.f32 0.0, %v4713
    %v4715 = vpop.f32.mrb[0].mxu0
    %v4716 = vpop.f32.mrb[0].mxu0
    %v4717 = vadd.f32 0.0, %v4716
    %v4718 = vpop.f32.mrb[0].mxu0
    %4719 = vmatprep.mubr.bf16.mxu0 0
    %4720 = vmatmul.mubr.bf16.gmra.mrb[0].mxu0 %v4537
    %v4721 = vpop.f32.mrb[0].mxu0
    %v4722 = vadd.f32 0.0, %v4721
    %v4723 = vpop.f32.mrb[0].mxu0
    %v4724 = vpop.f32.mrb[0].mxu0
    %v4725 = vadd.f32 0.0, %v4724
    %v4726 = vpop.f32.mrb[0].mxu0
    %4727 = vmatprep.mubr.bf16.mxu0 0
    %4728 = vmatmul.mubr.bf16.gmra.mrb[0].mxu0 %v4540
    %v4729 = vpop.f32.mrb[0].mxu0
    %v4730 = vadd.f32 0.0, %v4729
    %v4731 = vpop.f32.mrb[0].mxu0
    %v4732 = vpop.f32.mrb[0].mxu0
    %v4733 = vadd.f32 0.0, %v4732
    %v4734 = vpop.f32.mrb[0].mxu0
    %4735 = vmatprep.mubr.bf16.mxu0 0
    %4736 = vmatmul.mubr.bf16.gmra.mrb[0].mxu0 %v4543
    %v4737 = vpop.f32.mrb[0].mxu0
    %v4738 = vadd.f32 0.0, %v4737
    %v4739 = vpop.f32.mrb[0].mxu0
    %v4740 = vpop.f32.mrb[0].mxu0
    %v4741 = vadd.f32 0.0, %v4740
    %v4742 = vpop.f32.mrb[0].mxu0
    %4743 = vmatprep.mubr.bf16.mxu0 0
    %4744 = vmatmul.mubr.bf16.gmra.mrb[0].mxu0 %v4546
    %v4745 = vpop.f32.mrb[0].mxu0
    %v4746 = vadd.f32 0.0, %v4745
    %v4747 = vpop.f32.mrb[0].mxu0
    %v4748 = vpop.f32.mrb[0].mxu0
    %v4749 = vadd.f32 0.0, %v4748
    %v4750 = vpop.f32.mrb[0].mxu0
    %4751 = vmatprep.mubr.bf16.mxu0 0
    %4752 = vmatmul.mubr.bf16.gmra.mrb[0].mxu0 %v4549
    %v4753 = vpop.f32.mrb[0].mxu0
    %v4754 = vadd.f32 0.0, %v4753
    %v4755 = vpop.f32.mrb[0].mxu0
    %v4756 = vpop.f32.mrb[0].mxu0
    %v4757 = vadd.f32 0.0, %v4756
    %v4758 = vpop.f32.mrb[0].mxu0
    %4759 = vmatprep.mubr.bf16.mxu0 0
    %4760 = vmatmul.mubr.bf16.gmra.mrb[0].mxu0 %v4552
    %v4761 = vpop.f32.mrb[0].mxu0
    %v4762 = vadd.f32 0.0, %v4761
    %v4763 = vpop.f32.mrb[0].mxu0
    %v4764 = vpop.f32.mrb[0].mxu0
    %v4765 = vadd.f32 0.0, %v4764
    %v4766 = vpop.f32.mrb[0].mxu0
    %4767 = vmatprep.mubr.bf16.mxu0 0
    %4768 = vmatmul.mubr.bf16.gmra.mrb[0].mxu0 %v4555
    %v4769 = vpop.f32.mrb[0].mxu0
    %v4770 = vadd.f32 0.0, %v4769
    %v4771 = vpop.f32.mrb[0].mxu0
    %v4772 = vpop.f32.mrb[0].mxu0
    %v4773 = vadd.f32 0.0, %v4772
    %v4774 = vpop.f32.mrb[0].mxu0
    %4775 = vmatprep.mubr.bf16.mxu0 0
    %4776 = vmatmul.mubr.bf16.gmra.mrb[0].mxu0 %v4558
    %v4777 = vpop.f32.mrb[0].mxu0
    %v4778 = vadd.f32 0.0, %v4777
    %v4779 = vpop.f32.mrb[0].mxu0
    %v4780 = vpop.f32.mrb[0].mxu0
    %v4781 = vadd.f32 0.0, %v4780
    %v4782 = vpop.f32.mrb[0].mxu0
    %4783 = vmatprep.mubr.bf16.mxu0 0
    %4784 = vmatmul.mubr.bf16.gmra.mrb[0].mxu0 %v4561
    %v4785 = vpop.f32.mrb[0].mxu0
    %v4786 = vadd.f32 0.0, %v4785
    %v4787 = vpop.f32.mrb[0].mxu0
    %v4788 = vpop.f32.mrb[0].mxu0
    %v4789 = vadd.f32 0.0, %v4788
    %v4790 = vpop.f32.mrb[0].mxu0
    %4791 = vmatprep.mubr.bf16.mxu0 0
    %4792 = vmatmul.mubr.bf16.gmra.mrb[0].mxu0 %v4564
    %v4793 = vpop.f32.mrb[0].mxu0
    %v4794 = vadd.f32 0.0, %v4793
    %v4795 = vpop.f32.mrb[0].mxu0
    %v4796 = vpop.f32.mrb[0].mxu0
    %v4797 = vadd.f32 0.0, %v4796
    %v4798 = vpop.f32.mrb[0].mxu0
    %4799 = vmatprep.mubr.bf16.mxu0 0
    %4800 = vmatmul.mubr.bf16.gmra.mrb[0].mxu0 %v4567
    %v4801 = vpop.f32.mrb[0].mxu0
    %v4802 = vadd.f32 0.0, %v4801
    %v4803 = vpop.f32.mrb[0].mxu0
    %v4804 = vpop.f32.mrb[0].mxu0
    %v4805 = vadd.f32 0.0, %v4804
    %v4806 = vpop.f32.mrb[0].mxu0
    %4807 = vmatprep.mubr.bf16.mxu0 0
    %4808 = vmatmul.mubr.bf16.gmra.mrb[0].mxu0 %v4570
    %v4809 = vpop.f32.mrb[0].mxu0
    %v4810 = vadd.f32 0.0, %v4809
    %v4811 = vpop.f32.mrb[0].mxu0
    %v4812 = vpop.f32.mrb[0].mxu0
    %v4813 = vadd.f32 0.0, %v4812
    %v4814 = vpop.f32.mrb[0].mxu0
    %4815 = vmatprep.mubr.bf16.mxu0 0
    %4816 = vmatmul.mubr.bf16.gmra.mrb[0].mxu0 %v4573
    %v4817 = vpop.f32.mrb[0].mxu0
    %v4818 = vadd.f32 0.0, %v4817
    %v4819 = vpop.f32.mrb[0].mxu0
    %v4820 = vpop.f32.mrb[0].mxu0
    %v4821 = vadd.f32 0.0, %v4820
    %v4822 = vpop.f32.mrb[0].mxu0
    %4823 = vmatprep.mubr.bf16.mxu0 0
    %4824 = vmatmul.mubr.bf16.gmra.mrb[0].mxu0 %v4576
    %v4825 = vpop.f32.mrb[0].mxu0
    %v4826 = vadd.f32 0.0, %v4825
    %v4827 = vpop.f32.mrb[0].mxu0
    %v4828 = vpop.f32.mrb[0].mxu0
    %v4829 = vadd.f32 0.0, %v4828
    %v4830 = vpop.f32.mrb[0].mxu0
    %4831 = vmatprep.mubr.bf16.mxu0 0
    %4832 = vmatmul.mubr.bf16.gmra.mrb[0].mxu0 %v4579
    %v4833 = vpop.f32.mrb[0].mxu0
    %v4834 = vadd.f32 0.0, %v4833
    %v4835 = vpop.f32.mrb[0].mxu0
    %v4836 = vpop.f32.mrb[0].mxu0
    %v4837 = vadd.f32 0.0, %v4836
    %v4838 = vpop.f32.mrb[0].mxu0
    %4839 = vmatprep.mubr.bf16.mxu0 0
    %4840 = vmatmul.mubr.bf16.gmra.mrb[0].mxu0 %v4582
    %v4841 = vpop.f32.mrb[0].mxu0
    %v4842 = vadd.f32 0.0, %v4841
    %v4843 = vpop.f32.mrb[0].mxu0
    %v4844 = vpop.f32.mrb[0].mxu0
    %v4845 = vadd.f32 0.0, %v4844
    %v4846 = vpop.f32.mrb[0].mxu0
    %4847 = vmatprep.mubr.bf16.mxu0 0
    %4848 = vmatmul.mubr.bf16.gmra.mrb[0].mxu0 %v4585
    %v4849 = vpop.f32.mrb[0].mxu0
    %v4850 = vadd.f32 0.0, %v4849
    %v4851 = vpop.f32.mrb[0].mxu0
    %v4852 = vpop.f32.mrb[0].mxu0
    %v4853 = vadd.f32 0.0, %v4852
    %v4854 = vpop.f32.mrb[0].mxu0
    %4855 = vmatprep.mubr.bf16.mxu0 0
    %4856 = vmatmul.mubr.bf16.gmra.mrb[0].mxu0 %v4588
    %v4857 = vpop.f32.mrb[0].mxu0
    %v4858 = vadd.f32 0.0, %v4857
    %v4859 = vpop.f32.mrb[0].mxu0
    %v4860 = vpop.f32.mrb[0].mxu0
    %v4861 = vadd.f32 0.0, %v4860
    %v4862 = vpop.f32.mrb[0].mxu0
    %4863 = vmatprep.mubr.bf16.mxu0 0
    %4864 = vmatmul.mubr.bf16.gmra.mrb[0].mxu0 %v4591
    %v4865 = vpop.f32.mrb[0].mxu0
    %v4866 = vadd.f32 0.0, %v4865
    %v4867 = vpop.f32.mrb[0].mxu0
    %v4868 = vpop.f32.mrb[0].mxu0
    %v4869 = vadd.f32 0.0, %v4868
    %v4870 = vpop.f32.mrb[0].mxu0
    %4871 = vmatprep.mubr.bf16.mxu0 0
    %4872 = vmatmul.mubr.bf16.gmra.mrb[0].mxu0 %v4594
    %v4873 = vpop.f32.mrb[0].mxu0
    %v4874 = vadd.f32 0.0, %v4873
    %v4875 = vpop.f32.mrb[0].mxu0
    %v4876 = vpop.f32.mrb[0].mxu0
    %v4877 = vadd.f32 0.0, %v4876
    %v4878 = vpop.f32.mrb[0].mxu0
    %4879 = vmatprep.mubr.bf16.mxu0 0
    %4880 = vmatmul.mubr.bf16.gmra.mrb[0].mxu0 %v4597
    %v4881 = vpop.f32.mrb[0].mxu0
    %v4882 = vadd.f32 0.0, %v4881
    %v4883 = vpop.f32.mrb[0].mxu0
    %v4884 = vpop.f32.mrb[0].mxu0
    %v4885 = vadd.f32 0.0, %v4884
    %v4886 = vpop.f32.mrb[0].mxu0
    %4887 = vdwg.mxu0
    %v4888 = vadd.f32 %v4327, %v4634
    %v4889 = vadd.f32 %v4328, %v4637
    %v4890 = vadd.f32 %v4329, %v4642
    %v4891 = vadd.f32 %v4330, %v4645
    %v4892 = vadd.f32 %v4331, %v4650
    %v4893 = vadd.f32 %v4332, %v4653
    %v4894 = vadd.f32 %v4333, %v4658
    %v4895 = vadd.f32 %v4334, %v4661
    %v4896 = vadd.f32 %v4335, %v4666
    %v4897 = vadd.f32 %v4336, %v4669
    %v4898 = vadd.f32 %v4337, %v4674
    %v4899 = vadd.f32 %v4338, %v4677
    %v4900 = vadd.f32 %v4339, %v4682
    %v4901 = vadd.f32 %v4340, %v4685
    %v4902 = vadd.f32 %v4341, %v4690
    %v4903 = vadd.f32 %v4342, %v4693
    %v4904 = vadd.f32 %v4343, %v4698
    %v4905 = vadd.f32 %v4344, %v4701
    %v4906 = vadd.f32 %v4345, %v4706
    %v4907 = vadd.f32 %v4346, %v4709
    %v4908 = vadd.f32 %v4347, %v4714
    %v4909 = vadd.f32 %v4348, %v4717
    %v4910 = vadd.f32 %v4349, %v4722
    %v4911 = vadd.f32 %v4350, %v4725
    %v4912 = vadd.f32 %v4351, %v4730
    %v4913 = vadd.f32 %v4352, %v4733
    %v4914 = vadd.f32 %v4353, %v4738
    %v4915 = vadd.f32 %v4354, %v4741
    %v4916 = vadd.f32 %v4355, %v4746
    %v4917 = vadd.f32 %v4356, %v4749
    %v4918 = vadd.f32 %v4357, %v4754
    %v4919 = vadd.f32 %v4358, %v4757
    %v4920 = vadd.f32 %v4359, %v4762
    %v4921 = vadd.f32 %v4360, %v4765
    %v4922 = vadd.f32 %v4361, %v4770
    %v4923 = vadd.f32 %v4362, %v4773
    %v4924 = vadd.f32 %v4363, %v4778
    %v4925 = vadd.f32 %v4364, %v4781
    %v4926 = vadd.f32 %v4365, %v4786
    %v4927 = vadd.f32 %v4366, %v4789
    %v4928 = vadd.f32 %v4367, %v4794
    %v4929 = vadd.f32 %v4368, %v4797
    %v4930 = vadd.f32 %v4369, %v4802
    %v4931 = vadd.f32 %v4370, %v4805
    %v4932 = vadd.f32 %v4371, %v4810
    %v4933 = vadd.f32 %v4372, %v4813
    %v4934 = vadd.f32 %v4373, %v4818
    %v4935 = vadd.f32 %v4374, %v4821
    %v4936 = vadd.f32 %v4375, %v4826
    %v4937 = vadd.f32 %v4376, %v4829
    %v4938 = vadd.f32 %v4377, %v4834
    %v4939 = vadd.f32 %v4378, %v4837
    %v4940 = vadd.f32 %v4379, %v4842
    %v4941 = vadd.f32 %v4380, %v4845
    %v4942 = vadd.f32 %v4381, %v4850
    %v4943 = vadd.f32 %v4382, %v4853
    %v4944 = vadd.f32 %v4383, %v4858
    %v4945 = vadd.f32 %v4384, %v4861
    %v4946 = vadd.f32 %v4385, %v4866
    %v4947 = vadd.f32 %v4386, %v4869
    %v4948 = vadd.f32 %v4387, %v4874
    %v4949 = vadd.f32 %v4388, %v4877
    %v4950 = vadd.f32 %v4389, %v4882
    %v4951 = vadd.f32 %v4390, %v4885
    %v4952 = vsel %vm240, %v4888, 0.0
    %v4953 = vsel %vm240, %v4889, 0.0
    %v4954 = vadd.f32 %v4952, %v4953
    %v4955 = vsel %vm240, %v4890, 0.0
    %v4956 = vadd.f32 %v4954, %v4955
    %v4957 = vsel %vm240, %v4891, 0.0
    %v4958 = vadd.f32 %v4956, %v4957
    %v4959 = vsel %vm240, %v4892, 0.0
    %v4960 = vadd.f32 %v4958, %v4959
    %v4961 = vsel %vm240, %v4893, 0.0
    %v4962 = vadd.f32 %v4960, %v4961
    %v4963 = vsel %vm240, %v4894, 0.0
    %v4964 = vadd.f32 %v4962, %v4963
    %v4965 = vsel %vm240, %v4895, 0.0
    %v4966 = vadd.f32 %v4964, %v4965
    %v4967 = vsel %vm240, %v4896, 0.0
    %v4968 = vadd.f32 %v4966, %v4967
    %v4969 = vsel %vm240, %v4897, 0.0
    %v4970 = vadd.f32 %v4968, %v4969
    %v4971 = vsel %vm240, %v4898, 0.0
    %v4972 = vadd.f32 %v4970, %v4971
    %v4973 = vsel %vm240, %v4899, 0.0
    %v4974 = vadd.f32 %v4972, %v4973
    %v4975 = vsel %vm240, %v4900, 0.0
    %v4976 = vadd.f32 %v4974, %v4975
    %v4977 = vsel %vm240, %v4901, 0.0
    %v4978 = vadd.f32 %v4976, %v4977
    %v4979 = vsel %vm240, %v4902, 0.0
    %v4980 = vadd.f32 %v4978, %v4979
    %v4981 = vsel %vm240, %v4903, 0.0
    %v4982 = vadd.f32 %v4980, %v4981
    %v4983 = vsel %vm240, %v4904, 0.0
    %v4984 = vadd.f32 %v4982, %v4983
    %v4985 = vsel %vm240, %v4905, 0.0
    %v4986 = vadd.f32 %v4984, %v4985
    %v4987 = vsel %vm240, %v4906, 0.0
    %v4988 = vadd.f32 %v4986, %v4987
    %v4989 = vsel %vm240, %v4907, 0.0
    %v4990 = vadd.f32 %v4988, %v4989
    %v4991 = vsel %vm240, %v4908, 0.0
    %v4992 = vadd.f32 %v4990, %v4991
    %v4993 = vsel %vm240, %v4909, 0.0
    %v4994 = vadd.f32 %v4992, %v4993
    %v4995 = vsel %vm240, %v4910, 0.0
    %v4996 = vadd.f32 %v4994, %v4995
    %v4997 = vsel %vm240, %v4911, 0.0
    %v4998 = vadd.f32 %v4996, %v4997
    %v4999 = vsel %vm240, %v4912, 0.0
    %v5000 = vadd.f32 %v4998, %v4999
    %v5001 = vsel %vm240, %v4913, 0.0
    %v5002 = vadd.f32 %v5000, %v5001
    %v5003 = vsel %vm240, %v4914, 0.0
    %v5004 = vadd.f32 %v5002, %v5003
    %v5005 = vsel %vm240, %v4915, 0.0
    %v5006 = vadd.f32 %v5004, %v5005
    %v5007 = vsel %vm240, %v4916, 0.0
    %v5008 = vadd.f32 %v5006, %v5007
    %v5009 = vsel %vm240, %v4917, 0.0
    %v5010 = vadd.f32 %v5008, %v5009
    %v5011 = vsel %vm240, %v4918, 0.0
    %v5012 = vadd.f32 %v5010, %v5011
    %v5013 = vsel %vm240, %v4919, 0.0
    %v5014 = vadd.f32 %v5012, %v5013
    %v5015 = vsel %vm240, %v4920, 0.0
    %v5016 = vadd.f32 %v5014, %v5015
    %v5017 = vsel %vm240, %v4921, 0.0
    %v5018 = vadd.f32 %v5016, %v5017
    %v5019 = vsel %vm240, %v4922, 0.0
    %v5020 = vadd.f32 %v5018, %v5019
    %v5021 = vsel %vm240, %v4923, 0.0
    %v5022 = vadd.f32 %v5020, %v5021
    %v5023 = vsel %vm240, %v4924, 0.0
    %v5024 = vadd.f32 %v5022, %v5023
    %v5025 = vsel %vm240, %v4925, 0.0
    %v5026 = vadd.f32 %v5024, %v5025
    %v5027 = vsel %vm240, %v4926, 0.0
    %v5028 = vadd.f32 %v5026, %v5027
    %v5029 = vsel %vm240, %v4927, 0.0
    %v5030 = vadd.f32 %v5028, %v5029
    %v5031 = vsel %vm240, %v4928, 0.0
    %v5032 = vadd.f32 %v5030, %v5031
    %v5033 = vsel %vm240, %v4929, 0.0
    %v5034 = vadd.f32 %v5032, %v5033
    %v5035 = vsel %vm240, %v4930, 0.0
    %v5036 = vadd.f32 %v5034, %v5035
    %v5037 = vsel %vm240, %v4931, 0.0
    %v5038 = vadd.f32 %v5036, %v5037
    %v5039 = vsel %vm240, %v4932, 0.0
    %v5040 = vadd.f32 %v5038, %v5039
    %v5041 = vsel %vm240, %v4933, 0.0
    %v5042 = vadd.f32 %v5040, %v5041
    %v5043 = vsel %vm240, %v4934, 0.0
    %v5044 = vadd.f32 %v5042, %v5043
    %v5045 = vsel %vm240, %v4935, 0.0
    %v5046 = vadd.f32 %v5044, %v5045
    %v5047 = vsel %vm240, %v4936, 0.0
    %v5048 = vadd.f32 %v5046, %v5047
    %v5049 = vsel %vm240, %v4937, 0.0
    %v5050 = vadd.f32 %v5048, %v5049
    %v5051 = vsel %vm240, %v4938, 0.0
    %v5052 = vadd.f32 %v5050, %v5051
    %v5053 = vsel %vm240, %v4939, 0.0
    %v5054 = vadd.f32 %v5052, %v5053
    %v5055 = vsel %vm240, %v4940, 0.0
    %v5056 = vadd.f32 %v5054, %v5055
    %v5057 = vsel %vm240, %v4941, 0.0
    %v5058 = vadd.f32 %v5056, %v5057
    %v5059 = vsel %vm240, %v4942, 0.0
    %v5060 = vadd.f32 %v5058, %v5059
    %v5061 = vsel %vm240, %v4943, 0.0
    %v5062 = vadd.f32 %v5060, %v5061
    %v5063 = vsel %vm240, %v4944, 0.0
    %v5064 = vadd.f32 %v5062, %v5063
    %v5065 = vsel %vm240, %v4945, 0.0
    %v5066 = vadd.f32 %v5064, %v5065
    %v5067 = vsel %vm240, %v4946, 0.0
    %v5068 = vadd.f32 %v5066, %v5067
    %v5069 = vsel %vm240, %v4947, 0.0
    %v5070 = vadd.f32 %v5068, %v5069
    %v5071 = vsel %vm240, %v4948, 0.0
    %v5072 = vadd.f32 %v5070, %v5071
    %v5073 = vsel %vm240, %v4949, 0.0
    %v5074 = vadd.f32 %v5072, %v5073
    %v5075 = vsel %vm240, %v4950, 0.0
    %v5076 = vadd.f32 %v5074, %v5075
    %v5077 = vsel %vm240, %v4951, 0.0
    %v5078 = vadd.f32 %v5076, %v5077
    %v5079 = vrot.slane %v5078, 4
    %v5080 = vadd.f32 %v5078, %v5079
    %v5081 = vrot.slane %v5080, 2
    %v5082 = vadd.f32 %v5080, %v5081
    %v5083 = vrot.slane %v5082, 1
    %v5084 = vadd.f32 %v5082, %v5083
    %v5085 = vrcp.pop 512.0
    %v5086 = vmul.f32 %v5084, %v5085
    %v5087 = vsub.f32 %v4888, %v5086
    %v5088 = vsub.f32 %v4889, %v5086
    %v5089 = vsub.f32 %v4890, %v5086
    %v5090 = vsub.f32 %v4891, %v5086
    %v5091 = vsub.f32 %v4892, %v5086
    %v5092 = vsub.f32 %v4893, %v5086
    %v5093 = vsub.f32 %v4894, %v5086
    %v5094 = vsub.f32 %v4895, %v5086
    %v5095 = vsub.f32 %v4896, %v5086
    %v5096 = vsub.f32 %v4897, %v5086
    %v5097 = vsub.f32 %v4898, %v5086
    %v5098 = vsub.f32 %v4899, %v5086
    %v5099 = vsub.f32 %v4900, %v5086
    %v5100 = vsub.f32 %v4901, %v5086
    %v5101 = vsub.f32 %v4902, %v5086
    %v5102 = vsub.f32 %v4903, %v5086
    %v5103 = vsub.f32 %v4904, %v5086
    %v5104 = vsub.f32 %v4905, %v5086
    %v5105 = vsub.f32 %v4906, %v5086
    %v5106 = vsub.f32 %v4907, %v5086
    %v5107 = vsub.f32 %v4908, %v5086
    %v5108 = vsub.f32 %v4909, %v5086
    %v5109 = vsub.f32 %v4910, %v5086
    %v5110 = vsub.f32 %v4911, %v5086
    %v5111 = vsub.f32 %v4912, %v5086
    %v5112 = vsub.f32 %v4913, %v5086
    %v5113 = vsub.f32 %v4914, %v5086
    %v5114 = vsub.f32 %v4915, %v5086
    %v5115 = vsub.f32 %v4916, %v5086
    %v5116 = vsub.f32 %v4917, %v5086
    %v5117 = vsub.f32 %v4918, %v5086
    %v5118 = vsub.f32 %v4919, %v5086
    %v5119 = vsub.f32 %v4920, %v5086
    %v5120 = vsub.f32 %v4921, %v5086
    %v5121 = vsub.f32 %v4922, %v5086
    %v5122 = vsub.f32 %v4923, %v5086
    %v5123 = vsub.f32 %v4924, %v5086
    %v5124 = vsub.f32 %v4925, %v5086
    %v5125 = vsub.f32 %v4926, %v5086
    %v5126 = vsub.f32 %v4927, %v5086
    %v5127 = vsub.f32 %v4928, %v5086
    %v5128 = vsub.f32 %v4929, %v5086
    %v5129 = vsub.f32 %v4930, %v5086
    %v5130 = vsub.f32 %v4931, %v5086
    %v5131 = vsub.f32 %v4932, %v5086
    %v5132 = vsub.f32 %v4933, %v5086
    %v5133 = vsub.f32 %v4934, %v5086
    %v5134 = vsub.f32 %v4935, %v5086
    %v5135 = vsub.f32 %v4936, %v5086
    %v5136 = vsub.f32 %v4937, %v5086
    %v5137 = vsub.f32 %v4938, %v5086
    %v5138 = vsub.f32 %v4939, %v5086
    %v5139 = vsub.f32 %v4940, %v5086
    %v5140 = vsub.f32 %v4941, %v5086
    %v5141 = vsub.f32 %v4942, %v5086
    %v5142 = vsub.f32 %v4943, %v5086
    %v5143 = vsub.f32 %v4944, %v5086
    %v5144 = vsub.f32 %v4945, %v5086
    %v5145 = vsub.f32 %v4946, %v5086
    %v5146 = vsub.f32 %v4947, %v5086
    %v5147 = vsub.f32 %v4948, %v5086
    %v5148 = vsub.f32 %v4949, %v5086
    %v5149 = vsub.f32 %v4950, %v5086
    %v5150 = vsub.f32 %v4951, %v5086
    %v5151 = vmul.f32 %v5087, %v5087
    %v5152 = vmul.f32 %v5088, %v5088
    %v5153 = vmul.f32 %v5089, %v5089
    %v5154 = vmul.f32 %v5090, %v5090
    %v5155 = vmul.f32 %v5091, %v5091
    %v5156 = vmul.f32 %v5092, %v5092
    %v5157 = vmul.f32 %v5093, %v5093
    %v5158 = vmul.f32 %v5094, %v5094
    %v5159 = vmul.f32 %v5095, %v5095
    %v5160 = vmul.f32 %v5096, %v5096
    %v5161 = vmul.f32 %v5097, %v5097
    %v5162 = vmul.f32 %v5098, %v5098
    %v5163 = vmul.f32 %v5099, %v5099
    %v5164 = vmul.f32 %v5100, %v5100
    %v5165 = vmul.f32 %v5101, %v5101
    %v5166 = vmul.f32 %v5102, %v5102
    %v5167 = vmul.f32 %v5103, %v5103
    %v5168 = vmul.f32 %v5104, %v5104
    %v5169 = vmul.f32 %v5105, %v5105
    %v5170 = vmul.f32 %v5106, %v5106
    %v5171 = vmul.f32 %v5107, %v5107
    %v5172 = vmul.f32 %v5108, %v5108
    %v5173 = vmul.f32 %v5109, %v5109
    %v5174 = vmul.f32 %v5110, %v5110
    %v5175 = vmul.f32 %v5111, %v5111
    %v5176 = vmul.f32 %v5112, %v5112
    %v5177 = vmul.f32 %v5113, %v5113
    %v5178 = vmul.f32 %v5114, %v5114
    %v5179 = vmul.f32 %v5115, %v5115
    %v5180 = vmul.f32 %v5116, %v5116
    %v5181 = vmul.f32 %v5117, %v5117
    %v5182 = vmul.f32 %v5118, %v5118
    %v5183 = vmul.f32 %v5119, %v5119
    %v5184 = vmul.f32 %v5120, %v5120
    %v5185 = vmul.f32 %v5121, %v5121
    %v5186 = vmul.f32 %v5122, %v5122
    %v5187 = vmul.f32 %v5123, %v5123
    %v5188 = vmul.f32 %v5124, %v5124
    %v5189 = vmul.f32 %v5125, %v5125
    %v5190 = vmul.f32 %v5126, %v5126
    %v5191 = vmul.f32 %v5127, %v5127
    %v5192 = vmul.f32 %v5128, %v5128
    %v5193 = vmul.f32 %v5129, %v5129
    %v5194 = vmul.f32 %v5130, %v5130
    %v5195 = vmul.f32 %v5131, %v5131
    %v5196 = vmul.f32 %v5132, %v5132
    %v5197 = vmul.f32 %v5133, %v5133
    %v5198 = vmul.f32 %v5134, %v5134
    %v5199 = vmul.f32 %v5135, %v5135
    %v5200 = vmul.f32 %v5136, %v5136
    %v5201 = vmul.f32 %v5137, %v5137
    %v5202 = vmul.f32 %v5138, %v5138
    %v5203 = vmul.f32 %v5139, %v5139
    %v5204 = vmul.f32 %v5140, %v5140
    %v5205 = vmul.f32 %v5141, %v5141
    %v5206 = vmul.f32 %v5142, %v5142
    %v5207 = vmul.f32 %v5143, %v5143
    %v5208 = vmul.f32 %v5144, %v5144
    %v5209 = vmul.f32 %v5145, %v5145
    %v5210 = vmul.f32 %v5146, %v5146
    %v5211 = vmul.f32 %v5147, %v5147
    %v5212 = vmul.f32 %v5148, %v5148
    %v5213 = vmul.f32 %v5149, %v5149
    %v5214 = vmul.f32 %v5150, %v5150
    %v5215 = vsel %vm240, %v5151, 0.0
    %v5216 = vsel %vm240, %v5152, 0.0
    %v5217 = vadd.f32 %v5215, %v5216
    %v5218 = vsel %vm240, %v5153, 0.0
    %v5219 = vadd.f32 %v5217, %v5218
    %v5220 = vsel %vm240, %v5154, 0.0
    %v5221 = vadd.f32 %v5219, %v5220
    %v5222 = vsel %vm240, %v5155, 0.0
    %v5223 = vadd.f32 %v5221, %v5222
    %v5224 = vsel %vm240, %v5156, 0.0
    %v5225 = vadd.f32 %v5223, %v5224
    %v5226 = vsel %vm240, %v5157, 0.0
    %v5227 = vadd.f32 %v5225, %v5226
    %v5228 = vsel %vm240, %v5158, 0.0
    %v5229 = vadd.f32 %v5227, %v5228
    %v5230 = vsel %vm240, %v5159, 0.0
    %v5231 = vadd.f32 %v5229, %v5230
    %v5232 = vsel %vm240, %v5160, 0.0
    %v5233 = vadd.f32 %v5231, %v5232
    %v5234 = vsel %vm240, %v5161, 0.0
    %v5235 = vadd.f32 %v5233, %v5234
    %v5236 = vsel %vm240, %v5162, 0.0
    %v5237 = vadd.f32 %v5235, %v5236
    %v5238 = vsel %vm240, %v5163, 0.0
    %v5239 = vadd.f32 %v5237, %v5238
    %v5240 = vsel %vm240, %v5164, 0.0
    %v5241 = vadd.f32 %v5239, %v5240
    %v5242 = vsel %vm240, %v5165, 0.0
    %v5243 = vadd.f32 %v5241, %v5242
    %v5244 = vsel %vm240, %v5166, 0.0
    %v5245 = vadd.f32 %v5243, %v5244
    %v5246 = vsel %vm240, %v5167, 0.0
    %v5247 = vadd.f32 %v5245, %v5246
    %v5248 = vsel %vm240, %v5168, 0.0
    %v5249 = vadd.f32 %v5247, %v5248
    %v5250 = vsel %vm240, %v5169, 0.0
    %v5251 = vadd.f32 %v5249, %v5250
    %v5252 = vsel %vm240, %v5170, 0.0
    %v5253 = vadd.f32 %v5251, %v5252
    %v5254 = vsel %vm240, %v5171, 0.0
    %v5255 = vadd.f32 %v5253, %v5254
    %v5256 = vsel %vm240, %v5172, 0.0
    %v5257 = vadd.f32 %v5255, %v5256
    %v5258 = vsel %vm240, %v5173, 0.0
    %v5259 = vadd.f32 %v5257, %v5258
    %v5260 = vsel %vm240, %v5174, 0.0
    %v5261 = vadd.f32 %v5259, %v5260
    %v5262 = vsel %vm240, %v5175, 0.0
    %v5263 = vadd.f32 %v5261, %v5262
    %v5264 = vsel %vm240, %v5176, 0.0
    %v5265 = vadd.f32 %v5263, %v5264
    %v5266 = vsel %vm240, %v5177, 0.0
    %v5267 = vadd.f32 %v5265, %v5266
    %v5268 = vsel %vm240, %v5178, 0.0
    %v5269 = vadd.f32 %v5267, %v5268
    %v5270 = vsel %vm240, %v5179, 0.0
    %v5271 = vadd.f32 %v5269, %v5270
    %v5272 = vsel %vm240, %v5180, 0.0
    %v5273 = vadd.f32 %v5271, %v5272
    %v5274 = vsel %vm240, %v5181, 0.0
    %v5275 = vadd.f32 %v5273, %v5274
    %v5276 = vsel %vm240, %v5182, 0.0
    %v5277 = vadd.f32 %v5275, %v5276
    %v5278 = vsel %vm240, %v5183, 0.0
    %v5279 = vadd.f32 %v5277, %v5278
    %v5280 = vsel %vm240, %v5184, 0.0
    %v5281 = vadd.f32 %v5279, %v5280
    %v5282 = vsel %vm240, %v5185, 0.0
    %v5283 = vadd.f32 %v5281, %v5282
    %v5284 = vsel %vm240, %v5186, 0.0
    %v5285 = vadd.f32 %v5283, %v5284
    %v5286 = vsel %vm240, %v5187, 0.0
    %v5287 = vadd.f32 %v5285, %v5286
    %v5288 = vsel %vm240, %v5188, 0.0
    %v5289 = vadd.f32 %v5287, %v5288
    %v5290 = vsel %vm240, %v5189, 0.0
    %v5291 = vadd.f32 %v5289, %v5290
    %v5292 = vsel %vm240, %v5190, 0.0
    %v5293 = vadd.f32 %v5291, %v5292
    %v5294 = vsel %vm240, %v5191, 0.0
    %v5295 = vadd.f32 %v5293, %v5294
    %v5296 = vsel %vm240, %v5192, 0.0
    %v5297 = vadd.f32 %v5295, %v5296
    %v5298 = vsel %vm240, %v5193, 0.0
    %v5299 = vadd.f32 %v5297, %v5298
    %v5300 = vsel %vm240, %v5194, 0.0
    %v5301 = vadd.f32 %v5299, %v5300
    %v5302 = vsel %vm240, %v5195, 0.0
    %v5303 = vadd.f32 %v5301, %v5302
    %v5304 = vsel %vm240, %v5196, 0.0
    %v5305 = vadd.f32 %v5303, %v5304
    %v5306 = vsel %vm240, %v5197, 0.0
    %v5307 = vadd.f32 %v5305, %v5306
    %v5308 = vsel %vm240, %v5198, 0.0
    %v5309 = vadd.f32 %v5307, %v5308
    %v5310 = vsel %vm240, %v5199, 0.0
    %v5311 = vadd.f32 %v5309, %v5310
    %v5312 = vsel %vm240, %v5200, 0.0
    %v5313 = vadd.f32 %v5311, %v5312
    %v5314 = vsel %vm240, %v5201, 0.0
    %v5315 = vadd.f32 %v5313, %v5314
    %v5316 = vsel %vm240, %v5202, 0.0
    %v5317 = vadd.f32 %v5315, %v5316
    %v5318 = vsel %vm240, %v5203, 0.0
    %v5319 = vadd.f32 %v5317, %v5318
    %v5320 = vsel %vm240, %v5204, 0.0
    %v5321 = vadd.f32 %v5319, %v5320
    %v5322 = vsel %vm240, %v5205, 0.0
    %v5323 = vadd.f32 %v5321, %v5322
    %v5324 = vsel %vm240, %v5206, 0.0
    %v5325 = vadd.f32 %v5323, %v5324
    %v5326 = vsel %vm240, %v5207, 0.0
    %v5327 = vadd.f32 %v5325, %v5326
    %v5328 = vsel %vm240, %v5208, 0.0
    %v5329 = vadd.f32 %v5327, %v5328
    %v5330 = vsel %vm240, %v5209, 0.0
    %v5331 = vadd.f32 %v5329, %v5330
    %v5332 = vsel %vm240, %v5210, 0.0
    %v5333 = vadd.f32 %v5331, %v5332
    %v5334 = vsel %vm240, %v5211, 0.0
    %v5335 = vadd.f32 %v5333, %v5334
    %v5336 = vsel %vm240, %v5212, 0.0
    %v5337 = vadd.f32 %v5335, %v5336
    %v5338 = vsel %vm240, %v5213, 0.0
    %v5339 = vadd.f32 %v5337, %v5338
    %v5340 = vsel %vm240, %v5214, 0.0
    %v5341 = vadd.f32 %v5339, %v5340
    %v5342 = vrot.slane %v5341, 4
    %v5343 = vadd.f32 %v5341, %v5342
    %v5344 = vrot.slane %v5343, 2
    %v5345 = vadd.f32 %v5343, %v5344
    %v5346 = vrot.slane %v5345, 1
    %v5347 = vadd.f32 %v5345, %v5346
    %v5348 = vmul.f32 %v5347, %v5085
    %v5349 = vld [vmem:[%s3] sm:$0x1]
    %v5350 = vadd.f32 %v5348, 1e-05
    %v5351 = vrsqrt.pop %v5350
    %v5352 = vmul.f32 %v5349, %v5351
    %v5353 = vld [vmem:[%s4] sm:$0x1]
    %v5354 = vmul.f32 %v5086, %v5352
    %v5355 = vsub.f32 %v5353, %v5354
    %v5357 = vlaneseq
    %v5358 = vshrl.u32 %v5357, 7
    %v5359 = vsub.s32 0, %v5358
    %v5360 = vrot.slane %v5352, %v5359
    %v5362 = vmul.f32 %v4888, %v5360
    %v5363 = vmul.f32 %v4889, %v5360
    %v5364 = vmul.f32 %v4890, %v5360
    %v5365 = vmul.f32 %v4891, %v5360
    %v5366 = vmul.f32 %v4892, %v5360
    %v5367 = vmul.f32 %v4893, %v5360
    %v5368 = vmul.f32 %v4894, %v5360
    %v5369 = vmul.f32 %v4895, %v5360
    %v5370 = vmul.f32 %v4896, %v5360
    %v5371 = vmul.f32 %v4897, %v5360
    %v5372 = vmul.f32 %v4898, %v5360
    %v5373 = vmul.f32 %v4899, %v5360
    %v5374 = vmul.f32 %v4900, %v5360
    %v5375 = vmul.f32 %v4901, %v5360
    %v5376 = vmul.f32 %v4902, %v5360
    %v5377 = vmul.f32 %v4903, %v5360
    %v5378 = vmul.f32 %v4904, %v5360
    %v5379 = vmul.f32 %v4905, %v5360
    %v5380 = vmul.f32 %v4906, %v5360
    %v5381 = vmul.f32 %v4907, %v5360
    %v5382 = vmul.f32 %v4908, %v5360
    %v5383 = vmul.f32 %v4909, %v5360
    %v5384 = vmul.f32 %v4910, %v5360
    %v5385 = vmul.f32 %v4911, %v5360
    %v5386 = vmul.f32 %v4912, %v5360
    %v5387 = vmul.f32 %v4913, %v5360
    %v5388 = vmul.f32 %v4914, %v5360
    %v5389 = vmul.f32 %v4915, %v5360
    %v5390 = vmul.f32 %v4916, %v5360
    %v5391 = vmul.f32 %v4917, %v5360
    %v5392 = vmul.f32 %v4918, %v5360
    %v5393 = vmul.f32 %v4919, %v5360
    %v5394 = vmul.f32 %v4920, %v5360
    %v5395 = vmul.f32 %v4921, %v5360
    %v5396 = vmul.f32 %v4922, %v5360
    %v5397 = vmul.f32 %v4923, %v5360
    %v5398 = vmul.f32 %v4924, %v5360
    %v5399 = vmul.f32 %v4925, %v5360
    %v5400 = vmul.f32 %v4926, %v5360
    %v5401 = vmul.f32 %v4927, %v5360
    %v5402 = vmul.f32 %v4928, %v5360
    %v5403 = vmul.f32 %v4929, %v5360
    %v5404 = vmul.f32 %v4930, %v5360
    %v5405 = vmul.f32 %v4931, %v5360
    %v5406 = vmul.f32 %v4932, %v5360
    %v5407 = vmul.f32 %v4933, %v5360
    %v5408 = vmul.f32 %v4934, %v5360
    %v5409 = vmul.f32 %v4935, %v5360
    %v5410 = vmul.f32 %v4936, %v5360
    %v5411 = vmul.f32 %v4937, %v5360
    %v5412 = vmul.f32 %v4938, %v5360
    %v5413 = vmul.f32 %v4939, %v5360
    %v5414 = vmul.f32 %v4940, %v5360
    %v5415 = vmul.f32 %v4941, %v5360
    %v5416 = vmul.f32 %v4942, %v5360
    %v5417 = vmul.f32 %v4943, %v5360
    %v5418 = vmul.f32 %v4944, %v5360
    %v5419 = vmul.f32 %v4945, %v5360
    %v5420 = vmul.f32 %v4946, %v5360
    %v5421 = vmul.f32 %v4947, %v5360
    %v5422 = vmul.f32 %v4948, %v5360
    %v5423 = vmul.f32 %v4949, %v5360
    %v5424 = vmul.f32 %v4950, %v5360
    %v5425 = vmul.f32 %v4951, %v5360
    %v5427 = vlaneseq
    %v5428 = vshrl.u32 %v5427, 7
    %v5429 = vsub.s32 0, %v5428
    %v5430 = vrot.slane %v5355, %v5429
    %v5432 = vadd.f32 %v5362, %v5430
    %v5433 = vadd.f32 %v5363, %v5430
    %v5434 = vadd.f32 %v5364, %v5430
    %v5435 = vadd.f32 %v5365, %v5430
    %v5436 = vadd.f32 %v5366, %v5430
    %v5437 = vadd.f32 %v5367, %v5430
    %v5438 = vadd.f32 %v5368, %v5430
    %v5439 = vadd.f32 %v5369, %v5430
    %v5440 = vadd.f32 %v5370, %v5430
    %v5441 = vadd.f32 %v5371, %v5430
    %v5442 = vadd.f32 %v5372, %v5430
    %v5443 = vadd.f32 %v5373, %v5430
    %v5444 = vadd.f32 %v5374, %v5430
    %v5445 = vadd.f32 %v5375, %v5430
    %v5446 = vadd.f32 %v5376, %v5430
    %v5447 = vadd.f32 %v5377, %v5430
    %v5448 = vadd.f32 %v5378, %v5430
    %v5449 = vadd.f32 %v5379, %v5430
    %v5450 = vadd.f32 %v5380, %v5430
    %v5451 = vadd.f32 %v5381, %v5430
    %v5452 = vadd.f32 %v5382, %v5430
    %v5453 = vadd.f32 %v5383, %v5430
    %v5454 = vadd.f32 %v5384, %v5430
    %v5455 = vadd.f32 %v5385, %v5430
    %v5456 = vadd.f32 %v5386, %v5430
    %v5457 = vadd.f32 %v5387, %v5430
    %v5458 = vadd.f32 %v5388, %v5430
    %v5459 = vadd.f32 %v5389, %v5430
    %v5460 = vadd.f32 %v5390, %v5430
    %v5461 = vadd.f32 %v5391, %v5430
    %v5462 = vadd.f32 %v5392, %v5430
    %v5463 = vadd.f32 %v5393, %v5430
    %v5464 = vadd.f32 %v5394, %v5430
    %v5465 = vadd.f32 %v5395, %v5430
    %v5466 = vadd.f32 %v5396, %v5430
    %v5467 = vadd.f32 %v5397, %v5430
    %v5468 = vadd.f32 %v5398, %v5430
    %v5469 = vadd.f32 %v5399, %v5430
    %v5470 = vadd.f32 %v5400, %v5430
    %v5471 = vadd.f32 %v5401, %v5430
    %v5472 = vadd.f32 %v5402, %v5430
    %v5473 = vadd.f32 %v5403, %v5430
    %v5474 = vadd.f32 %v5404, %v5430
    %v5475 = vadd.f32 %v5405, %v5430
    %v5476 = vadd.f32 %v5406, %v5430
    %v5477 = vadd.f32 %v5407, %v5430
    %v5478 = vadd.f32 %v5408, %v5430
    %v5479 = vadd.f32 %v5409, %v5430
    %v5480 = vadd.f32 %v5410, %v5430
    %v5481 = vadd.f32 %v5411, %v5430
    %v5482 = vadd.f32 %v5412, %v5430
    %v5483 = vadd.f32 %v5413, %v5430
    %v5484 = vadd.f32 %v5414, %v5430
    %v5485 = vadd.f32 %v5415, %v5430
    %v5486 = vadd.f32 %v5416, %v5430
    %v5487 = vadd.f32 %v5417, %v5430
    %v5488 = vadd.f32 %v5418, %v5430
    %v5489 = vadd.f32 %v5419, %v5430
    %v5490 = vadd.f32 %v5420, %v5430
    %v5491 = vadd.f32 %v5421, %v5430
    %v5492 = vadd.f32 %v5422, %v5430
    %v5493 = vadd.f32 %v5423, %v5430
    %v5494 = vadd.f32 %v5424, %v5430
    %v5495 = vadd.f32 %v5425, %v5430
    %v5496 = vmax.f32 %v5432, 0.0
    %v5497 = vmax.f32 %v5433, 0.0
    %v5498 = vmax.f32 %v5434, 0.0
    %v5499 = vmax.f32 %v5435, 0.0
    %v5500 = vmax.f32 %v5436, 0.0
    %v5501 = vmax.f32 %v5437, 0.0
    %v5502 = vmax.f32 %v5438, 0.0
    %v5503 = vmax.f32 %v5439, 0.0
    %v5504 = vmax.f32 %v5440, 0.0
    %v5505 = vmax.f32 %v5441, 0.0
    %v5506 = vmax.f32 %v5442, 0.0
    %v5507 = vmax.f32 %v5443, 0.0
    %v5508 = vmax.f32 %v5444, 0.0
    %v5509 = vmax.f32 %v5445, 0.0
    %v5510 = vmax.f32 %v5446, 0.0
    %v5511 = vmax.f32 %v5447, 0.0
    %v5512 = vmax.f32 %v5448, 0.0
    %v5513 = vmax.f32 %v5449, 0.0
    %v5514 = vmax.f32 %v5450, 0.0
    %v5515 = vmax.f32 %v5451, 0.0
    %v5516 = vmax.f32 %v5452, 0.0
    %v5517 = vmax.f32 %v5453, 0.0
    %v5518 = vmax.f32 %v5454, 0.0
    %v5519 = vmax.f32 %v5455, 0.0
    %v5520 = vmax.f32 %v5456, 0.0
    %v5521 = vmax.f32 %v5457, 0.0
    %v5522 = vmax.f32 %v5458, 0.0
    %v5523 = vmax.f32 %v5459, 0.0
    %v5524 = vmax.f32 %v5460, 0.0
    %v5525 = vmax.f32 %v5461, 0.0
    %v5526 = vmax.f32 %v5462, 0.0
    %v5527 = vmax.f32 %v5463, 0.0
    %v5528 = vmax.f32 %v5464, 0.0
    %v5529 = vmax.f32 %v5465, 0.0
    %v5530 = vmax.f32 %v5466, 0.0
    %v5531 = vmax.f32 %v5467, 0.0
    %v5532 = vmax.f32 %v5468, 0.0
    %v5533 = vmax.f32 %v5469, 0.0
    %v5534 = vmax.f32 %v5470, 0.0
    %v5535 = vmax.f32 %v5471, 0.0
    %v5536 = vmax.f32 %v5472, 0.0
    %v5537 = vmax.f32 %v5473, 0.0
    %v5538 = vmax.f32 %v5474, 0.0
    %v5539 = vmax.f32 %v5475, 0.0
    %v5540 = vmax.f32 %v5476, 0.0
    %v5541 = vmax.f32 %v5477, 0.0
    %v5542 = vmax.f32 %v5478, 0.0
    %v5543 = vmax.f32 %v5479, 0.0
    %v5544 = vmax.f32 %v5480, 0.0
    %v5545 = vmax.f32 %v5481, 0.0
    %v5546 = vmax.f32 %v5482, 0.0
    %v5547 = vmax.f32 %v5483, 0.0
    %v5548 = vmax.f32 %v5484, 0.0
    %v5549 = vmax.f32 %v5485, 0.0
    %v5550 = vmax.f32 %v5486, 0.0
    %v5551 = vmax.f32 %v5487, 0.0
    %v5552 = vmax.f32 %v5488, 0.0
    %v5553 = vmax.f32 %v5489, 0.0
    %v5554 = vmax.f32 %v5490, 0.0
    %v5555 = vmax.f32 %v5491, 0.0
    %v5556 = vmax.f32 %v5492, 0.0
    %v5557 = vmax.f32 %v5493, 0.0
    %v5558 = vmax.f32 %v5494, 0.0
    %v5559 = vmax.f32 %v5495, 0.0
    %5560 = vst.msk [vmem:[#allocation2] sm:$0xff] %vm240, 0.0
    %5561 = vst.msk [vmem:[#allocation2 + $0x8] sm:$0xff] %vm240, 0.0
    %vm5562 = vcmask 254976
    %5563 = vst.msk [vmem:[#allocation2 + $0x10] sm:$0x3] %vm5562, 0.0
    %5564 = vst.msk [vmem:[#allocation2 + $0x18] sm:$0xff] %vm240, 0.0
    %5565 = vst.msk [vmem:[#allocation2 + $0x20] sm:$0xff] %vm240, 0.0
    %5566 = vst.msk [vmem:[#allocation2 + $0x28] sm:$0x3] %vm5562, 0.0
    %5567 = vst.msk [vmem:[#allocation2 + $0x30] sm:$0xff] %vm240, 0.0
    %5568 = vst.msk [vmem:[#allocation2 + $0x38] sm:$0xff] %vm240, 0.0
    %5569 = vst.msk [vmem:[#allocation2 + $0x40] sm:$0x3] %vm5562, 0.0
    %5570 = vst.msk [vmem:[#allocation2 + $0x48] sm:$0xff] %vm240, 0.0
    %5571 = vst.msk [vmem:[#allocation2 + $0x50] sm:$0xff] %vm240, 0.0
    %5572 = vst.msk [vmem:[#allocation2 + $0x58] sm:$0x3] %vm5562, 0.0
    %5573 = vst.msk [vmem:[#allocation2 + $0x60] sm:$0xff] %vm240, 0.0
    %5574 = vst.msk [vmem:[#allocation2 + $0x68] sm:$0xff] %vm240, 0.0
    %5575 = vst.msk [vmem:[#allocation2 + $0x70] sm:$0x3] %vm5562, 0.0
    %5576 = vst.msk [vmem:[#allocation2 + $0x78] sm:$0xff] %vm240, 0.0
    %5577 = vst.msk [vmem:[#allocation2 + $0x80] sm:$0xff] %vm240, 0.0
    %5578 = vst.msk [vmem:[#allocation2 + $0x88] sm:$0x3] %vm5562, 0.0
    %5579 = vst.msk [vmem:[#allocation2 + $0x90] sm:$0xff] %vm240, 0.0
    %5580 = vst.msk [vmem:[#allocation2 + $0x98] sm:$0xff] %vm240, 0.0
    %5581 = vst.msk [vmem:[#allocation2 + $0xa0] sm:$0x3] %vm5562, 0.0
    %5582 = vst.msk [vmem:[#allocation2 + $0xa8] sm:$0xff] %vm240, 0.0
    %5583 = vst.msk [vmem:[#allocation2 + $0xb0] sm:$0xff] %vm240, 0.0
    %5584 = vst.msk [vmem:[#allocation2 + $0xb8] sm:$0x3] %vm5562, 0.0
    %5585 = vst.msk [vmem:[#allocation2 + $0xc0] sm:$0xff] %vm240, 0.0
    %5586 = vst.msk [vmem:[#allocation2 + $0xc8] sm:$0xff] %vm240, 0.0
    %5587 = vst.msk [vmem:[#allocation2 + $0xd0] sm:$0x3] %vm5562, 0.0
    %5588 = vst.msk [vmem:[#allocation2 + $0xd8] sm:$0xff] %vm240, 0.0
    %5589 = vst.msk [vmem:[#allocation2 + $0xe0] sm:$0xff] %vm240, 0.0
    %5590 = vst.msk [vmem:[#allocation2 + $0xe8] sm:$0x3] %vm5562, 0.0
    %5591 = vst.msk [vmem:[#allocation2 + $0xf0] sm:$0xff] %vm240, 0.0
    %5592 = vst.msk [vmem:[#allocation2 + $0xf8] sm:$0xff] %vm240, 0.0
    %5593 = vst.msk [vmem:[#allocation2 + $0x100] sm:$0x3] %vm5562, 0.0
    %5594 = vst.msk [vmem:[#allocation2 + $0x108] sm:$0xff] %vm240, 0.0
    %5595 = vst.msk [vmem:[#allocation2 + $0x110] sm:$0xff] %vm240, 0.0
    %5596 = vst.msk [vmem:[#allocation2 + $0x118] sm:$0x3] %vm5562, 0.0
    %5597 = vst.msk [vmem:[#allocation2 + $0x120] sm:$0xff] %vm240, 0.0
    %5598 = vst.msk [vmem:[#allocation2 + $0x128] sm:$0xff] %vm240, 0.0
    %5599 = vst.msk [vmem:[#allocation2 + $0x130] sm:$0x3] %vm5562, 0.0
    %5600 = vst.msk [vmem:[#allocation2 + $0x138] sm:$0xff] %vm240, 0.0
    %5601 = vst.msk [vmem:[#allocation2 + $0x140] sm:$0xff] %vm240, 0.0
    %5602 = vst.msk [vmem:[#allocation2 + $0x148] sm:$0x3] %vm5562, 0.0
    %5603 = vst.msk [vmem:[#allocation2 + $0x150] sm:$0xff] %vm240, 0.0
    %5604 = vst.msk [vmem:[#allocation2 + $0x158] sm:$0xff] %vm240, 0.0
    %5605 = vst.msk [vmem:[#allocation2 + $0x160] sm:$0x3] %vm5562, 0.0
    %5606 = vst.msk [vmem:[#allocation2 + $0x168] sm:$0xff] %vm240, 0.0
    %5607 = vst.msk [vmem:[#allocation2 + $0x170] sm:$0xff] %vm240, 0.0
    %5608 = vst.msk [vmem:[#allocation2 + $0x178] sm:$0x3] %vm5562, 0.0
    %5609 = vst.msk [vmem:[#allocation2 + $0x180] sm:$0xff] %vm240, 0.0
    %5610 = vst.msk [vmem:[#allocation2 + $0x188] sm:$0xff] %vm240, 0.0
    %5611 = vst.msk [vmem:[#allocation2 + $0x190] sm:$0x3] %vm5562, 0.0
    %5612 = vst.msk [vmem:[#allocation2 + $0x198] sm:$0xff] %vm240, 0.0
    %5613 = vst.msk [vmem:[#allocation2 + $0x1a0] sm:$0xff] %vm240, 0.0
    %5614 = vst.msk [vmem:[#allocation2 + $0x1a8] sm:$0x3] %vm5562, 0.0
    %5615 = vst.msk [vmem:[#allocation2 + $0x1b0] sm:$0xff] %vm240, 0.0
    %5616 = vst.msk [vmem:[#allocation2 + $0x1b8] sm:$0xff] %vm240, 0.0
    %5617 = vst.msk [vmem:[#allocation2 + $0x1c0] sm:$0x3] %vm5562, 0.0
    %5618 = vst.msk [vmem:[#allocation2 + $0x1c8] sm:$0xff] %vm240, 0.0
    %5619 = vst.msk [vmem:[#allocation2 + $0x1d0] sm:$0xff] %vm240, 0.0
    %5620 = vst.msk [vmem:[#allocation2 + $0x1d8] sm:$0x3] %vm5562, 0.0
    %5621 = vst.msk [vmem:[#allocation2 + $0x1e0] sm:$0xff] %vm240, 0.0
    %5622 = vst.msk [vmem:[#allocation2 + $0x1e8] sm:$0xff] %vm240, 0.0
    %5623 = vst.msk [vmem:[#allocation2 + $0x1f0] sm:$0x3] %vm5562, 0.0
    %5624 = vst.msk [vmem:[#allocation2 + $0x1f8] sm:$0xff] %vm240, 0.0
    %5625 = vst.msk [vmem:[#allocation2 + $0x200] sm:$0xff] %vm240, 0.0
    %5626 = vst.msk [vmem:[#allocation2 + $0x208] sm:$0x3] %vm5562, 0.0
    %5627 = vst.msk [vmem:[#allocation2 + $0x210] sm:$0xff] %vm240, 0.0
    %5628 = vst.msk [vmem:[#allocation2 + $0x218] sm:$0xff] %vm240, 0.0
    %5629 = vst.msk [vmem:[#allocation2 + $0x220] sm:$0x3] %vm5562, 0.0
    %5630 = vst.msk [vmem:[#allocation2 + $0x228] sm:$0xff] %vm240, 0.0
    %5631 = vst.msk [vmem:[#allocation2 + $0x230] sm:$0xff] %vm240, 0.0
    %5632 = vst.msk [vmem:[#allocation2 + $0x238] sm:$0x3] %vm5562, 0.0
    %5633 = vst.msk [vmem:[#allocation2 + $0x240] sm:$0xff] %vm240, 0.0
    %5634 = vst.msk [vmem:[#allocation2 + $0x248] sm:$0xff] %vm240, 0.0
    %5635 = vst.msk [vmem:[#allocation2 + $0x250] sm:$0x3] %vm5562, 0.0
    %5636 = vst.msk [vmem:[#allocation2 + $0x258] sm:$0xff] %vm240, 0.0
    %5637 = vst.msk [vmem:[#allocation2 + $0x260] sm:$0xff] %vm240, 0.0
    %5638 = vst.msk [vmem:[#allocation2 + $0x268] sm:$0x3] %vm5562, 0.0
    %5639 = vst.msk [vmem:[#allocation2 + $0x270] sm:$0xff] %vm240, 0.0
    %5640 = vst.msk [vmem:[#allocation2 + $0x278] sm:$0xff] %vm240, 0.0
    %5641 = vst.msk [vmem:[#allocation2 + $0x280] sm:$0x3] %vm5562, 0.0
    %5642 = vst.msk [vmem:[#allocation2 + $0x288] sm:$0xff] %vm240, 0.0
    %5643 = vst.msk [vmem:[#allocation2 + $0x290] sm:$0xff] %vm240, 0.0
    %5644 = vst.msk [vmem:[#allocation2 + $0x298] sm:$0x3] %vm5562, 0.0
    %5645 = vst.msk [vmem:[#allocation2 + $0x2a0] sm:$0xff] %vm240, 0.0
    %5646 = vst.msk [vmem:[#allocation2 + $0x2a8] sm:$0xff] %vm240, 0.0
    %5647 = vst.msk [vmem:[#allocation2 + $0x2b0] sm:$0x3] %vm5562, 0.0
    %5648 = vst.msk [vmem:[#allocation2 + $0x2b8] sm:$0xff] %vm240, 0.0
    %5649 = vst.msk [vmem:[#allocation2 + $0x2c0] sm:$0xff] %vm240, 0.0
    %5650 = vst.msk [vmem:[#allocation2 + $0x2c8] sm:$0x3] %vm5562, 0.0
    %5651 = vst.msk [vmem:[#allocation2 + $0x2d0] sm:$0xff] %vm240, 0.0
    %5652 = vst.msk [vmem:[#allocation2 + $0x2d8] sm:$0xff] %vm240, 0.0
    %5653 = vst.msk [vmem:[#allocation2 + $0x2e0] sm:$0x3] %vm5562, 0.0
    %5654 = vst.msk [vmem:[#allocation2 + $0x2e8] sm:$0xff] %vm240, 0.0
    %5655 = vst.msk [vmem:[#allocation2 + $0x2f0] sm:$0xff] %vm240, 0.0
    %5656 = vst.msk [vmem:[#allocation2 + $0x2f8] sm:$0x3] %vm5562, 0.0
    %5657 = vst.msk [vmem:[#allocation2 + $0x300] sm:$0xff] %vm240, 0.0
    %5658 = vst.msk [vmem:[#allocation2 + $0x308] sm:$0xff] %vm240, 0.0
    %5659 = vst.msk [vmem:[#allocation2 + $0x310] sm:$0x3] %vm5562, 0.0
    %5660 = vst.msk [vmem:[#allocation2 + $0x318] sm:$0xff] %vm240, 0.0
    %5661 = vst.msk [vmem:[#allocation2 + $0x320] sm:$0xff] %vm240, 0.0
    %5662 = vst.msk [vmem:[#allocation2 + $0x328] sm:$0x3] %vm5562, 0.0
    %5663 = vst.msk [vmem:[#allocation2 + $0x330] sm:$0xff] %vm240, 0.0
    %5664 = vst.msk [vmem:[#allocation2 + $0x338] sm:$0xff] %vm240, 0.0
    %5665 = vst.msk [vmem:[#allocation2 + $0x340] sm:$0x3] %vm5562, 0.0
    %5666 = vst.msk [vmem:[#allocation2 + $0x348] sm:$0xff] %vm240, 0.0
    %5667 = vst.msk [vmem:[#allocation2 + $0x350] sm:$0xff] %vm240, 0.0
    %5668 = vst.msk [vmem:[#allocation2 + $0x358] sm:$0x3] %vm5562, 0.0
    %s5669 = scalar_lea.vmem [#allocation2], 24
    %5670 = vst.msk [vmem:[%s5669 + $0x1] sm:$0xff] %vm240, %v5496
    %5671 = vst.msk [vmem:[%s5669 + $0x9] sm:$0xff] %vm240, %v5497
    %5672 = vst.msk [vmem:[%s5669 + $0x19] sm:$0xff] %vm240, %v5498
    %5673 = vst.msk [vmem:[%s5669 + $0x21] sm:$0xff] %vm240, %v5499
    %5674 = vst.msk [vmem:[%s5669 + $0x31] sm:$0xff] %vm240, %v5500
    %5675 = vst.msk [vmem:[%s5669 + $0x39] sm:$0xff] %vm240, %v5501
    %5676 = vst.msk [vmem:[%s5669 + $0x49] sm:$0xff] %vm240, %v5502
    %5677 = vst.msk [vmem:[%s5669 + $0x51] sm:$0xff] %vm240, %v5503
    %5678 = vst.msk [vmem:[%s5669 + $0x61] sm:$0xff] %vm240, %v5504
    %5679 = vst.msk [vmem:[%s5669 + $0x69] sm:$0xff] %vm240, %v5505
    %5680 = vst.msk [vmem:[%s5669 + $0x79] sm:$0xff] %vm240, %v5506
    %5681 = vst.msk [vmem:[%s5669 + $0x81] sm:$0xff] %vm240, %v5507
    %5682 = vst.msk [vmem:[%s5669 + $0x91] sm:$0xff] %vm240, %v5508
    %5683 = vst.msk [vmem:[%s5669 + $0x99] sm:$0xff] %vm240, %v5509
    %5684 = vst.msk [vmem:[%s5669 + $0xa9] sm:$0xff] %vm240, %v5510
    %5685 = vst.msk [vmem:[%s5669 + $0xb1] sm:$0xff] %vm240, %v5511
    %5686 = vst.msk [vmem:[%s5669 + $0xc1] sm:$0xff] %vm240, %v5512
    %5687 = vst.msk [vmem:[%s5669 + $0xc9] sm:$0xff] %vm240, %v5513
    %5688 = vst.msk [vmem:[%s5669 + $0xd9] sm:$0xff] %vm240, %v5514
    %5689 = vst.msk [vmem:[%s5669 + $0xe1] sm:$0xff] %vm240, %v5515
    %5690 = vst.msk [vmem:[%s5669 + $0xf1] sm:$0xff] %vm240, %v5516
    %5691 = vst.msk [vmem:[%s5669 + $0xf9] sm:$0xff] %vm240, %v5517
    %5692 = vst.msk [vmem:[%s5669 + $0x109] sm:$0xff] %vm240, %v5518
    %5693 = vst.msk [vmem:[%s5669 + $0x111] sm:$0xff] %vm240, %v5519
    %5694 = vst.msk [vmem:[%s5669 + $0x121] sm:$0xff] %vm240, %v5520
    %5695 = vst.msk [vmem:[%s5669 + $0x129] sm:$0xff] %vm240, %v5521
    %5696 = vst.msk [vmem:[%s5669 + $0x139] sm:$0xff] %vm240, %v5522
    %5697 = vst.msk [vmem:[%s5669 + $0x141] sm:$0xff] %vm240, %v5523
    %5698 = vst.msk [vmem:[%s5669 + $0x151] sm:$0xff] %vm240, %v5524
    %5699 = vst.msk [vmem:[%s5669 + $0x159] sm:$0xff] %vm240, %v5525
    %5700 = vst.msk [vmem:[%s5669 + $0x169] sm:$0xff] %vm240, %v5526
    %5701 = vst.msk [vmem:[%s5669 + $0x171] sm:$0xff] %vm240, %v5527
    %5702 = vst.msk [vmem:[%s5669 + $0x1b1] sm:$0xff] %vm240, %v5528
    %5703 = vst.msk [vmem:[%s5669 + $0x1b9] sm:$0xff] %vm240, %v5529
    %5704 = vst.msk [vmem:[%s5669 + $0x1c9] sm:$0xff] %vm240, %v5530
    %5705 = vst.msk [vmem:[%s5669 + $0x1d1] sm:$0xff] %vm240, %v5531
    %5706 = vst.msk [vmem:[%s5669 + $0x1e1] sm:$0xff] %vm240, %v5532
    %5707 = vst.msk [vmem:[%s5669 + $0x1e9] sm:$0xff] %vm240, %v5533
    %5708 = vst.msk [vmem:[%s5669 + $0x1f9] sm:$0xff] %vm240, %v5534
    %5709 = vst.msk [vmem:[%s5669 + $0x201] sm:$0xff] %vm240, %v5535
    %5710 = vst.msk [vmem:[%s5669 + $0x211] sm:$0xff] %vm240, %v5536
    %5711 = vst.msk [vmem:[%s5669 + $0x219] sm:$0xff] %vm240, %v5537
    %5712 = vst.msk [vmem:[%s5669 + $0x229] sm:$0xff] %vm240, %v5538
    %5713 = vst.msk [vmem:[%s5669 + $0x231] sm:$0xff] %vm240, %v5539
    %5714 = vst.msk [vmem:[%s5669 + $0x241] sm:$0xff] %vm240, %v5540
    %5715 = vst.msk [vmem:[%s5669 + $0x249] sm:$0xff] %vm240, %v5541
    %5716 = vst.msk [vmem:[%s5669 + $0x259] sm:$0xff] %vm240, %v5542
    %5717 = vst.msk [vmem:[%s5669 + $0x261] sm:$0xff] %vm240, %v5543
    %5718 = vst.msk [vmem:[%s5669 + $0x271] sm:$0xff] %vm240, %v5544
    %5719 = vst.msk [vmem:[%s5669 + $0x279] sm:$0xff] %vm240, %v5545
    %5720 = vst.msk [vmem:[%s5669 + $0x289] sm:$0xff] %vm240, %v5546
    %5721 = vst.msk [vmem:[%s5669 + $0x291] sm:$0xff] %vm240, %v5547
    %5722 = vst.msk [vmem:[%s5669 + $0x2a1] sm:$0xff] %vm240, %v5548
    %5723 = vst.msk [vmem:[%s5669 + $0x2a9] sm:$0xff] %vm240, %v5549
    %5724 = vst.msk [vmem:[%s5669 + $0x2b9] sm:$0xff] %vm240, %v5550
    %5725 = vst.msk [vmem:[%s5669 + $0x2c1] sm:$0xff] %vm240, %v5551
    %5726 = vst.msk [vmem:[%s5669 + $0x2d1] sm:$0xff] %vm240, %v5552
    %5727 = vst.msk [vmem:[%s5669 + $0x2d9] sm:$0xff] %vm240, %v5553
    %5728 = vst.msk [vmem:[%s5669 + $0x2e9] sm:$0xff] %vm240, %v5554
    %5729 = vst.msk [vmem:[%s5669 + $0x2f1] sm:$0xff] %vm240, %v5555
    %5730 = vst.msk [vmem:[%s5669 + $0x301] sm:$0xff] %vm240, %v5556
    %5731 = vst.msk [vmem:[%s5669 + $0x309] sm:$0xff] %vm240, %v5557
    %5732 = vst.msk [vmem:[%s5669 + $0x319] sm:$0xff] %vm240, %v5558
    %5733 = vst.msk [vmem:[%s5669 + $0x321] sm:$0xff] %vm240, %v5559
    %v5734 = vld [vmem:[#allocation2] sm:$0xff]
    %v5735 = vld [vmem:[#allocation2 + $0x8] sm:$0xff]
    %v5736 = vld [vmem:[#allocation2 + $0x18] sm:$0xff]
    %v5737 = vld [vmem:[#allocation2 + $0x20] sm:$0xff]
    %v5738 = vld [vmem:[#allocation2 + $0x30] sm:$0xff]
    %v5739 = vld [vmem:[#allocation2 + $0x38] sm:$0xff]
    %v5740 = vld [vmem:[#allocation2 + $0x48] sm:$0xff]
    %v5741 = vld [vmem:[#allocation2 + $0x50] sm:$0xff]
    %v5742 = vld [vmem:[#allocation2 + $0x60] sm:$0xff]
    %v5743 = vld [vmem:[#allocation2 + $0x68] sm:$0xff]
    %v5744 = vld [vmem:[#allocation2 + $0x78] sm:$0xff]
    %v5745 = vld [vmem:[#allocation2 + $0x80] sm:$0xff]
    %v5746 = vld [vmem:[#allocation2 + $0x90] sm:$0xff]
    %v5747 = vld [vmem:[#allocation2 + $0x98] sm:$0xff]
    %v5748 = vld [vmem:[#allocation2 + $0xa8] sm:$0xff]
    %v5749 = vld [vmem:[#allocation2 + $0xb0] sm:$0xff]
    %v5750 = vld [vmem:[#allocation2 + $0xc0] sm:$0xff]
    %v5751 = vld [vmem:[#allocation2 + $0xc8] sm:$0xff]
    %v5752 = vld [vmem:[#allocation2 + $0xd8] sm:$0xff]
    %v5753 = vld [vmem:[#allocation2 + $0xe0] sm:$0xff]
    %v5754 = vld [vmem:[#allocation2 + $0xf0] sm:$0xff]
    %v5755 = vld [vmem:[#allocation2 + $0xf8] sm:$0xff]
    %v5756 = vld [vmem:[#allocation2 + $0x108] sm:$0xff]
    %v5757 = vld [vmem:[#allocation2 + $0x110] sm:$0xff]
    %v5758 = vld [vmem:[#allocation2 + $0x120] sm:$0xff]
    %v5759 = vld [vmem:[#allocation2 + $0x128] sm:$0xff]
    %v5760 = vld [vmem:[#allocation2 + $0x138] sm:$0xff]
    %v5761 = vld [vmem:[#allocation2 + $0x140] sm:$0xff]
    %v5762 = vld [vmem:[#allocation2 + $0x150] sm:$0xff]
    %v5763 = vld [vmem:[#allocation2 + $0x158] sm:$0xff]
    %v5764 = vld [vmem:[#allocation2 + $0x168] sm:$0xff]
    %v5765 = vld [vmem:[#allocation2 + $0x170] sm:$0xff]
    %v5766 = vld [vmem:[#allocation2 + $0x1b0] sm:$0xff]
    %v5767 = vld [vmem:[#allocation2 + $0x1b8] sm:$0xff]
    %v5768 = vld [vmem:[#allocation2 + $0x1c8] sm:$0xff]
    %v5769 = vld [vmem:[#allocation2 + $0x1d0] sm:$0xff]
    %v5770 = vld [vmem:[#allocation2 + $0x1e0] sm:$0xff]
    %v5771 = vld [vmem:[#allocation2 + $0x1e8] sm:$0xff]
    %v5772 = vld [vmem:[#allocation2 + $0x1f8] sm:$0xff]
    %v5773 = vld [vmem:[#allocation2 + $0x200] sm:$0xff]
    %v5774 = vld [vmem:[#allocation2 + $0x210] sm:$0xff]
    %v5775 = vld [vmem:[#allocation2 + $0x218] sm:$0xff]
    %v5776 = vld [vmem:[#allocation2 + $0x228] sm:$0xff]
    %v5777 = vld [vmem:[#allocation2 + $0x230] sm:$0xff]
    %v5778 = vld [vmem:[#allocation2 + $0x240] sm:$0xff]
    %v5779 = vld [vmem:[#allocation2 + $0x248] sm:$0xff]
    %v5780 = vld [vmem:[#allocation2 + $0x258] sm:$0xff]
    %v5781 = vld [vmem:[#allocation2 + $0x260] sm:$0xff]
    %v5782 = vld [vmem:[#allocation2 + $0x270] sm:$0xff]
    %v5783 = vld [vmem:[#allocation2 + $0x278] sm:$0xff]
    %v5784 = vld [vmem:[#allocation2 + $0x288] sm:$0xff]
    %v5785 = vld [vmem:[#allocation2 + $0x290] sm:$0xff]
    %v5786 = vld [vmem:[#allocation2 + $0x2a0] sm:$0xff]
    %v5787 = vld [vmem:[#allocation2 + $0x2a8] sm:$0xff]
    %v5788 = vld [vmem:[#allocation2 + $0x2b8] sm:$0xff]
    %v5789 = vld [vmem:[#allocation2 + $0x2c0] sm:$0xff]
    %v5790 = vld [vmem:[#allocation2 + $0x2d0] sm:$0xff]
    %v5791 = vld [vmem:[#allocation2 + $0x2d8] sm:$0xff]
    %v5792 = vld [vmem:[#allocation2 + $0x2e8] sm:$0xff]
    %v5793 = vld [vmem:[#allocation2 + $0x2f0] sm:$0xff]
    %v5794 = vld [vmem:[#allocation2 + $0x300] sm:$0xff]
    %v5795 = vld [vmem:[#allocation2 + $0x308] sm:$0xff]
    %v5796 = vld [vmem:[#allocation2 + $0x318] sm:$0xff]
    %v5797 = vld [vmem:[#allocation2 + $0x320] sm:$0xff]
    %v5798 = vpack.c.bf16 %v5735, %v5734
    %v5799 = vpack.c.bf16 %v5737, %v5736
    %v5800 = vpack.c.bf16 %v5739, %v5738
    %v5801 = vpack.c.bf16 %v5741, %v5740
    %v5802 = vpack.c.bf16 %v5743, %v5742
    %v5803 = vpack.c.bf16 %v5745, %v5744
    %v5804 = vpack.c.bf16 %v5747, %v5746
    %v5805 = vpack.c.bf16 %v5749, %v5748
    %v5806 = vpack.c.bf16 %v5751, %v5750
    %v5807 = vpack.c.bf16 %v5753, %v5752
    %v5808 = vpack.c.bf16 %v5755, %v5754
    %v5809 = vpack.c.bf16 %v5757, %v5756
    %v5810 = vpack.c.bf16 %v5759, %v5758
    %v5811 = vpack.c.bf16 %v5761, %v5760
    %v5812 = vpack.c.bf16 %v5763, %v5762
    %v5813 = vpack.c.bf16 %v5765, %v5764
    %v5814 = vpack.c.bf16 %v5767, %v5766
    %v5815 = vpack.c.bf16 %v5769, %v5768
    %v5816 = vpack.c.bf16 %v5771, %v5770
    %v5817 = vpack.c.bf16 %v5773, %v5772
    %v5818 = vpack.c.bf16 %v5775, %v5774
    %v5819 = vpack.c.bf16 %v5777, %v5776
    %v5820 = vpack.c.bf16 %v5779, %v5778
    %v5821 = vpack.c.bf16 %v5781, %v5780
    %v5822 = vpack.c.bf16 %v5783, %v5782
    %v5823 = vpack.c.bf16 %v5785, %v5784
    %v5824 = vpack.c.bf16 %v5787, %v5786
    %v5825 = vpack.c.bf16 %v5789, %v5788
    %v5826 = vpack.c.bf16 %v5791, %v5790
    %v5827 = vpack.c.bf16 %v5793, %v5792
    %v5828 = vpack.c.bf16 %v5795, %v5794
    %v5829 = vpack.c.bf16 %v5797, %v5796
    %v5830 = vld [vmem:[%s2] sm:$0xf]
    %v5831 = vld [vmem:[%s2 + $0x4] sm:$0xf]
    %v5832 = vld [vmem:[%s2 + $0x8] sm:$0xf]
    %v5833 = vld [vmem:[%s2 + $0xc] sm:$0xf]
    %v5834 = vld [vmem:[#allocation2 + $0x1] sm:$0xff]
    %v5835 = vld [vmem:[#allocation2 + $0x9] sm:$0xff]
    %v5836 = vld [vmem:[#allocation2 + $0x19] sm:$0xff]
    %v5837 = vld [vmem:[#allocation2 + $0x21] sm:$0xff]
    %v5838 = vld [vmem:[#allocation2 + $0x31] sm:$0xff]
    %v5839 = vld [vmem:[#allocation2 + $0x39] sm:$0xff]
    %v5840 = vld [vmem:[#allocation2 + $0x49] sm:$0xff]
    %v5841 = vld [vmem:[#allocation2 + $0x51] sm:$0xff]
    %v5842 = vld [vmem:[#allocation2 + $0x61] sm:$0xff]
    %v5843 = vld [vmem:[#allocation2 + $0x69] sm:$0xff]
    %v5844 = vld [vmem:[#allocation2 + $0x79] sm:$0xff]
    %v5845 = vld [vmem:[#allocation2 + $0x81] sm:$0xff]
    %v5846 = vld [vmem:[#allocation2 + $0x91] sm:$0xff]
    %v5847 = vld [vmem:[#allocation2 + $0x99] sm:$0xff]
    %v5848 = vld [vmem:[#allocation2 + $0xa9] sm:$0xff]
    %v5849 = vld [vmem:[#allocation2 + $0xb1] sm:$0xff]
    %v5850 = vld [vmem:[#allocation2 + $0xc1] sm:$0xff]
    %v5851 = vld [vmem:[#allocation2 + $0xc9] sm:$0xff]
    %v5852 = vld [vmem:[#allocation2 + $0xd9] sm:$0xff]
    %v5853 = vld [vmem:[#allocation2 + $0xe1] sm:$0xff]
    %v5854 = vld [vmem:[#allocation2 + $0xf1] sm:$0xff]
    %v5855 = vld [vmem:[#allocation2 + $0xf9] sm:$0xff]
    %v5856 = vld [vmem:[#allocation2 + $0x109] sm:$0xff]
    %v5857 = vld [vmem:[#allocation2 + $0x111] sm:$0xff]
    %v5858 = vld [vmem:[#allocation2 + $0x121] sm:$0xff]
    %v5859 = vld [vmem:[#allocation2 + $0x129] sm:$0xff]
    %v5860 = vld [vmem:[#allocation2 + $0x139] sm:$0xff]
    %v5861 = vld [vmem:[#allocation2 + $0x141] sm:$0xff]
    %v5862 = vld [vmem:[#allocation2 + $0x151] sm:$0xff]
    %v5863 = vld [vmem:[#allocation2 + $0x159] sm:$0xff]
    %v5864 = vld [vmem:[#allocation2 + $0x169] sm:$0xff]
    %v5865 = vld [vmem:[#allocation2 + $0x171] sm:$0xff]
    %v5866 = vld [vmem:[#allocation2 + $0x1b1] sm:$0xff]
    %v5867 = vld [vmem:[#allocation2 + $0x1b9] sm:$0xff]
    %v5868 = vld [vmem:[#allocation2 + $0x1c9] sm:$0xff]
    %v5869 = vld [vmem:[#allocation2 + $0x1d1] sm:$0xff]
    %v5870 = vld [vmem:[#allocation2 + $0x1e1] sm:$0xff]
    %v5871 = vld [vmem:[#allocation2 + $0x1e9] sm:$0xff]
    %v5872 = vld [vmem:[#allocation2 + $0x1f9] sm:$0xff]
    %v5873 = vld [vmem:[#allocation2 + $0x201] sm:$0xff]
    %v5874 = vld [vmem:[#allocation2 + $0x211] sm:$0xff]
    %v5875 = vld [vmem:[#allocation2 + $0x219] sm:$0xff]
    %v5876 = vld [vmem:[#allocation2 + $0x229] sm:$0xff]
    %v5877 = vld [vmem:[#allocation2 + $0x231] sm:$0xff]
    %v5878 = vld [vmem:[#allocation2 + $0x241] sm:$0xff]
    %v5879 = vld [vmem:[#allocation2 + $0x249] sm:$0xff]
    %v5880 = vld [vmem:[#allocation2 + $0x259] sm:$0xff]
    %v5881 = vld [vmem:[#allocation2 + $0x261] sm:$0xff]
    %v5882 = vld [vmem:[#allocation2 + $0x271] sm:$0xff]
    %v5883 = vld [vmem:[#allocation2 + $0x279] sm:$0xff]
    %v5884 = vld [vmem:[#allocation2 + $0x289] sm:$0xff]
    %v5885 = vld [vmem:[#allocation2 + $0x291] sm:$0xff]
    %v5886 = vld [vmem:[#allocation2 + $0x2a1] sm:$0xff]
    %v5887 = vld [vmem:[#allocation2 + $0x2a9] sm:$0xff]
    %v5888 = vld [vmem:[#allocation2 + $0x2b9] sm:$0xff]
    %v5889 = vld [vmem:[#allocation2 + $0x2c1] sm:$0xff]
    %v5890 = vld [vmem:[#allocation2 + $0x2d1] sm:$0xff]
    %v5891 = vld [vmem:[#allocation2 + $0x2d9] sm:$0xff]
    %v5892 = vld [vmem:[#allocation2 + $0x2e9] sm:$0xff]
    %v5893 = vld [vmem:[#allocation2 + $0x2f1] sm:$0xff]
    %v5894 = vld [vmem:[#allocation2 + $0x301] sm:$0xff]
    %v5895 = vld [vmem:[#allocation2 + $0x309] sm:$0xff]
    %v5896 = vld [vmem:[#allocation2 + $0x319] sm:$0xff]
    %v5897 = vld [vmem:[#allocation2 + $0x321] sm:$0xff]
    %v5898 = vpack.c.bf16 %v5835, %v5834
    %v5899 = vpack.c.bf16 %v5837, %v5836
    %v5900 = vpack.c.bf16 %v5839, %v5838
    %v5901 = vpack.c.bf16 %v5841, %v5840
    %v5902 = vpack.c.bf16 %v5843, %v5842
    %v5903 = vpack.c.bf16 %v5845, %v5844
    %v5904 = vpack.c.bf16 %v5847, %v5846
    %v5905 = vpack.c.bf16 %v5849, %v5848
    %v5906 = vpack.c.bf16 %v5851, %v5850
    %v5907 = vpack.c.bf16 %v5853, %v5852
    %v5908 = vpack.c.bf16 %v5855, %v5854
    %v5909 = vpack.c.bf16 %v5857, %v5856
    %v5910 = vpack.c.bf16 %v5859, %v5858
    %v5911 = vpack.c.bf16 %v5861, %v5860
    %v5912 = vpack.c.bf16 %v5863, %v5862
    %v5913 = vpack.c.bf16 %v5865, %v5864
    %v5914 = vpack.c.bf16 %v5867, %v5866
    %v5915 = vpack.c.bf16 %v5869, %v5868
    %v5916 = vpack.c.bf16 %v5871, %v5870
    %v5917 = vpack.c.bf16 %v5873, %v5872
    %v5918 = vpack.c.bf16 %v5875, %v5874
    %v5919 = vpack.c.bf16 %v5877, %v5876
    %v5920 = vpack.c.bf16 %v5879, %v5878
    %v5921 = vpack.c.bf16 %v5881, %v5880
    %v5922 = vpack.c.bf16 %v5883, %v5882
    %v5923 = vpack.c.bf16 %v5885, %v5884
    %v5924 = vpack.c.bf16 %v5887, %v5886
    %v5925 = vpack.c.bf16 %v5889, %v5888
    %v5926 = vpack.c.bf16 %v5891, %v5890
    %v5927 = vpack.c.bf16 %v5893, %v5892
    %v5928 = vpack.c.bf16 %v5895, %v5894
    %v5929 = vpack.c.bf16 %v5897, %v5896
    %v5930 = vld [vmem:[%s2 + $0x10] sm:$0xf]
    %v5931 = vld [vmem:[%s2 + $0x14] sm:$0xf]
    %v5932 = vld [vmem:[%s2 + $0x18] sm:$0xf]
    %v5933 = vld [vmem:[%s2 + $0x1c] sm:$0xf]
    %v5938 = vunpack.c.l.b16 %v5930
    %v5939 = vunpack.c.l.b16 %v5931
    %v5940 = vunpack.c.l.b16 %v5932
    %v5941 = vunpack.c.l.b16 %v5933
    %v5942 = vpack.c.b16 %v5939, %v5938
    %v5943 = vpack.c.b16 %v5941, %v5940
    %v5947 = vsel %vm240, %v5898, 0
    %v5950 = vsel %vm240, %v5899, 0
    %v5953 = vsel %vm240, %v5900, 0
    %v5956 = vsel %vm240, %v5901, 0
    %v5959 = vsel %vm240, %v5902, 0
    %v5962 = vsel %vm240, %v5903, 0
    %v5965 = vsel %vm240, %v5904, 0
    %v5968 = vsel %vm240, %v5905, 0
    %v5971 = vsel %vm240, %v5906, 0
    %v5974 = vsel %vm240, %v5907, 0
    %v5977 = vsel %vm240, %v5908, 0
    %v5980 = vsel %vm240, %v5909, 0
    %v5983 = vsel %vm240, %v5910, 0
    %v5986 = vsel %vm240, %v5911, 0
    %v5989 = vsel %vm240, %v5912, 0
    %v5992 = vsel %vm240, %v5913, 0
    %v5995 = vsel %vm240, %v5914, 0
    %v5998 = vsel %vm240, %v5915, 0
    %v6001 = vsel %vm240, %v5916, 0
    %v6004 = vsel %vm240, %v5917, 0
    %v6007 = vsel %vm240, %v5918, 0
    %v6010 = vsel %vm240, %v5919, 0
    %v6013 = vsel %vm240, %v5920, 0
    %v6016 = vsel %vm240, %v5921, 0
    %v6019 = vsel %vm240, %v5922, 0
    %v6022 = vsel %vm240, %v5923, 0
    %v6025 = vsel %vm240, %v5924, 0
    %v6028 = vsel %vm240, %v5925, 0
    %v6031 = vsel %vm240, %v5926, 0
    %v6034 = vsel %vm240, %v5927, 0
    %v6037 = vsel %vm240, %v5928, 0
    %v6040 = vsel %vm240, %v5929, 0
    %6042 = vmatprep.subr.bf16.mxu0 0
    %6043 = vmatpush1.bf16.msra.mxu0 %v5942
    %6044 = vmatprep.subr.bf16.mxu0 0
    %6045 = vmatpush1.bf16.msra.mxu0 %v5943
    %6046 = vmatprep.subr.bf16.mxu0 0
    %6047 = vmatpush1.bf16.msra.mxu0 0
    %6048 = vmatprep.subr.bf16.mxu0 0
    %6049 = vmatpush1.bf16.msra.mxu0 0
    %6050 = vmatprep.subr.bf16.mxu0 0
    %6051 = vmatpush1.bf16.msra.mxu0 0
    %6052 = vmatprep.subr.bf16.mxu0 0
    %6053 = vmatpush1.bf16.msra.mxu0 0
    %6054 = vmatprep.subr.bf16.mxu0 0
    %6055 = vmatpush1.bf16.msra.mxu0 0
    %6056 = vmatprep.subr.bf16.mxu0 0
    %6057 = vmatpush1.bf16.msra.mxu0 0
    %6058 = vmatprep.subr.bf16.mxu0 0
    %6059 = vmatpush1.bf16.msra.mxu0 0
    %6060 = vmatprep.subr.bf16.mxu0 0
    %6061 = vmatpush1.bf16.msra.mxu0 0
    %6062 = vmatprep.subr.bf16.mxu0 0
    %6063 = vmatpush1.bf16.msra.mxu0 0
    %6064 = vmatprep.subr.bf16.mxu0 0
    %6065 = vmatpush1.bf16.msra.mxu0 0
    %6066 = vmatprep.subr.bf16.mxu0 0
    %6067 = vmatpush1.bf16.msra.mxu0 0
    %6068 = vmatprep.subr.bf16.mxu0 0
    %6069 = vmatpush1.bf16.msra.mxu0 0
    %6070 = vmatprep.subr.bf16.mxu0 0
    %6071 = vmatpush1.bf16.msra.mxu0 0
    %6072 = vmatprep.subr.bf16.mxu0 0
    %6073 = vmatpush1.bf16.msra.mxu0 0
    %6074 = vmatprep.mubr.bf16.mxu0 0
    %6075 = vmatmul.mubr.bf16.gmra.mrb[0].mxu0 %v5947
    %v6076 = vpop.f32.mrb[0].mxu0
    %v6077 = vadd.f32 0.0, %v6076
    %v6078 = vpop.f32.mrb[0].mxu0
    %v6079 = vpop.f32.mrb[0].mxu0
    %v6080 = vadd.f32 0.0, %v6079
    %v6081 = vpop.f32.mrb[0].mxu0
    %6082 = vmatprep.mubr.bf16.mxu0 0
    %6083 = vmatmul.mubr.bf16.gmra.mrb[0].mxu0 %v5950
    %v6084 = vpop.f32.mrb[0].mxu0
    %v6085 = vadd.f32 0.0, %v6084
    %v6086 = vpop.f32.mrb[0].mxu0
    %v6087 = vpop.f32.mrb[0].mxu0
    %v6088 = vadd.f32 0.0, %v6087
    %v6089 = vpop.f32.mrb[0].mxu0
    %6090 = vmatprep.mubr.bf16.mxu0 0
    %6091 = vmatmul.mubr.bf16.gmra.mrb[0].mxu0 %v5953
    %v6092 = vpop.f32.mrb[0].mxu0
    %v6093 = vadd.f32 0.0, %v6092
    %v6094 = vpop.f32.mrb[0].mxu0
    %v6095 = vpop.f32.mrb[0].mxu0
    %v6096 = vadd.f32 0.0, %v6095
    %v6097 = vpop.f32.mrb[0].mxu0
    %6098 = vmatprep.mubr.bf16.mxu0 0
    %6099 = vmatmul.mubr.bf16.gmra.mrb[0].mxu0 %v5956
    %v6100 = vpop.f32.mrb[0].mxu0
    %v6101 = vadd.f32 0.0, %v6100
    %v6102 = vpop.f32.mrb[0].mxu0
    %v6103 = vpop.f32.mrb[0].mxu0
    %v6104 = vadd.f32 0.0, %v6103
    %v6105 = vpop.f32.mrb[0].mxu0
    %6106 = vmatprep.mubr.bf16.mxu0 0
    %6107 = vmatmul.mubr.bf16.gmra.mrb[0].mxu0 %v5959
    %v6108 = vpop.f32.mrb[0].mxu0
    %v6109 = vadd.f32 0.0, %v6108
    %v6110 = vpop.f32.mrb[0].mxu0
    %v6111 = vpop.f32.mrb[0].mxu0
    %v6112 = vadd.f32 0.0, %v6111
    %v6113 = vpop.f32.mrb[0].mxu0
    %6114 = vmatprep.mubr.bf16.mxu0 0
    %6115 = vmatmul.mubr.bf16.gmra.mrb[0].mxu0 %v5962
    %v6116 = vpop.f32.mrb[0].mxu0
    %v6117 = vadd.f32 0.0, %v6116
    %v6118 = vpop.f32.mrb[0].mxu0
    %v6119 = vpop.f32.mrb[0].mxu0
    %v6120 = vadd.f32 0.0, %v6119
    %v6121 = vpop.f32.mrb[0].mxu0
    %6122 = vmatprep.mubr.bf16.mxu0 0
    %6123 = vmatmul.mubr.bf16.gmra.mrb[0].mxu0 %v5965
    %v6124 = vpop.f32.mrb[0].mxu0
    %v6125 = vadd.f32 0.0, %v6124
    %v6126 = vpop.f32.mrb[0].mxu0
    %v6127 = vpop.f32.mrb[0].mxu0
    %v6128 = vadd.f32 0.0, %v6127
    %v6129 = vpop.f32.mrb[0].mxu0
    %6130 = vmatprep.mubr.bf16.mxu0 0
    %6131 = vmatmul.mubr.bf16.gmra.mrb[0].mxu0 %v5968
    %v6132 = vpop.f32.mrb[0].mxu0
    %v6133 = vadd.f32 0.0, %v6132
    %v6134 = vpop.f32.mrb[0].mxu0
    %v6135 = vpop.f32.mrb[0].mxu0
    %v6136 = vadd.f32 0.0, %v6135
    %v6137 = vpop.f32.mrb[0].mxu0
    %6138 = vmatprep.mubr.bf16.mxu0 0
    %6139 = vmatmul.mubr.bf16.gmra.mrb[0].mxu0 %v5971
    %v6140 = vpop.f32.mrb[0].mxu0
    %v6141 = vadd.f32 0.0, %v6140
    %v6142 = vpop.f32.mrb[0].mxu0
    %v6143 = vpop.f32.mrb[0].mxu0
    %v6144 = vadd.f32 0.0, %v6143
    %v6145 = vpop.f32.mrb[0].mxu0
    %6146 = vmatprep.mubr.bf16.mxu0 0
    %6147 = vmatmul.mubr.bf16.gmra.mrb[0].mxu0 %v5974
    %v6148 = vpop.f32.mrb[0].mxu0
    %v6149 = vadd.f32 0.0, %v6148
    %v6150 = vpop.f32.mrb[0].mxu0
    %v6151 = vpop.f32.mrb[0].mxu0
    %v6152 = vadd.f32 0.0, %v6151
    %v6153 = vpop.f32.mrb[0].mxu0
    %6154 = vmatprep.mubr.bf16.mxu0 0
    %6155 = vmatmul.mubr.bf16.gmra.mrb[0].mxu0 %v5977
    %v6156 = vpop.f32.mrb[0].mxu0
    %v6157 = vadd.f32 0.0, %v6156
    %v6158 = vpop.f32.mrb[0].mxu0
    %v6159 = vpop.f32.mrb[0].mxu0
    %v6160 = vadd.f32 0.0, %v6159
    %v6161 = vpop.f32.mrb[0].mxu0
    %6162 = vmatprep.mubr.bf16.mxu0 0
    %6163 = vmatmul.mubr.bf16.gmra.mrb[0].mxu0 %v5980
    %v6164 = vpop.f32.mrb[0].mxu0
    %v6165 = vadd.f32 0.0, %v6164
    %v6166 = vpop.f32.mrb[0].mxu0
    %v6167 = vpop.f32.mrb[0].mxu0
    %v6168 = vadd.f32 0.0, %v6167
    %v6169 = vpop.f32.mrb[0].mxu0
    %6170 = vmatprep.mubr.bf16.mxu0 0
    %6171 = vmatmul.mubr.bf16.gmra.mrb[0].mxu0 %v5983
    %v6172 = vpop.f32.mrb[0].mxu0
    %v6173 = vadd.f32 0.0, %v6172
    %v6174 = vpop.f32.mrb[0].mxu0
    %v6175 = vpop.f32.mrb[0].mxu0
    %v6176 = vadd.f32 0.0, %v6175
    %v6177 = vpop.f32.mrb[0].mxu0
    %6178 = vmatprep.mubr.bf16.mxu0 0
    %6179 = vmatmul.mubr.bf16.gmra.mrb[0].mxu0 %v5986
    %v6180 = vpop.f32.mrb[0].mxu0
    %v6181 = vadd.f32 0.0, %v6180
    %v6182 = vpop.f32.mrb[0].mxu0
    %v6183 = vpop.f32.mrb[0].mxu0
    %v6184 = vadd.f32 0.0, %v6183
    %v6185 = vpop.f32.mrb[0].mxu0
    %6186 = vmatprep.mubr.bf16.mxu0 0
    %6187 = vmatmul.mubr.bf16.gmra.mrb[0].mxu0 %v5989
    %v6188 = vpop.f32.mrb[0].mxu0
    %v6189 = vadd.f32 0.0, %v6188
    %v6190 = vpop.f32.mrb[0].mxu0
    %v6191 = vpop.f32.mrb[0].mxu0
    %v6192 = vadd.f32 0.0, %v6191
    %v6193 = vpop.f32.mrb[0].mxu0
    %6194 = vmatprep.mubr.bf16.mxu0 0
    %6195 = vmatmul.mubr.bf16.gmra.mrb[0].mxu0 %v5992
    %v6196 = vpop.f32.mrb[0].mxu0
    %v6197 = vadd.f32 0.0, %v6196
    %v6198 = vpop.f32.mrb[0].mxu0
    %v6199 = vpop.f32.mrb[0].mxu0
    %v6200 = vadd.f32 0.0, %v6199
    %v6201 = vpop.f32.mrb[0].mxu0
    %6202 = vmatprep.mubr.bf16.mxu0 0
    %6203 = vmatmul.mubr.bf16.gmra.mrb[0].mxu0 %v5995
    %v6204 = vpop.f32.mrb[0].mxu0
    %v6205 = vadd.f32 0.0, %v6204
    %v6206 = vpop.f32.mrb[0].mxu0
    %v6207 = vpop.f32.mrb[0].mxu0
    %v6208 = vadd.f32 0.0, %v6207
    %v6209 = vpop.f32.mrb[0].mxu0
    %6210 = vmatprep.mubr.bf16.mxu0 0
    %6211 = vmatmul.mubr.bf16.gmra.mrb[0].mxu0 %v5998
    %v6212 = vpop.f32.mrb[0].mxu0
    %v6213 = vadd.f32 0.0, %v6212
    %v6214 = vpop.f32.mrb[0].mxu0
    %v6215 = vpop.f32.mrb[0].mxu0
    %v6216 = vadd.f32 0.0, %v6215
    %v6217 = vpop.f32.mrb[0].mxu0
    %6218 = vmatprep.mubr.bf16.mxu0 0
    %6219 = vmatmul.mubr.bf16.gmra.mrb[0].mxu0 %v6001
    %v6220 = vpop.f32.mrb[0].mxu0
    %v6221 = vadd.f32 0.0, %v6220
    %v6222 = vpop.f32.mrb[0].mxu0
    %v6223 = vpop.f32.mrb[0].mxu0
    %v6224 = vadd.f32 0.0, %v6223
    %v6225 = vpop.f32.mrb[0].mxu0
    %6226 = vmatprep.mubr.bf16.mxu0 0
    %6227 = vmatmul.mubr.bf16.gmra.mrb[0].mxu0 %v6004
    %v6228 = vpop.f32.mrb[0].mxu0
    %v6229 = vadd.f32 0.0, %v6228
    %v6230 = vpop.f32.mrb[0].mxu0
    %v6231 = vpop.f32.mrb[0].mxu0
    %v6232 = vadd.f32 0.0, %v6231
    %v6233 = vpop.f32.mrb[0].mxu0
    %6234 = vmatprep.mubr.bf16.mxu0 0
    %6235 = vmatmul.mubr.bf16.gmra.mrb[0].mxu0 %v6007
    %v6236 = vpop.f32.mrb[0].mxu0
    %v6237 = vadd.f32 0.0, %v6236
    %v6238 = vpop.f32.mrb[0].mxu0
    %v6239 = vpop.f32.mrb[0].mxu0
    %v6240 = vadd.f32 0.0, %v6239
    %v6241 = vpop.f32.mrb[0].mxu0
    %6242 = vmatprep.mubr.bf16.mxu0 0
    %6243 = vmatmul.mubr.bf16.gmra.mrb[0].mxu0 %v6010
    %v6244 = vpop.f32.mrb[0].mxu0
    %v6245 = vadd.f32 0.0, %v6244
    %v6246 = vpop.f32.mrb[0].mxu0
    %v6247 = vpop.f32.mrb[0].mxu0
    %v6248 = vadd.f32 0.0, %v6247
    %v6249 = vpop.f32.mrb[0].mxu0
    %6250 = vmatprep.mubr.bf16.mxu0 0
    %6251 = vmatmul.mubr.bf16.gmra.mrb[0].mxu0 %v6013
    %v6252 = vpop.f32.mrb[0].mxu0
    %v6253 = vadd.f32 0.0, %v6252
    %v6254 = vpop.f32.mrb[0].mxu0
    %v6255 = vpop.f32.mrb[0].mxu0
    %v6256 = vadd.f32 0.0, %v6255
    %v6257 = vpop.f32.mrb[0].mxu0
    %6258 = vmatprep.mubr.bf16.mxu0 0
    %6259 = vmatmul.mubr.bf16.gmra.mrb[0].mxu0 %v6016
    %v6260 = vpop.f32.mrb[0].mxu0
    %v6261 = vadd.f32 0.0, %v6260
    %v6262 = vpop.f32.mrb[0].mxu0
    %v6263 = vpop.f32.mrb[0].mxu0
    %v6264 = vadd.f32 0.0, %v6263
    %v6265 = vpop.f32.mrb[0].mxu0
    %6266 = vmatprep.mubr.bf16.mxu0 0
    %6267 = vmatmul.mubr.bf16.gmra.mrb[0].mxu0 %v6019
    %v6268 = vpop.f32.mrb[0].mxu0
    %v6269 = vadd.f32 0.0, %v6268
    %v6270 = vpop.f32.mrb[0].mxu0
    %v6271 = vpop.f32.mrb[0].mxu0
    %v6272 = vadd.f32 0.0, %v6271
    %v6273 = vpop.f32.mrb[0].mxu0
    %6274 = vmatprep.mubr.bf16.mxu0 0
    %6275 = vmatmul.mubr.bf16.gmra.mrb[0].mxu0 %v6022
    %v6276 = vpop.f32.mrb[0].mxu0
    %v6277 = vadd.f32 0.0, %v6276
    %v6278 = vpop.f32.mrb[0].mxu0
    %v6279 = vpop.f32.mrb[0].mxu0
    %v6280 = vadd.f32 0.0, %v6279
    %v6281 = vpop.f32.mrb[0].mxu0
    %6282 = vmatprep.mubr.bf16.mxu0 0
    %6283 = vmatmul.mubr.bf16.gmra.mrb[0].mxu0 %v6025
    %v6284 = vpop.f32.mrb[0].mxu0
    %v6285 = vadd.f32 0.0, %v6284
    %v6286 = vpop.f32.mrb[0].mxu0
    %v6287 = vpop.f32.mrb[0].mxu0
    %v6288 = vadd.f32 0.0, %v6287
    %v6289 = vpop.f32.mrb[0].mxu0
    %6290 = vmatprep.mubr.bf16.mxu0 0
    %6291 = vmatmul.mubr.bf16.gmra.mrb[0].mxu0 %v6028
    %v6292 = vpop.f32.mrb[0].mxu0
    %v6293 = vadd.f32 0.0, %v6292
    %v6294 = vpop.f32.mrb[0].mxu0
    %v6295 = vpop.f32.mrb[0].mxu0
    %v6296 = vadd.f32 0.0, %v6295
    %v6297 = vpop.f32.mrb[0].mxu0
    %6298 = vmatprep.mubr.bf16.mxu0 0
    %6299 = vmatmul.mubr.bf16.gmra.mrb[0].mxu0 %v6031
    %v6300 = vpop.f32.mrb[0].mxu0
    %v6301 = vadd.f32 0.0, %v6300
    %v6302 = vpop.f32.mrb[0].mxu0
    %v6303 = vpop.f32.mrb[0].mxu0
    %v6304 = vadd.f32 0.0, %v6303
    %v6305 = vpop.f32.mrb[0].mxu0
    %6306 = vmatprep.mubr.bf16.mxu0 0
    %6307 = vmatmul.mubr.bf16.gmra.mrb[0].mxu0 %v6034
    %v6308 = vpop.f32.mrb[0].mxu0
    %v6309 = vadd.f32 0.0, %v6308
    %v6310 = vpop.f32.mrb[0].mxu0
    %v6311 = vpop.f32.mrb[0].mxu0
    %v6312 = vadd.f32 0.0, %v6311
    %v6313 = vpop.f32.mrb[0].mxu0
    %6314 = vmatprep.mubr.bf16.mxu0 0
    %6315 = vmatmul.mubr.bf16.gmra.mrb[0].mxu0 %v6037
    %v6316 = vpop.f32.mrb[0].mxu0
    %v6317 = vadd.f32 0.0, %v6316
    %v6318 = vpop.f32.mrb[0].mxu0
    %v6319 = vpop.f32.mrb[0].mxu0
    %v6320 = vadd.f32 0.0, %v6319
    %v6321 = vpop.f32.mrb[0].mxu0
    %6322 = vmatprep.mubr.bf16.mxu0 0
    %6323 = vmatmul.mubr.bf16.gmra.mrb[0].mxu0 %v6040
    %v6324 = vpop.f32.mrb[0].mxu0
    %v6325 = vadd.f32 0.0, %v6324
    %v6326 = vpop.f32.mrb[0].mxu0
    %v6327 = vpop.f32.mrb[0].mxu0
    %v6328 = vadd.f32 0.0, %v6327
    %v6329 = vpop.f32.mrb[0].mxu0
    %6330 = vdwg.mxu0
    %v6335 = vunpack.c.l.b16 %v5830
    %v6336 = vunpack.c.l.b16 %v5831
    %v6337 = vunpack.c.l.b16 %v5832
    %v6338 = vunpack.c.l.b16 %v5833
    %v6339 = vpack.c.b16 %v6336, %v6335
    %v6340 = vpack.c.b16 %v6338, %v6337
    %v6344 = vsel %vm240, %v5798, 0
    %v6347 = vsel %vm240, %v5799, 0
    %v6350 = vsel %vm240, %v5800, 0
    %v6353 = vsel %vm240, %v5801, 0
    %v6356 = vsel %vm240, %v5802, 0
    %v6359 = vsel %vm240, %v5803, 0
    %v6362 = vsel %vm240, %v5804, 0
    %v6365 = vsel %vm240, %v5805, 0
    %v6368 = vsel %vm240, %v5806, 0
    %v6371 = vsel %vm240, %v5807, 0
    %v6374 = vsel %vm240, %v5808, 0
    %v6377 = vsel %vm240, %v5809, 0
    %v6380 = vsel %vm240, %v5810, 0
    %v6383 = vsel %vm240, %v5811, 0
    %v6386 = vsel %vm240, %v5812, 0
    %v6389 = vsel %vm240, %v5813, 0
    %v6392 = vsel %vm240, %v5814, 0
    %v6395 = vsel %vm240, %v5815, 0
    %v6398 = vsel %vm240, %v5816, 0
    %v6401 = vsel %vm240, %v5817, 0
    %v6404 = vsel %vm240, %v5818, 0
    %v6407 = vsel %vm240, %v5819, 0
    %v6410 = vsel %vm240, %v5820, 0
    %v6413 = vsel %vm240, %v5821, 0
    %v6416 = vsel %vm240, %v5822, 0
    %v6419 = vsel %vm240, %v5823, 0
    %v6422 = vsel %vm240, %v5824, 0
    %v6425 = vsel %vm240, %v5825, 0
    %v6428 = vsel %vm240, %v5826, 0
    %v6431 = vsel %vm240, %v5827, 0
    %v6434 = vsel %vm240, %v5828, 0
    %v6437 = vsel %vm240, %v5829, 0
    %6439 = vmatprep.subr.bf16.mxu0 0
    %6440 = vmatpush1.bf16.msra.mxu0 %v6339
    %6441 = vmatprep.subr.bf16.mxu0 0
    %6442 = vmatpush1.bf16.msra.mxu0 %v6340
    %6443 = vmatprep.subr.bf16.mxu0 0
    %6444 = vmatpush1.bf16.msra.mxu0 0
    %6445 = vmatprep.subr.bf16.mxu0 0
    %6446 = vmatpush1.bf16.msra.mxu0 0
    %6447 = vmatprep.subr.bf16.mxu0 0
    %6448 = vmatpush1.bf16.msra.mxu0 0
    %6449 = vmatprep.subr.bf16.mxu0 0
    %6450 = vmatpush1.bf16.msra.mxu0 0
    %6451 = vmatprep.subr.bf16.mxu0 0
    %6452 = vmatpush1.bf16.msra.mxu0 0
    %6453 = vmatprep.subr.bf16.mxu0 0
    %6454 = vmatpush1.bf16.msra.mxu0 0
    %6455 = vmatprep.subr.bf16.mxu0 0
    %6456 = vmatpush1.bf16.msra.mxu0 0
    %6457 = vmatprep.subr.bf16.mxu0 0
    %6458 = vmatpush1.bf16.msra.mxu0 0
    %6459 = vmatprep.subr.bf16.mxu0 0
    %6460 = vmatpush1.bf16.msra.mxu0 0
    %6461 = vmatprep.subr.bf16.mxu0 0
    %6462 = vmatpush1.bf16.msra.mxu0 0
    %6463 = vmatprep.subr.bf16.mxu0 0
    %6464 = vmatpush1.bf16.msra.mxu0 0
    %6465 = vmatprep.subr.bf16.mxu0 0
    %6466 = vmatpush1.bf16.msra.mxu0 0
    %6467 = vmatprep.subr.bf16.mxu0 0
    %6468 = vmatpush1.bf16.msra.mxu0 0
    %6469 = vmatprep.subr.bf16.mxu0 0
    %6470 = vmatpush1.bf16.msra.mxu0 0
    %6471 = vmatprep.mubr.bf16.mxu0 0
    %6472 = vmatmul.mubr.bf16.gmra.mrb[0].mxu0 %v6344
    %v6473 = vpop.f32.mrb[0].mxu0
    %v6474 = vadd.f32 %v6077, %v6473
    %v6475 = vpop.f32.mrb[0].mxu0
    %v6476 = vpop.f32.mrb[0].mxu0
    %v6477 = vadd.f32 %v6080, %v6476
    %v6478 = vpop.f32.mrb[0].mxu0
    %6479 = vmatprep.mubr.bf16.mxu0 0
    %6480 = vmatmul.mubr.bf16.gmra.mrb[0].mxu0 %v6347
    %v6481 = vpop.f32.mrb[0].mxu0
    %v6482 = vadd.f32 %v6085, %v6481
    %v6483 = vpop.f32.mrb[0].mxu0
    %v6484 = vpop.f32.mrb[0].mxu0
    %v6485 = vadd.f32 %v6088, %v6484
    %v6486 = vpop.f32.mrb[0].mxu0
    %6487 = vmatprep.mubr.bf16.mxu0 0
    %6488 = vmatmul.mubr.bf16.gmra.mrb[0].mxu0 %v6350
    %v6489 = vpop.f32.mrb[0].mxu0
    %v6490 = vadd.f32 %v6093, %v6489
    %v6491 = vpop.f32.mrb[0].mxu0
    %v6492 = vpop.f32.mrb[0].mxu0
    %v6493 = vadd.f32 %v6096, %v6492
    %v6494 = vpop.f32.mrb[0].mxu0
    %6495 = vmatprep.mubr.bf16.mxu0 0
    %6496 = vmatmul.mubr.bf16.gmra.mrb[0].mxu0 %v6353
    %v6497 = vpop.f32.mrb[0].mxu0
    %v6498 = vadd.f32 %v6101, %v6497
    %v6499 = vpop.f32.mrb[0].mxu0
    %v6500 = vpop.f32.mrb[0].mxu0
    %v6501 = vadd.f32 %v6104, %v6500
    %v6502 = vpop.f32.mrb[0].mxu0
    %6503 = vmatprep.mubr.bf16.mxu0 0
    %6504 = vmatmul.mubr.bf16.gmra.mrb[0].mxu0 %v6356
    %v6505 = vpop.f32.mrb[0].mxu0
    %v6506 = vadd.f32 %v6109, %v6505
    %v6507 = vpop.f32.mrb[0].mxu0
    %v6508 = vpop.f32.mrb[0].mxu0
    %v6509 = vadd.f32 %v6112, %v6508
    %v6510 = vpop.f32.mrb[0].mxu0
    %6511 = vmatprep.mubr.bf16.mxu0 0
    %6512 = vmatmul.mubr.bf16.gmra.mrb[0].mxu0 %v6359
    %v6513 = vpop.f32.mrb[0].mxu0
    %v6514 = vadd.f32 %v6117, %v6513
    %v6515 = vpop.f32.mrb[0].mxu0
    %v6516 = vpop.f32.mrb[0].mxu0
    %v6517 = vadd.f32 %v6120, %v6516
    %v6518 = vpop.f32.mrb[0].mxu0
    %6519 = vmatprep.mubr.bf16.mxu0 0
    %6520 = vmatmul.mubr.bf16.gmra.mrb[0].mxu0 %v6362
    %v6521 = vpop.f32.mrb[0].mxu0
    %v6522 = vadd.f32 %v6125, %v6521
    %v6523 = vpop.f32.mrb[0].mxu0
    %v6524 = vpop.f32.mrb[0].mxu0
    %v6525 = vadd.f32 %v6128, %v6524
    %v6526 = vpop.f32.mrb[0].mxu0
    %6527 = vmatprep.mubr.bf16.mxu0 0
    %6528 = vmatmul.mubr.bf16.gmra.mrb[0].mxu0 %v6365
    %v6529 = vpop.f32.mrb[0].mxu0
    %v6530 = vadd.f32 %v6133, %v6529
    %v6531 = vpop.f32.mrb[0].mxu0
    %v6532 = vpop.f32.mrb[0].mxu0
    %v6533 = vadd.f32 %v6136, %v6532
    %v6534 = vpop.f32.mrb[0].mxu0
    %6535 = vmatprep.mubr.bf16.mxu0 0
    %6536 = vmatmul.mubr.bf16.gmra.mrb[0].mxu0 %v6368
    %v6537 = vpop.f32.mrb[0].mxu0
    %v6538 = vadd.f32 %v6141, %v6537
    %v6539 = vpop.f32.mrb[0].mxu0
    %v6540 = vpop.f32.mrb[0].mxu0
    %v6541 = vadd.f32 %v6144, %v6540
    %v6542 = vpop.f32.mrb[0].mxu0
    %6543 = vmatprep.mubr.bf16.mxu0 0
    %6544 = vmatmul.mubr.bf16.gmra.mrb[0].mxu0 %v6371
    %v6545 = vpop.f32.mrb[0].mxu0
    %v6546 = vadd.f32 %v6149, %v6545
    %v6547 = vpop.f32.mrb[0].mxu0
    %v6548 = vpop.f32.mrb[0].mxu0
    %v6549 = vadd.f32 %v6152, %v6548
    %v6550 = vpop.f32.mrb[0].mxu0
    %6551 = vmatprep.mubr.bf16.mxu0 0
    %6552 = vmatmul.mubr.bf16.gmra.mrb[0].mxu0 %v6374
    %v6553 = vpop.f32.mrb[0].mxu0
    %v6554 = vadd.f32 %v6157, %v6553
    %v6555 = vpop.f32.mrb[0].mxu0
    %v6556 = vpop.f32.mrb[0].mxu0
    %v6557 = vadd.f32 %v6160, %v6556
    %v6558 = vpop.f32.mrb[0].mxu0
    %6559 = vmatprep.mubr.bf16.mxu0 0
    %6560 = vmatmul.mubr.bf16.gmra.mrb[0].mxu0 %v6377
    %v6561 = vpop.f32.mrb[0].mxu0
    %v6562 = vadd.f32 %v6165, %v6561
    %v6563 = vpop.f32.mrb[0].mxu0
    %v6564 = vpop.f32.mrb[0].mxu0
    %v6565 = vadd.f32 %v6168, %v6564
    %v6566 = vpop.f32.mrb[0].mxu0
    %6567 = vmatprep.mubr.bf16.mxu0 0
    %6568 = vmatmul.mubr.bf16.gmra.mrb[0].mxu0 %v6380
    %v6569 = vpop.f32.mrb[0].mxu0
    %v6570 = vadd.f32 %v6173, %v6569
    %v6571 = vpop.f32.mrb[0].mxu0
    %v6572 = vpop.f32.mrb[0].mxu0
    %v6573 = vadd.f32 %v6176, %v6572
    %v6574 = vpop.f32.mrb[0].mxu0
    %6575 = vmatprep.mubr.bf16.mxu0 0
    %6576 = vmatmul.mubr.bf16.gmra.mrb[0].mxu0 %v6383
    %v6577 = vpop.f32.mrb[0].mxu0
    %v6578 = vadd.f32 %v6181, %v6577
    %v6579 = vpop.f32.mrb[0].mxu0
    %v6580 = vpop.f32.mrb[0].mxu0
    %v6581 = vadd.f32 %v6184, %v6580
    %v6582 = vpop.f32.mrb[0].mxu0
    %6583 = vmatprep.mubr.bf16.mxu0 0
    %6584 = vmatmul.mubr.bf16.gmra.mrb[0].mxu0 %v6386
    %v6585 = vpop.f32.mrb[0].mxu0
    %v6586 = vadd.f32 %v6189, %v6585
    %v6587 = vpop.f32.mrb[0].mxu0
    %v6588 = vpop.f32.mrb[0].mxu0
    %v6589 = vadd.f32 %v6192, %v6588
    %v6590 = vpop.f32.mrb[0].mxu0
    %6591 = vmatprep.mubr.bf16.mxu0 0
    %6592 = vmatmul.mubr.bf16.gmra.mrb[0].mxu0 %v6389
    %v6593 = vpop.f32.mrb[0].mxu0
    %v6594 = vadd.f32 %v6197, %v6593
    %v6595 = vpop.f32.mrb[0].mxu0
    %v6596 = vpop.f32.mrb[0].mxu0
    %v6597 = vadd.f32 %v6200, %v6596
    %v6598 = vpop.f32.mrb[0].mxu0
    %6599 = vmatprep.mubr.bf16.mxu0 0
    %6600 = vmatmul.mubr.bf16.gmra.mrb[0].mxu0 %v6392
    %v6601 = vpop.f32.mrb[0].mxu0
    %v6602 = vadd.f32 %v6205, %v6601
    %v6603 = vpop.f32.mrb[0].mxu0
    %v6604 = vpop.f32.mrb[0].mxu0
    %v6605 = vadd.f32 %v6208, %v6604
    %v6606 = vpop.f32.mrb[0].mxu0
    %6607 = vmatprep.mubr.bf16.mxu0 0
    %6608 = vmatmul.mubr.bf16.gmra.mrb[0].mxu0 %v6395
    %v6609 = vpop.f32.mrb[0].mxu0
    %v6610 = vadd.f32 %v6213, %v6609
    %v6611 = vpop.f32.mrb[0].mxu0
    %v6612 = vpop.f32.mrb[0].mxu0
    %v6613 = vadd.f32 %v6216, %v6612
    %v6614 = vpop.f32.mrb[0].mxu0
    %6615 = vmatprep.mubr.bf16.mxu0 0
    %6616 = vmatmul.mubr.bf16.gmra.mrb[0].mxu0 %v6398
    %v6617 = vpop.f32.mrb[0].mxu0
    %v6618 = vadd.f32 %v6221, %v6617
    %v6619 = vpop.f32.mrb[0].mxu0
    %v6620 = vpop.f32.mrb[0].mxu0
    %v6621 = vadd.f32 %v6224, %v6620
    %v6622 = vpop.f32.mrb[0].mxu0
    %6623 = vmatprep.mubr.bf16.mxu0 0
    %6624 = vmatmul.mubr.bf16.gmra.mrb[0].mxu0 %v6401
    %v6625 = vpop.f32.mrb[0].mxu0
    %v6626 = vadd.f32 %v6229, %v6625
    %v6627 = vpop.f32.mrb[0].mxu0
    %v6628 = vpop.f32.mrb[0].mxu0
    %v6629 = vadd.f32 %v6232, %v6628
    %v6630 = vpop.f32.mrb[0].mxu0
    %6631 = vmatprep.mubr.bf16.mxu0 0
    %6632 = vmatmul.mubr.bf16.gmra.mrb[0].mxu0 %v6404
    %v6633 = vpop.f32.mrb[0].mxu0
    %v6634 = vadd.f32 %v6237, %v6633
    %v6635 = vpop.f32.mrb[0].mxu0
    %v6636 = vpop.f32.mrb[0].mxu0
    %v6637 = vadd.f32 %v6240, %v6636
    %v6638 = vpop.f32.mrb[0].mxu0
    %6639 = vmatprep.mubr.bf16.mxu0 0
    %6640 = vmatmul.mubr.bf16.gmra.mrb[0].mxu0 %v6407
    %v6641 = vpop.f32.mrb[0].mxu0
    %v6642 = vadd.f32 %v6245, %v6641
    %v6643 = vpop.f32.mrb[0].mxu0
    %v6644 = vpop.f32.mrb[0].mxu0
    %v6645 = vadd.f32 %v6248, %v6644
    %v6646 = vpop.f32.mrb[0].mxu0
    %6647 = vmatprep.mubr.bf16.mxu0 0
    %6648 = vmatmul.mubr.bf16.gmra.mrb[0].mxu0 %v6410
    %v6649 = vpop.f32.mrb[0].mxu0
    %v6650 = vadd.f32 %v6253, %v6649
    %v6651 = vpop.f32.mrb[0].mxu0
    %v6652 = vpop.f32.mrb[0].mxu0
    %v6653 = vadd.f32 %v6256, %v6652
    %v6654 = vpop.f32.mrb[0].mxu0
    %6655 = vmatprep.mubr.bf16.mxu0 0
    %6656 = vmatmul.mubr.bf16.gmra.mrb[0].mxu0 %v6413
    %v6657 = vpop.f32.mrb[0].mxu0
    %v6658 = vadd.f32 %v6261, %v6657
    %v6659 = vpop.f32.mrb[0].mxu0
    %v6660 = vpop.f32.mrb[0].mxu0
    %v6661 = vadd.f32 %v6264, %v6660
    %v6662 = vpop.f32.mrb[0].mxu0
    %6663 = vmatprep.mubr.bf16.mxu0 0
    %6664 = vmatmul.mubr.bf16.gmra.mrb[0].mxu0 %v6416
    %v6665 = vpop.f32.mrb[0].mxu0
    %v6666 = vadd.f32 %v6269, %v6665
    %v6667 = vpop.f32.mrb[0].mxu0
    %v6668 = vpop.f32.mrb[0].mxu0
    %v6669 = vadd.f32 %v6272, %v6668
    %v6670 = vpop.f32.mrb[0].mxu0
    %6671 = vmatprep.mubr.bf16.mxu0 0
    %6672 = vmatmul.mubr.bf16.gmra.mrb[0].mxu0 %v6419
    %v6673 = vpop.f32.mrb[0].mxu0
    %v6674 = vadd.f32 %v6277, %v6673
    %v6675 = vpop.f32.mrb[0].mxu0
    %v6676 = vpop.f32.mrb[0].mxu0
    %v6677 = vadd.f32 %v6280, %v6676
    %v6678 = vpop.f32.mrb[0].mxu0
    %6679 = vmatprep.mubr.bf16.mxu0 0
    %6680 = vmatmul.mubr.bf16.gmra.mrb[0].mxu0 %v6422
    %v6681 = vpop.f32.mrb[0].mxu0
    %v6682 = vadd.f32 %v6285, %v6681
    %v6683 = vpop.f32.mrb[0].mxu0
    %v6684 = vpop.f32.mrb[0].mxu0
    %v6685 = vadd.f32 %v6288, %v6684
    %v6686 = vpop.f32.mrb[0].mxu0
    %6687 = vmatprep.mubr.bf16.mxu0 0
    %6688 = vmatmul.mubr.bf16.gmra.mrb[0].mxu0 %v6425
    %v6689 = vpop.f32.mrb[0].mxu0
    %v6690 = vadd.f32 %v6293, %v6689
    %v6691 = vpop.f32.mrb[0].mxu0
    %v6692 = vpop.f32.mrb[0].mxu0
    %v6693 = vadd.f32 %v6296, %v6692
    %v6694 = vpop.f32.mrb[0].mxu0
    %6695 = vmatprep.mubr.bf16.mxu0 0
    %6696 = vmatmul.mubr.bf16.gmra.mrb[0].mxu0 %v6428
    %v6697 = vpop.f32.mrb[0].mxu0
    %v6698 = vadd.f32 %v6301, %v6697
    %v6699 = vpop.f32.mrb[0].mxu0
    %v6700 = vpop.f32.mrb[0].mxu0
    %v6701 = vadd.f32 %v6304, %v6700
    %v6702 = vpop.f32.mrb[0].mxu0
    %6703 = vmatprep.mubr.bf16.mxu0 0
    %6704 = vmatmul.mubr.bf16.gmra.mrb[0].mxu0 %v6431
    %v6705 = vpop.f32.mrb[0].mxu0
    %v6706 = vadd.f32 %v6309, %v6705
    %v6707 = vpop.f32.mrb[0].mxu0
    %v6708 = vpop.f32.mrb[0].mxu0
    %v6709 = vadd.f32 %v6312, %v6708
    %v6710 = vpop.f32.mrb[0].mxu0
    %6711 = vmatprep.mubr.bf16.mxu0 0
    %6712 = vmatmul.mubr.bf16.gmra.mrb[0].mxu0 %v6434
    %v6713 = vpop.f32.mrb[0].mxu0
    %v6714 = vadd.f32 %v6317, %v6713
    %v6715 = vpop.f32.mrb[0].mxu0
    %v6716 = vpop.f32.mrb[0].mxu0
    %v6717 = vadd.f32 %v6320, %v6716
    %v6718 = vpop.f32.mrb[0].mxu0
    %6719 = vmatprep.mubr.bf16.mxu0 0
    %6720 = vmatmul.mubr.bf16.gmra.mrb[0].mxu0 %v6437
    %v6721 = vpop.f32.mrb[0].mxu0
    %v6722 = vadd.f32 %v6325, %v6721
    %v6723 = vpop.f32.mrb[0].mxu0
    %v6724 = vpop.f32.mrb[0].mxu0
    %v6725 = vadd.f32 %v6328, %v6724
    %v6726 = vpop.f32.mrb[0].mxu0
    %6727 = vdwg.mxu0
    %v6728 = vld [vmem:[#allocation2 + $0x2] sm:$0xff]
    %v6729 = vld [vmem:[#allocation2 + $0xa] sm:$0xff]
    %v6730 = vld [vmem:[#allocation2 + $0x1a] sm:$0xff]
    %v6731 = vld [vmem:[#allocation2 + $0x22] sm:$0xff]
    %v6732 = vld [vmem:[#allocation2 + $0x32] sm:$0xff]
    %v6733 = vld [vmem:[#allocation2 + $0x3a] sm:$0xff]
    %v6734 = vld [vmem:[#allocation2 + $0x4a] sm:$0xff]
    %v6735 = vld [vmem:[#allocation2 + $0x52] sm:$0xff]
    %v6736 = vld [vmem:[#allocation2 + $0x62] sm:$0xff]
    %v6737 = vld [vmem:[#allocation2 + $0x6a] sm:$0xff]
    %v6738 = vld [vmem:[#allocation2 + $0x7a] sm:$0xff]
    %v6739 = vld [vmem:[#allocation2 + $0x82] sm:$0xff]
    %v6740 = vld [vmem:[#allocation2 + $0x92] sm:$0xff]
    %v6741 = vld [vmem:[#allocation2 + $0x9a] sm:$0xff]
    %v6742 = vld [vmem:[#allocation2 + $0xaa] sm:$0xff]
    %v6743 = vld [vmem:[#allocation2 + $0xb2] sm:$0xff]
    %v6744 = vld [vmem:[#allocation2 + $0xc2] sm:$0xff]
    %v6745 = vld [vmem:[#allocation2 + $0xca] sm:$0xff]
    %v6746 = vld [vmem:[#allocation2 + $0xda] sm:$0xff]
    %v6747 = vld [vmem:[#allocation2 + $0xe2] sm:$0xff]
    %v6748 = vld [vmem:[#allocation2 + $0xf2] sm:$0xff]
    %v6749 = vld [vmem:[#allocation2 + $0xfa] sm:$0xff]
    %v6750 = vld [vmem:[#allocation2 + $0x10a] sm:$0xff]
    %v6751 = vld [vmem:[#allocation2 + $0x112] sm:$0xff]
    %v6752 = vld [vmem:[#allocation2 + $0x122] sm:$0xff]
    %v6753 = vld [vmem:[#allocation2 + $0x12a] sm:$0xff]
    %v6754 = vld [vmem:[#allocation2 + $0x13a] sm:$0xff]
    %v6755 = vld [vmem:[#allocation2 + $0x142] sm:$0xff]
    %v6756 = vld [vmem:[#allocation2 + $0x152] sm:$0xff]
    %v6757 = vld [vmem:[#allocation2 + $0x15a] sm:$0xff]
    %v6758 = vld [vmem:[#allocation2 + $0x16a] sm:$0xff]
    %v6759 = vld [vmem:[#allocation2 + $0x172] sm:$0xff]
    %v6760 = vld [vmem:[#allocation2 + $0x1b2] sm:$0xff]
    %v6761 = vld [vmem:[#allocation2 + $0x1ba] sm:$0xff]
    %v6762 = vld [vmem:[#allocation2 + $0x1ca] sm:$0xff]
    %v6763 = vld [vmem:[#allocation2 + $0x1d2] sm:$0xff]
    %v6764 = vld [vmem:[#allocation2 + $0x1e2] sm:$0xff]
    %v6765 = vld [vmem:[#allocation2 + $0x1ea] sm:$0xff]
    %v6766 = vld [vmem:[#allocation2 + $0x1fa] sm:$0xff]
    %v6767 = vld [vmem:[#allocation2 + $0x202] sm:$0xff]
    %v6768 = vld [vmem:[#allocation2 + $0x212] sm:$0xff]
    %v6769 = vld [vmem:[#allocation2 + $0x21a] sm:$0xff]
    %v6770 = vld [vmem:[#allocation2 + $0x22a] sm:$0xff]
    %v6771 = vld [vmem:[#allocation2 + $0x232] sm:$0xff]
    %v6772 = vld [vmem:[#allocation2 + $0x242] sm:$0xff]
    %v6773 = vld [vmem:[#allocation2 + $0x24a] sm:$0xff]
    %v6774 = vld [vmem:[#allocation2 + $0x25a] sm:$0xff]
    %v6775 = vld [vmem:[#allocation2 + $0x262] sm:$0xff]
    %v6776 = vld [vmem:[#allocation2 + $0x272] sm:$0xff]
    %v6777 = vld [vmem:[#allocation2 + $0x27a] sm:$0xff]
    %v6778 = vld [vmem:[#allocation2 + $0x28a] sm:$0xff]
    %v6779 = vld [vmem:[#allocation2 + $0x292] sm:$0xff]
    %v6780 = vld [vmem:[#allocation2 + $0x2a2] sm:$0xff]
    %v6781 = vld [vmem:[#allocation2 + $0x2aa] sm:$0xff]
    %v6782 = vld [vmem:[#allocation2 + $0x2ba] sm:$0xff]
    %v6783 = vld [vmem:[#allocation2 + $0x2c2] sm:$0xff]
    %v6784 = vld [vmem:[#allocation2 + $0x2d2] sm:$0xff]
    %v6785 = vld [vmem:[#allocation2 + $0x2da] sm:$0xff]
    %v6786 = vld [vmem:[#allocation2 + $0x2ea] sm:$0xff]
    %v6787 = vld [vmem:[#allocation2 + $0x2f2] sm:$0xff]
    %v6788 = vld [vmem:[#allocation2 + $0x302] sm:$0xff]
    %v6789 = vld [vmem:[#allocation2 + $0x30a] sm:$0xff]
    %v6790 = vld [vmem:[#allocation2 + $0x31a] sm:$0xff]
    %v6791 = vld [vmem:[#allocation2 + $0x322] sm:$0xff]
    %v6792 = vpack.c.bf16 %v6729, %v6728
    %v6793 = vpack.c.bf16 %v6731, %v6730
    %v6794 = vpack.c.bf16 %v6733, %v6732
    %v6795 = vpack.c.bf16 %v6735, %v6734
    %v6796 = vpack.c.bf16 %v6737, %v6736
    %v6797 = vpack.c.bf16 %v6739, %v6738
    %v6798 = vpack.c.bf16 %v6741, %v6740
    %v6799 = vpack.c.bf16 %v6743, %v6742
    %v6800 = vpack.c.bf16 %v6745, %v6744
    %v6801 = vpack.c.bf16 %v6747, %v6746
    %v6802 = vpack.c.bf16 %v6749, %v6748
    %v6803 = vpack.c.bf16 %v6751, %v6750
    %v6804 = vpack.c.bf16 %v6753, %v6752
    %v6805 = vpack.c.bf16 %v6755, %v6754
    %v6806 = vpack.c.bf16 %v6757, %v6756
    %v6807 = vpack.c.bf16 %v6759, %v6758
    %v6808 = vpack.c.bf16 %v6761, %v6760
    %v6809 = vpack.c.bf16 %v6763, %v6762
    %v6810 = vpack.c.bf16 %v6765, %v6764
    %v6811 = vpack.c.bf16 %v6767, %v6766
    %v6812 = vpack.c.bf16 %v6769, %v6768
    %v6813 = vpack.c.bf16 %v6771, %v6770
    %v6814 = vpack.c.bf16 %v6773, %v6772
    %v6815 = vpack.c.bf16 %v6775, %v6774
    %v6816 = vpack.c.bf16 %v6777, %v6776
    %v6817 = vpack.c.bf16 %v6779, %v6778
    %v6818 = vpack.c.bf16 %v6781, %v6780
    %v6819 = vpack.c.bf16 %v6783, %v6782
    %v6820 = vpack.c.bf16 %v6785, %v6784
    %v6821 = vpack.c.bf16 %v6787, %v6786
    %v6822 = vpack.c.bf16 %v6789, %v6788
    %v6823 = vpack.c.bf16 %v6791, %v6790
    %v6824 = vld [vmem:[%s2 + $0x20] sm:$0xf]
    %v6825 = vld [vmem:[%s2 + $0x24] sm:$0xf]
    %v6826 = vld [vmem:[%s2 + $0x28] sm:$0xf]
    %v6827 = vld [vmem:[%s2 + $0x2c] sm:$0xf]
    %v6832 = vunpack.c.l.b16 %v6824
    %v6833 = vunpack.c.l.b16 %v6825
    %v6834 = vunpack.c.l.b16 %v6826
    %v6835 = vunpack.c.l.b16 %v6827
    %v6836 = vpack.c.b16 %v6833, %v6832
    %v6837 = vpack.c.b16 %v6835, %v6834
    %v6841 = vsel %vm240, %v6792, 0
    %v6844 = vsel %vm240, %v6793, 0
    %v6847 = vsel %vm240, %v6794, 0
    %v6850 = vsel %vm240, %v6795, 0
    %v6853 = vsel %vm240, %v6796, 0
    %v6856 = vsel %vm240, %v6797, 0
    %v6859 = vsel %vm240, %v6798, 0
    %v6862 = vsel %vm240, %v6799, 0
    %v6865 = vsel %vm240, %v6800, 0
    %v6868 = vsel %vm240, %v6801, 0
    %v6871 = vsel %vm240, %v6802, 0
    %v6874 = vsel %vm240, %v6803, 0
    %v6877 = vsel %vm240, %v6804, 0
    %v6880 = vsel %vm240, %v6805, 0
    %v6883 = vsel %vm240, %v6806, 0
    %v6886 = vsel %vm240, %v6807, 0
    %v6889 = vsel %vm240, %v6808, 0
    %v6892 = vsel %vm240, %v6809, 0
    %v6895 = vsel %vm240, %v6810, 0
    %v6898 = vsel %vm240, %v6811, 0
    %v6901 = vsel %vm240, %v6812, 0
    %v6904 = vsel %vm240, %v6813, 0
    %v6907 = vsel %vm240, %v6814, 0
    %v6910 = vsel %vm240, %v6815, 0
    %v6913 = vsel %vm240, %v6816, 0
    %v6916 = vsel %vm240, %v6817, 0
    %v6919 = vsel %vm240, %v6818, 0
    %v6922 = vsel %vm240, %v6819, 0
    %v6925 = vsel %vm240, %v6820, 0
    %v6928 = vsel %vm240, %v6821, 0
    %v6931 = vsel %vm240, %v6822, 0
    %v6934 = vsel %vm240, %v6823, 0
    %6936 = vmatprep.subr.bf16.mxu0 0
    %6937 = vmatpush1.bf16.msra.mxu0 %v6836
    %6938 = vmatprep.subr.bf16.mxu0 0
    %6939 = vmatpush1.bf16.msra.mxu0 %v6837
    %6940 = vmatprep.subr.bf16.mxu0 0
    %6941 = vmatpush1.bf16.msra.mxu0 0
    %6942 = vmatprep.subr.bf16.mxu0 0
    %6943 = vmatpush1.bf16.msra.mxu0 0
    %6944 = vmatprep.subr.bf16.mxu0 0
    %6945 = vmatpush1.bf16.msra.mxu0 0
    %6946 = vmatprep.subr.bf16.mxu0 0
    %6947 = vmatpush1.bf16.msra.mxu0 0
    %6948 = vmatprep.subr.bf16.mxu0 0
    %6949 = vmatpush1.bf16.msra.mxu0 0
    %6950 = vmatprep.subr.bf16.mxu0 0
    %6951 = vmatpush1.bf16.msra.mxu0 0
    %6952 = vmatprep.subr.bf16.mxu0 0
    %6953 = vmatpush1.bf16.msra.mxu0 0
    %6954 = vmatprep.subr.bf16.mxu0 0
    %6955 = vmatpush1.bf16.msra.mxu0 0
    %6956 = vmatprep.subr.bf16.mxu0 0
    %6957 = vmatpush1.bf16.msra.mxu0 0
    %6958 = vmatprep.subr.bf16.mxu0 0
    %6959 = vmatpush1.bf16.msra.mxu0 0
    %6960 = vmatprep.subr.bf16.mxu0 0
    %6961 = vmatpush1.bf16.msra.mxu0 0
    %6962 = vmatprep.subr.bf16.mxu0 0
    %6963 = vmatpush1.bf16.msra.mxu0 0
    %6964 = vmatprep.subr.bf16.mxu0 0
    %6965 = vmatpush1.bf16.msra.mxu0 0
    %6966 = vmatprep.subr.bf16.mxu0 0
    %6967 = vmatpush1.bf16.msra.mxu0 0
    %6968 = vmatprep.mubr.bf16.mxu0 0
    %6969 = vmatmul.mubr.bf16.gmra.mrb[0].mxu0 %v6841
    %v6970 = vpop.f32.mrb[0].mxu0
    %v6971 = vadd.f32 0.0, %v6970
    %v6972 = vpop.f32.mrb[0].mxu0
    %v6973 = vpop.f32.mrb[0].mxu0
    %v6974 = vadd.f32 0.0, %v6973
    %v6975 = vpop.f32.mrb[0].mxu0
    %6976 = vmatprep.mubr.bf16.mxu0 0
    %6977 = vmatmul.mubr.bf16.gmra.mrb[0].mxu0 %v6844
    %v6978 = vpop.f32.mrb[0].mxu0
    %v6979 = vadd.f32 0.0, %v6978
    %v6980 = vpop.f32.mrb[0].mxu0
    %v6981 = vpop.f32.mrb[0].mxu0
    %v6982 = vadd.f32 0.0, %v6981
    %v6983 = vpop.f32.mrb[0].mxu0
    %6984 = vmatprep.mubr.bf16.mxu0 0
    %6985 = vmatmul.mubr.bf16.gmra.mrb[0].mxu0 %v6847
    %v6986 = vpop.f32.mrb[0].mxu0
    %v6987 = vadd.f32 0.0, %v6986
    %v6988 = vpop.f32.mrb[0].mxu0
    %v6989 = vpop.f32.mrb[0].mxu0
    %v6990 = vadd.f32 0.0, %v6989
    %v6991 = vpop.f32.mrb[0].mxu0
    %6992 = vmatprep.mubr.bf16.mxu0 0
    %6993 = vmatmul.mubr.bf16.gmra.mrb[0].mxu0 %v6850
    %v6994 = vpop.f32.mrb[0].mxu0
    %v6995 = vadd.f32 0.0, %v6994
    %v6996 = vpop.f32.mrb[0].mxu0
    %v6997 = vpop.f32.mrb[0].mxu0
    %v6998 = vadd.f32 0.0, %v6997
    %v6999 = vpop.f32.mrb[0].mxu0
    %7000 = vmatprep.mubr.bf16.mxu0 0
    %7001 = vmatmul.mubr.bf16.gmra.mrb[0].mxu0 %v6853
    %v7002 = vpop.f32.mrb[0].mxu0
    %v7003 = vadd.f32 0.0, %v7002
    %v7004 = vpop.f32.mrb[0].mxu0
    %v7005 = vpop.f32.mrb[0].mxu0
    %v7006 = vadd.f32 0.0, %v7005
    %v7007 = vpop.f32.mrb[0].mxu0
    %7008 = vmatprep.mubr.bf16.mxu0 0
    %7009 = vmatmul.mubr.bf16.gmra.mrb[0].mxu0 %v6856
    %v7010 = vpop.f32.mrb[0].mxu0
    %v7011 = vadd.f32 0.0, %v7010
    %v7012 = vpop.f32.mrb[0].mxu0
    %v7013 = vpop.f32.mrb[0].mxu0
    %v7014 = vadd.f32 0.0, %v7013
    %v7015 = vpop.f32.mrb[0].mxu0
    %7016 = vmatprep.mubr.bf16.mxu0 0
    %7017 = vmatmul.mubr.bf16.gmra.mrb[0].mxu0 %v6859
    %v7018 = vpop.f32.mrb[0].mxu0
    %v7019 = vadd.f32 0.0, %v7018
    %v7020 = vpop.f32.mrb[0].mxu0
    %v7021 = vpop.f32.mrb[0].mxu0
    %v7022 = vadd.f32 0.0, %v7021
    %v7023 = vpop.f32.mrb[0].mxu0
    %7024 = vmatprep.mubr.bf16.mxu0 0
    %7025 = vmatmul.mubr.bf16.gmra.mrb[0].mxu0 %v6862
    %v7026 = vpop.f32.mrb[0].mxu0
    %v7027 = vadd.f32 0.0, %v7026
    %v7028 = vpop.f32.mrb[0].mxu0
    %v7029 = vpop.f32.mrb[0].mxu0
    %v7030 = vadd.f32 0.0, %v7029
    %v7031 = vpop.f32.mrb[0].mxu0
    %7032 = vmatprep.mubr.bf16.mxu0 0
    %7033 = vmatmul.mubr.bf16.gmra.mrb[0].mxu0 %v6865
    %v7034 = vpop.f32.mrb[0].mxu0
    %v7035 = vadd.f32 0.0, %v7034
    %v7036 = vpop.f32.mrb[0].mxu0
    %v7037 = vpop.f32.mrb[0].mxu0
    %v7038 = vadd.f32 0.0, %v7037
    %v7039 = vpop.f32.mrb[0].mxu0
    %7040 = vmatprep.mubr.bf16.mxu0 0
    %7041 = vmatmul.mubr.bf16.gmra.mrb[0].mxu0 %v6868
    %v7042 = vpop.f32.mrb[0].mxu0
    %v7043 = vadd.f32 0.0, %v7042
    %v7044 = vpop.f32.mrb[0].mxu0
    %v7045 = vpop.f32.mrb[0].mxu0
    %v7046 = vadd.f32 0.0, %v7045
    %v7047 = vpop.f32.mrb[0].mxu0
    %7048 = vmatprep.mubr.bf16.mxu0 0
    %7049 = vmatmul.mubr.bf16.gmra.mrb[0].mxu0 %v6871
    %v7050 = vpop.f32.mrb[0].mxu0
    %v7051 = vadd.f32 0.0, %v7050
    %v7052 = vpop.f32.mrb[0].mxu0
    %v7053 = vpop.f32.mrb[0].mxu0
    %v7054 = vadd.f32 0.0, %v7053
    %v7055 = vpop.f32.mrb[0].mxu0
    %7056 = vmatprep.mubr.bf16.mxu0 0
    %7057 = vmatmul.mubr.bf16.gmra.mrb[0].mxu0 %v6874
    %v7058 = vpop.f32.mrb[0].mxu0
    %v7059 = vadd.f32 0.0, %v7058
    %v7060 = vpop.f32.mrb[0].mxu0
    %v7061 = vpop.f32.mrb[0].mxu0
    %v7062 = vadd.f32 0.0, %v7061
    %v7063 = vpop.f32.mrb[0].mxu0
    %7064 = vmatprep.mubr.bf16.mxu0 0
    %7065 = vmatmul.mubr.bf16.gmra.mrb[0].mxu0 %v6877
    %v7066 = vpop.f32.mrb[0].mxu0
    %v7067 = vadd.f32 0.0, %v7066
    %v7068 = vpop.f32.mrb[0].mxu0
    %v7069 = vpop.f32.mrb[0].mxu0
    %v7070 = vadd.f32 0.0, %v7069
    %v7071 = vpop.f32.mrb[0].mxu0
    %7072 = vmatprep.mubr.bf16.mxu0 0
    %7073 = vmatmul.mubr.bf16.gmra.mrb[0].mxu0 %v6880
    %v7074 = vpop.f32.mrb[0].mxu0
    %v7075 = vadd.f32 0.0, %v7074
    %v7076 = vpop.f32.mrb[0].mxu0
    %v7077 = vpop.f32.mrb[0].mxu0
    %v7078 = vadd.f32 0.0, %v7077
    %v7079 = vpop.f32.mrb[0].mxu0
    %7080 = vmatprep.mubr.bf16.mxu0 0
    %7081 = vmatmul.mubr.bf16.gmra.mrb[0].mxu0 %v6883
    %v7082 = vpop.f32.mrb[0].mxu0
    %v7083 = vadd.f32 0.0, %v7082
    %v7084 = vpop.f32.mrb[0].mxu0
    %v7085 = vpop.f32.mrb[0].mxu0
    %v7086 = vadd.f32 0.0, %v7085
    %v7087 = vpop.f32.mrb[0].mxu0
    %7088 = vmatprep.mubr.bf16.mxu0 0
    %7089 = vmatmul.mubr.bf16.gmra.mrb[0].mxu0 %v6886
    %v7090 = vpop.f32.mrb[0].mxu0
    %v7091 = vadd.f32 0.0, %v7090
    %v7092 = vpop.f32.mrb[0].mxu0
    %v7093 = vpop.f32.mrb[0].mxu0
    %v7094 = vadd.f32 0.0, %v7093
    %v7095 = vpop.f32.mrb[0].mxu0
    %7096 = vmatprep.mubr.bf16.mxu0 0
    %7097 = vmatmul.mubr.bf16.gmra.mrb[0].mxu0 %v6889
    %v7098 = vpop.f32.mrb[0].mxu0
    %v7099 = vadd.f32 0.0, %v7098
    %v7100 = vpop.f32.mrb[0].mxu0
    %v7101 = vpop.f32.mrb[0].mxu0
    %v7102 = vadd.f32 0.0, %v7101
    %v7103 = vpop.f32.mrb[0].mxu0
    %7104 = vmatprep.mubr.bf16.mxu0 0
    %7105 = vmatmul.mubr.bf16.gmra.mrb[0].mxu0 %v6892
    %v7106 = vpop.f32.mrb[0].mxu0
    %v7107 = vadd.f32 0.0, %v7106
    %v7108 = vpop.f32.mrb[0].mxu0
    %v7109 = vpop.f32.mrb[0].mxu0
    %v7110 = vadd.f32 0.0, %v7109
    %v7111 = vpop.f32.mrb[0].mxu0
    %7112 = vmatprep.mubr.bf16.mxu0 0
    %7113 = vmatmul.mubr.bf16.gmra.mrb[0].mxu0 %v6895
    %v7114 = vpop.f32.mrb[0].mxu0
    %v7115 = vadd.f32 0.0, %v7114
    %v7116 = vpop.f32.mrb[0].mxu0
    %v7117 = vpop.f32.mrb[0].mxu0
    %v7118 = vadd.f32 0.0, %v7117
    %v7119 = vpop.f32.mrb[0].mxu0
    %7120 = vmatprep.mubr.bf16.mxu0 0
    %7121 = vmatmul.mubr.bf16.gmra.mrb[0].mxu0 %v6898
    %v7122 = vpop.f32.mrb[0].mxu0
    %v7123 = vadd.f32 0.0, %v7122
    %v7124 = vpop.f32.mrb[0].mxu0
    %v7125 = vpop.f32.mrb[0].mxu0
    %v7126 = vadd.f32 0.0, %v7125
    %v7127 = vpop.f32.mrb[0].mxu0
    %7128 = vmatprep.mubr.bf16.mxu0 0
    %7129 = vmatmul.mubr.bf16.gmra.mrb[0].mxu0 %v6901
    %v7130 = vpop.f32.mrb[0].mxu0
    %v7131 = vadd.f32 0.0, %v7130
    %v7132 = vpop.f32.mrb[0].mxu0
    %v7133 = vpop.f32.mrb[0].mxu0
    %v7134 = vadd.f32 0.0, %v7133
    %v7135 = vpop.f32.mrb[0].mxu0
    %7136 = vmatprep.mubr.bf16.mxu0 0
    %7137 = vmatmul.mubr.bf16.gmra.mrb[0].mxu0 %v6904
    %v7138 = vpop.f32.mrb[0].mxu0
    %v7139 = vadd.f32 0.0, %v7138
    %v7140 = vpop.f32.mrb[0].mxu0
    %v7141 = vpop.f32.mrb[0].mxu0
    %v7142 = vadd.f32 0.0, %v7141
    %v7143 = vpop.f32.mrb[0].mxu0
    %7144 = vmatprep.mubr.bf16.mxu0 0
    %7145 = vmatmul.mubr.bf16.gmra.mrb[0].mxu0 %v6907
    %v7146 = vpop.f32.mrb[0].mxu0
    %v7147 = vadd.f32 0.0, %v7146
    %v7148 = vpop.f32.mrb[0].mxu0
    %v7149 = vpop.f32.mrb[0].mxu0
    %v7150 = vadd.f32 0.0, %v7149
    %v7151 = vpop.f32.mrb[0].mxu0
    %7152 = vmatprep.mubr.bf16.mxu0 0
    %7153 = vmatmul.mubr.bf16.gmra.mrb[0].mxu0 %v6910
    %v7154 = vpop.f32.mrb[0].mxu0
    %v7155 = vadd.f32 0.0, %v7154
    %v7156 = vpop.f32.mrb[0].mxu0
    %v7157 = vpop.f32.mrb[0].mxu0
    %v7158 = vadd.f32 0.0, %v7157
    %v7159 = vpop.f32.mrb[0].mxu0
    %7160 = vmatprep.mubr.bf16.mxu0 0
    %7161 = vmatmul.mubr.bf16.gmra.mrb[0].mxu0 %v6913
    %v7162 = vpop.f32.mrb[0].mxu0
    %v7163 = vadd.f32 0.0, %v7162
    %v7164 = vpop.f32.mrb[0].mxu0
    %v7165 = vpop.f32.mrb[0].mxu0
    %v7166 = vadd.f32 0.0, %v7165
    %v7167 = vpop.f32.mrb[0].mxu0
    %7168 = vmatprep.mubr.bf16.mxu0 0
    %7169 = vmatmul.mubr.bf16.gmra.mrb[0].mxu0 %v6916
    %v7170 = vpop.f32.mrb[0].mxu0
    %v7171 = vadd.f32 0.0, %v7170
    %v7172 = vpop.f32.mrb[0].mxu0
    %v7173 = vpop.f32.mrb[0].mxu0
    %v7174 = vadd.f32 0.0, %v7173
    %v7175 = vpop.f32.mrb[0].mxu0
    %7176 = vmatprep.mubr.bf16.mxu0 0
    %7177 = vmatmul.mubr.bf16.gmra.mrb[0].mxu0 %v6919
    %v7178 = vpop.f32.mrb[0].mxu0
    %v7179 = vadd.f32 0.0, %v7178
    %v7180 = vpop.f32.mrb[0].mxu0
    %v7181 = vpop.f32.mrb[0].mxu0
    %v7182 = vadd.f32 0.0, %v7181
    %v7183 = vpop.f32.mrb[0].mxu0
    %7184 = vmatprep.mubr.bf16.mxu0 0
    %7185 = vmatmul.mubr.bf16.gmra.mrb[0].mxu0 %v6922
    %v7186 = vpop.f32.mrb[0].mxu0
    %v7187 = vadd.f32 0.0, %v7186
    %v7188 = vpop.f32.mrb[0].mxu0
    %v7189 = vpop.f32.mrb[0].mxu0
    %v7190 = vadd.f32 0.0, %v7189
    %v7191 = vpop.f32.mrb[0].mxu0
    %7192 = vmatprep.mubr.bf16.mxu0 0
    %7193 = vmatmul.mubr.bf16.gmra.mrb[0].mxu0 %v6925
    %v7194 = vpop.f32.mrb[0].mxu0
    %v7195 = vadd.f32 0.0, %v7194
    %v7196 = vpop.f32.mrb[0].mxu0
    %v7197 = vpop.f32.mrb[0].mxu0
    %v7198 = vadd.f32 0.0, %v7197
    %v7199 = vpop.f32.mrb[0].mxu0
    %7200 = vmatprep.mubr.bf16.mxu0 0
    %7201 = vmatmul.mubr.bf16.gmra.mrb[0].mxu0 %v6928
    %v7202 = vpop.f32.mrb[0].mxu0
    %v7203 = vadd.f32 0.0, %v7202
    %v7204 = vpop.f32.mrb[0].mxu0
    %v7205 = vpop.f32.mrb[0].mxu0
    %v7206 = vadd.f32 0.0, %v7205
    %v7207 = vpop.f32.mrb[0].mxu0
    %7208 = vmatprep.mubr.bf16.mxu0 0
    %7209 = vmatmul.mubr.bf16.gmra.mrb[0].mxu0 %v6931
    %v7210 = vpop.f32.mrb[0].mxu0
    %v7211 = vadd.f32 0.0, %v7210
    %v7212 = vpop.f32.mrb[0].mxu0
    %v7213 = vpop.f32.mrb[0].mxu0
    %v7214 = vadd.f32 0.0, %v7213
    %v7215 = vpop.f32.mrb[0].mxu0
    %7216 = vmatprep.mubr.bf16.mxu0 0
    %7217 = vmatmul.mubr.bf16.gmra.mrb[0].mxu0 %v6934
    %v7218 = vpop.f32.mrb[0].mxu0
    %v7219 = vadd.f32 0.0, %v7218
    %v7220 = vpop.f32.mrb[0].mxu0
    %v7221 = vpop.f32.mrb[0].mxu0
    %v7222 = vadd.f32 0.0, %v7221
    %v7223 = vpop.f32.mrb[0].mxu0
    %7224 = vdwg.mxu0
    %v7225 = vadd.f32 %v6474, %v6971
    %v7226 = vadd.f32 %v6477, %v6974
    %v7227 = vadd.f32 %v6482, %v6979
    %v7228 = vadd.f32 %v6485, %v6982
    %v7229 = vadd.f32 %v6490, %v6987
    %v7230 = vadd.f32 %v6493, %v6990
    %v7231 = vadd.f32 %v6498, %v6995
    %v7232 = vadd.f32 %v6501, %v6998
    %v7233 = vadd.f32 %v6506, %v7003
    %v7234 = vadd.f32 %v6509, %v7006
    %v7235 = vadd.f32 %v6514, %v7011
    %v7236 = vadd.f32 %v6517, %v7014
    %v7237 = vadd.f32 %v6522, %v7019
    %v7238 = vadd.f32 %v6525, %v7022
    %v7239 = vadd.f32 %v6530, %v7027
    %v7240 = vadd.f32 %v6533, %v7030
    %v7241 = vadd.f32 %v6538, %v7035
    %v7242 = vadd.f32 %v6541, %v7038
    %v7243 = vadd.f32 %v6546, %v7043
    %v7244 = vadd.f32 %v6549, %v7046
    %v7245 = vadd.f32 %v6554, %v7051
    %v7246 = vadd.f32 %v6557, %v7054
    %v7247 = vadd.f32 %v6562, %v7059
    %v7248 = vadd.f32 %v6565, %v7062
    %v7249 = vadd.f32 %v6570, %v7067
    %v7250 = vadd.f32 %v6573, %v7070
    %v7251 = vadd.f32 %v6578, %v7075
    %v7252 = vadd.f32 %v6581, %v7078
    %v7253 = vadd.f32 %v6586, %v7083
    %v7254 = vadd.f32 %v6589, %v7086
    %v7255 = vadd.f32 %v6594, %v7091
    %v7256 = vadd.f32 %v6597, %v7094
    %v7257 = vadd.f32 %v6602, %v7099
    %v7258 = vadd.f32 %v6605, %v7102
    %v7259 = vadd.f32 %v6610, %v7107
    %v7260 = vadd.f32 %v6613, %v7110
    %v7261 = vadd.f32 %v6618, %v7115
    %v7262 = vadd.f32 %v6621, %v7118
    %v7263 = vadd.f32 %v6626, %v7123
    %v7264 = vadd.f32 %v6629, %v7126
    %v7265 = vadd.f32 %v6634, %v7131
    %v7266 = vadd.f32 %v6637, %v7134
    %v7267 = vadd.f32 %v6642, %v7139
    %v7268 = vadd.f32 %v6645, %v7142
    %v7269 = vadd.f32 %v6650, %v7147
    %v7270 = vadd.f32 %v6653, %v7150
    %v7271 = vadd.f32 %v6658, %v7155
    %v7272 = vadd.f32 %v6661, %v7158
    %v7273 = vadd.f32 %v6666, %v7163
    %v7274 = vadd.f32 %v6669, %v7166
    %v7275 = vadd.f32 %v6674, %v7171
    %v7276 = vadd.f32 %v6677, %v7174
    %v7277 = vadd.f32 %v6682, %v7179
    %v7278 = vadd.f32 %v6685, %v7182
    %v7279 = vadd.f32 %v6690, %v7187
    %v7280 = vadd.f32 %v6693, %v7190
    %v7281 = vadd.f32 %v6698, %v7195
    %v7282 = vadd.f32 %v6701, %v7198
    %v7283 = vadd.f32 %v6706, %v7203
    %v7284 = vadd.f32 %v6709, %v7206
    %v7285 = vadd.f32 %v6714, %v7211
    %v7286 = vadd.f32 %v6717, %v7214
    %v7287 = vadd.f32 %v6722, %v7219
    %v7288 = vadd.f32 %v6725, %v7222
    %v7289 = vld [vmem:[%s5669] sm:$0xff]
    %v7290 = vld [vmem:[%s5669 + $0x8] sm:$0xff]
    %v7291 = vld [vmem:[%s5669 + $0x18] sm:$0xff]
    %v7292 = vld [vmem:[%s5669 + $0x20] sm:$0xff]
    %v7293 = vld [vmem:[%s5669 + $0x30] sm:$0xff]
    %v7294 = vld [vmem:[%s5669 + $0x38] sm:$0xff]
    %v7295 = vld [vmem:[%s5669 + $0x48] sm:$0xff]
    %v7296 = vld [vmem:[%s5669 + $0x50] sm:$0xff]
    %v7297 = vld [vmem:[%s5669 + $0x60] sm:$0xff]
    %v7298 = vld [vmem:[%s5669 + $0x68] sm:$0xff]
    %v7299 = vld [vmem:[%s5669 + $0x78] sm:$0xff]
    %v7300 = vld [vmem:[%s5669 + $0x80] sm:$0xff]
    %v7301 = vld [vmem:[%s5669 + $0x90] sm:$0xff]
    %v7302 = vld [vmem:[%s5669 + $0x98] sm:$0xff]
    %v7303 = vld [vmem:[%s5669 + $0xa8] sm:$0xff]
    %v7304 = vld [vmem:[%s5669 + $0xb0] sm:$0xff]
    %v7305 = vld [vmem:[%s5669 + $0xc0] sm:$0xff]
    %v7306 = vld [vmem:[%s5669 + $0xc8] sm:$0xff]
    %v7307 = vld [vmem:[%s5669 + $0xd8] sm:$0xff]
    %v7308 = vld [vmem:[%s5669 + $0xe0] sm:$0xff]
    %v7309 = vld [vmem:[%s5669 + $0xf0] sm:$0xff]
    %v7310 = vld [vmem:[%s5669 + $0xf8] sm:$0xff]
    %v7311 = vld [vmem:[%s5669 + $0x108] sm:$0xff]
    %v7312 = vld [vmem:[%s5669 + $0x110] sm:$0xff]
    %v7313 = vld [vmem:[%s5669 + $0x120] sm:$0xff]
    %v7314 = vld [vmem:[%s5669 + $0x128] sm:$0xff]
    %v7315 = vld [vmem:[%s5669 + $0x138] sm:$0xff]
    %v7316 = vld [vmem:[%s5669 + $0x140] sm:$0xff]
    %v7317 = vld [vmem:[%s5669 + $0x150] sm:$0xff]
    %v7318 = vld [vmem:[%s5669 + $0x158] sm:$0xff]
    %v7319 = vld [vmem:[%s5669 + $0x168] sm:$0xff]
    %v7320 = vld [vmem:[%s5669 + $0x170] sm:$0xff]
    %v7321 = vld [vmem:[%s5669 + $0x1b0] sm:$0xff]
    %v7322 = vld [vmem:[%s5669 + $0x1b8] sm:$0xff]
    %v7323 = vld [vmem:[%s5669 + $0x1c8] sm:$0xff]
    %v7324 = vld [vmem:[%s5669 + $0x1d0] sm:$0xff]
    %v7325 = vld [vmem:[%s5669 + $0x1e0] sm:$0xff]
    %v7326 = vld [vmem:[%s5669 + $0x1e8] sm:$0xff]
    %v7327 = vld [vmem:[%s5669 + $0x1f8] sm:$0xff]
    %v7328 = vld [vmem:[%s5669 + $0x200] sm:$0xff]
    %v7329 = vld [vmem:[%s5669 + $0x210] sm:$0xff]
    %v7330 = vld [vmem:[%s5669 + $0x218] sm:$0xff]
    %v7331 = vld [vmem:[%s5669 + $0x228] sm:$0xff]
    %v7332 = vld [vmem:[%s5669 + $0x230] sm:$0xff]
    %v7333 = vld [vmem:[%s5669 + $0x240] sm:$0xff]
    %v7334 = vld [vmem:[%s5669 + $0x248] sm:$0xff]
    %v7335 = vld [vmem:[%s5669 + $0x258] sm:$0xff]
    %v7336 = vld [vmem:[%s5669 + $0x260] sm:$0xff]
    %v7337 = vld [vmem:[%s5669 + $0x270] sm:$0xff]
    %v7338 = vld [vmem:[%s5669 + $0x278] sm:$0xff]
    %v7339 = vld [vmem:[%s5669 + $0x288] sm:$0xff]
    %v7340 = vld [vmem:[%s5669 + $0x290] sm:$0xff]
    %v7341 = vld [vmem:[%s5669 + $0x2a0] sm:$0xff]
    %v7342 = vld [vmem:[%s5669 + $0x2a8] sm:$0xff]
    %v7343 = vld [vmem:[%s5669 + $0x2b8] sm:$0xff]
    %v7344 = vld [vmem:[%s5669 + $0x2c0] sm:$0xff]
    %v7345 = vld [vmem:[%s5669 + $0x2d0] sm:$0xff]
    %v7346 = vld [vmem:[%s5669 + $0x2d8] sm:$0xff]
    %v7347 = vld [vmem:[%s5669 + $0x2e8] sm:$0xff]
    %v7348 = vld [vmem:[%s5669 + $0x2f0] sm:$0xff]
    %v7349 = vld [vmem:[%s5669 + $0x300] sm:$0xff]
    %v7350 = vld [vmem:[%s5669 + $0x308] sm:$0xff]
    %v7351 = vld [vmem:[%s5669 + $0x318] sm:$0xff]
    %v7352 = vld [vmem:[%s5669 + $0x320] sm:$0xff]
    %v7353 = vpack.c.bf16 %v7290, %v7289
    %v7354 = vpack.c.bf16 %v7292, %v7291
    %v7355 = vpack.c.bf16 %v7294, %v7293
    %v7356 = vpack.c.bf16 %v7296, %v7295
    %v7357 = vpack.c.bf16 %v7298, %v7297
    %v7358 = vpack.c.bf16 %v7300, %v7299
    %v7359 = vpack.c.bf16 %v7302, %v7301
    %v7360 = vpack.c.bf16 %v7304, %v7303
    %v7361 = vpack.c.bf16 %v7306, %v7305
    %v7362 = vpack.c.bf16 %v7308, %v7307
    %v7363 = vpack.c.bf16 %v7310, %v7309
    %v7364 = vpack.c.bf16 %v7312, %v7311
    %v7365 = vpack.c.bf16 %v7314, %v7313
    %v7366 = vpack.c.bf16 %v7316, %v7315
    %v7367 = vpack.c.bf16 %v7318, %v7317
    %v7368 = vpack.c.bf16 %v7320, %v7319
    %v7369 = vpack.c.bf16 %v7322, %v7321
    %v7370 = vpack.c.bf16 %v7324, %v7323
    %v7371 = vpack.c.bf16 %v7326, %v7325
    %v7372 = vpack.c.bf16 %v7328, %v7327
    %v7373 = vpack.c.bf16 %v7330, %v7329
    %v7374 = vpack.c.bf16 %v7332, %v7331
    %v7375 = vpack.c.bf16 %v7334, %v7333
    %v7376 = vpack.c.bf16 %v7336, %v7335
    %v7377 = vpack.c.bf16 %v7338, %v7337
    %v7378 = vpack.c.bf16 %v7340, %v7339
    %v7379 = vpack.c.bf16 %v7342, %v7341
    %v7380 = vpack.c.bf16 %v7344, %v7343
    %v7381 = vpack.c.bf16 %v7346, %v7345
    %v7382 = vpack.c.bf16 %v7348, %v7347
    %v7383 = vpack.c.bf16 %v7350, %v7349
    %v7384 = vpack.c.bf16 %v7352, %v7351
    %v7385 = vld [vmem:[%s2 + $0x30] sm:$0xf]
    %v7386 = vld [vmem:[%s2 + $0x34] sm:$0xf]
    %v7387 = vld [vmem:[%s2 + $0x38] sm:$0xf]
    %v7388 = vld [vmem:[%s2 + $0x3c] sm:$0xf]
    %v7393 = vunpack.c.l.b16 %v7385
    %v7394 = vunpack.c.l.b16 %v7386
    %v7395 = vunpack.c.l.b16 %v7387
    %v7396 = vunpack.c.l.b16 %v7388
    %v7397 = vpack.c.b16 %v7394, %v7393
    %v7398 = vpack.c.b16 %v7396, %v7395
    %v7402 = vsel %vm240, %v7353, 0
    %v7405 = vsel %vm240, %v7354, 0
    %v7408 = vsel %vm240, %v7355, 0
    %v7411 = vsel %vm240, %v7356, 0
    %v7414 = vsel %vm240, %v7357, 0
    %v7417 = vsel %vm240, %v7358, 0
    %v7420 = vsel %vm240, %v7359, 0
    %v7423 = vsel %vm240, %v7360, 0
    %v7426 = vsel %vm240, %v7361, 0
    %v7429 = vsel %vm240, %v7362, 0
    %v7432 = vsel %vm240, %v7363, 0
    %v7435 = vsel %vm240, %v7364, 0
    %v7438 = vsel %vm240, %v7365, 0
    %v7441 = vsel %vm240, %v7366, 0
    %v7444 = vsel %vm240, %v7367, 0
    %v7447 = vsel %vm240, %v7368, 0
    %v7450 = vsel %vm240, %v7369, 0
    %v7453 = vsel %vm240, %v7370, 0
    %v7456 = vsel %vm240, %v7371, 0
    %v7459 = vsel %vm240, %v7372, 0
    %v7462 = vsel %vm240, %v7373, 0
    %v7465 = vsel %vm240, %v7374, 0
    %v7468 = vsel %vm240, %v7375, 0
    %v7471 = vsel %vm240, %v7376, 0
    %v7474 = vsel %vm240, %v7377, 0
    %v7477 = vsel %vm240, %v7378, 0
    %v7480 = vsel %vm240, %v7379, 0
    %v7483 = vsel %vm240, %v7380, 0
    %v7486 = vsel %vm240, %v7381, 0
    %v7489 = vsel %vm240, %v7382, 0
    %v7492 = vsel %vm240, %v7383, 0
    %v7495 = vsel %vm240, %v7384, 0
    %7497 = vmatprep.subr.bf16.mxu0 0
    %7498 = vmatpush1.bf16.msra.mxu0 %v7397
    %7499 = vmatprep.subr.bf16.mxu0 0
    %7500 = vmatpush1.bf16.msra.mxu0 %v7398
    %7501 = vmatprep.subr.bf16.mxu0 0
    %7502 = vmatpush1.bf16.msra.mxu0 0
    %7503 = vmatprep.subr.bf16.mxu0 0
    %7504 = vmatpush1.bf16.msra.mxu0 0
    %7505 = vmatprep.subr.bf16.mxu0 0
    %7506 = vmatpush1.bf16.msra.mxu0 0
    %7507 = vmatprep.subr.bf16.mxu0 0
    %7508 = vmatpush1.bf16.msra.mxu0 0
    %7509 = vmatprep.subr.bf16.mxu0 0
    %7510 = vmatpush1.bf16.msra.mxu0 0
    %7511 = vmatprep.subr.bf16.mxu0 0
    %7512 = vmatpush1.bf16.msra.mxu0 0
    %7513 = vmatprep.subr.bf16.mxu0 0
    %7514 = vmatpush1.bf16.msra.mxu0 0
    %7515 = vmatprep.subr.bf16.mxu0 0
    %7516 = vmatpush1.bf16.msra.mxu0 0
    %7517 = vmatprep.subr.bf16.mxu0 0
    %7518 = vmatpush1.bf16.msra.mxu0 0
    %7519 = vmatprep.subr.bf16.mxu0 0
    %7520 = vmatpush1.bf16.msra.mxu0 0
    %7521 = vmatprep.subr.bf16.mxu0 0
    %7522 = vmatpush1.bf16.msra.mxu0 0
    %7523 = vmatprep.subr.bf16.mxu0 0
    %7524 = vmatpush1.bf16.msra.mxu0 0
    %7525 = vmatprep.subr.bf16.mxu0 0
    %7526 = vmatpush1.bf16.msra.mxu0 0
    %7527 = vmatprep.subr.bf16.mxu0 0
    %7528 = vmatpush1.bf16.msra.mxu0 0
    %7529 = vmatprep.mubr.bf16.mxu0 0
    %7530 = vmatmul.mubr.bf16.gmra.mrb[0].mxu0 %v7402
    %v7531 = vpop.f32.mrb[0].mxu0
    %v7532 = vadd.f32 0.0, %v7531
    %v7533 = vpop.f32.mrb[0].mxu0
    %v7534 = vpop.f32.mrb[0].mxu0
    %v7535 = vadd.f32 0.0, %v7534
    %v7536 = vpop.f32.mrb[0].mxu0
    %7537 = vmatprep.mubr.bf16.mxu0 0
    %7538 = vmatmul.mubr.bf16.gmra.mrb[0].mxu0 %v7405
    %v7539 = vpop.f32.mrb[0].mxu0
    %v7540 = vadd.f32 0.0, %v7539
    %v7541 = vpop.f32.mrb[0].mxu0
    %v7542 = vpop.f32.mrb[0].mxu0
    %v7543 = vadd.f32 0.0, %v7542
    %v7544 = vpop.f32.mrb[0].mxu0
    %7545 = vmatprep.mubr.bf16.mxu0 0
    %7546 = vmatmul.mubr.bf16.gmra.mrb[0].mxu0 %v7408
    %v7547 = vpop.f32.mrb[0].mxu0
    %v7548 = vadd.f32 0.0, %v7547
    %v7549 = vpop.f32.mrb[0].mxu0
    %v7550 = vpop.f32.mrb[0].mxu0
    %v7551 = vadd.f32 0.0, %v7550
    %v7552 = vpop.f32.mrb[0].mxu0
    %7553 = vmatprep.mubr.bf16.mxu0 0
    %7554 = vmatmul.mubr.bf16.gmra.mrb[0].mxu0 %v7411
    %v7555 = vpop.f32.mrb[0].mxu0
    %v7556 = vadd.f32 0.0, %v7555
    %v7557 = vpop.f32.mrb[0].mxu0
    %v7558 = vpop.f32.mrb[0].mxu0
    %v7559 = vadd.f32 0.0, %v7558
    %v7560 = vpop.f32.mrb[0].mxu0
    %7561 = vmatprep.mubr.bf16.mxu0 0
    %7562 = vmatmul.mubr.bf16.gmra.mrb[0].mxu0 %v7414
    %v7563 = vpop.f32.mrb[0].mxu0
    %v7564 = vadd.f32 0.0, %v7563
    %v7565 = vpop.f32.mrb[0].mxu0
    %v7566 = vpop.f32.mrb[0].mxu0
    %v7567 = vadd.f32 0.0, %v7566
    %v7568 = vpop.f32.mrb[0].mxu0
    %7569 = vmatprep.mubr.bf16.mxu0 0
    %7570 = vmatmul.mubr.bf16.gmra.mrb[0].mxu0 %v7417
    %v7571 = vpop.f32.mrb[0].mxu0
    %v7572 = vadd.f32 0.0, %v7571
    %v7573 = vpop.f32.mrb[0].mxu0
    %v7574 = vpop.f32.mrb[0].mxu0
    %v7575 = vadd.f32 0.0, %v7574
    %v7576 = vpop.f32.mrb[0].mxu0
    %7577 = vmatprep.mubr.bf16.mxu0 0
    %7578 = vmatmul.mubr.bf16.gmra.mrb[0].mxu0 %v7420
    %v7579 = vpop.f32.mrb[0].mxu0
    %v7580 = vadd.f32 0.0, %v7579
    %v7581 = vpop.f32.mrb[0].mxu0
    %v7582 = vpop.f32.mrb[0].mxu0
    %v7583 = vadd.f32 0.0, %v7582
    %v7584 = vpop.f32.mrb[0].mxu0
    %7585 = vmatprep.mubr.bf16.mxu0 0
    %7586 = vmatmul.mubr.bf16.gmra.mrb[0].mxu0 %v7423
    %v7587 = vpop.f32.mrb[0].mxu0
    %v7588 = vadd.f32 0.0, %v7587
    %v7589 = vpop.f32.mrb[0].mxu0
    %v7590 = vpop.f32.mrb[0].mxu0
    %v7591 = vadd.f32 0.0, %v7590
    %v7592 = vpop.f32.mrb[0].mxu0
    %7593 = vmatprep.mubr.bf16.mxu0 0
    %7594 = vmatmul.mubr.bf16.gmra.mrb[0].mxu0 %v7426
    %v7595 = vpop.f32.mrb[0].mxu0
    %v7596 = vadd.f32 0.0, %v7595
    %v7597 = vpop.f32.mrb[0].mxu0
    %v7598 = vpop.f32.mrb[0].mxu0
    %v7599 = vadd.f32 0.0, %v7598
    %v7600 = vpop.f32.mrb[0].mxu0
    %7601 = vmatprep.mubr.bf16.mxu0 0
    %7602 = vmatmul.mubr.bf16.gmra.mrb[0].mxu0 %v7429
    %v7603 = vpop.f32.mrb[0].mxu0
    %v7604 = vadd.f32 0.0, %v7603
    %v7605 = vpop.f32.mrb[0].mxu0
    %v7606 = vpop.f32.mrb[0].mxu0
    %v7607 = vadd.f32 0.0, %v7606
    %v7608 = vpop.f32.mrb[0].mxu0
    %7609 = vmatprep.mubr.bf16.mxu0 0
    %7610 = vmatmul.mubr.bf16.gmra.mrb[0].mxu0 %v7432
    %v7611 = vpop.f32.mrb[0].mxu0
    %v7612 = vadd.f32 0.0, %v7611
    %v7613 = vpop.f32.mrb[0].mxu0
    %v7614 = vpop.f32.mrb[0].mxu0
    %v7615 = vadd.f32 0.0, %v7614
    %v7616 = vpop.f32.mrb[0].mxu0
    %7617 = vmatprep.mubr.bf16.mxu0 0
    %7618 = vmatmul.mubr.bf16.gmra.mrb[0].mxu0 %v7435
    %v7619 = vpop.f32.mrb[0].mxu0
    %v7620 = vadd.f32 0.0, %v7619
    %v7621 = vpop.f32.mrb[0].mxu0
    %v7622 = vpop.f32.mrb[0].mxu0
    %v7623 = vadd.f32 0.0, %v7622
    %v7624 = vpop.f32.mrb[0].mxu0
    %7625 = vmatprep.mubr.bf16.mxu0 0
    %7626 = vmatmul.mubr.bf16.gmra.mrb[0].mxu0 %v7438
    %v7627 = vpop.f32.mrb[0].mxu0
    %v7628 = vadd.f32 0.0, %v7627
    %v7629 = vpop.f32.mrb[0].mxu0
    %v7630 = vpop.f32.mrb[0].mxu0
    %v7631 = vadd.f32 0.0, %v7630
    %v7632 = vpop.f32.mrb[0].mxu0
    %7633 = vmatprep.mubr.bf16.mxu0 0
    %7634 = vmatmul.mubr.bf16.gmra.mrb[0].mxu0 %v7441
    %v7635 = vpop.f32.mrb[0].mxu0
    %v7636 = vadd.f32 0.0, %v7635
    %v7637 = vpop.f32.mrb[0].mxu0
    %v7638 = vpop.f32.mrb[0].mxu0
    %v7639 = vadd.f32 0.0, %v7638
    %v7640 = vpop.f32.mrb[0].mxu0
    %7641 = vmatprep.mubr.bf16.mxu0 0
    %7642 = vmatmul.mubr.bf16.gmra.mrb[0].mxu0 %v7444
    %v7643 = vpop.f32.mrb[0].mxu0
    %v7644 = vadd.f32 0.0, %v7643
    %v7645 = vpop.f32.mrb[0].mxu0
    %v7646 = vpop.f32.mrb[0].mxu0
    %v7647 = vadd.f32 0.0, %v7646
    %v7648 = vpop.f32.mrb[0].mxu0
    %7649 = vmatprep.mubr.bf16.mxu0 0
    %7650 = vmatmul.mubr.bf16.gmra.mrb[0].mxu0 %v7447
    %v7651 = vpop.f32.mrb[0].mxu0
    %v7652 = vadd.f32 0.0, %v7651
    %v7653 = vpop.f32.mrb[0].mxu0
    %v7654 = vpop.f32.mrb[0].mxu0
    %v7655 = vadd.f32 0.0, %v7654
    %v7656 = vpop.f32.mrb[0].mxu0
    %7657 = vmatprep.mubr.bf16.mxu0 0
    %7658 = vmatmul.mubr.bf16.gmra.mrb[0].mxu0 %v7450
    %v7659 = vpop.f32.mrb[0].mxu0
    %v7660 = vadd.f32 0.0, %v7659
    %v7661 = vpop.f32.mrb[0].mxu0
    %v7662 = vpop.f32.mrb[0].mxu0
    %v7663 = vadd.f32 0.0, %v7662
    %v7664 = vpop.f32.mrb[0].mxu0
    %7665 = vmatprep.mubr.bf16.mxu0 0
    %7666 = vmatmul.mubr.bf16.gmra.mrb[0].mxu0 %v7453
    %v7667 = vpop.f32.mrb[0].mxu0
    %v7668 = vadd.f32 0.0, %v7667
    %v7669 = vpop.f32.mrb[0].mxu0
    %v7670 = vpop.f32.mrb[0].mxu0
    %v7671 = vadd.f32 0.0, %v7670
    %v7672 = vpop.f32.mrb[0].mxu0
    %7673 = vmatprep.mubr.bf16.mxu0 0
    %7674 = vmatmul.mubr.bf16.gmra.mrb[0].mxu0 %v7456
    %v7675 = vpop.f32.mrb[0].mxu0
    %v7676 = vadd.f32 0.0, %v7675
    %v7677 = vpop.f32.mrb[0].mxu0
    %v7678 = vpop.f32.mrb[0].mxu0
    %v7679 = vadd.f32 0.0, %v7678
    %v7680 = vpop.f32.mrb[0].mxu0
    %7681 = vmatprep.mubr.bf16.mxu0 0
    %7682 = vmatmul.mubr.bf16.gmra.mrb[0].mxu0 %v7459
    %v7683 = vpop.f32.mrb[0].mxu0
    %v7684 = vadd.f32 0.0, %v7683
    %v7685 = vpop.f32.mrb[0].mxu0
    %v7686 = vpop.f32.mrb[0].mxu0
    %v7687 = vadd.f32 0.0, %v7686
    %v7688 = vpop.f32.mrb[0].mxu0
    %7689 = vmatprep.mubr.bf16.mxu0 0
    %7690 = vmatmul.mubr.bf16.gmra.mrb[0].mxu0 %v7462
    %v7691 = vpop.f32.mrb[0].mxu0
    %v7692 = vadd.f32 0.0, %v7691
    %v7693 = vpop.f32.mrb[0].mxu0
    %v7694 = vpop.f32.mrb[0].mxu0
    %v7695 = vadd.f32 0.0, %v7694
    %v7696 = vpop.f32.mrb[0].mxu0
    %7697 = vmatprep.mubr.bf16.mxu0 0
    %7698 = vmatmul.mubr.bf16.gmra.mrb[0].mxu0 %v7465
    %v7699 = vpop.f32.mrb[0].mxu0
    %v7700 = vadd.f32 0.0, %v7699
    %v7701 = vpop.f32.mrb[0].mxu0
    %v7702 = vpop.f32.mrb[0].mxu0
    %v7703 = vadd.f32 0.0, %v7702
    %v7704 = vpop.f32.mrb[0].mxu0
    %7705 = vmatprep.mubr.bf16.mxu0 0
    %7706 = vmatmul.mubr.bf16.gmra.mrb[0].mxu0 %v7468
    %v7707 = vpop.f32.mrb[0].mxu0
    %v7708 = vadd.f32 0.0, %v7707
    %v7709 = vpop.f32.mrb[0].mxu0
    %v7710 = vpop.f32.mrb[0].mxu0
    %v7711 = vadd.f32 0.0, %v7710
    %v7712 = vpop.f32.mrb[0].mxu0
    %7713 = vmatprep.mubr.bf16.mxu0 0
    %7714 = vmatmul.mubr.bf16.gmra.mrb[0].mxu0 %v7471
    %v7715 = vpop.f32.mrb[0].mxu0
    %v7716 = vadd.f32 0.0, %v7715
    %v7717 = vpop.f32.mrb[0].mxu0
    %v7718 = vpop.f32.mrb[0].mxu0
    %v7719 = vadd.f32 0.0, %v7718
    %v7720 = vpop.f32.mrb[0].mxu0
    %7721 = vmatprep.mubr.bf16.mxu0 0
    %7722 = vmatmul.mubr.bf16.gmra.mrb[0].mxu0 %v7474
    %v7723 = vpop.f32.mrb[0].mxu0
    %v7724 = vadd.f32 0.0, %v7723
    %v7725 = vpop.f32.mrb[0].mxu0
    %v7726 = vpop.f32.mrb[0].mxu0
    %v7727 = vadd.f32 0.0, %v7726
    %v7728 = vpop.f32.mrb[0].mxu0
    %7729 = vmatprep.mubr.bf16.mxu0 0
    %7730 = vmatmul.mubr.bf16.gmra.mrb[0].mxu0 %v7477
    %v7731 = vpop.f32.mrb[0].mxu0
    %v7732 = vadd.f32 0.0, %v7731
    %v7733 = vpop.f32.mrb[0].mxu0
    %v7734 = vpop.f32.mrb[0].mxu0
    %v7735 = vadd.f32 0.0, %v7734
    %v7736 = vpop.f32.mrb[0].mxu0
    %7737 = vmatprep.mubr.bf16.mxu0 0
    %7738 = vmatmul.mubr.bf16.gmra.mrb[0].mxu0 %v7480
    %v7739 = vpop.f32.mrb[0].mxu0
    %v7740 = vadd.f32 0.0, %v7739
    %v7741 = vpop.f32.mrb[0].mxu0
    %v7742 = vpop.f32.mrb[0].mxu0
    %v7743 = vadd.f32 0.0, %v7742
    %v7744 = vpop.f32.mrb[0].mxu0
    %7745 = vmatprep.mubr.bf16.mxu0 0
    %7746 = vmatmul.mubr.bf16.gmra.mrb[0].mxu0 %v7483
    %v7747 = vpop.f32.mrb[0].mxu0
    %v7748 = vadd.f32 0.0, %v7747
    %v7749 = vpop.f32.mrb[0].mxu0
    %v7750 = vpop.f32.mrb[0].mxu0
    %v7751 = vadd.f32 0.0, %v7750
    %v7752 = vpop.f32.mrb[0].mxu0
    %7753 = vmatprep.mubr.bf16.mxu0 0
    %7754 = vmatmul.mubr.bf16.gmra.mrb[0].mxu0 %v7486
    %v7755 = vpop.f32.mrb[0].mxu0
    %v7756 = vadd.f32 0.0, %v7755
    %v7757 = vpop.f32.mrb[0].mxu0
    %v7758 = vpop.f32.mrb[0].mxu0
    %v7759 = vadd.f32 0.0, %v7758
    %v7760 = vpop.f32.mrb[0].mxu0
    %7761 = vmatprep.mubr.bf16.mxu0 0
    %7762 = vmatmul.mubr.bf16.gmra.mrb[0].mxu0 %v7489
    %v7763 = vpop.f32.mrb[0].mxu0
    %v7764 = vadd.f32 0.0, %v7763
    %v7765 = vpop.f32.mrb[0].mxu0
    %v7766 = vpop.f32.mrb[0].mxu0
    %v7767 = vadd.f32 0.0, %v7766
    %v7768 = vpop.f32.mrb[0].mxu0
    %7769 = vmatprep.mubr.bf16.mxu0 0
    %7770 = vmatmul.mubr.bf16.gmra.mrb[0].mxu0 %v7492
    %v7771 = vpop.f32.mrb[0].mxu0
    %v7772 = vadd.f32 0.0, %v7771
    %v7773 = vpop.f32.mrb[0].mxu0
    %v7774 = vpop.f32.mrb[0].mxu0
    %v7775 = vadd.f32 0.0, %v7774
    %v7776 = vpop.f32.mrb[0].mxu0
    %7777 = vmatprep.mubr.bf16.mxu0 0
    %7778 = vmatmul.mubr.bf16.gmra.mrb[0].mxu0 %v7495
    %v7779 = vpop.f32.mrb[0].mxu0
    %v7780 = vadd.f32 0.0, %v7779
    %v7781 = vpop.f32.mrb[0].mxu0
    %v7782 = vpop.f32.mrb[0].mxu0
    %v7783 = vadd.f32 0.0, %v7782
    %v7784 = vpop.f32.mrb[0].mxu0
    %7785 = vdwg.mxu0
    %v7786 = vadd.f32 %v7225, %v7532
    %v7787 = vadd.f32 %v7226, %v7535
    %v7788 = vadd.f32 %v7227, %v7540
    %v7789 = vadd.f32 %v7228, %v7543
    %v7790 = vadd.f32 %v7229, %v7548
    %v7791 = vadd.f32 %v7230, %v7551
    %v7792 = vadd.f32 %v7231, %v7556
    %v7793 = vadd.f32 %v7232, %v7559
    %v7794 = vadd.f32 %v7233, %v7564
    %v7795 = vadd.f32 %v7234, %v7567
    %v7796 = vadd.f32 %v7235, %v7572
    %v7797 = vadd.f32 %v7236, %v7575
    %v7798 = vadd.f32 %v7237, %v7580
    %v7799 = vadd.f32 %v7238, %v7583
    %v7800 = vadd.f32 %v7239, %v7588
    %v7801 = vadd.f32 %v7240, %v7591
    %v7802 = vadd.f32 %v7241, %v7596
    %v7803 = vadd.f32 %v7242, %v7599
    %v7804 = vadd.f32 %v7243, %v7604
    %v7805 = vadd.f32 %v7244, %v7607
    %v7806 = vadd.f32 %v7245, %v7612
    %v7807 = vadd.f32 %v7246, %v7615
    %v7808 = vadd.f32 %v7247, %v7620
    %v7809 = vadd.f32 %v7248, %v7623
    %v7810 = vadd.f32 %v7249, %v7628
    %v7811 = vadd.f32 %v7250, %v7631
    %v7812 = vadd.f32 %v7251, %v7636
    %v7813 = vadd.f32 %v7252, %v7639
    %v7814 = vadd.f32 %v7253, %v7644
    %v7815 = vadd.f32 %v7254, %v7647
    %v7816 = vadd.f32 %v7255, %v7652
    %v7817 = vadd.f32 %v7256, %v7655
    %v7818 = vadd.f32 %v7257, %v7660
    %v7819 = vadd.f32 %v7258, %v7663
    %v7820 = vadd.f32 %v7259, %v7668
    %v7821 = vadd.f32 %v7260, %v7671
    %v7822 = vadd.f32 %v7261, %v7676
    %v7823 = vadd.f32 %v7262, %v7679
    %v7824 = vadd.f32 %v7263, %v7684
    %v7825 = vadd.f32 %v7264, %v7687
    %v7826 = vadd.f32 %v7265, %v7692
    %v7827 = vadd.f32 %v7266, %v7695
    %v7828 = vadd.f32 %v7267, %v7700
    %v7829 = vadd.f32 %v7268, %v7703
    %v7830 = vadd.f32 %v7269, %v7708
    %v7831 = vadd.f32 %v7270, %v7711
    %v7832 = vadd.f32 %v7271, %v7716
    %v7833 = vadd.f32 %v7272, %v7719
    %v7834 = vadd.f32 %v7273, %v7724
    %v7835 = vadd.f32 %v7274, %v7727
    %v7836 = vadd.f32 %v7275, %v7732
    %v7837 = vadd.f32 %v7276, %v7735
    %v7838 = vadd.f32 %v7277, %v7740
    %v7839 = vadd.f32 %v7278, %v7743
    %v7840 = vadd.f32 %v7279, %v7748
    %v7841 = vadd.f32 %v7280, %v7751
    %v7842 = vadd.f32 %v7281, %v7756
    %v7843 = vadd.f32 %v7282, %v7759
    %v7844 = vadd.f32 %v7283, %v7764
    %v7845 = vadd.f32 %v7284, %v7767
    %v7846 = vadd.f32 %v7285, %v7772
    %v7847 = vadd.f32 %v7286, %v7775
    %v7848 = vadd.f32 %v7287, %v7780
    %v7849 = vadd.f32 %v7288, %v7783
    %v7850 = vld [vmem:[%s5669 + $0x1] sm:$0xff]
    %v7851 = vld [vmem:[%s5669 + $0x9] sm:$0xff]
    %v7852 = vld [vmem:[%s5669 + $0x19] sm:$0xff]
    %v7853 = vld [vmem:[%s5669 + $0x21] sm:$0xff]
    %v7854 = vld [vmem:[%s5669 + $0x31] sm:$0xff]
    %v7855 = vld [vmem:[%s5669 + $0x39] sm:$0xff]
    %v7856 = vld [vmem:[%s5669 + $0x49] sm:$0xff]
    %v7857 = vld [vmem:[%s5669 + $0x51] sm:$0xff]
    %v7858 = vld [vmem:[%s5669 + $0x61] sm:$0xff]
    %v7859 = vld [vmem:[%s5669 + $0x69] sm:$0xff]
    %v7860 = vld [vmem:[%s5669 + $0x79] sm:$0xff]
    %v7861 = vld [vmem:[%s5669 + $0x81] sm:$0xff]
    %v7862 = vld [vmem:[%s5669 + $0x91] sm:$0xff]
    %v7863 = vld [vmem:[%s5669 + $0x99] sm:$0xff]
    %v7864 = vld [vmem:[%s5669 + $0xa9] sm:$0xff]
    %v7865 = vld [vmem:[%s5669 + $0xb1] sm:$0xff]
    %v7866 = vld [vmem:[%s5669 + $0xc1] sm:$0xff]
    %v7867 = vld [vmem:[%s5669 + $0xc9] sm:$0xff]
    %v7868 = vld [vmem:[%s5669 + $0xd9] sm:$0xff]
    %v7869 = vld [vmem:[%s5669 + $0xe1] sm:$0xff]
    %v7870 = vld [vmem:[%s5669 + $0xf1] sm:$0xff]
    %v7871 = vld [vmem:[%s5669 + $0xf9] sm:$0xff]
    %v7872 = vld [vmem:[%s5669 + $0x109] sm:$0xff]
    %v7873 = vld [vmem:[%s5669 + $0x111] sm:$0xff]
    %v7874 = vld [vmem:[%s5669 + $0x121] sm:$0xff]
    %v7875 = vld [vmem:[%s5669 + $0x129] sm:$0xff]
    %v7876 = vld [vmem:[%s5669 + $0x139] sm:$0xff]
    %v7877 = vld [vmem:[%s5669 + $0x141] sm:$0xff]
    %v7878 = vld [vmem:[%s5669 + $0x151] sm:$0xff]
    %v7879 = vld [vmem:[%s5669 + $0x159] sm:$0xff]
    %v7880 = vld [vmem:[%s5669 + $0x169] sm:$0xff]
    %v7881 = vld [vmem:[%s5669 + $0x171] sm:$0xff]
    %v7882 = vld [vmem:[%s5669 + $0x1b1] sm:$0xff]
    %v7883 = vld [vmem:[%s5669 + $0x1b9] sm:$0xff]
    %v7884 = vld [vmem:[%s5669 + $0x1c9] sm:$0xff]
    %v7885 = vld [vmem:[%s5669 + $0x1d1] sm:$0xff]
    %v7886 = vld [vmem:[%s5669 + $0x1e1] sm:$0xff]
    %v7887 = vld [vmem:[%s5669 + $0x1e9] sm:$0xff]
    %v7888 = vld [vmem:[%s5669 + $0x1f9] sm:$0xff]
    %v7889 = vld [vmem:[%s5669 + $0x201] sm:$0xff]
    %v7890 = vld [vmem:[%s5669 + $0x211] sm:$0xff]
    %v7891 = vld [vmem:[%s5669 + $0x219] sm:$0xff]
    %v7892 = vld [vmem:[%s5669 + $0x229] sm:$0xff]
    %v7893 = vld [vmem:[%s5669 + $0x231] sm:$0xff]
    %v7894 = vld [vmem:[%s5669 + $0x241] sm:$0xff]
    %v7895 = vld [vmem:[%s5669 + $0x249] sm:$0xff]
    %v7896 = vld [vmem:[%s5669 + $0x259] sm:$0xff]
    %v7897 = vld [vmem:[%s5669 + $0x261] sm:$0xff]
    %v7898 = vld [vmem:[%s5669 + $0x271] sm:$0xff]
    %v7899 = vld [vmem:[%s5669 + $0x279] sm:$0xff]
    %v7900 = vld [vmem:[%s5669 + $0x289] sm:$0xff]
    %v7901 = vld [vmem:[%s5669 + $0x291] sm:$0xff]
    %v7902 = vld [vmem:[%s5669 + $0x2a1] sm:$0xff]
    %v7903 = vld [vmem:[%s5669 + $0x2a9] sm:$0xff]
    %v7904 = vld [vmem:[%s5669 + $0x2b9] sm:$0xff]
    %v7905 = vld [vmem:[%s5669 + $0x2c1] sm:$0xff]
    %v7906 = vld [vmem:[%s5669 + $0x2d1] sm:$0xff]
    %v7907 = vld [vmem:[%s5669 + $0x2d9] sm:$0xff]
    %v7908 = vld [vmem:[%s5669 + $0x2e9] sm:$0xff]
    %v7909 = vld [vmem:[%s5669 + $0x2f1] sm:$0xff]
    %v7910 = vld [vmem:[%s5669 + $0x301] sm:$0xff]
    %v7911 = vld [vmem:[%s5669 + $0x309] sm:$0xff]
    %v7912 = vld [vmem:[%s5669 + $0x319] sm:$0xff]
    %v7913 = vld [vmem:[%s5669 + $0x321] sm:$0xff]
    %v7914 = vpack.c.bf16 %v7851, %v7850
    %v7915 = vpack.c.bf16 %v7853, %v7852
    %v7916 = vpack.c.bf16 %v7855, %v7854
    %v7917 = vpack.c.bf16 %v7857, %v7856
    %v7918 = vpack.c.bf16 %v7859, %v7858
    %v7919 = vpack.c.bf16 %v7861, %v7860
    %v7920 = vpack.c.bf16 %v7863, %v7862
    %v7921 = vpack.c.bf16 %v7865, %v7864
    %v7922 = vpack.c.bf16 %v7867, %v7866
    %v7923 = vpack.c.bf16 %v7869, %v7868
    %v7924 = vpack.c.bf16 %v7871, %v7870
    %v7925 = vpack.c.bf16 %v7873, %v7872
    %v7926 = vpack.c.bf16 %v7875, %v7874
    %v7927 = vpack.c.bf16 %v7877, %v7876
    %v7928 = vpack.c.bf16 %v7879, %v7878
    %v7929 = vpack.c.bf16 %v7881, %v7880
    %v7930 = vpack.c.bf16 %v7883, %v7882
    %v7931 = vpack.c.bf16 %v7885, %v7884
    %v7932 = vpack.c.bf16 %v7887, %v7886
    %v7933 = vpack.c.bf16 %v7889, %v7888
    %v7934 = vpack.c.bf16 %v7891, %v7890
    %v7935 = vpack.c.bf16 %v7893, %v7892
    %v7936 = vpack.c.bf16 %v7895, %v7894
    %v7937 = vpack.c.bf16 %v7897, %v7896
    %v7938 = vpack.c.bf16 %v7899, %v7898
    %v7939 = vpack.c.bf16 %v7901, %v7900
    %v7940 = vpack.c.bf16 %v7903, %v7902
    %v7941 = vpack.c.bf16 %v7905, %v7904
    %v7942 = vpack.c.bf16 %v7907, %v7906
    %v7943 = vpack.c.bf16 %v7909, %v7908
    %v7944 = vpack.c.bf16 %v7911, %v7910
    %v7945 = vpack.c.bf16 %v7913, %v7912
    %v7946 = vld [vmem:[%s2 + $0x40] sm:$0xf]
    %v7947 = vld [vmem:[%s2 + $0x44] sm:$0xf]
    %v7948 = vld [vmem:[%s2 + $0x48] sm:$0xf]
    %v7949 = vld [vmem:[%s2 + $0x4c] sm:$0xf]
    %v7954 = vunpack.c.l.b16 %v7946
    %v7955 = vunpack.c.l.b16 %v7947
    %v7956 = vunpack.c.l.b16 %v7948
    %v7957 = vunpack.c.l.b16 %v7949
    %v7958 = vpack.c.b16 %v7955, %v7954
    %v7959 = vpack.c.b16 %v7957, %v7956
    %v7963 = vsel %vm240, %v7914, 0
    %v7966 = vsel %vm240, %v7915, 0
    %v7969 = vsel %vm240, %v7916, 0
    %v7972 = vsel %vm240, %v7917, 0
    %v7975 = vsel %vm240, %v7918, 0
    %v7978 = vsel %vm240, %v7919, 0
    %v7981 = vsel %vm240, %v7920, 0
    %v7984 = vsel %vm240, %v7921, 0
    %v7987 = vsel %vm240, %v7922, 0
    %v7990 = vsel %vm240, %v7923, 0
    %v7993 = vsel %vm240, %v7924, 0
    %v7996 = vsel %vm240, %v7925, 0
    %v7999 = vsel %vm240, %v7926, 0
    %v8002 = vsel %vm240, %v7927, 0
    %v8005 = vsel %vm240, %v7928, 0
    %v8008 = vsel %vm240, %v7929, 0
    %v8011 = vsel %vm240, %v7930, 0
    %v8014 = vsel %vm240, %v7931, 0
    %v8017 = vsel %vm240, %v7932, 0
    %v8020 = vsel %vm240, %v7933, 0
    %v8023 = vsel %vm240, %v7934, 0
    %v8026 = vsel %vm240, %v7935, 0
    %v8029 = vsel %vm240, %v7936, 0
    %v8032 = vsel %vm240, %v7937, 0
    %v8035 = vsel %vm240, %v7938, 0
    %v8038 = vsel %vm240, %v7939, 0
    %v8041 = vsel %vm240, %v7940, 0
    %v8044 = vsel %vm240, %v7941, 0
    %v8047 = vsel %vm240, %v7942, 0
    %v8050 = vsel %vm240, %v7943, 0
    %v8053 = vsel %vm240, %v7944, 0
    %v8056 = vsel %vm240, %v7945, 0
    %8058 = vmatprep.subr.bf16.mxu0 0
    %8059 = vmatpush1.bf16.msra.mxu0 %v7958
    %8060 = vmatprep.subr.bf16.mxu0 0
    %8061 = vmatpush1.bf16.msra.mxu0 %v7959
    %8062 = vmatprep.subr.bf16.mxu0 0
    %8063 = vmatpush1.bf16.msra.mxu0 0
    %8064 = vmatprep.subr.bf16.mxu0 0
    %8065 = vmatpush1.bf16.msra.mxu0 0
    %8066 = vmatprep.subr.bf16.mxu0 0
    %8067 = vmatpush1.bf16.msra.mxu0 0
    %8068 = vmatprep.subr.bf16.mxu0 0
    %8069 = vmatpush1.bf16.msra.mxu0 0
    %8070 = vmatprep.subr.bf16.mxu0 0
    %8071 = vmatpush1.bf16.msra.mxu0 0
    %8072 = vmatprep.subr.bf16.mxu0 0
    %8073 = vmatpush1.bf16.msra.mxu0 0
    %8074 = vmatprep.subr.bf16.mxu0 0
    %8075 = vmatpush1.bf16.msra.mxu0 0
    %8076 = vmatprep.subr.bf16.mxu0 0
    %8077 = vmatpush1.bf16.msra.mxu0 0
    %8078 = vmatprep.subr.bf16.mxu0 0
    %8079 = vmatpush1.bf16.msra.mxu0 0
    %8080 = vmatprep.subr.bf16.mxu0 0
    %8081 = vmatpush1.bf16.msra.mxu0 0
    %8082 = vmatprep.subr.bf16.mxu0 0
    %8083 = vmatpush1.bf16.msra.mxu0 0
    %8084 = vmatprep.subr.bf16.mxu0 0
    %8085 = vmatpush1.bf16.msra.mxu0 0
    %8086 = vmatprep.subr.bf16.mxu0 0
    %8087 = vmatpush1.bf16.msra.mxu0 0
    %8088 = vmatprep.subr.bf16.mxu0 0
    %8089 = vmatpush1.bf16.msra.mxu0 0
    %8090 = vmatprep.mubr.bf16.mxu0 0
    %8091 = vmatmul.mubr.bf16.gmra.mrb[0].mxu0 %v7963
    %v8092 = vpop.f32.mrb[0].mxu0
    %v8093 = vadd.f32 0.0, %v8092
    %v8094 = vpop.f32.mrb[0].mxu0
    %v8095 = vpop.f32.mrb[0].mxu0
    %v8096 = vadd.f32 0.0, %v8095
    %v8097 = vpop.f32.mrb[0].mxu0
    %8098 = vmatprep.mubr.bf16.mxu0 0
    %8099 = vmatmul.mubr.bf16.gmra.mrb[0].mxu0 %v7966
    %v8100 = vpop.f32.mrb[0].mxu0
    %v8101 = vadd.f32 0.0, %v8100
    %v8102 = vpop.f32.mrb[0].mxu0
    %v8103 = vpop.f32.mrb[0].mxu0
    %v8104 = vadd.f32 0.0, %v8103
    %v8105 = vpop.f32.mrb[0].mxu0
    %8106 = vmatprep.mubr.bf16.mxu0 0
    %8107 = vmatmul.mubr.bf16.gmra.mrb[0].mxu0 %v7969
    %v8108 = vpop.f32.mrb[0].mxu0
    %v8109 = vadd.f32 0.0, %v8108
    %v8110 = vpop.f32.mrb[0].mxu0
    %v8111 = vpop.f32.mrb[0].mxu0
    %v8112 = vadd.f32 0.0, %v8111
    %v8113 = vpop.f32.mrb[0].mxu0
    %8114 = vmatprep.mubr.bf16.mxu0 0
    %8115 = vmatmul.mubr.bf16.gmra.mrb[0].mxu0 %v7972
    %v8116 = vpop.f32.mrb[0].mxu0
    %v8117 = vadd.f32 0.0, %v8116
    %v8118 = vpop.f32.mrb[0].mxu0
    %v8119 = vpop.f32.mrb[0].mxu0
    %v8120 = vadd.f32 0.0, %v8119
    %v8121 = vpop.f32.mrb[0].mxu0
    %8122 = vmatprep.mubr.bf16.mxu0 0
    %8123 = vmatmul.mubr.bf16.gmra.mrb[0].mxu0 %v7975
    %v8124 = vpop.f32.mrb[0].mxu0
    %v8125 = vadd.f32 0.0, %v8124
    %v8126 = vpop.f32.mrb[0].mxu0
    %v8127 = vpop.f32.mrb[0].mxu0
    %v8128 = vadd.f32 0.0, %v8127
    %v8129 = vpop.f32.mrb[0].mxu0
    %8130 = vmatprep.mubr.bf16.mxu0 0
    %8131 = vmatmul.mubr.bf16.gmra.mrb[0].mxu0 %v7978
    %v8132 = vpop.f32.mrb[0].mxu0
    %v8133 = vadd.f32 0.0, %v8132
    %v8134 = vpop.f32.mrb[0].mxu0
    %v8135 = vpop.f32.mrb[0].mxu0
    %v8136 = vadd.f32 0.0, %v8135
    %v8137 = vpop.f32.mrb[0].mxu0
    %8138 = vmatprep.mubr.bf16.mxu0 0
    %8139 = vmatmul.mubr.bf16.gmra.mrb[0].mxu0 %v7981
    %v8140 = vpop.f32.mrb[0].mxu0
    %v8141 = vadd.f32 0.0, %v8140
    %v8142 = vpop.f32.mrb[0].mxu0
    %v8143 = vpop.f32.mrb[0].mxu0
    %v8144 = vadd.f32 0.0, %v8143
    %v8145 = vpop.f32.mrb[0].mxu0
    %8146 = vmatprep.mubr.bf16.mxu0 0
    %8147 = vmatmul.mubr.bf16.gmra.mrb[0].mxu0 %v7984
    %v8148 = vpop.f32.mrb[0].mxu0
    %v8149 = vadd.f32 0.0, %v8148
    %v8150 = vpop.f32.mrb[0].mxu0
    %v8151 = vpop.f32.mrb[0].mxu0
    %v8152 = vadd.f32 0.0, %v8151
    %v8153 = vpop.f32.mrb[0].mxu0
    %8154 = vmatprep.mubr.bf16.mxu0 0
    %8155 = vmatmul.mubr.bf16.gmra.mrb[0].mxu0 %v7987
    %v8156 = vpop.f32.mrb[0].mxu0
    %v8157 = vadd.f32 0.0, %v8156
    %v8158 = vpop.f32.mrb[0].mxu0
    %v8159 = vpop.f32.mrb[0].mxu0
    %v8160 = vadd.f32 0.0, %v8159
    %v8161 = vpop.f32.mrb[0].mxu0
    %8162 = vmatprep.mubr.bf16.mxu0 0
    %8163 = vmatmul.mubr.bf16.gmra.mrb[0].mxu0 %v7990
    %v8164 = vpop.f32.mrb[0].mxu0
    %v8165 = vadd.f32 0.0, %v8164
    %v8166 = vpop.f32.mrb[0].mxu0
    %v8167 = vpop.f32.mrb[0].mxu0
    %v8168 = vadd.f32 0.0, %v8167
    %v8169 = vpop.f32.mrb[0].mxu0
    %8170 = vmatprep.mubr.bf16.mxu0 0
    %8171 = vmatmul.mubr.bf16.gmra.mrb[0].mxu0 %v7993
    %v8172 = vpop.f32.mrb[0].mxu0
    %v8173 = vadd.f32 0.0, %v8172
    %v8174 = vpop.f32.mrb[0].mxu0
    %v8175 = vpop.f32.mrb[0].mxu0
    %v8176 = vadd.f32 0.0, %v8175
    %v8177 = vpop.f32.mrb[0].mxu0
    %8178 = vmatprep.mubr.bf16.mxu0 0
    %8179 = vmatmul.mubr.bf16.gmra.mrb[0].mxu0 %v7996
    %v8180 = vpop.f32.mrb[0].mxu0
    %v8181 = vadd.f32 0.0, %v8180
    %v8182 = vpop.f32.mrb[0].mxu0
    %v8183 = vpop.f32.mrb[0].mxu0
    %v8184 = vadd.f32 0.0, %v8183
    %v8185 = vpop.f32.mrb[0].mxu0
    %8186 = vmatprep.mubr.bf16.mxu0 0
    %8187 = vmatmul.mubr.bf16.gmra.mrb[0].mxu0 %v7999
    %v8188 = vpop.f32.mrb[0].mxu0
    %v8189 = vadd.f32 0.0, %v8188
    %v8190 = vpop.f32.mrb[0].mxu0
    %v8191 = vpop.f32.mrb[0].mxu0
    %v8192 = vadd.f32 0.0, %v8191
    %v8193 = vpop.f32.mrb[0].mxu0
    %8194 = vmatprep.mubr.bf16.mxu0 0
    %8195 = vmatmul.mubr.bf16.gmra.mrb[0].mxu0 %v8002
    %v8196 = vpop.f32.mrb[0].mxu0
    %v8197 = vadd.f32 0.0, %v8196
    %v8198 = vpop.f32.mrb[0].mxu0
    %v8199 = vpop.f32.mrb[0].mxu0
    %v8200 = vadd.f32 0.0, %v8199
    %v8201 = vpop.f32.mrb[0].mxu0
    %8202 = vmatprep.mubr.bf16.mxu0 0
    %8203 = vmatmul.mubr.bf16.gmra.mrb[0].mxu0 %v8005
    %v8204 = vpop.f32.mrb[0].mxu0
    %v8205 = vadd.f32 0.0, %v8204
    %v8206 = vpop.f32.mrb[0].mxu0
    %v8207 = vpop.f32.mrb[0].mxu0
    %v8208 = vadd.f32 0.0, %v8207
    %v8209 = vpop.f32.mrb[0].mxu0
    %8210 = vmatprep.mubr.bf16.mxu0 0
    %8211 = vmatmul.mubr.bf16.gmra.mrb[0].mxu0 %v8008
    %v8212 = vpop.f32.mrb[0].mxu0
    %v8213 = vadd.f32 0.0, %v8212
    %v8214 = vpop.f32.mrb[0].mxu0
    %v8215 = vpop.f32.mrb[0].mxu0
    %v8216 = vadd.f32 0.0, %v8215
    %v8217 = vpop.f32.mrb[0].mxu0
    %8218 = vmatprep.mubr.bf16.mxu0 0
    %8219 = vmatmul.mubr.bf16.gmra.mrb[0].mxu0 %v8011
    %v8220 = vpop.f32.mrb[0].mxu0
    %v8221 = vadd.f32 0.0, %v8220
    %v8222 = vpop.f32.mrb[0].mxu0
    %v8223 = vpop.f32.mrb[0].mxu0
    %v8224 = vadd.f32 0.0, %v8223
    %v8225 = vpop.f32.mrb[0].mxu0
    %8226 = vmatprep.mubr.bf16.mxu0 0
    %8227 = vmatmul.mubr.bf16.gmra.mrb[0].mxu0 %v8014
    %v8228 = vpop.f32.mrb[0].mxu0
    %v8229 = vadd.f32 0.0, %v8228
    %v8230 = vpop.f32.mrb[0].mxu0
    %v8231 = vpop.f32.mrb[0].mxu0
    %v8232 = vadd.f32 0.0, %v8231
    %v8233 = vpop.f32.mrb[0].mxu0
    %8234 = vmatprep.mubr.bf16.mxu0 0
    %8235 = vmatmul.mubr.bf16.gmra.mrb[0].mxu0 %v8017
    %v8236 = vpop.f32.mrb[0].mxu0
    %v8237 = vadd.f32 0.0, %v8236
    %v8238 = vpop.f32.mrb[0].mxu0
    %v8239 = vpop.f32.mrb[0].mxu0
    %v8240 = vadd.f32 0.0, %v8239
    %v8241 = vpop.f32.mrb[0].mxu0
    %8242 = vmatprep.mubr.bf16.mxu0 0
    %8243 = vmatmul.mubr.bf16.gmra.mrb[0].mxu0 %v8020
    %v8244 = vpop.f32.mrb[0].mxu0
    %v8245 = vadd.f32 0.0, %v8244
    %v8246 = vpop.f32.mrb[0].mxu0
    %v8247 = vpop.f32.mrb[0].mxu0
    %v8248 = vadd.f32 0.0, %v8247
    %v8249 = vpop.f32.mrb[0].mxu0
    %8250 = vmatprep.mubr.bf16.mxu0 0
    %8251 = vmatmul.mubr.bf16.gmra.mrb[0].mxu0 %v8023
    %v8252 = vpop.f32.mrb[0].mxu0
    %v8253 = vadd.f32 0.0, %v8252
    %v8254 = vpop.f32.mrb[0].mxu0
    %v8255 = vpop.f32.mrb[0].mxu0
    %v8256 = vadd.f32 0.0, %v8255
    %v8257 = vpop.f32.mrb[0].mxu0
    %8258 = vmatprep.mubr.bf16.mxu0 0
    %8259 = vmatmul.mubr.bf16.gmra.mrb[0].mxu0 %v8026
    %v8260 = vpop.f32.mrb[0].mxu0
    %v8261 = vadd.f32 0.0, %v8260
    %v8262 = vpop.f32.mrb[0].mxu0
    %v8263 = vpop.f32.mrb[0].mxu0
    %v8264 = vadd.f32 0.0, %v8263
    %v8265 = vpop.f32.mrb[0].mxu0
    %8266 = vmatprep.mubr.bf16.mxu0 0
    %8267 = vmatmul.mubr.bf16.gmra.mrb[0].mxu0 %v8029
    %v8268 = vpop.f32.mrb[0].mxu0
    %v8269 = vadd.f32 0.0, %v8268
    %v8270 = vpop.f32.mrb[0].mxu0
    %v8271 = vpop.f32.mrb[0].mxu0
    %v8272 = vadd.f32 0.0, %v8271
    %v8273 = vpop.f32.mrb[0].mxu0
    %8274 = vmatprep.mubr.bf16.mxu0 0
    %8275 = vmatmul.mubr.bf16.gmra.mrb[0].mxu0 %v8032
    %v8276 = vpop.f32.mrb[0].mxu0
    %v8277 = vadd.f32 0.0, %v8276
    %v8278 = vpop.f32.mrb[0].mxu0
    %v8279 = vpop.f32.mrb[0].mxu0
    %v8280 = vadd.f32 0.0, %v8279
    %v8281 = vpop.f32.mrb[0].mxu0
    %8282 = vmatprep.mubr.bf16.mxu0 0
    %8283 = vmatmul.mubr.bf16.gmra.mrb[0].mxu0 %v8035
    %v8284 = vpop.f32.mrb[0].mxu0
    %v8285 = vadd.f32 0.0, %v8284
    %v8286 = vpop.f32.mrb[0].mxu0
    %v8287 = vpop.f32.mrb[0].mxu0
    %v8288 = vadd.f32 0.0, %v8287
    %v8289 = vpop.f32.mrb[0].mxu0
    %8290 = vmatprep.mubr.bf16.mxu0 0
    %8291 = vmatmul.mubr.bf16.gmra.mrb[0].mxu0 %v8038
    %v8292 = vpop.f32.mrb[0].mxu0
    %v8293 = vadd.f32 0.0, %v8292
    %v8294 = vpop.f32.mrb[0].mxu0
    %v8295 = vpop.f32.mrb[0].mxu0
    %v8296 = vadd.f32 0.0, %v8295
    %v8297 = vpop.f32.mrb[0].mxu0
    %8298 = vmatprep.mubr.bf16.mxu0 0
    %8299 = vmatmul.mubr.bf16.gmra.mrb[0].mxu0 %v8041
    %v8300 = vpop.f32.mrb[0].mxu0
    %v8301 = vadd.f32 0.0, %v8300
    %v8302 = vpop.f32.mrb[0].mxu0
    %v8303 = vpop.f32.mrb[0].mxu0
    %v8304 = vadd.f32 0.0, %v8303
    %v8305 = vpop.f32.mrb[0].mxu0
    %8306 = vmatprep.mubr.bf16.mxu0 0
    %8307 = vmatmul.mubr.bf16.gmra.mrb[0].mxu0 %v8044
    %v8308 = vpop.f32.mrb[0].mxu0
    %v8309 = vadd.f32 0.0, %v8308
    %v8310 = vpop.f32.mrb[0].mxu0
    %v8311 = vpop.f32.mrb[0].mxu0
    %v8312 = vadd.f32 0.0, %v8311
    %v8313 = vpop.f32.mrb[0].mxu0
    %8314 = vmatprep.mubr.bf16.mxu0 0
    %8315 = vmatmul.mubr.bf16.gmra.mrb[0].mxu0 %v8047
    %v8316 = vpop.f32.mrb[0].mxu0
    %v8317 = vadd.f32 0.0, %v8316
    %v8318 = vpop.f32.mrb[0].mxu0
    %v8319 = vpop.f32.mrb[0].mxu0
    %v8320 = vadd.f32 0.0, %v8319
    %v8321 = vpop.f32.mrb[0].mxu0
    %8322 = vmatprep.mubr.bf16.mxu0 0
    %8323 = vmatmul.mubr.bf16.gmra.mrb[0].mxu0 %v8050
    %v8324 = vpop.f32.mrb[0].mxu0
    %v8325 = vadd.f32 0.0, %v8324
    %v8326 = vpop.f32.mrb[0].mxu0
    %v8327 = vpop.f32.mrb[0].mxu0
    %v8328 = vadd.f32 0.0, %v8327
    %v8329 = vpop.f32.mrb[0].mxu0
    %8330 = vmatprep.mubr.bf16.mxu0 0
    %8331 = vmatmul.mubr.bf16.gmra.mrb[0].mxu0 %v8053
    %v8332 = vpop.f32.mrb[0].mxu0
    %v8333 = vadd.f32 0.0, %v8332
    %v8334 = vpop.f32.mrb[0].mxu0
    %v8335 = vpop.f32.mrb[0].mxu0
    %v8336 = vadd.f32 0.0, %v8335
    %v8337 = vpop.f32.mrb[0].mxu0
    %8338 = vmatprep.mubr.bf16.mxu0 0
    %8339 = vmatmul.mubr.bf16.gmra.mrb[0].mxu0 %v8056
    %v8340 = vpop.f32.mrb[0].mxu0
    %v8341 = vadd.f32 0.0, %v8340
    %v8342 = vpop.f32.mrb[0].mxu0
    %v8343 = vpop.f32.mrb[0].mxu0
    %v8344 = vadd.f32 0.0, %v8343
    %v8345 = vpop.f32.mrb[0].mxu0
    %8346 = vdwg.mxu0
    %v8347 = vadd.f32 %v7786, %v8093
    %v8348 = vadd.f32 %v7787, %v8096
    %v8349 = vadd.f32 %v7788, %v8101
    %v8350 = vadd.f32 %v7789, %v8104
    %v8351 = vadd.f32 %v7790, %v8109
    %v8352 = vadd.f32 %v7791, %v8112
    %v8353 = vadd.f32 %v7792, %v8117
    %v8354 = vadd.f32 %v7793, %v8120
    %v8355 = vadd.f32 %v7794, %v8125
    %v8356 = vadd.f32 %v7795, %v8128
    %v8357 = vadd.f32 %v7796, %v8133
    %v8358 = vadd.f32 %v7797, %v8136
    %v8359 = vadd.f32 %v7798, %v8141
    %v8360 = vadd.f32 %v7799, %v8144
    %v8361 = vadd.f32 %v7800, %v8149
    %v8362 = vadd.f32 %v7801, %v8152
    %v8363 = vadd.f32 %v7802, %v8157
    %v8364 = vadd.f32 %v7803, %v8160
    %v8365 = vadd.f32 %v7804, %v8165
    %v8366 = vadd.f32 %v7805, %v8168
    %v8367 = vadd.f32 %v7806, %v8173
    %v8368 = vadd.f32 %v7807, %v8176
    %v8369 = vadd.f32 %v7808, %v8181
    %v8370 = vadd.f32 %v7809, %v8184
    %v8371 = vadd.f32 %v7810, %v8189
    %v8372 = vadd.f32 %v7811, %v8192
    %v8373 = vadd.f32 %v7812, %v8197
    %v8374 = vadd.f32 %v7813, %v8200
    %v8375 = vadd.f32 %v7814, %v8205
    %v8376 = vadd.f32 %v7815, %v8208
    %v8377 = vadd.f32 %v7816, %v8213
    %v8378 = vadd.f32 %v7817, %v8216
    %v8379 = vadd.f32 %v7818, %v8221
    %v8380 = vadd.f32 %v7819, %v8224
    %v8381 = vadd.f32 %v7820, %v8229
    %v8382 = vadd.f32 %v7821, %v8232
    %v8383 = vadd.f32 %v7822, %v8237
    %v8384 = vadd.f32 %v7823, %v8240
    %v8385 = vadd.f32 %v7824, %v8245
    %v8386 = vadd.f32 %v7825, %v8248
    %v8387 = vadd.f32 %v7826, %v8253
    %v8388 = vadd.f32 %v7827, %v8256
    %v8389 = vadd.f32 %v7828, %v8261
    %v8390 = vadd.f32 %v7829, %v8264
    %v8391 = vadd.f32 %v7830, %v8269
    %v8392 = vadd.f32 %v7831, %v8272
    %v8393 = vadd.f32 %v7832, %v8277
    %v8394 = vadd.f32 %v7833, %v8280
    %v8395 = vadd.f32 %v7834, %v8285
    %v8396 = vadd.f32 %v7835, %v8288
    %v8397 = vadd.f32 %v7836, %v8293
    %v8398 = vadd.f32 %v7837, %v8296
    %v8399 = vadd.f32 %v7838, %v8301
    %v8400 = vadd.f32 %v7839, %v8304
    %v8401 = vadd.f32 %v7840, %v8309
    %v8402 = vadd.f32 %v7841, %v8312
    %v8403 = vadd.f32 %v7842, %v8317
    %v8404 = vadd.f32 %v7843, %v8320
    %v8405 = vadd.f32 %v7844, %v8325
    %v8406 = vadd.f32 %v7845, %v8328
    %v8407 = vadd.f32 %v7846, %v8333
    %v8408 = vadd.f32 %v7847, %v8336
    %v8409 = vadd.f32 %v7848, %v8341
    %v8410 = vadd.f32 %v7849, %v8344
    %v8411 = vld [vmem:[%s5669 + $0x2] sm:$0xff]
    %v8412 = vld [vmem:[%s5669 + $0xa] sm:$0xff]
    %v8413 = vld [vmem:[%s5669 + $0x1a] sm:$0xff]
    %v8414 = vld [vmem:[%s5669 + $0x22] sm:$0xff]
    %v8415 = vld [vmem:[%s5669 + $0x32] sm:$0xff]
    %v8416 = vld [vmem:[%s5669 + $0x3a] sm:$0xff]
    %v8417 = vld [vmem:[%s5669 + $0x4a] sm:$0xff]
    %v8418 = vld [vmem:[%s5669 + $0x52] sm:$0xff]
    %v8419 = vld [vmem:[%s5669 + $0x62] sm:$0xff]
    %v8420 = vld [vmem:[%s5669 + $0x6a] sm:$0xff]
    %v8421 = vld [vmem:[%s5669 + $0x7a] sm:$0xff]
    %v8422 = vld [vmem:[%s5669 + $0x82] sm:$0xff]
    %v8423 = vld [vmem:[%s5669 + $0x92] sm:$0xff]
    %v8424 = vld [vmem:[%s5669 + $0x9a] sm:$0xff]
    %v8425 = vld [vmem:[%s5669 + $0xaa] sm:$0xff]
    %v8426 = vld [vmem:[%s5669 + $0xb2] sm:$0xff]
    %v8427 = vld [vmem:[%s5669 + $0xc2] sm:$0xff]
    %v8428 = vld [vmem:[%s5669 + $0xca] sm:$0xff]
    %v8429 = vld [vmem:[%s5669 + $0xda] sm:$0xff]
    %v8430 = vld [vmem:[%s5669 + $0xe2] sm:$0xff]
    %v8431 = vld [vmem:[%s5669 + $0xf2] sm:$0xff]
    %v8432 = vld [vmem:[%s5669 + $0xfa] sm:$0xff]
    %v8433 = vld [vmem:[%s5669 + $0x10a] sm:$0xff]
    %v8434 = vld [vmem:[%s5669 + $0x112] sm:$0xff]
    %v8435 = vld [vmem:[%s5669 + $0x122] sm:$0xff]
    %v8436 = vld [vmem:[%s5669 + $0x12a] sm:$0xff]
    %v8437 = vld [vmem:[%s5669 + $0x13a] sm:$0xff]
    %v8438 = vld [vmem:[%s5669 + $0x142] sm:$0xff]
    %v8439 = vld [vmem:[%s5669 + $0x152] sm:$0xff]
    %v8440 = vld [vmem:[%s5669 + $0x15a] sm:$0xff]
    %v8441 = vld [vmem:[%s5669 + $0x16a] sm:$0xff]
    %v8442 = vld [vmem:[%s5669 + $0x172] sm:$0xff]
    %v8443 = vld [vmem:[%s5669 + $0x1b2] sm:$0xff]
    %v8444 = vld [vmem:[%s5669 + $0x1ba] sm:$0xff]
    %v8445 = vld [vmem:[%s5669 + $0x1ca] sm:$0xff]
    %v8446 = vld [vmem:[%s5669 + $0x1d2] sm:$0xff]
    %v8447 = vld [vmem:[%s5669 + $0x1e2] sm:$0xff]
    %v8448 = vld [vmem:[%s5669 + $0x1ea] sm:$0xff]
    %v8449 = vld [vmem:[%s5669 + $0x1fa] sm:$0xff]
    %v8450 = vld [vmem:[%s5669 + $0x202] sm:$0xff]
    %v8451 = vld [vmem:[%s5669 + $0x212] sm:$0xff]
    %v8452 = vld [vmem:[%s5669 + $0x21a] sm:$0xff]
    %v8453 = vld [vmem:[%s5669 + $0x22a] sm:$0xff]
    %v8454 = vld [vmem:[%s5669 + $0x232] sm:$0xff]
    %v8455 = vld [vmem:[%s5669 + $0x242] sm:$0xff]
    %v8456 = vld [vmem:[%s5669 + $0x24a] sm:$0xff]
    %v8457 = vld [vmem:[%s5669 + $0x25a] sm:$0xff]
    %v8458 = vld [vmem:[%s5669 + $0x262] sm:$0xff]
    %v8459 = vld [vmem:[%s5669 + $0x272] sm:$0xff]
    %v8460 = vld [vmem:[%s5669 + $0x27a] sm:$0xff]
    %v8461 = vld [vmem:[%s5669 + $0x28a] sm:$0xff]
    %v8462 = vld [vmem:[%s5669 + $0x292] sm:$0xff]
    %v8463 = vld [vmem:[%s5669 + $0x2a2] sm:$0xff]
    %v8464 = vld [vmem:[%s5669 + $0x2aa] sm:$0xff]
    %v8465 = vld [vmem:[%s5669 + $0x2ba] sm:$0xff]
    %v8466 = vld [vmem:[%s5669 + $0x2c2] sm:$0xff]
    %v8467 = vld [vmem:[%s5669 + $0x2d2] sm:$0xff]
    %v8468 = vld [vmem:[%s5669 + $0x2da] sm:$0xff]
    %v8469 = vld [vmem:[%s5669 + $0x2ea] sm:$0xff]
    %v8470 = vld [vmem:[%s5669 + $0x2f2] sm:$0xff]
    %v8471 = vld [vmem:[%s5669 + $0x302] sm:$0xff]
    %v8472 = vld [vmem:[%s5669 + $0x30a] sm:$0xff]
    %v8473 = vld [vmem:[%s5669 + $0x31a] sm:$0xff]
    %v8474 = vld [vmem:[%s5669 + $0x322] sm:$0xff]
    %v8475 = vpack.c.bf16 %v8412, %v8411
    %v8476 = vpack.c.bf16 %v8414, %v8413
    %v8477 = vpack.c.bf16 %v8416, %v8415
    %v8478 = vpack.c.bf16 %v8418, %v8417
    %v8479 = vpack.c.bf16 %v8420, %v8419
    %v8480 = vpack.c.bf16 %v8422, %v8421
    %v8481 = vpack.c.bf16 %v8424, %v8423
    %v8482 = vpack.c.bf16 %v8426, %v8425
    %v8483 = vpack.c.bf16 %v8428, %v8427
    %v8484 = vpack.c.bf16 %v8430, %v8429
    %v8485 = vpack.c.bf16 %v8432, %v8431
    %v8486 = vpack.c.bf16 %v8434, %v8433
    %v8487 = vpack.c.bf16 %v8436, %v8435
    %v8488 = vpack.c.bf16 %v8438, %v8437
    %v8489 = vpack.c.bf16 %v8440, %v8439
    %v8490 = vpack.c.bf16 %v8442, %v8441
    %v8491 = vpack.c.bf16 %v8444, %v8443
    %v8492 = vpack.c.bf16 %v8446, %v8445
    %v8493 = vpack.c.bf16 %v8448, %v8447
    %v8494 = vpack.c.bf16 %v8450, %v8449
    %v8495 = vpack.c.bf16 %v8452, %v8451
    %v8496 = vpack.c.bf16 %v8454, %v8453
    %v8497 = vpack.c.bf16 %v8456, %v8455
    %v8498 = vpack.c.bf16 %v8458, %v8457
    %v8499 = vpack.c.bf16 %v8460, %v8459
    %v8500 = vpack.c.bf16 %v8462, %v8461
    %v8501 = vpack.c.bf16 %v8464, %v8463
    %v8502 = vpack.c.bf16 %v8466, %v8465
    %v8503 = vpack.c.bf16 %v8468, %v8467
    %v8504 = vpack.c.bf16 %v8470, %v8469
    %v8505 = vpack.c.bf16 %v8472, %v8471
    %v8506 = vpack.c.bf16 %v8474, %v8473
    %v8507 = vld [vmem:[%s2 + $0x50] sm:$0xf]
    %v8508 = vld [vmem:[%s2 + $0x54] sm:$0xf]
    %v8509 = vld [vmem:[%s2 + $0x58] sm:$0xf]
    %v8510 = vld [vmem:[%s2 + $0x5c] sm:$0xf]
    %v8515 = vunpack.c.l.b16 %v8507
    %v8516 = vunpack.c.l.b16 %v8508
    %v8517 = vunpack.c.l.b16 %v8509
    %v8518 = vunpack.c.l.b16 %v8510
    %v8519 = vpack.c.b16 %v8516, %v8515
    %v8520 = vpack.c.b16 %v8518, %v8517
    %v8524 = vsel %vm240, %v8475, 0
    %v8527 = vsel %vm240, %v8476, 0
    %v8530 = vsel %vm240, %v8477, 0
    %v8533 = vsel %vm240, %v8478, 0
    %v8536 = vsel %vm240, %v8479, 0
    %v8539 = vsel %vm240, %v8480, 0
    %v8542 = vsel %vm240, %v8481, 0
    %v8545 = vsel %vm240, %v8482, 0
    %v8548 = vsel %vm240, %v8483, 0
    %v8551 = vsel %vm240, %v8484, 0
    %v8554 = vsel %vm240, %v8485, 0
    %v8557 = vsel %vm240, %v8486, 0
    %v8560 = vsel %vm240, %v8487, 0
    %v8563 = vsel %vm240, %v8488, 0
    %v8566 = vsel %vm240, %v8489, 0
    %v8569 = vsel %vm240, %v8490, 0
    %v8572 = vsel %vm240, %v8491, 0
    %v8575 = vsel %vm240, %v8492, 0
    %v8578 = vsel %vm240, %v8493, 0
    %v8581 = vsel %vm240, %v8494, 0
    %v8584 = vsel %vm240, %v8495, 0
    %v8587 = vsel %vm240, %v8496, 0
    %v8590 = vsel %vm240, %v8497, 0
    %v8593 = vsel %vm240, %v8498, 0
    %v8596 = vsel %vm240, %v8499, 0
    %v8599 = vsel %vm240, %v8500, 0
    %v8602 = vsel %vm240, %v8501, 0
    %v8605 = vsel %vm240, %v8502, 0
    %v8608 = vsel %vm240, %v8503, 0
    %v8611 = vsel %vm240, %v8504, 0
    %v8614 = vsel %vm240, %v8505, 0
    %v8617 = vsel %vm240, %v8506, 0
    %8619 = vmatprep.subr.bf16.mxu0 0
    %8620 = vmatpush1.bf16.msra.mxu0 %v8519
    %8621 = vmatprep.subr.bf16.mxu0 0
    %8622 = vmatpush1.bf16.msra.mxu0 %v8520
    %8623 = vmatprep.subr.bf16.mxu0 0
    %8624 = vmatpush1.bf16.msra.mxu0 0
    %8625 = vmatprep.subr.bf16.mxu0 0
    %8626 = vmatpush1.bf16.msra.mxu0 0
    %8627 = vmatprep.subr.bf16.mxu0 0
    %8628 = vmatpush1.bf16.msra.mxu0 0
    %8629 = vmatprep.subr.bf16.mxu0 0
    %8630 = vmatpush1.bf16.msra.mxu0 0
    %8631 = vmatprep.subr.bf16.mxu0 0
    %8632 = vmatpush1.bf16.msra.mxu0 0
    %8633 = vmatprep.subr.bf16.mxu0 0
    %8634 = vmatpush1.bf16.msra.mxu0 0
    %8635 = vmatprep.subr.bf16.mxu0 0
    %8636 = vmatpush1.bf16.msra.mxu0 0
    %8637 = vmatprep.subr.bf16.mxu0 0
    %8638 = vmatpush1.bf16.msra.mxu0 0
    %8639 = vmatprep.subr.bf16.mxu0 0
    %8640 = vmatpush1.bf16.msra.mxu0 0
    %8641 = vmatprep.subr.bf16.mxu0 0
    %8642 = vmatpush1.bf16.msra.mxu0 0
    %8643 = vmatprep.subr.bf16.mxu0 0
    %8644 = vmatpush1.bf16.msra.mxu0 0
    %8645 = vmatprep.subr.bf16.mxu0 0
    %8646 = vmatpush1.bf16.msra.mxu0 0
    %8647 = vmatprep.subr.bf16.mxu0 0
    %8648 = vmatpush1.bf16.msra.mxu0 0
    %8649 = vmatprep.subr.bf16.mxu0 0
    %8650 = vmatpush1.bf16.msra.mxu0 0
    %8651 = vmatprep.mubr.bf16.mxu0 0
    %8652 = vmatmul.mubr.bf16.gmra.mrb[0].mxu0 %v8524
    %v8653 = vpop.f32.mrb[0].mxu0
    %v8654 = vadd.f32 0.0, %v8653
    %v8655 = vpop.f32.mrb[0].mxu0
    %v8656 = vpop.f32.mrb[0].mxu0
    %v8657 = vadd.f32 0.0, %v8656
    %v8658 = vpop.f32.mrb[0].mxu0
    %8659 = vmatprep.mubr.bf16.mxu0 0
    %8660 = vmatmul.mubr.bf16.gmra.mrb[0].mxu0 %v8527
    %v8661 = vpop.f32.mrb[0].mxu0
    %v8662 = vadd.f32 0.0, %v8661
    %v8663 = vpop.f32.mrb[0].mxu0
    %v8664 = vpop.f32.mrb[0].mxu0
    %v8665 = vadd.f32 0.0, %v8664
    %v8666 = vpop.f32.mrb[0].mxu0
    %8667 = vmatprep.mubr.bf16.mxu0 0
    %8668 = vmatmul.mubr.bf16.gmra.mrb[0].mxu0 %v8530
    %v8669 = vpop.f32.mrb[0].mxu0
    %v8670 = vadd.f32 0.0, %v8669
    %v8671 = vpop.f32.mrb[0].mxu0
    %v8672 = vpop.f32.mrb[0].mxu0
    %v8673 = vadd.f32 0.0, %v8672
    %v8674 = vpop.f32.mrb[0].mxu0
    %8675 = vmatprep.mubr.bf16.mxu0 0
    %8676 = vmatmul.mubr.bf16.gmra.mrb[0].mxu0 %v8533
    %v8677 = vpop.f32.mrb[0].mxu0
    %v8678 = vadd.f32 0.0, %v8677
    %v8679 = vpop.f32.mrb[0].mxu0
    %v8680 = vpop.f32.mrb[0].mxu0
    %v8681 = vadd.f32 0.0, %v8680
    %v8682 = vpop.f32.mrb[0].mxu0
    %8683 = vmatprep.mubr.bf16.mxu0 0
    %8684 = vmatmul.mubr.bf16.gmra.mrb[0].mxu0 %v8536
    %v8685 = vpop.f32.mrb[0].mxu0
    %v8686 = vadd.f32 0.0, %v8685
    %v8687 = vpop.f32.mrb[0].mxu0
    %v8688 = vpop.f32.mrb[0].mxu0
    %v8689 = vadd.f32 0.0, %v8688
    %v8690 = vpop.f32.mrb[0].mxu0
    %8691 = vmatprep.mubr.bf16.mxu0 0
    %8692 = vmatmul.mubr.bf16.gmra.mrb[0].mxu0 %v8539
    %v8693 = vpop.f32.mrb[0].mxu0
    %v8694 = vadd.f32 0.0, %v8693
    %v8695 = vpop.f32.mrb[0].mxu0
    %v8696 = vpop.f32.mrb[0].mxu0
    %v8697 = vadd.f32 0.0, %v8696
    %v8698 = vpop.f32.mrb[0].mxu0
    %8699 = vmatprep.mubr.bf16.mxu0 0
    %8700 = vmatmul.mubr.bf16.gmra.mrb[0].mxu0 %v8542
    %v8701 = vpop.f32.mrb[0].mxu0
    %v8702 = vadd.f32 0.0, %v8701
    %v8703 = vpop.f32.mrb[0].mxu0
    %v8704 = vpop.f32.mrb[0].mxu0
    %v8705 = vadd.f32 0.0, %v8704
    %v8706 = vpop.f32.mrb[0].mxu0
    %8707 = vmatprep.mubr.bf16.mxu0 0
    %8708 = vmatmul.mubr.bf16.gmra.mrb[0].mxu0 %v8545
    %v8709 = vpop.f32.mrb[0].mxu0
    %v8710 = vadd.f32 0.0, %v8709
    %v8711 = vpop.f32.mrb[0].mxu0
    %v8712 = vpop.f32.mrb[0].mxu0
    %v8713 = vadd.f32 0.0, %v8712
    %v8714 = vpop.f32.mrb[0].mxu0
    %8715 = vmatprep.mubr.bf16.mxu0 0
    %8716 = vmatmul.mubr.bf16.gmra.mrb[0].mxu0 %v8548
    %v8717 = vpop.f32.mrb[0].mxu0
    %v8718 = vadd.f32 0.0, %v8717
    %v8719 = vpop.f32.mrb[0].mxu0
    %v8720 = vpop.f32.mrb[0].mxu0
    %v8721 = vadd.f32 0.0, %v8720
    %v8722 = vpop.f32.mrb[0].mxu0
    %8723 = vmatprep.mubr.bf16.mxu0 0
    %8724 = vmatmul.mubr.bf16.gmra.mrb[0].mxu0 %v8551
    %v8725 = vpop.f32.mrb[0].mxu0
    %v8726 = vadd.f32 0.0, %v8725
    %v8727 = vpop.f32.mrb[0].mxu0
    %v8728 = vpop.f32.mrb[0].mxu0
    %v8729 = vadd.f32 0.0, %v8728
    %v8730 = vpop.f32.mrb[0].mxu0
    %8731 = vmatprep.mubr.bf16.mxu0 0
    %8732 = vmatmul.mubr.bf16.gmra.mrb[0].mxu0 %v8554
    %v8733 = vpop.f32.mrb[0].mxu0
    %v8734 = vadd.f32 0.0, %v8733
    %v8735 = vpop.f32.mrb[0].mxu0
    %v8736 = vpop.f32.mrb[0].mxu0
    %v8737 = vadd.f32 0.0, %v8736
    %v8738 = vpop.f32.mrb[0].mxu0
    %8739 = vmatprep.mubr.bf16.mxu0 0
    %8740 = vmatmul.mubr.bf16.gmra.mrb[0].mxu0 %v8557
    %v8741 = vpop.f32.mrb[0].mxu0
    %v8742 = vadd.f32 0.0, %v8741
    %v8743 = vpop.f32.mrb[0].mxu0
    %v8744 = vpop.f32.mrb[0].mxu0
    %v8745 = vadd.f32 0.0, %v8744
    %v8746 = vpop.f32.mrb[0].mxu0
    %8747 = vmatprep.mubr.bf16.mxu0 0
    %8748 = vmatmul.mubr.bf16.gmra.mrb[0].mxu0 %v8560
    %v8749 = vpop.f32.mrb[0].mxu0
    %v8750 = vadd.f32 0.0, %v8749
    %v8751 = vpop.f32.mrb[0].mxu0
    %v8752 = vpop.f32.mrb[0].mxu0
    %v8753 = vadd.f32 0.0, %v8752
    %v8754 = vpop.f32.mrb[0].mxu0
    %8755 = vmatprep.mubr.bf16.mxu0 0
    %8756 = vmatmul.mubr.bf16.gmra.mrb[0].mxu0 %v8563
    %v8757 = vpop.f32.mrb[0].mxu0
    %v8758 = vadd.f32 0.0, %v8757
    %v8759 = vpop.f32.mrb[0].mxu0
    %v8760 = vpop.f32.mrb[0].mxu0
    %v8761 = vadd.f32 0.0, %v8760
    %v8762 = vpop.f32.mrb[0].mxu0
    %8763 = vmatprep.mubr.bf16.mxu0 0
    %8764 = vmatmul.mubr.bf16.gmra.mrb[0].mxu0 %v8566
    %v8765 = vpop.f32.mrb[0].mxu0
    %v8766 = vadd.f32 0.0, %v8765
    %v8767 = vpop.f32.mrb[0].mxu0
    %v8768 = vpop.f32.mrb[0].mxu0
    %v8769 = vadd.f32 0.0, %v8768
    %v8770 = vpop.f32.mrb[0].mxu0
    %8771 = vmatprep.mubr.bf16.mxu0 0
    %8772 = vmatmul.mubr.bf16.gmra.mrb[0].mxu0 %v8569
    %v8773 = vpop.f32.mrb[0].mxu0
    %v8774 = vadd.f32 0.0, %v8773
    %v8775 = vpop.f32.mrb[0].mxu0
    %v8776 = vpop.f32.mrb[0].mxu0
    %v8777 = vadd.f32 0.0, %v8776
    %v8778 = vpop.f32.mrb[0].mxu0
    %8779 = vmatprep.mubr.bf16.mxu0 0
    %8780 = vmatmul.mubr.bf16.gmra.mrb[0].mxu0 %v8572
    %v8781 = vpop.f32.mrb[0].mxu0
    %v8782 = vadd.f32 0.0, %v8781
    %v8783 = vpop.f32.mrb[0].mxu0
    %v8784 = vpop.f32.mrb[0].mxu0
    %v8785 = vadd.f32 0.0, %v8784
    %v8786 = vpop.f32.mrb[0].mxu0
    %8787 = vmatprep.mubr.bf16.mxu0 0
    %8788 = vmatmul.mubr.bf16.gmra.mrb[0].mxu0 %v8575
    %v8789 = vpop.f32.mrb[0].mxu0
    %v8790 = vadd.f32 0.0, %v8789
    %v8791 = vpop.f32.mrb[0].mxu0
    %v8792 = vpop.f32.mrb[0].mxu0
    %v8793 = vadd.f32 0.0, %v8792
    %v8794 = vpop.f32.mrb[0].mxu0
    %8795 = vmatprep.mubr.bf16.mxu0 0
    %8796 = vmatmul.mubr.bf16.gmra.mrb[0].mxu0 %v8578
    %v8797 = vpop.f32.mrb[0].mxu0
    %v8798 = vadd.f32 0.0, %v8797
    %v8799 = vpop.f32.mrb[0].mxu0
    %v8800 = vpop.f32.mrb[0].mxu0
    %v8801 = vadd.f32 0.0, %v8800
    %v8802 = vpop.f32.mrb[0].mxu0
    %8803 = vmatprep.mubr.bf16.mxu0 0
    %8804 = vmatmul.mubr.bf16.gmra.mrb[0].mxu0 %v8581
    %v8805 = vpop.f32.mrb[0].mxu0
    %v8806 = vadd.f32 0.0, %v8805
    %v8807 = vpop.f32.mrb[0].mxu0
    %v8808 = vpop.f32.mrb[0].mxu0
    %v8809 = vadd.f32 0.0, %v8808
    %v8810 = vpop.f32.mrb[0].mxu0
    %8811 = vmatprep.mubr.bf16.mxu0 0
    %8812 = vmatmul.mubr.bf16.gmra.mrb[0].mxu0 %v8584
    %v8813 = vpop.f32.mrb[0].mxu0
    %v8814 = vadd.f32 0.0, %v8813
    %v8815 = vpop.f32.mrb[0].mxu0
    %v8816 = vpop.f32.mrb[0].mxu0
    %v8817 = vadd.f32 0.0, %v8816
    %v8818 = vpop.f32.mrb[0].mxu0
    %8819 = vmatprep.mubr.bf16.mxu0 0
    %8820 = vmatmul.mubr.bf16.gmra.mrb[0].mxu0 %v8587
    %v8821 = vpop.f32.mrb[0].mxu0
    %v8822 = vadd.f32 0.0, %v8821
    %v8823 = vpop.f32.mrb[0].mxu0
    %v8824 = vpop.f32.mrb[0].mxu0
    %v8825 = vadd.f32 0.0, %v8824
    %v8826 = vpop.f32.mrb[0].mxu0
    %8827 = vmatprep.mubr.bf16.mxu0 0
    %8828 = vmatmul.mubr.bf16.gmra.mrb[0].mxu0 %v8590
    %v8829 = vpop.f32.mrb[0].mxu0
    %v8830 = vadd.f32 0.0, %v8829
    %v8831 = vpop.f32.mrb[0].mxu0
    %v8832 = vpop.f32.mrb[0].mxu0
    %v8833 = vadd.f32 0.0, %v8832
    %v8834 = vpop.f32.mrb[0].mxu0
    %8835 = vmatprep.mubr.bf16.mxu0 0
    %8836 = vmatmul.mubr.bf16.gmra.mrb[0].mxu0 %v8593
    %v8837 = vpop.f32.mrb[0].mxu0
    %v8838 = vadd.f32 0.0, %v8837
    %v8839 = vpop.f32.mrb[0].mxu0
    %v8840 = vpop.f32.mrb[0].mxu0
    %v8841 = vadd.f32 0.0, %v8840
    %v8842 = vpop.f32.mrb[0].mxu0
    %8843 = vmatprep.mubr.bf16.mxu0 0
    %8844 = vmatmul.mubr.bf16.gmra.mrb[0].mxu0 %v8596
    %v8845 = vpop.f32.mrb[0].mxu0
    %v8846 = vadd.f32 0.0, %v8845
    %v8847 = vpop.f32.mrb[0].mxu0
    %v8848 = vpop.f32.mrb[0].mxu0
    %v8849 = vadd.f32 0.0, %v8848
    %v8850 = vpop.f32.mrb[0].mxu0
    %8851 = vmatprep.mubr.bf16.mxu0 0
    %8852 = vmatmul.mubr.bf16.gmra.mrb[0].mxu0 %v8599
    %v8853 = vpop.f32.mrb[0].mxu0
    %v8854 = vadd.f32 0.0, %v8853
    %v8855 = vpop.f32.mrb[0].mxu0
    %v8856 = vpop.f32.mrb[0].mxu0
    %v8857 = vadd.f32 0.0, %v8856
    %v8858 = vpop.f32.mrb[0].mxu0
    %8859 = vmatprep.mubr.bf16.mxu0 0
    %8860 = vmatmul.mubr.bf16.gmra.mrb[0].mxu0 %v8602
    %v8861 = vpop.f32.mrb[0].mxu0
    %v8862 = vadd.f32 0.0, %v8861
    %v8863 = vpop.f32.mrb[0].mxu0
    %v8864 = vpop.f32.mrb[0].mxu0
    %v8865 = vadd.f32 0.0, %v8864
    %v8866 = vpop.f32.mrb[0].mxu0
    %8867 = vmatprep.mubr.bf16.mxu0 0
    %8868 = vmatmul.mubr.bf16.gmra.mrb[0].mxu0 %v8605
    %v8869 = vpop.f32.mrb[0].mxu0
    %v8870 = vadd.f32 0.0, %v8869
    %v8871 = vpop.f32.mrb[0].mxu0
    %v8872 = vpop.f32.mrb[0].mxu0
    %v8873 = vadd.f32 0.0, %v8872
    %v8874 = vpop.f32.mrb[0].mxu0
    %8875 = vmatprep.mubr.bf16.mxu0 0
    %8876 = vmatmul.mubr.bf16.gmra.mrb[0].mxu0 %v8608
    %v8877 = vpop.f32.mrb[0].mxu0
    %v8878 = vadd.f32 0.0, %v8877
    %v8879 = vpop.f32.mrb[0].mxu0
    %v8880 = vpop.f32.mrb[0].mxu0
    %v8881 = vadd.f32 0.0, %v8880
    %v8882 = vpop.f32.mrb[0].mxu0
    %8883 = vmatprep.mubr.bf16.mxu0 0
    %8884 = vmatmul.mubr.bf16.gmra.mrb[0].mxu0 %v8611
    %v8885 = vpop.f32.mrb[0].mxu0
    %v8886 = vadd.f32 0.0, %v8885
    %v8887 = vpop.f32.mrb[0].mxu0
    %v8888 = vpop.f32.mrb[0].mxu0
    %v8889 = vadd.f32 0.0, %v8888
    %v8890 = vpop.f32.mrb[0].mxu0
    %8891 = vmatprep.mubr.bf16.mxu0 0
    %8892 = vmatmul.mubr.bf16.gmra.mrb[0].mxu0 %v8614
    %v8893 = vpop.f32.mrb[0].mxu0
    %v8894 = vadd.f32 0.0, %v8893
    %v8895 = vpop.f32.mrb[0].mxu0
    %v8896 = vpop.f32.mrb[0].mxu0
    %v8897 = vadd.f32 0.0, %v8896
    %v8898 = vpop.f32.mrb[0].mxu0
    %8899 = vmatprep.mubr.bf16.mxu0 0
    %8900 = vmatmul.mubr.bf16.gmra.mrb[0].mxu0 %v8617
    %v8901 = vpop.f32.mrb[0].mxu0
    %v8902 = vadd.f32 0.0, %v8901
    %v8903 = vpop.f32.mrb[0].mxu0
    %v8904 = vpop.f32.mrb[0].mxu0
    %v8905 = vadd.f32 0.0, %v8904
    %v8906 = vpop.f32.mrb[0].mxu0
    %8907 = vdwg.mxu0
    %v8908 = vadd.f32 %v8347, %v8654
    %v8909 = vadd.f32 %v8348, %v8657
    %v8910 = vadd.f32 %v8349, %v8662
    %v8911 = vadd.f32 %v8350, %v8665
    %v8912 = vadd.f32 %v8351, %v8670
    %v8913 = vadd.f32 %v8352, %v8673
    %v8914 = vadd.f32 %v8353, %v8678
    %v8915 = vadd.f32 %v8354, %v8681
    %v8916 = vadd.f32 %v8355, %v8686
    %v8917 = vadd.f32 %v8356, %v8689
    %v8918 = vadd.f32 %v8357, %v8694
    %v8919 = vadd.f32 %v8358, %v8697
    %v8920 = vadd.f32 %v8359, %v8702
    %v8921 = vadd.f32 %v8360, %v8705
    %v8922 = vadd.f32 %v8361, %v8710
    %v8923 = vadd.f32 %v8362, %v8713
    %v8924 = vadd.f32 %v8363, %v8718
    %v8925 = vadd.f32 %v8364, %v8721
    %v8926 = vadd.f32 %v8365, %v8726
    %v8927 = vadd.f32 %v8366, %v8729
    %v8928 = vadd.f32 %v8367, %v8734
    %v8929 = vadd.f32 %v8368, %v8737
    %v8930 = vadd.f32 %v8369, %v8742
    %v8931 = vadd.f32 %v8370, %v8745
    %v8932 = vadd.f32 %v8371, %v8750
    %v8933 = vadd.f32 %v8372, %v8753
    %v8934 = vadd.f32 %v8373, %v8758
    %v8935 = vadd.f32 %v8374, %v8761
    %v8936 = vadd.f32 %v8375, %v8766
    %v8937 = vadd.f32 %v8376, %v8769
    %v8938 = vadd.f32 %v8377, %v8774
    %v8939 = vadd.f32 %v8378, %v8777
    %v8940 = vadd.f32 %v8379, %v8782
    %v8941 = vadd.f32 %v8380, %v8785
    %v8942 = vadd.f32 %v8381, %v8790
    %v8943 = vadd.f32 %v8382, %v8793
    %v8944 = vadd.f32 %v8383, %v8798
    %v8945 = vadd.f32 %v8384, %v8801
    %v8946 = vadd.f32 %v8385, %v8806
    %v8947 = vadd.f32 %v8386, %v8809
    %v8948 = vadd.f32 %v8387, %v8814
    %v8949 = vadd.f32 %v8388, %v8817
    %v8950 = vadd.f32 %v8389, %v8822
    %v8951 = vadd.f32 %v8390, %v8825
    %v8952 = vadd.f32 %v8391, %v8830
    %v8953 = vadd.f32 %v8392, %v8833
    %v8954 = vadd.f32 %v8393, %v8838
    %v8955 = vadd.f32 %v8394, %v8841
    %v8956 = vadd.f32 %v8395, %v8846
    %v8957 = vadd.f32 %v8396, %v8849
    %v8958 = vadd.f32 %v8397, %v8854
    %v8959 = vadd.f32 %v8398, %v8857
    %v8960 = vadd.f32 %v8399, %v8862
    %v8961 = vadd.f32 %v8400, %v8865
    %v8962 = vadd.f32 %v8401, %v8870
    %v8963 = vadd.f32 %v8402, %v8873
    %v8964 = vadd.f32 %v8403, %v8878
    %v8965 = vadd.f32 %v8404, %v8881
    %v8966 = vadd.f32 %v8405, %v8886
    %v8967 = vadd.f32 %v8406, %v8889
    %v8968 = vadd.f32 %v8407, %v8894
    %v8969 = vadd.f32 %v8408, %v8897
    %v8970 = vadd.f32 %v8409, %v8902
    %v8971 = vadd.f32 %v8410, %v8905
    %s8972 = scalar_lea.vmem [#allocation2], 48
    %v8973 = vld [vmem:[%s8972] sm:$0xff]
    %v8974 = vld [vmem:[%s8972 + $0x8] sm:$0xff]
    %v8975 = vld [vmem:[%s8972 + $0x18] sm:$0xff]
    %v8976 = vld [vmem:[%s8972 + $0x20] sm:$0xff]
    %v8977 = vld [vmem:[%s8972 + $0x30] sm:$0xff]
    %v8978 = vld [vmem:[%s8972 + $0x38] sm:$0xff]
    %v8979 = vld [vmem:[%s8972 + $0x48] sm:$0xff]
    %v8980 = vld [vmem:[%s8972 + $0x50] sm:$0xff]
    %v8981 = vld [vmem:[%s8972 + $0x60] sm:$0xff]
    %v8982 = vld [vmem:[%s8972 + $0x68] sm:$0xff]
    %v8983 = vld [vmem:[%s8972 + $0x78] sm:$0xff]
    %v8984 = vld [vmem:[%s8972 + $0x80] sm:$0xff]
    %v8985 = vld [vmem:[%s8972 + $0x90] sm:$0xff]
    %v8986 = vld [vmem:[%s8972 + $0x98] sm:$0xff]
    %v8987 = vld [vmem:[%s8972 + $0xa8] sm:$0xff]
    %v8988 = vld [vmem:[%s8972 + $0xb0] sm:$0xff]
    %v8989 = vld [vmem:[%s8972 + $0xc0] sm:$0xff]
    %v8990 = vld [vmem:[%s8972 + $0xc8] sm:$0xff]
    %v8991 = vld [vmem:[%s8972 + $0xd8] sm:$0xff]
    %v8992 = vld [vmem:[%s8972 + $0xe0] sm:$0xff]
    %v8993 = vld [vmem:[%s8972 + $0xf0] sm:$0xff]
    %v8994 = vld [vmem:[%s8972 + $0xf8] sm:$0xff]
    %v8995 = vld [vmem:[%s8972 + $0x108] sm:$0xff]
    %v8996 = vld [vmem:[%s8972 + $0x110] sm:$0xff]
    %v8997 = vld [vmem:[%s8972 + $0x120] sm:$0xff]
    %v8998 = vld [vmem:[%s8972 + $0x128] sm:$0xff]
    %v8999 = vld [vmem:[%s8972 + $0x138] sm:$0xff]
    %v9000 = vld [vmem:[%s8972 + $0x140] sm:$0xff]
    %v9001 = vld [vmem:[%s8972 + $0x150] sm:$0xff]
    %v9002 = vld [vmem:[%s8972 + $0x158] sm:$0xff]
    %v9003 = vld [vmem:[%s8972 + $0x168] sm:$0xff]
    %v9004 = vld [vmem:[%s8972 + $0x170] sm:$0xff]
    %v9005 = vld [vmem:[%s8972 + $0x1b0] sm:$0xff]
    %v9006 = vld [vmem:[%s8972 + $0x1b8] sm:$0xff]
    %v9007 = vld [vmem:[%s8972 + $0x1c8] sm:$0xff]
    %v9008 = vld [vmem:[%s8972 + $0x1d0] sm:$0xff]
    %v9009 = vld [vmem:[%s8972 + $0x1e0] sm:$0xff]
    %v9010 = vld [vmem:[%s8972 + $0x1e8] sm:$0xff]
    %v9011 = vld [vmem:[%s8972 + $0x1f8] sm:$0xff]
    %v9012 = vld [vmem:[%s8972 + $0x200] sm:$0xff]
    %v9013 = vld [vmem:[%s8972 + $0x210] sm:$0xff]
    %v9014 = vld [vmem:[%s8972 + $0x218] sm:$0xff]
    %v9015 = vld [vmem:[%s8972 + $0x228] sm:$0xff]
    %v9016 = vld [vmem:[%s8972 + $0x230] sm:$0xff]
    %v9017 = vld [vmem:[%s8972 + $0x240] sm:$0xff]
    %v9018 = vld [vmem:[%s8972 + $0x248] sm:$0xff]
    %v9019 = vld [vmem:[%s8972 + $0x258] sm:$0xff]
    %v9020 = vld [vmem:[%s8972 + $0x260] sm:$0xff]
    %v9021 = vld [vmem:[%s8972 + $0x270] sm:$0xff]
    %v9022 = vld [vmem:[%s8972 + $0x278] sm:$0xff]
    %v9023 = vld [vmem:[%s8972 + $0x288] sm:$0xff]
    %v9024 = vld [vmem:[%s8972 + $0x290] sm:$0xff]
    %v9025 = vld [vmem:[%s8972 + $0x2a0] sm:$0xff]
    %v9026 = vld [vmem:[%s8972 + $0x2a8] sm:$0xff]
    %v9027 = vld [vmem:[%s8972 + $0x2b8] sm:$0xff]
    %v9028 = vld [vmem:[%s8972 + $0x2c0] sm:$0xff]
    %v9029 = vld [vmem:[%s8972 + $0x2d0] sm:$0xff]
    %v9030 = vld [vmem:[%s8972 + $0x2d8] sm:$0xff]
    %v9031 = vld [vmem:[%s8972 + $0x2e8] sm:$0xff]
    %v9032 = vld [vmem:[%s8972 + $0x2f0] sm:$0xff]
    %v9033 = vld [vmem:[%s8972 + $0x300] sm:$0xff]
    %v9034 = vld [vmem:[%s8972 + $0x308] sm:$0xff]
    %v9035 = vld [vmem:[%s8972 + $0x318] sm:$0xff]
    %v9036 = vld [vmem:[%s8972 + $0x320] sm:$0xff]
    %v9037 = vpack.c.bf16 %v8974, %v8973
    %v9038 = vpack.c.bf16 %v8976, %v8975
    %v9039 = vpack.c.bf16 %v8978, %v8977
    %v9040 = vpack.c.bf16 %v8980, %v8979
    %v9041 = vpack.c.bf16 %v8982, %v8981
    %v9042 = vpack.c.bf16 %v8984, %v8983
    %v9043 = vpack.c.bf16 %v8986, %v8985
    %v9044 = vpack.c.bf16 %v8988, %v8987
    %v9045 = vpack.c.bf16 %v8990, %v8989
    %v9046 = vpack.c.bf16 %v8992, %v8991
    %v9047 = vpack.c.bf16 %v8994, %v8993
    %v9048 = vpack.c.bf16 %v8996, %v8995
    %v9049 = vpack.c.bf16 %v8998, %v8997
    %v9050 = vpack.c.bf16 %v9000, %v8999
    %v9051 = vpack.c.bf16 %v9002, %v9001
    %v9052 = vpack.c.bf16 %v9004, %v9003
    %v9053 = vpack.c.bf16 %v9006, %v9005
    %v9054 = vpack.c.bf16 %v9008, %v9007
    %v9055 = vpack.c.bf16 %v9010, %v9009
    %v9056 = vpack.c.bf16 %v9012, %v9011
    %v9057 = vpack.c.bf16 %v9014, %v9013
    %v9058 = vpack.c.bf16 %v9016, %v9015
    %v9059 = vpack.c.bf16 %v9018, %v9017
    %v9060 = vpack.c.bf16 %v9020, %v9019
    %v9061 = vpack.c.bf16 %v9022, %v9021
    %v9062 = vpack.c.bf16 %v9024, %v9023
    %v9063 = vpack.c.bf16 %v9026, %v9025
    %v9064 = vpack.c.bf16 %v9028, %v9027
    %v9065 = vpack.c.bf16 %v9030, %v9029
    %v9066 = vpack.c.bf16 %v9032, %v9031
    %v9067 = vpack.c.bf16 %v9034, %v9033
    %v9068 = vpack.c.bf16 %v9036, %v9035
    %v9069 = vld [vmem:[%s2 + $0x60] sm:$0xf]
    %v9070 = vld [vmem:[%s2 + $0x64] sm:$0xf]
    %v9071 = vld [vmem:[%s2 + $0x68] sm:$0xf]
    %v9072 = vld [vmem:[%s2 + $0x6c] sm:$0xf]
    %v9077 = vunpack.c.l.b16 %v9069
    %v9078 = vunpack.c.l.b16 %v9070
    %v9079 = vunpack.c.l.b16 %v9071
    %v9080 = vunpack.c.l.b16 %v9072
    %v9081 = vpack.c.b16 %v9078, %v9077
    %v9082 = vpack.c.b16 %v9080, %v9079
    %v9086 = vsel %vm240, %v9037, 0
    %v9089 = vsel %vm240, %v9038, 0
    %v9092 = vsel %vm240, %v9039, 0
    %v9095 = vsel %vm240, %v9040, 0
    %v9098 = vsel %vm240, %v9041, 0
    %v9101 = vsel %vm240, %v9042, 0
    %v9104 = vsel %vm240, %v9043, 0
    %v9107 = vsel %vm240, %v9044, 0
    %v9110 = vsel %vm240, %v9045, 0
    %v9113 = vsel %vm240, %v9046, 0
    %v9116 = vsel %vm240, %v9047, 0
    %v9119 = vsel %vm240, %v9048, 0
    %v9122 = vsel %vm240, %v9049, 0
    %v9125 = vsel %vm240, %v9050, 0
    %v9128 = vsel %vm240, %v9051, 0
    %v9131 = vsel %vm240, %v9052, 0
    %v9134 = vsel %vm240, %v9053, 0
    %v9137 = vsel %vm240, %v9054, 0
    %v9140 = vsel %vm240, %v9055, 0
    %v9143 = vsel %vm240, %v9056, 0
    %v9146 = vsel %vm240, %v9057, 0
    %v9149 = vsel %vm240, %v9058, 0
    %v9152 = vsel %vm240, %v9059, 0
    %v9155 = vsel %vm240, %v9060, 0
    %v9158 = vsel %vm240, %v9061, 0
    %v9161 = vsel %vm240, %v9062, 0
    %v9164 = vsel %vm240, %v9063, 0
    %v9167 = vsel %vm240, %v9064, 0
    %v9170 = vsel %vm240, %v9065, 0
    %v9173 = vsel %vm240, %v9066, 0
    %v9176 = vsel %vm240, %v9067, 0
    %v9179 = vsel %vm240, %v9068, 0
    %9181 = vmatprep.subr.bf16.mxu0 0
    %9182 = vmatpush1.bf16.msra.mxu0 %v9081
    %9183 = vmatprep.subr.bf16.mxu0 0
    %9184 = vmatpush1.bf16.msra.mxu0 %v9082
    %9185 = vmatprep.subr.bf16.mxu0 0
    %9186 = vmatpush1.bf16.msra.mxu0 0
    %9187 = vmatprep.subr.bf16.mxu0 0
    %9188 = vmatpush1.bf16.msra.mxu0 0
    %9189 = vmatprep.subr.bf16.mxu0 0
    %9190 = vmatpush1.bf16.msra.mxu0 0
    %9191 = vmatprep.subr.bf16.mxu0 0
    %9192 = vmatpush1.bf16.msra.mxu0 0
    %9193 = vmatprep.subr.bf16.mxu0 0
    %9194 = vmatpush1.bf16.msra.mxu0 0
    %9195 = vmatprep.subr.bf16.mxu0 0
    %9196 = vmatpush1.bf16.msra.mxu0 0
    %9197 = vmatprep.subr.bf16.mxu0 0
    %9198 = vmatpush1.bf16.msra.mxu0 0
    %9199 = vmatprep.subr.bf16.mxu0 0
    %9200 = vmatpush1.bf16.msra.mxu0 0
    %9201 = vmatprep.subr.bf16.mxu0 0
    %9202 = vmatpush1.bf16.msra.mxu0 0
    %9203 = vmatprep.subr.bf16.mxu0 0
    %9204 = vmatpush1.bf16.msra.mxu0 0
    %9205 = vmatprep.subr.bf16.mxu0 0
    %9206 = vmatpush1.bf16.msra.mxu0 0
    %9207 = vmatprep.subr.bf16.mxu0 0
    %9208 = vmatpush1.bf16.msra.mxu0 0
    %9209 = vmatprep.subr.bf16.mxu0 0
    %9210 = vmatpush1.bf16.msra.mxu0 0
    %9211 = vmatprep.subr.bf16.mxu0 0
    %9212 = vmatpush1.bf16.msra.mxu0 0
    %9213 = vmatprep.mubr.bf16.mxu0 0
    %9214 = vmatmul.mubr.bf16.gmra.mrb[0].mxu0 %v9086
    %v9215 = vpop.f32.mrb[0].mxu0
    %v9216 = vadd.f32 0.0, %v9215
    %v9217 = vpop.f32.mrb[0].mxu0
    %v9218 = vpop.f32.mrb[0].mxu0
    %v9219 = vadd.f32 0.0, %v9218
    %v9220 = vpop.f32.mrb[0].mxu0
    %9221 = vmatprep.mubr.bf16.mxu0 0
    %9222 = vmatmul.mubr.bf16.gmra.mrb[0].mxu0 %v9089
    %v9223 = vpop.f32.mrb[0].mxu0
    %v9224 = vadd.f32 0.0, %v9223
    %v9225 = vpop.f32.mrb[0].mxu0
    %v9226 = vpop.f32.mrb[0].mxu0
    %v9227 = vadd.f32 0.0, %v9226
    %v9228 = vpop.f32.mrb[0].mxu0
    %9229 = vmatprep.mubr.bf16.mxu0 0
    %9230 = vmatmul.mubr.bf16.gmra.mrb[0].mxu0 %v9092
    %v9231 = vpop.f32.mrb[0].mxu0
    %v9232 = vadd.f32 0.0, %v9231
    %v9233 = vpop.f32.mrb[0].mxu0
    %v9234 = vpop.f32.mrb[0].mxu0
    %v9235 = vadd.f32 0.0, %v9234
    %v9236 = vpop.f32.mrb[0].mxu0
    %9237 = vmatprep.mubr.bf16.mxu0 0
    %9238 = vmatmul.mubr.bf16.gmra.mrb[0].mxu0 %v9095
    %v9239 = vpop.f32.mrb[0].mxu0
    %v9240 = vadd.f32 0.0, %v9239
    %v9241 = vpop.f32.mrb[0].mxu0
    %v9242 = vpop.f32.mrb[0].mxu0
    %v9243 = vadd.f32 0.0, %v9242
    %v9244 = vpop.f32.mrb[0].mxu0
    %9245 = vmatprep.mubr.bf16.mxu0 0
    %9246 = vmatmul.mubr.bf16.gmra.mrb[0].mxu0 %v9098
    %v9247 = vpop.f32.mrb[0].mxu0
    %v9248 = vadd.f32 0.0, %v9247
    %v9249 = vpop.f32.mrb[0].mxu0
    %v9250 = vpop.f32.mrb[0].mxu0
    %v9251 = vadd.f32 0.0, %v9250
    %v9252 = vpop.f32.mrb[0].mxu0
    %9253 = vmatprep.mubr.bf16.mxu0 0
    %9254 = vmatmul.mubr.bf16.gmra.mrb[0].mxu0 %v9101
    %v9255 = vpop.f32.mrb[0].mxu0
    %v9256 = vadd.f32 0.0, %v9255
    %v9257 = vpop.f32.mrb[0].mxu0
    %v9258 = vpop.f32.mrb[0].mxu0
    %v9259 = vadd.f32 0.0, %v9258
    %v9260 = vpop.f32.mrb[0].mxu0
    %9261 = vmatprep.mubr.bf16.mxu0 0
    %9262 = vmatmul.mubr.bf16.gmra.mrb[0].mxu0 %v9104
    %v9263 = vpop.f32.mrb[0].mxu0
    %v9264 = vadd.f32 0.0, %v9263
    %v9265 = vpop.f32.mrb[0].mxu0
    %v9266 = vpop.f32.mrb[0].mxu0
    %v9267 = vadd.f32 0.0, %v9266
    %v9268 = vpop.f32.mrb[0].mxu0
    %9269 = vmatprep.mubr.bf16.mxu0 0
    %9270 = vmatmul.mubr.bf16.gmra.mrb[0].mxu0 %v9107
    %v9271 = vpop.f32.mrb[0].mxu0
    %v9272 = vadd.f32 0.0, %v9271
    %v9273 = vpop.f32.mrb[0].mxu0
    %v9274 = vpop.f32.mrb[0].mxu0
    %v9275 = vadd.f32 0.0, %v9274
    %v9276 = vpop.f32.mrb[0].mxu0
    %9277 = vmatprep.mubr.bf16.mxu0 0
    %9278 = vmatmul.mubr.bf16.gmra.mrb[0].mxu0 %v9110
    %v9279 = vpop.f32.mrb[0].mxu0
    %v9280 = vadd.f32 0.0, %v9279
    %v9281 = vpop.f32.mrb[0].mxu0
    %v9282 = vpop.f32.mrb[0].mxu0
    %v9283 = vadd.f32 0.0, %v9282
    %v9284 = vpop.f32.mrb[0].mxu0
    %9285 = vmatprep.mubr.bf16.mxu0 0
    %9286 = vmatmul.mubr.bf16.gmra.mrb[0].mxu0 %v9113
    %v9287 = vpop.f32.mrb[0].mxu0
    %v9288 = vadd.f32 0.0, %v9287
    %v9289 = vpop.f32.mrb[0].mxu0
    %v9290 = vpop.f32.mrb[0].mxu0
    %v9291 = vadd.f32 0.0, %v9290
    %v9292 = vpop.f32.mrb[0].mxu0
    %9293 = vmatprep.mubr.bf16.mxu0 0
    %9294 = vmatmul.mubr.bf16.gmra.mrb[0].mxu0 %v9116
    %v9295 = vpop.f32.mrb[0].mxu0
    %v9296 = vadd.f32 0.0, %v9295
    %v9297 = vpop.f32.mrb[0].mxu0
    %v9298 = vpop.f32.mrb[0].mxu0
    %v9299 = vadd.f32 0.0, %v9298
    %v9300 = vpop.f32.mrb[0].mxu0
    %9301 = vmatprep.mubr.bf16.mxu0 0
    %9302 = vmatmul.mubr.bf16.gmra.mrb[0].mxu0 %v9119
    %v9303 = vpop.f32.mrb[0].mxu0
    %v9304 = vadd.f32 0.0, %v9303
    %v9305 = vpop.f32.mrb[0].mxu0
    %v9306 = vpop.f32.mrb[0].mxu0
    %v9307 = vadd.f32 0.0, %v9306
    %v9308 = vpop.f32.mrb[0].mxu0
    %9309 = vmatprep.mubr.bf16.mxu0 0
    %9310 = vmatmul.mubr.bf16.gmra.mrb[0].mxu0 %v9122
    %v9311 = vpop.f32.mrb[0].mxu0
    %v9312 = vadd.f32 0.0, %v9311
    %v9313 = vpop.f32.mrb[0].mxu0
    %v9314 = vpop.f32.mrb[0].mxu0
    %v9315 = vadd.f32 0.0, %v9314
    %v9316 = vpop.f32.mrb[0].mxu0
    %9317 = vmatprep.mubr.bf16.mxu0 0
    %9318 = vmatmul.mubr.bf16.gmra.mrb[0].mxu0 %v9125
    %v9319 = vpop.f32.mrb[0].mxu0
    %v9320 = vadd.f32 0.0, %v9319
    %v9321 = vpop.f32.mrb[0].mxu0
    %v9322 = vpop.f32.mrb[0].mxu0
    %v9323 = vadd.f32 0.0, %v9322
    %v9324 = vpop.f32.mrb[0].mxu0
    %9325 = vmatprep.mubr.bf16.mxu0 0
    %9326 = vmatmul.mubr.bf16.gmra.mrb[0].mxu0 %v9128
    %v9327 = vpop.f32.mrb[0].mxu0
    %v9328 = vadd.f32 0.0, %v9327
    %v9329 = vpop.f32.mrb[0].mxu0
    %v9330 = vpop.f32.mrb[0].mxu0
    %v9331 = vadd.f32 0.0, %v9330
    %v9332 = vpop.f32.mrb[0].mxu0
    %9333 = vmatprep.mubr.bf16.mxu0 0
    %9334 = vmatmul.mubr.bf16.gmra.mrb[0].mxu0 %v9131
    %v9335 = vpop.f32.mrb[0].mxu0
    %v9336 = vadd.f32 0.0, %v9335
    %v9337 = vpop.f32.mrb[0].mxu0
    %v9338 = vpop.f32.mrb[0].mxu0
    %v9339 = vadd.f32 0.0, %v9338
    %v9340 = vpop.f32.mrb[0].mxu0
    %9341 = vmatprep.mubr.bf16.mxu0 0
    %9342 = vmatmul.mubr.bf16.gmra.mrb[0].mxu0 %v9134
    %v9343 = vpop.f32.mrb[0].mxu0
    %v9344 = vadd.f32 0.0, %v9343
    %v9345 = vpop.f32.mrb[0].mxu0
    %v9346 = vpop.f32.mrb[0].mxu0
    %v9347 = vadd.f32 0.0, %v9346
    %v9348 = vpop.f32.mrb[0].mxu0
    %9349 = vmatprep.mubr.bf16.mxu0 0
    %9350 = vmatmul.mubr.bf16.gmra.mrb[0].mxu0 %v9137
    %v9351 = vpop.f32.mrb[0].mxu0
    %v9352 = vadd.f32 0.0, %v9351
    %v9353 = vpop.f32.mrb[0].mxu0
    %v9354 = vpop.f32.mrb[0].mxu0
    %v9355 = vadd.f32 0.0, %v9354
    %v9356 = vpop.f32.mrb[0].mxu0
    %9357 = vmatprep.mubr.bf16.mxu0 0
    %9358 = vmatmul.mubr.bf16.gmra.mrb[0].mxu0 %v9140
    %v9359 = vpop.f32.mrb[0].mxu0
    %v9360 = vadd.f32 0.0, %v9359
    %v9361 = vpop.f32.mrb[0].mxu0
    %v9362 = vpop.f32.mrb[0].mxu0
    %v9363 = vadd.f32 0.0, %v9362
    %v9364 = vpop.f32.mrb[0].mxu0
    %9365 = vmatprep.mubr.bf16.mxu0 0
    %9366 = vmatmul.mubr.bf16.gmra.mrb[0].mxu0 %v9143
    %v9367 = vpop.f32.mrb[0].mxu0
    %v9368 = vadd.f32 0.0, %v9367
    %v9369 = vpop.f32.mrb[0].mxu0
    %v9370 = vpop.f32.mrb[0].mxu0
    %v9371 = vadd.f32 0.0, %v9370
    %v9372 = vpop.f32.mrb[0].mxu0
    %9373 = vmatprep.mubr.bf16.mxu0 0
    %9374 = vmatmul.mubr.bf16.gmra.mrb[0].mxu0 %v9146
    %v9375 = vpop.f32.mrb[0].mxu0
    %v9376 = vadd.f32 0.0, %v9375
    %v9377 = vpop.f32.mrb[0].mxu0
    %v9378 = vpop.f32.mrb[0].mxu0
    %v9379 = vadd.f32 0.0, %v9378
    %v9380 = vpop.f32.mrb[0].mxu0
    %9381 = vmatprep.mubr.bf16.mxu0 0
    %9382 = vmatmul.mubr.bf16.gmra.mrb[0].mxu0 %v9149
    %v9383 = vpop.f32.mrb[0].mxu0
    %v9384 = vadd.f32 0.0, %v9383
    %v9385 = vpop.f32.mrb[0].mxu0
    %v9386 = vpop.f32.mrb[0].mxu0
    %v9387 = vadd.f32 0.0, %v9386
    %v9388 = vpop.f32.mrb[0].mxu0
    %9389 = vmatprep.mubr.bf16.mxu0 0
    %9390 = vmatmul.mubr.bf16.gmra.mrb[0].mxu0 %v9152
    %v9391 = vpop.f32.mrb[0].mxu0
    %v9392 = vadd.f32 0.0, %v9391
    %v9393 = vpop.f32.mrb[0].mxu0
    %v9394 = vpop.f32.mrb[0].mxu0
    %v9395 = vadd.f32 0.0, %v9394
    %v9396 = vpop.f32.mrb[0].mxu0
    %9397 = vmatprep.mubr.bf16.mxu0 0
    %9398 = vmatmul.mubr.bf16.gmra.mrb[0].mxu0 %v9155
    %v9399 = vpop.f32.mrb[0].mxu0
    %v9400 = vadd.f32 0.0, %v9399
    %v9401 = vpop.f32.mrb[0].mxu0
    %v9402 = vpop.f32.mrb[0].mxu0
    %v9403 = vadd.f32 0.0, %v9402
    %v9404 = vpop.f32.mrb[0].mxu0
    %9405 = vmatprep.mubr.bf16.mxu0 0
    %9406 = vmatmul.mubr.bf16.gmra.mrb[0].mxu0 %v9158
    %v9407 = vpop.f32.mrb[0].mxu0
    %v9408 = vadd.f32 0.0, %v9407
    %v9409 = vpop.f32.mrb[0].mxu0
    %v9410 = vpop.f32.mrb[0].mxu0
    %v9411 = vadd.f32 0.0, %v9410
    %v9412 = vpop.f32.mrb[0].mxu0
    %9413 = vmatprep.mubr.bf16.mxu0 0
    %9414 = vmatmul.mubr.bf16.gmra.mrb[0].mxu0 %v9161
    %v9415 = vpop.f32.mrb[0].mxu0
    %v9416 = vadd.f32 0.0, %v9415
    %v9417 = vpop.f32.mrb[0].mxu0
    %v9418 = vpop.f32.mrb[0].mxu0
    %v9419 = vadd.f32 0.0, %v9418
    %v9420 = vpop.f32.mrb[0].mxu0
    %9421 = vmatprep.mubr.bf16.mxu0 0
    %9422 = vmatmul.mubr.bf16.gmra.mrb[0].mxu0 %v9164
    %v9423 = vpop.f32.mrb[0].mxu0
    %v9424 = vadd.f32 0.0, %v9423
    %v9425 = vpop.f32.mrb[0].mxu0
    %v9426 = vpop.f32.mrb[0].mxu0
    %v9427 = vadd.f32 0.0, %v9426
    %v9428 = vpop.f32.mrb[0].mxu0
    %9429 = vmatprep.mubr.bf16.mxu0 0
    %9430 = vmatmul.mubr.bf16.gmra.mrb[0].mxu0 %v9167
    %v9431 = vpop.f32.mrb[0].mxu0
    %v9432 = vadd.f32 0.0, %v9431
    %v9433 = vpop.f32.mrb[0].mxu0
    %v9434 = vpop.f32.mrb[0].mxu0
    %v9435 = vadd.f32 0.0, %v9434
    %v9436 = vpop.f32.mrb[0].mxu0
    %9437 = vmatprep.mubr.bf16.mxu0 0
    %9438 = vmatmul.mubr.bf16.gmra.mrb[0].mxu0 %v9170
    %v9439 = vpop.f32.mrb[0].mxu0
    %v9440 = vadd.f32 0.0, %v9439
    %v9441 = vpop.f32.mrb[0].mxu0
    %v9442 = vpop.f32.mrb[0].mxu0
    %v9443 = vadd.f32 0.0, %v9442
    %v9444 = vpop.f32.mrb[0].mxu0
    %9445 = vmatprep.mubr.bf16.mxu0 0
    %9446 = vmatmul.mubr.bf16.gmra.mrb[0].mxu0 %v9173
    %v9447 = vpop.f32.mrb[0].mxu0
    %v9448 = vadd.f32 0.0, %v9447
    %v9449 = vpop.f32.mrb[0].mxu0
    %v9450 = vpop.f32.mrb[0].mxu0
    %v9451 = vadd.f32 0.0, %v9450
    %v9452 = vpop.f32.mrb[0].mxu0
    %9453 = vmatprep.mubr.bf16.mxu0 0
    %9454 = vmatmul.mubr.bf16.gmra.mrb[0].mxu0 %v9176
    %v9455 = vpop.f32.mrb[0].mxu0
    %v9456 = vadd.f32 0.0, %v9455
    %v9457 = vpop.f32.mrb[0].mxu0
    %v9458 = vpop.f32.mrb[0].mxu0
    %v9459 = vadd.f32 0.0, %v9458
    %v9460 = vpop.f32.mrb[0].mxu0
    %9461 = vmatprep.mubr.bf16.mxu0 0
    %9462 = vmatmul.mubr.bf16.gmra.mrb[0].mxu0 %v9179
    %v9463 = vpop.f32.mrb[0].mxu0
    %v9464 = vadd.f32 0.0, %v9463
    %v9465 = vpop.f32.mrb[0].mxu0
    %v9466 = vpop.f32.mrb[0].mxu0
    %v9467 = vadd.f32 0.0, %v9466
    %v9468 = vpop.f32.mrb[0].mxu0
    %9469 = vdwg.mxu0
    %v9470 = vadd.f32 %v8908, %v9216
    %v9471 = vadd.f32 %v8909, %v9219
    %v9472 = vadd.f32 %v8910, %v9224
    %v9473 = vadd.f32 %v8911, %v9227
    %v9474 = vadd.f32 %v8912, %v9232
    %v9475 = vadd.f32 %v8913, %v9235
    %v9476 = vadd.f32 %v8914, %v9240
    %v9477 = vadd.f32 %v8915, %v9243
    %v9478 = vadd.f32 %v8916, %v9248
    %v9479 = vadd.f32 %v8917, %v9251
    %v9480 = vadd.f32 %v8918, %v9256
    %v9481 = vadd.f32 %v8919, %v9259
    %v9482 = vadd.f32 %v8920, %v9264
    %v9483 = vadd.f32 %v8921, %v9267
    %v9484 = vadd.f32 %v8922, %v9272
    %v9485 = vadd.f32 %v8923, %v9275
    %v9486 = vadd.f32 %v8924, %v9280
    %v9487 = vadd.f32 %v8925, %v9283
    %v9488 = vadd.f32 %v8926, %v9288
    %v9489 = vadd.f32 %v8927, %v9291
    %v9490 = vadd.f32 %v8928, %v9296
    %v9491 = vadd.f32 %v8929, %v9299
    %v9492 = vadd.f32 %v8930, %v9304
    %v9493 = vadd.f32 %v8931, %v9307
    %v9494 = vadd.f32 %v8932, %v9312
    %v9495 = vadd.f32 %v8933, %v9315
    %v9496 = vadd.f32 %v8934, %v9320
    %v9497 = vadd.f32 %v8935, %v9323
    %v9498 = vadd.f32 %v8936, %v9328
    %v9499 = vadd.f32 %v8937, %v9331
    %v9500 = vadd.f32 %v8938, %v9336
    %v9501 = vadd.f32 %v8939, %v9339
    %v9502 = vadd.f32 %v8940, %v9344
    %v9503 = vadd.f32 %v8941, %v9347
    %v9504 = vadd.f32 %v8942, %v9352
    %v9505 = vadd.f32 %v8943, %v9355
    %v9506 = vadd.f32 %v8944, %v9360
    %v9507 = vadd.f32 %v8945, %v9363
    %v9508 = vadd.f32 %v8946, %v9368
    %v9509 = vadd.f32 %v8947, %v9371
    %v9510 = vadd.f32 %v8948, %v9376
    %v9511 = vadd.f32 %v8949, %v9379
    %v9512 = vadd.f32 %v8950, %v9384
    %v9513 = vadd.f32 %v8951, %v9387
    %v9514 = vadd.f32 %v8952, %v9392
    %v9515 = vadd.f32 %v8953, %v9395
    %v9516 = vadd.f32 %v8954, %v9400
    %v9517 = vadd.f32 %v8955, %v9403
    %v9518 = vadd.f32 %v8956, %v9408
    %v9519 = vadd.f32 %v8957, %v9411
    %v9520 = vadd.f32 %v8958, %v9416
    %v9521 = vadd.f32 %v8959, %v9419
    %v9522 = vadd.f32 %v8960, %v9424
    %v9523 = vadd.f32 %v8961, %v9427
    %v9524 = vadd.f32 %v8962, %v9432
    %v9525 = vadd.f32 %v8963, %v9435
    %v9526 = vadd.f32 %v8964, %v9440
    %v9527 = vadd.f32 %v8965, %v9443
    %v9528 = vadd.f32 %v8966, %v9448
    %v9529 = vadd.f32 %v8967, %v9451
    %v9530 = vadd.f32 %v8968, %v9456
    %v9531 = vadd.f32 %v8969, %v9459
    %v9532 = vadd.f32 %v8970, %v9464
    %v9533 = vadd.f32 %v8971, %v9467
    %v9534 = vld [vmem:[%s8972 + $0x1] sm:$0xff]
    %v9535 = vld [vmem:[%s8972 + $0x9] sm:$0xff]
    %v9536 = vld [vmem:[%s8972 + $0x19] sm:$0xff]
    %v9537 = vld [vmem:[%s8972 + $0x21] sm:$0xff]
    %v9538 = vld [vmem:[%s8972 + $0x31] sm:$0xff]
    %v9539 = vld [vmem:[%s8972 + $0x39] sm:$0xff]
    %v9540 = vld [vmem:[%s8972 + $0x49] sm:$0xff]
    %v9541 = vld [vmem:[%s8972 + $0x51] sm:$0xff]
    %v9542 = vld [vmem:[%s8972 + $0x61] sm:$0xff]
    %v9543 = vld [vmem:[%s8972 + $0x69] sm:$0xff]
    %v9544 = vld [vmem:[%s8972 + $0x79] sm:$0xff]
    %v9545 = vld [vmem:[%s8972 + $0x81] sm:$0xff]
    %v9546 = vld [vmem:[%s8972 + $0x91] sm:$0xff]
    %v9547 = vld [vmem:[%s8972 + $0x99] sm:$0xff]
    %v9548 = vld [vmem:[%s8972 + $0xa9] sm:$0xff]
    %v9549 = vld [vmem:[%s8972 + $0xb1] sm:$0xff]
    %v9550 = vld [vmem:[%s8972 + $0xc1] sm:$0xff]
    %v9551 = vld [vmem:[%s8972 + $0xc9] sm:$0xff]
    %v9552 = vld [vmem:[%s8972 + $0xd9] sm:$0xff]
    %v9553 = vld [vmem:[%s8972 + $0xe1] sm:$0xff]
    %v9554 = vld [vmem:[%s8972 + $0xf1] sm:$0xff]
    %v9555 = vld [vmem:[%s8972 + $0xf9] sm:$0xff]
    %v9556 = vld [vmem:[%s8972 + $0x109] sm:$0xff]
    %v9557 = vld [vmem:[%s8972 + $0x111] sm:$0xff]
    %v9558 = vld [vmem:[%s8972 + $0x121] sm:$0xff]
    %v9559 = vld [vmem:[%s8972 + $0x129] sm:$0xff]
    %v9560 = vld [vmem:[%s8972 + $0x139] sm:$0xff]
    %v9561 = vld [vmem:[%s8972 + $0x141] sm:$0xff]
    %v9562 = vld [vmem:[%s8972 + $0x151] sm:$0xff]
    %v9563 = vld [vmem:[%s8972 + $0x159] sm:$0xff]
    %v9564 = vld [vmem:[%s8972 + $0x169] sm:$0xff]
    %v9565 = vld [vmem:[%s8972 + $0x171] sm:$0xff]
    %v9566 = vld [vmem:[%s8972 + $0x1b1] sm:$0xff]
    %v9567 = vld [vmem:[%s8972 + $0x1b9] sm:$0xff]
    %v9568 = vld [vmem:[%s8972 + $0x1c9] sm:$0xff]
    %v9569 = vld [vmem:[%s8972 + $0x1d1] sm:$0xff]
    %v9570 = vld [vmem:[%s8972 + $0x1e1] sm:$0xff]
    %v9571 = vld [vmem:[%s8972 + $0x1e9] sm:$0xff]
    %v9572 = vld [vmem:[%s8972 + $0x1f9] sm:$0xff]
    %v9573 = vld [vmem:[%s8972 + $0x201] sm:$0xff]
    %v9574 = vld [vmem:[%s8972 + $0x211] sm:$0xff]
    %v9575 = vld [vmem:[%s8972 + $0x219] sm:$0xff]
    %v9576 = vld [vmem:[%s8972 + $0x229] sm:$0xff]
    %v9577 = vld [vmem:[%s8972 + $0x231] sm:$0xff]
    %v9578 = vld [vmem:[%s8972 + $0x241] sm:$0xff]
    %v9579 = vld [vmem:[%s8972 + $0x249] sm:$0xff]
    %v9580 = vld [vmem:[%s8972 + $0x259] sm:$0xff]
    %v9581 = vld [vmem:[%s8972 + $0x261] sm:$0xff]
    %v9582 = vld [vmem:[%s8972 + $0x271] sm:$0xff]
    %v9583 = vld [vmem:[%s8972 + $0x279] sm:$0xff]
    %v9584 = vld [vmem:[%s8972 + $0x289] sm:$0xff]
    %v9585 = vld [vmem:[%s8972 + $0x291] sm:$0xff]
    %v9586 = vld [vmem:[%s8972 + $0x2a1] sm:$0xff]
    %v9587 = vld [vmem:[%s8972 + $0x2a9] sm:$0xff]
    %v9588 = vld [vmem:[%s8972 + $0x2b9] sm:$0xff]
    %v9589 = vld [vmem:[%s8972 + $0x2c1] sm:$0xff]
    %v9590 = vld [vmem:[%s8972 + $0x2d1] sm:$0xff]
    %v9591 = vld [vmem:[%s8972 + $0x2d9] sm:$0xff]
    %v9592 = vld [vmem:[%s8972 + $0x2e9] sm:$0xff]
    %v9593 = vld [vmem:[%s8972 + $0x2f1] sm:$0xff]
    %v9594 = vld [vmem:[%s8972 + $0x301] sm:$0xff]
    %v9595 = vld [vmem:[%s8972 + $0x309] sm:$0xff]
    %v9596 = vld [vmem:[%s8972 + $0x319] sm:$0xff]
    %v9597 = vld [vmem:[%s8972 + $0x321] sm:$0xff]
    %v9598 = vpack.c.bf16 %v9535, %v9534
    %v9599 = vpack.c.bf16 %v9537, %v9536
    %v9600 = vpack.c.bf16 %v9539, %v9538
    %v9601 = vpack.c.bf16 %v9541, %v9540
    %v9602 = vpack.c.bf16 %v9543, %v9542
    %v9603 = vpack.c.bf16 %v9545, %v9544
    %v9604 = vpack.c.bf16 %v9547, %v9546
    %v9605 = vpack.c.bf16 %v9549, %v9548
    %v9606 = vpack.c.bf16 %v9551, %v9550
    %v9607 = vpack.c.bf16 %v9553, %v9552
    %v9608 = vpack.c.bf16 %v9555, %v9554
    %v9609 = vpack.c.bf16 %v9557, %v9556
    %v9610 = vpack.c.bf16 %v9559, %v9558
    %v9611 = vpack.c.bf16 %v9561, %v9560
    %v9612 = vpack.c.bf16 %v9563, %v9562
    %v9613 = vpack.c.bf16 %v9565, %v9564
    %v9614 = vpack.c.bf16 %v9567, %v9566
    %v9615 = vpack.c.bf16 %v9569, %v9568
    %v9616 = vpack.c.bf16 %v9571, %v9570
    %v9617 = vpack.c.bf16 %v9573, %v9572
    %v9618 = vpack.c.bf16 %v9575, %v9574
    %v9619 = vpack.c.bf16 %v9577, %v9576
    %v9620 = vpack.c.bf16 %v9579, %v9578
    %v9621 = vpack.c.bf16 %v9581, %v9580
    %v9622 = vpack.c.bf16 %v9583, %v9582
    %v9623 = vpack.c.bf16 %v9585, %v9584
    %v9624 = vpack.c.bf16 %v9587, %v9586
    %v9625 = vpack.c.bf16 %v9589, %v9588
    %v9626 = vpack.c.bf16 %v9591, %v9590
    %v9627 = vpack.c.bf16 %v9593, %v9592
    %v9628 = vpack.c.bf16 %v9595, %v9594
    %v9629 = vpack.c.bf16 %v9597, %v9596
    %v9630 = vld [vmem:[%s2 + $0x70] sm:$0xf]
    %v9631 = vld [vmem:[%s2 + $0x74] sm:$0xf]
    %v9632 = vld [vmem:[%s2 + $0x78] sm:$0xf]
    %v9633 = vld [vmem:[%s2 + $0x7c] sm:$0xf]
    %v9638 = vunpack.c.l.b16 %v9630
    %v9639 = vunpack.c.l.b16 %v9631
    %v9640 = vunpack.c.l.b16 %v9632
    %v9641 = vunpack.c.l.b16 %v9633
    %v9642 = vpack.c.b16 %v9639, %v9638
    %v9643 = vpack.c.b16 %v9641, %v9640
    %v9647 = vsel %vm240, %v9598, 0
    %v9650 = vsel %vm240, %v9599, 0
    %v9653 = vsel %vm240, %v9600, 0
    %v9656 = vsel %vm240, %v9601, 0
    %v9659 = vsel %vm240, %v9602, 0
    %v9662 = vsel %vm240, %v9603, 0
    %v9665 = vsel %vm240, %v9604, 0
    %v9668 = vsel %vm240, %v9605, 0
    %v9671 = vsel %vm240, %v9606, 0
    %v9674 = vsel %vm240, %v9607, 0
    %v9677 = vsel %vm240, %v9608, 0
    %v9680 = vsel %vm240, %v9609, 0
    %v9683 = vsel %vm240, %v9610, 0
    %v9686 = vsel %vm240, %v9611, 0
    %v9689 = vsel %vm240, %v9612, 0
    %v9692 = vsel %vm240, %v9613, 0
    %v9695 = vsel %vm240, %v9614, 0
    %v9698 = vsel %vm240, %v9615, 0
    %v9701 = vsel %vm240, %v9616, 0
    %v9704 = vsel %vm240, %v9617, 0
    %v9707 = vsel %vm240, %v9618, 0
    %v9710 = vsel %vm240, %v9619, 0
    %v9713 = vsel %vm240, %v9620, 0
    %v9716 = vsel %vm240, %v9621, 0
    %v9719 = vsel %vm240, %v9622, 0
    %v9722 = vsel %vm240, %v9623, 0
    %v9725 = vsel %vm240, %v9624, 0
    %v9728 = vsel %vm240, %v9625, 0
    %v9731 = vsel %vm240, %v9626, 0
    %v9734 = vsel %vm240, %v9627, 0
    %v9737 = vsel %vm240, %v9628, 0
    %v9740 = vsel %vm240, %v9629, 0
    %9742 = vmatprep.subr.bf16.mxu0 0
    %9743 = vmatpush1.bf16.msra.mxu0 %v9642
    %9744 = vmatprep.subr.bf16.mxu0 0
    %9745 = vmatpush1.bf16.msra.mxu0 %v9643
    %9746 = vmatprep.subr.bf16.mxu0 0
    %9747 = vmatpush1.bf16.msra.mxu0 0
    %9748 = vmatprep.subr.bf16.mxu0 0
    %9749 = vmatpush1.bf16.msra.mxu0 0
    %9750 = vmatprep.subr.bf16.mxu0 0
    %9751 = vmatpush1.bf16.msra.mxu0 0
    %9752 = vmatprep.subr.bf16.mxu0 0
    %9753 = vmatpush1.bf16.msra.mxu0 0
    %9754 = vmatprep.subr.bf16.mxu0 0
    %9755 = vmatpush1.bf16.msra.mxu0 0
    %9756 = vmatprep.subr.bf16.mxu0 0
    %9757 = vmatpush1.bf16.msra.mxu0 0
    %9758 = vmatprep.subr.bf16.mxu0 0
    %9759 = vmatpush1.bf16.msra.mxu0 0
    %9760 = vmatprep.subr.bf16.mxu0 0
    %9761 = vmatpush1.bf16.msra.mxu0 0
    %9762 = vmatprep.subr.bf16.mxu0 0
    %9763 = vmatpush1.bf16.msra.mxu0 0
    %9764 = vmatprep.subr.bf16.mxu0 0
    %9765 = vmatpush1.bf16.msra.mxu0 0
    %9766 = vmatprep.subr.bf16.mxu0 0
    %9767 = vmatpush1.bf16.msra.mxu0 0
    %9768 = vmatprep.subr.bf16.mxu0 0
    %9769 = vmatpush1.bf16.msra.mxu0 0
    %9770 = vmatprep.subr.bf16.mxu0 0
    %9771 = vmatpush1.bf16.msra.mxu0 0
    %9772 = vmatprep.subr.bf16.mxu0 0
    %9773 = vmatpush1.bf16.msra.mxu0 0
    %9774 = vmatprep.mubr.bf16.mxu0 0
    %9775 = vmatmul.mubr.bf16.gmra.mrb[0].mxu0 %v9647
    %v9776 = vpop.f32.mrb[0].mxu0
    %v9777 = vadd.f32 0.0, %v9776
    %v9778 = vpop.f32.mrb[0].mxu0
    %v9779 = vpop.f32.mrb[0].mxu0
    %v9780 = vadd.f32 0.0, %v9779
    %v9781 = vpop.f32.mrb[0].mxu0
    %9782 = vmatprep.mubr.bf16.mxu0 0
    %9783 = vmatmul.mubr.bf16.gmra.mrb[0].mxu0 %v9650
    %v9784 = vpop.f32.mrb[0].mxu0
    %v9785 = vadd.f32 0.0, %v9784
    %v9786 = vpop.f32.mrb[0].mxu0
    %v9787 = vpop.f32.mrb[0].mxu0
    %v9788 = vadd.f32 0.0, %v9787
    %v9789 = vpop.f32.mrb[0].mxu0
    %9790 = vmatprep.mubr.bf16.mxu0 0
    %9791 = vmatmul.mubr.bf16.gmra.mrb[0].mxu0 %v9653
    %v9792 = vpop.f32.mrb[0].mxu0
    %v9793 = vadd.f32 0.0, %v9792
    %v9794 = vpop.f32.mrb[0].mxu0
    %v9795 = vpop.f32.mrb[0].mxu0
    %v9796 = vadd.f32 0.0, %v9795
    %v9797 = vpop.f32.mrb[0].mxu0
    %9798 = vmatprep.mubr.bf16.mxu0 0
    %9799 = vmatmul.mubr.bf16.gmra.mrb[0].mxu0 %v9656
    %v9800 = vpop.f32.mrb[0].mxu0
    %v9801 = vadd.f32 0.0, %v9800
    %v9802 = vpop.f32.mrb[0].mxu0
    %v9803 = vpop.f32.mrb[0].mxu0
    %v9804 = vadd.f32 0.0, %v9803
    %v9805 = vpop.f32.mrb[0].mxu0
    %9806 = vmatprep.mubr.bf16.mxu0 0
    %9807 = vmatmul.mubr.bf16.gmra.mrb[0].mxu0 %v9659
    %v9808 = vpop.f32.mrb[0].mxu0
    %v9809 = vadd.f32 0.0, %v9808
    %v9810 = vpop.f32.mrb[0].mxu0
    %v9811 = vpop.f32.mrb[0].mxu0
    %v9812 = vadd.f32 0.0, %v9811
    %v9813 = vpop.f32.mrb[0].mxu0
    %9814 = vmatprep.mubr.bf16.mxu0 0
    %9815 = vmatmul.mubr.bf16.gmra.mrb[0].mxu0 %v9662
    %v9816 = vpop.f32.mrb[0].mxu0
    %v9817 = vadd.f32 0.0, %v9816
    %v9818 = vpop.f32.mrb[0].mxu0
    %v9819 = vpop.f32.mrb[0].mxu0
    %v9820 = vadd.f32 0.0, %v9819
    %v9821 = vpop.f32.mrb[0].mxu0
    %9822 = vmatprep.mubr.bf16.mxu0 0
    %9823 = vmatmul.mubr.bf16.gmra.mrb[0].mxu0 %v9665
    %v9824 = vpop.f32.mrb[0].mxu0
    %v9825 = vadd.f32 0.0, %v9824
    %v9826 = vpop.f32.mrb[0].mxu0
    %v9827 = vpop.f32.mrb[0].mxu0
    %v9828 = vadd.f32 0.0, %v9827
    %v9829 = vpop.f32.mrb[0].mxu0
    %9830 = vmatprep.mubr.bf16.mxu0 0
    %9831 = vmatmul.mubr.bf16.gmra.mrb[0].mxu0 %v9668
    %v9832 = vpop.f32.mrb[0].mxu0
    %v9833 = vadd.f32 0.0, %v9832
    %v9834 = vpop.f32.mrb[0].mxu0
    %v9835 = vpop.f32.mrb[0].mxu0
    %v9836 = vadd.f32 0.0, %v9835
    %v9837 = vpop.f32.mrb[0].mxu0
    %9838 = vmatprep.mubr.bf16.mxu0 0
    %9839 = vmatmul.mubr.bf16.gmra.mrb[0].mxu0 %v9671
    %v9840 = vpop.f32.mrb[0].mxu0
    %v9841 = vadd.f32 0.0, %v9840
    %v9842 = vpop.f32.mrb[0].mxu0
    %v9843 = vpop.f32.mrb[0].mxu0
    %v9844 = vadd.f32 0.0, %v9843
    %v9845 = vpop.f32.mrb[0].mxu0
    %9846 = vmatprep.mubr.bf16.mxu0 0
    %9847 = vmatmul.mubr.bf16.gmra.mrb[0].mxu0 %v9674
    %v9848 = vpop.f32.mrb[0].mxu0
    %v9849 = vadd.f32 0.0, %v9848
    %v9850 = vpop.f32.mrb[0].mxu0
    %v9851 = vpop.f32.mrb[0].mxu0
    %v9852 = vadd.f32 0.0, %v9851
    %v9853 = vpop.f32.mrb[0].mxu0
    %9854 = vmatprep.mubr.bf16.mxu0 0
    %9855 = vmatmul.mubr.bf16.gmra.mrb[0].mxu0 %v9677
    %v9856 = vpop.f32.mrb[0].mxu0
    %v9857 = vadd.f32 0.0, %v9856
    %v9858 = vpop.f32.mrb[0].mxu0
    %v9859 = vpop.f32.mrb[0].mxu0
    %v9860 = vadd.f32 0.0, %v9859
    %v9861 = vpop.f32.mrb[0].mxu0
    %9862 = vmatprep.mubr.bf16.mxu0 0
    %9863 = vmatmul.mubr.bf16.gmra.mrb[0].mxu0 %v9680
    %v9864 = vpop.f32.mrb[0].mxu0
    %v9865 = vadd.f32 0.0, %v9864
    %v9866 = vpop.f32.mrb[0].mxu0
    %v9867 = vpop.f32.mrb[0].mxu0
    %v9868 = vadd.f32 0.0, %v9867
    %v9869 = vpop.f32.mrb[0].mxu0
    %9870 = vmatprep.mubr.bf16.mxu0 0
    %9871 = vmatmul.mubr.bf16.gmra.mrb[0].mxu0 %v9683
    %v9872 = vpop.f32.mrb[0].mxu0
    %v9873 = vadd.f32 0.0, %v9872
    %v9874 = vpop.f32.mrb[0].mxu0
    %v9875 = vpop.f32.mrb[0].mxu0
    %v9876 = vadd.f32 0.0, %v9875
    %v9877 = vpop.f32.mrb[0].mxu0
    %9878 = vmatprep.mubr.bf16.mxu0 0
    %9879 = vmatmul.mubr.bf16.gmra.mrb[0].mxu0 %v9686
    %v9880 = vpop.f32.mrb[0].mxu0
    %v9881 = vadd.f32 0.0, %v9880
    %v9882 = vpop.f32.mrb[0].mxu0
    %v9883 = vpop.f32.mrb[0].mxu0
    %v9884 = vadd.f32 0.0, %v9883
    %v9885 = vpop.f32.mrb[0].mxu0
    %9886 = vmatprep.mubr.bf16.mxu0 0
    %9887 = vmatmul.mubr.bf16.gmra.mrb[0].mxu0 %v9689
    %v9888 = vpop.f32.mrb[0].mxu0
    %v9889 = vadd.f32 0.0, %v9888
    %v9890 = vpop.f32.mrb[0].mxu0
    %v9891 = vpop.f32.mrb[0].mxu0
    %v9892 = vadd.f32 0.0, %v9891
    %v9893 = vpop.f32.mrb[0].mxu0
    %9894 = vmatprep.mubr.bf16.mxu0 0
    %9895 = vmatmul.mubr.bf16.gmra.mrb[0].mxu0 %v9692
    %v9896 = vpop.f32.mrb[0].mxu0
    %v9897 = vadd.f32 0.0, %v9896
    %v9898 = vpop.f32.mrb[0].mxu0
    %v9899 = vpop.f32.mrb[0].mxu0
    %v9900 = vadd.f32 0.0, %v9899
    %v9901 = vpop.f32.mrb[0].mxu0
    %9902 = vmatprep.mubr.bf16.mxu0 0
    %9903 = vmatmul.mubr.bf16.gmra.mrb[0].mxu0 %v9695
    %v9904 = vpop.f32.mrb[0].mxu0
    %v9905 = vadd.f32 0.0, %v9904
    %v9906 = vpop.f32.mrb[0].mxu0
    %v9907 = vpop.f32.mrb[0].mxu0
    %v9908 = vadd.f32 0.0, %v9907
    %v9909 = vpop.f32.mrb[0].mxu0
    %9910 = vmatprep.mubr.bf16.mxu0 0
    %9911 = vmatmul.mubr.bf16.gmra.mrb[0].mxu0 %v9698
    %v9912 = vpop.f32.mrb[0].mxu0
    %v9913 = vadd.f32 0.0, %v9912
    %v9914 = vpop.f32.mrb[0].mxu0
    %v9915 = vpop.f32.mrb[0].mxu0
    %v9916 = vadd.f32 0.0, %v9915
    %v9917 = vpop.f32.mrb[0].mxu0
    %9918 = vmatprep.mubr.bf16.mxu0 0
    %9919 = vmatmul.mubr.bf16.gmra.mrb[0].mxu0 %v9701
    %v9920 = vpop.f32.mrb[0].mxu0
    %v9921 = vadd.f32 0.0, %v9920
    %v9922 = vpop.f32.mrb[0].mxu0
    %v9923 = vpop.f32.mrb[0].mxu0
    %v9924 = vadd.f32 0.0, %v9923
    %v9925 = vpop.f32.mrb[0].mxu0
    %9926 = vmatprep.mubr.bf16.mxu0 0
    %9927 = vmatmul.mubr.bf16.gmra.mrb[0].mxu0 %v9704
    %v9928 = vpop.f32.mrb[0].mxu0
    %v9929 = vadd.f32 0.0, %v9928
    %v9930 = vpop.f32.mrb[0].mxu0
    %v9931 = vpop.f32.mrb[0].mxu0
    %v9932 = vadd.f32 0.0, %v9931
    %v9933 = vpop.f32.mrb[0].mxu0
    %9934 = vmatprep.mubr.bf16.mxu0 0
    %9935 = vmatmul.mubr.bf16.gmra.mrb[0].mxu0 %v9707
    %v9936 = vpop.f32.mrb[0].mxu0
    %v9937 = vadd.f32 0.0, %v9936
    %v9938 = vpop.f32.mrb[0].mxu0
    %v9939 = vpop.f32.mrb[0].mxu0
    %v9940 = vadd.f32 0.0, %v9939
    %v9941 = vpop.f32.mrb[0].mxu0
    %9942 = vmatprep.mubr.bf16.mxu0 0
    %9943 = vmatmul.mubr.bf16.gmra.mrb[0].mxu0 %v9710
    %v9944 = vpop.f32.mrb[0].mxu0
    %v9945 = vadd.f32 0.0, %v9944
    %v9946 = vpop.f32.mrb[0].mxu0
    %v9947 = vpop.f32.mrb[0].mxu0
    %v9948 = vadd.f32 0.0, %v9947
    %v9949 = vpop.f32.mrb[0].mxu0
    %9950 = vmatprep.mubr.bf16.mxu0 0
    %9951 = vmatmul.mubr.bf16.gmra.mrb[0].mxu0 %v9713
    %v9952 = vpop.f32.mrb[0].mxu0
    %v9953 = vadd.f32 0.0, %v9952
    %v9954 = vpop.f32.mrb[0].mxu0
    %v9955 = vpop.f32.mrb[0].mxu0
    %v9956 = vadd.f32 0.0, %v9955
    %v9957 = vpop.f32.mrb[0].mxu0
    %9958 = vmatprep.mubr.bf16.mxu0 0
    %9959 = vmatmul.mubr.bf16.gmra.mrb[0].mxu0 %v9716
    %v9960 = vpop.f32.mrb[0].mxu0
    %v9961 = vadd.f32 0.0, %v9960
    %v9962 = vpop.f32.mrb[0].mxu0
    %v9963 = vpop.f32.mrb[0].mxu0
    %v9964 = vadd.f32 0.0, %v9963
    %v9965 = vpop.f32.mrb[0].mxu0
    %9966 = vmatprep.mubr.bf16.mxu0 0
    %9967 = vmatmul.mubr.bf16.gmra.mrb[0].mxu0 %v9719
    %v9968 = vpop.f32.mrb[0].mxu0
    %v9969 = vadd.f32 0.0, %v9968
    %v9970 = vpop.f32.mrb[0].mxu0
    %v9971 = vpop.f32.mrb[0].mxu0
    %v9972 = vadd.f32 0.0, %v9971
    %v9973 = vpop.f32.mrb[0].mxu0
    %9974 = vmatprep.mubr.bf16.mxu0 0
    %9975 = vmatmul.mubr.bf16.gmra.mrb[0].mxu0 %v9722
    %v9976 = vpop.f32.mrb[0].mxu0
    %v9977 = vadd.f32 0.0, %v9976
    %v9978 = vpop.f32.mrb[0].mxu0
    %v9979 = vpop.f32.mrb[0].mxu0
    %v9980 = vadd.f32 0.0, %v9979
    %v9981 = vpop.f32.mrb[0].mxu0
    %9982 = vmatprep.mubr.bf16.mxu0 0
    %9983 = vmatmul.mubr.bf16.gmra.mrb[0].mxu0 %v9725
    %v9984 = vpop.f32.mrb[0].mxu0
    %v9985 = vadd.f32 0.0, %v9984
    %v9986 = vpop.f32.mrb[0].mxu0
    %v9987 = vpop.f32.mrb[0].mxu0
    %v9988 = vadd.f32 0.0, %v9987
    %v9989 = vpop.f32.mrb[0].mxu0
    %9990 = vmatprep.mubr.bf16.mxu0 0
    %9991 = vmatmul.mubr.bf16.gmra.mrb[0].mxu0 %v9728
    %v9992 = vpop.f32.mrb[0].mxu0
    %v9993 = vadd.f32 0.0, %v9992
    %v9994 = vpop.f32.mrb[0].mxu0
    %v9995 = vpop.f32.mrb[0].mxu0
    %v9996 = vadd.f32 0.0, %v9995
    %v9997 = vpop.f32.mrb[0].mxu0
    %9998 = vmatprep.mubr.bf16.mxu0 0
    %9999 = vmatmul.mubr.bf16.gmra.mrb[0].mxu0 %v9731
    %v10000 = vpop.f32.mrb[0].mxu0
    %v10001 = vadd.f32 0.0, %v10000
    %v10002 = vpop.f32.mrb[0].mxu0
    %v10003 = vpop.f32.mrb[0].mxu0
    %v10004 = vadd.f32 0.0, %v10003
    %v10005 = vpop.f32.mrb[0].mxu0
    %10006 = vmatprep.mubr.bf16.mxu0 0
    %10007 = vmatmul.mubr.bf16.gmra.mrb[0].mxu0 %v9734
    %v10008 = vpop.f32.mrb[0].mxu0
    %v10009 = vadd.f32 0.0, %v10008
    %v10010 = vpop.f32.mrb[0].mxu0
    %v10011 = vpop.f32.mrb[0].mxu0
    %v10012 = vadd.f32 0.0, %v10011
    %v10013 = vpop.f32.mrb[0].mxu0
    %10014 = vmatprep.mubr.bf16.mxu0 0
    %10015 = vmatmul.mubr.bf16.gmra.mrb[0].mxu0 %v9737
    %v10016 = vpop.f32.mrb[0].mxu0
    %v10017 = vadd.f32 0.0, %v10016
    %v10018 = vpop.f32.mrb[0].mxu0
    %v10019 = vpop.f32.mrb[0].mxu0
    %v10020 = vadd.f32 0.0, %v10019
    %v10021 = vpop.f32.mrb[0].mxu0
    %10022 = vmatprep.mubr.bf16.mxu0 0
    %10023 = vmatmul.mubr.bf16.gmra.mrb[0].mxu0 %v9740
    %v10024 = vpop.f32.mrb[0].mxu0
    %v10025 = vadd.f32 0.0, %v10024
    %v10026 = vpop.f32.mrb[0].mxu0
    %v10027 = vpop.f32.mrb[0].mxu0
    %v10028 = vadd.f32 0.0, %v10027
    %v10029 = vpop.f32.mrb[0].mxu0
    %10030 = vdwg.mxu0
    %v10031 = vadd.f32 %v9470, %v9777
    %v10032 = vadd.f32 %v9471, %v9780
    %v10033 = vadd.f32 %v9472, %v9785
    %v10034 = vadd.f32 %v9473, %v9788
    %v10035 = vadd.f32 %v9474, %v9793
    %v10036 = vadd.f32 %v9475, %v9796
    %v10037 = vadd.f32 %v9476, %v9801
    %v10038 = vadd.f32 %v9477, %v9804
    %v10039 = vadd.f32 %v9478, %v9809
    %v10040 = vadd.f32 %v9479, %v9812
    %v10041 = vadd.f32 %v9480, %v9817
    %v10042 = vadd.f32 %v9481, %v9820
    %v10043 = vadd.f32 %v9482, %v9825
    %v10044 = vadd.f32 %v9483, %v9828
    %v10045 = vadd.f32 %v9484, %v9833
    %v10046 = vadd.f32 %v9485, %v9836
    %v10047 = vadd.f32 %v9486, %v9841
    %v10048 = vadd.f32 %v9487, %v9844
    %v10049 = vadd.f32 %v9488, %v9849
    %v10050 = vadd.f32 %v9489, %v9852
    %v10051 = vadd.f32 %v9490, %v9857
    %v10052 = vadd.f32 %v9491, %v9860
    %v10053 = vadd.f32 %v9492, %v9865
    %v10054 = vadd.f32 %v9493, %v9868
    %v10055 = vadd.f32 %v9494, %v9873
    %v10056 = vadd.f32 %v9495, %v9876
    %v10057 = vadd.f32 %v9496, %v9881
    %v10058 = vadd.f32 %v9497, %v9884
    %v10059 = vadd.f32 %v9498, %v9889
    %v10060 = vadd.f32 %v9499, %v9892
    %v10061 = vadd.f32 %v9500, %v9897
    %v10062 = vadd.f32 %v9501, %v9900
    %v10063 = vadd.f32 %v9502, %v9905
    %v10064 = vadd.f32 %v9503, %v9908
    %v10065 = vadd.f32 %v9504, %v9913
    %v10066 = vadd.f32 %v9505, %v9916
    %v10067 = vadd.f32 %v9506, %v9921
    %v10068 = vadd.f32 %v9507, %v9924
    %v10069 = vadd.f32 %v9508, %v9929
    %v10070 = vadd.f32 %v9509, %v9932
    %v10071 = vadd.f32 %v9510, %v9937
    %v10072 = vadd.f32 %v9511, %v9940
    %v10073 = vadd.f32 %v9512, %v9945
    %v10074 = vadd.f32 %v9513, %v9948
    %v10075 = vadd.f32 %v9514, %v9953
    %v10076 = vadd.f32 %v9515, %v9956
    %v10077 = vadd.f32 %v9516, %v9961
    %v10078 = vadd.f32 %v9517, %v9964
    %v10079 = vadd.f32 %v9518, %v9969
    %v10080 = vadd.f32 %v9519, %v9972
    %v10081 = vadd.f32 %v9520, %v9977
    %v10082 = vadd.f32 %v9521, %v9980
    %v10083 = vadd.f32 %v9522, %v9985
    %v10084 = vadd.f32 %v9523, %v9988
    %v10085 = vadd.f32 %v9524, %v9993
    %v10086 = vadd.f32 %v9525, %v9996
    %v10087 = vadd.f32 %v9526, %v10001
    %v10088 = vadd.f32 %v9527, %v10004
    %v10089 = vadd.f32 %v9528, %v10009
    %v10090 = vadd.f32 %v9529, %v10012
    %v10091 = vadd.f32 %v9530, %v10017
    %v10092 = vadd.f32 %v9531, %v10020
    %v10093 = vadd.f32 %v9532, %v10025
    %v10094 = vadd.f32 %v9533, %v10028
    %v10095 = vld [vmem:[%s8972 + $0x2] sm:$0xff]
    %v10096 = vld [vmem:[%s8972 + $0xa] sm:$0xff]
    %v10097 = vld [vmem:[%s8972 + $0x1a] sm:$0xff]
    %v10098 = vld [vmem:[%s8972 + $0x22] sm:$0xff]
    %v10099 = vld [vmem:[%s8972 + $0x32] sm:$0xff]
    %v10100 = vld [vmem:[%s8972 + $0x3a] sm:$0xff]
    %v10101 = vld [vmem:[%s8972 + $0x4a] sm:$0xff]
    %v10102 = vld [vmem:[%s8972 + $0x52] sm:$0xff]
    %v10103 = vld [vmem:[%s8972 + $0x62] sm:$0xff]
    %v10104 = vld [vmem:[%s8972 + $0x6a] sm:$0xff]
    %v10105 = vld [vmem:[%s8972 + $0x7a] sm:$0xff]
    %v10106 = vld [vmem:[%s8972 + $0x82] sm:$0xff]
    %v10107 = vld [vmem:[%s8972 + $0x92] sm:$0xff]
    %v10108 = vld [vmem:[%s8972 + $0x9a] sm:$0xff]
    %v10109 = vld [vmem:[%s8972 + $0xaa] sm:$0xff]
    %v10110 = vld [vmem:[%s8972 + $0xb2] sm:$0xff]
    %v10111 = vld [vmem:[%s8972 + $0xc2] sm:$0xff]
    %v10112 = vld [vmem:[%s8972 + $0xca] sm:$0xff]
    %v10113 = vld [vmem:[%s8972 + $0xda] sm:$0xff]
    %v10114 = vld [vmem:[%s8972 + $0xe2] sm:$0xff]
    %v10115 = vld [vmem:[%s8972 + $0xf2] sm:$0xff]
    %v10116 = vld [vmem:[%s8972 + $0xfa] sm:$0xff]
    %v10117 = vld [vmem:[%s8972 + $0x10a] sm:$0xff]
    %v10118 = vld [vmem:[%s8972 + $0x112] sm:$0xff]
    %v10119 = vld [vmem:[%s8972 + $0x122] sm:$0xff]
    %v10120 = vld [vmem:[%s8972 + $0x12a] sm:$0xff]
    %v10121 = vld [vmem:[%s8972 + $0x13a] sm:$0xff]
    %v10122 = vld [vmem:[%s8972 + $0x142] sm:$0xff]
    %v10123 = vld [vmem:[%s8972 + $0x152] sm:$0xff]
    %v10124 = vld [vmem:[%s8972 + $0x15a] sm:$0xff]
    %v10125 = vld [vmem:[%s8972 + $0x16a] sm:$0xff]
    %v10126 = vld [vmem:[%s8972 + $0x172] sm:$0xff]
    %v10127 = vld [vmem:[%s8972 + $0x1b2] sm:$0xff]
    %v10128 = vld [vmem:[%s8972 + $0x1ba] sm:$0xff]
    %v10129 = vld [vmem:[%s8972 + $0x1ca] sm:$0xff]
    %v10130 = vld [vmem:[%s8972 + $0x1d2] sm:$0xff]
    %v10131 = vld [vmem:[%s8972 + $0x1e2] sm:$0xff]
    %v10132 = vld [vmem:[%s8972 + $0x1ea] sm:$0xff]
    %v10133 = vld [vmem:[%s8972 + $0x1fa] sm:$0xff]
    %v10134 = vld [vmem:[%s8972 + $0x202] sm:$0xff]
    %v10135 = vld [vmem:[%s8972 + $0x212] sm:$0xff]
    %v10136 = vld [vmem:[%s8972 + $0x21a] sm:$0xff]
    %v10137 = vld [vmem:[%s8972 + $0x22a] sm:$0xff]
    %v10138 = vld [vmem:[%s8972 + $0x232] sm:$0xff]
    %v10139 = vld [vmem:[%s8972 + $0x242] sm:$0xff]
    %v10140 = vld [vmem:[%s8972 + $0x24a] sm:$0xff]
    %v10141 = vld [vmem:[%s8972 + $0x25a] sm:$0xff]
    %v10142 = vld [vmem:[%s8972 + $0x262] sm:$0xff]
    %v10143 = vld [vmem:[%s8972 + $0x272] sm:$0xff]
    %v10144 = vld [vmem:[%s8972 + $0x27a] sm:$0xff]
    %v10145 = vld [vmem:[%s8972 + $0x28a] sm:$0xff]
    %v10146 = vld [vmem:[%s8972 + $0x292] sm:$0xff]
    %v10147 = vld [vmem:[%s8972 + $0x2a2] sm:$0xff]
    %v10148 = vld [vmem:[%s8972 + $0x2aa] sm:$0xff]
    %v10149 = vld [vmem:[%s8972 + $0x2ba] sm:$0xff]
    %v10150 = vld [vmem:[%s8972 + $0x2c2] sm:$0xff]
    %v10151 = vld [vmem:[%s8972 + $0x2d2] sm:$0xff]
    %v10152 = vld [vmem:[%s8972 + $0x2da] sm:$0xff]
    %v10153 = vld [vmem:[%s8972 + $0x2ea] sm:$0xff]
    %v10154 = vld [vmem:[%s8972 + $0x2f2] sm:$0xff]
    %v10155 = vld [vmem:[%s8972 + $0x302] sm:$0xff]
    %v10156 = vld [vmem:[%s8972 + $0x30a] sm:$0xff]
    %v10157 = vld [vmem:[%s8972 + $0x31a] sm:$0xff]
    %v10158 = vld [vmem:[%s8972 + $0x322] sm:$0xff]
    %v10159 = vpack.c.bf16 %v10096, %v10095
    %v10160 = vpack.c.bf16 %v10098, %v10097
    %v10161 = vpack.c.bf16 %v10100, %v10099
    %v10162 = vpack.c.bf16 %v10102, %v10101
    %v10163 = vpack.c.bf16 %v10104, %v10103
    %v10164 = vpack.c.bf16 %v10106, %v10105
    %v10165 = vpack.c.bf16 %v10108, %v10107
    %v10166 = vpack.c.bf16 %v10110, %v10109
    %v10167 = vpack.c.bf16 %v10112, %v10111
    %v10168 = vpack.c.bf16 %v10114, %v10113
    %v10169 = vpack.c.bf16 %v10116, %v10115
    %v10170 = vpack.c.bf16 %v10118, %v10117
    %v10171 = vpack.c.bf16 %v10120, %v10119
    %v10172 = vpack.c.bf16 %v10122, %v10121
    %v10173 = vpack.c.bf16 %v10124, %v10123
    %v10174 = vpack.c.bf16 %v10126, %v10125
    %v10175 = vpack.c.bf16 %v10128, %v10127
    %v10176 = vpack.c.bf16 %v10130, %v10129
    %v10177 = vpack.c.bf16 %v10132, %v10131
    %v10178 = vpack.c.bf16 %v10134, %v10133
    %v10179 = vpack.c.bf16 %v10136, %v10135
    %v10180 = vpack.c.bf16 %v10138, %v10137
    %v10181 = vpack.c.bf16 %v10140, %v10139
    %v10182 = vpack.c.bf16 %v10142, %v10141
    %v10183 = vpack.c.bf16 %v10144, %v10143
    %v10184 = vpack.c.bf16 %v10146, %v10145
    %v10185 = vpack.c.bf16 %v10148, %v10147
    %v10186 = vpack.c.bf16 %v10150, %v10149
    %v10187 = vpack.c.bf16 %v10152, %v10151
    %v10188 = vpack.c.bf16 %v10154, %v10153
    %v10189 = vpack.c.bf16 %v10156, %v10155
    %v10190 = vpack.c.bf16 %v10158, %v10157
    %v10191 = vld [vmem:[%s2 + $0x80] sm:$0xf]
    %v10192 = vld [vmem:[%s2 + $0x84] sm:$0xf]
    %v10193 = vld [vmem:[%s2 + $0x88] sm:$0xf]
    %v10194 = vld [vmem:[%s2 + $0x8c] sm:$0xf]
    %v10199 = vunpack.c.l.b16 %v10191
    %v10200 = vunpack.c.l.b16 %v10192
    %v10201 = vunpack.c.l.b16 %v10193
    %v10202 = vunpack.c.l.b16 %v10194
    %v10203 = vpack.c.b16 %v10200, %v10199
    %v10204 = vpack.c.b16 %v10202, %v10201
    %v10208 = vsel %vm240, %v10159, 0
    %v10211 = vsel %vm240, %v10160, 0
    %v10214 = vsel %vm240, %v10161, 0
    %v10217 = vsel %vm240, %v10162, 0
    %v10220 = vsel %vm240, %v10163, 0
    %v10223 = vsel %vm240, %v10164, 0
    %v10226 = vsel %vm240, %v10165, 0
    %v10229 = vsel %vm240, %v10166, 0
    %v10232 = vsel %vm240, %v10167, 0
    %v10235 = vsel %vm240, %v10168, 0
    %v10238 = vsel %vm240, %v10169, 0
    %v10241 = vsel %vm240, %v10170, 0
    %v10244 = vsel %vm240, %v10171, 0
    %v10247 = vsel %vm240, %v10172, 0
    %v10250 = vsel %vm240, %v10173, 0
    %v10253 = vsel %vm240, %v10174, 0
    %v10256 = vsel %vm240, %v10175, 0
    %v10259 = vsel %vm240, %v10176, 0
    %v10262 = vsel %vm240, %v10177, 0
    %v10265 = vsel %vm240, %v10178, 0
    %v10268 = vsel %vm240, %v10179, 0
    %v10271 = vsel %vm240, %v10180, 0
    %v10274 = vsel %vm240, %v10181, 0
    %v10277 = vsel %vm240, %v10182, 0
    %v10280 = vsel %vm240, %v10183, 0
    %v10283 = vsel %vm240, %v10184, 0
    %v10286 = vsel %vm240, %v10185, 0
    %v10289 = vsel %vm240, %v10186, 0
    %v10292 = vsel %vm240, %v10187, 0
    %v10295 = vsel %vm240, %v10188, 0
    %v10298 = vsel %vm240, %v10189, 0
    %v10301 = vsel %vm240, %v10190, 0
    %10303 = vmatprep.subr.bf16.mxu0 0
    %10304 = vmatpush1.bf16.msra.mxu0 %v10203
    %10305 = vmatprep.subr.bf16.mxu0 0
    %10306 = vmatpush1.bf16.msra.mxu0 %v10204
    %10307 = vmatprep.subr.bf16.mxu0 0
    %10308 = vmatpush1.bf16.msra.mxu0 0
    %10309 = vmatprep.subr.bf16.mxu0 0
    %10310 = vmatpush1.bf16.msra.mxu0 0
    %10311 = vmatprep.subr.bf16.mxu0 0
    %10312 = vmatpush1.bf16.msra.mxu0 0
    %10313 = vmatprep.subr.bf16.mxu0 0
    %10314 = vmatpush1.bf16.msra.mxu0 0
    %10315 = vmatprep.subr.bf16.mxu0 0
    %10316 = vmatpush1.bf16.msra.mxu0 0
    %10317 = vmatprep.subr.bf16.mxu0 0
    %10318 = vmatpush1.bf16.msra.mxu0 0
    %10319 = vmatprep.subr.bf16.mxu0 0
    %10320 = vmatpush1.bf16.msra.mxu0 0
    %10321 = vmatprep.subr.bf16.mxu0 0
    %10322 = vmatpush1.bf16.msra.mxu0 0
    %10323 = vmatprep.subr.bf16.mxu0 0
    %10324 = vmatpush1.bf16.msra.mxu0 0
    %10325 = vmatprep.subr.bf16.mxu0 0
    %10326 = vmatpush1.bf16.msra.mxu0 0
    %10327 = vmatprep.subr.bf16.mxu0 0
    %10328 = vmatpush1.bf16.msra.mxu0 0
    %10329 = vmatprep.subr.bf16.mxu0 0
    %10330 = vmatpush1.bf16.msra.mxu0 0
    %10331 = vmatprep.subr.bf16.mxu0 0
    %10332 = vmatpush1.bf16.msra.mxu0 0
    %10333 = vmatprep.subr.bf16.mxu0 0
    %10334 = vmatpush1.bf16.msra.mxu0 0
    %10335 = vmatprep.mubr.bf16.mxu0 0
    %10336 = vmatmul.mubr.bf16.gmra.mrb[0].mxu0 %v10208
    %v10337 = vpop.f32.mrb[0].mxu0
    %v10338 = vadd.f32 0.0, %v10337
    %v10339 = vpop.f32.mrb[0].mxu0
    %v10340 = vpop.f32.mrb[0].mxu0
    %v10341 = vadd.f32 0.0, %v10340
    %v10342 = vpop.f32.mrb[0].mxu0
    %10343 = vmatprep.mubr.bf16.mxu0 0
    %10344 = vmatmul.mubr.bf16.gmra.mrb[0].mxu0 %v10211
    %v10345 = vpop.f32.mrb[0].mxu0
    %v10346 = vadd.f32 0.0, %v10345
    %v10347 = vpop.f32.mrb[0].mxu0
    %v10348 = vpop.f32.mrb[0].mxu0
    %v10349 = vadd.f32 0.0, %v10348
    %v10350 = vpop.f32.mrb[0].mxu0
    %10351 = vmatprep.mubr.bf16.mxu0 0
    %10352 = vmatmul.mubr.bf16.gmra.mrb[0].mxu0 %v10214
    %v10353 = vpop.f32.mrb[0].mxu0
    %v10354 = vadd.f32 0.0, %v10353
    %v10355 = vpop.f32.mrb[0].mxu0
    %v10356 = vpop.f32.mrb[0].mxu0
    %v10357 = vadd.f32 0.0, %v10356
    %v10358 = vpop.f32.mrb[0].mxu0
    %10359 = vmatprep.mubr.bf16.mxu0 0
    %10360 = vmatmul.mubr.bf16.gmra.mrb[0].mxu0 %v10217
    %v10361 = vpop.f32.mrb[0].mxu0
    %v10362 = vadd.f32 0.0, %v10361
    %v10363 = vpop.f32.mrb[0].mxu0
    %v10364 = vpop.f32.mrb[0].mxu0
    %v10365 = vadd.f32 0.0, %v10364
    %v10366 = vpop.f32.mrb[0].mxu0
    %10367 = vmatprep.mubr.bf16.mxu0 0
    %10368 = vmatmul.mubr.bf16.gmra.mrb[0].mxu0 %v10220
    %v10369 = vpop.f32.mrb[0].mxu0
    %v10370 = vadd.f32 0.0, %v10369
    %v10371 = vpop.f32.mrb[0].mxu0
    %v10372 = vpop.f32.mrb[0].mxu0
    %v10373 = vadd.f32 0.0, %v10372
    %v10374 = vpop.f32.mrb[0].mxu0
    %10375 = vmatprep.mubr.bf16.mxu0 0
    %10376 = vmatmul.mubr.bf16.gmra.mrb[0].mxu0 %v10223
    %v10377 = vpop.f32.mrb[0].mxu0
    %v10378 = vadd.f32 0.0, %v10377
    %v10379 = vpop.f32.mrb[0].mxu0
    %v10380 = vpop.f32.mrb[0].mxu0
    %v10381 = vadd.f32 0.0, %v10380
    %v10382 = vpop.f32.mrb[0].mxu0
    %10383 = vmatprep.mubr.bf16.mxu0 0
    %10384 = vmatmul.mubr.bf16.gmra.mrb[0].mxu0 %v10226
    %v10385 = vpop.f32.mrb[0].mxu0
    %v10386 = vadd.f32 0.0, %v10385
    %v10387 = vpop.f32.mrb[0].mxu0
    %v10388 = vpop.f32.mrb[0].mxu0
    %v10389 = vadd.f32 0.0, %v10388
    %v10390 = vpop.f32.mrb[0].mxu0
    %10391 = vmatprep.mubr.bf16.mxu0 0
    %10392 = vmatmul.mubr.bf16.gmra.mrb[0].mxu0 %v10229
    %v10393 = vpop.f32.mrb[0].mxu0
    %v10394 = vadd.f32 0.0, %v10393
    %v10395 = vpop.f32.mrb[0].mxu0
    %v10396 = vpop.f32.mrb[0].mxu0
    %v10397 = vadd.f32 0.0, %v10396
    %v10398 = vpop.f32.mrb[0].mxu0
    %10399 = vmatprep.mubr.bf16.mxu0 0
    %10400 = vmatmul.mubr.bf16.gmra.mrb[0].mxu0 %v10232
    %v10401 = vpop.f32.mrb[0].mxu0
    %v10402 = vadd.f32 0.0, %v10401
    %v10403 = vpop.f32.mrb[0].mxu0
    %v10404 = vpop.f32.mrb[0].mxu0
    %v10405 = vadd.f32 0.0, %v10404
    %v10406 = vpop.f32.mrb[0].mxu0
    %10407 = vmatprep.mubr.bf16.mxu0 0
    %10408 = vmatmul.mubr.bf16.gmra.mrb[0].mxu0 %v10235
    %v10409 = vpop.f32.mrb[0].mxu0
    %v10410 = vadd.f32 0.0, %v10409
    %v10411 = vpop.f32.mrb[0].mxu0
    %v10412 = vpop.f32.mrb[0].mxu0
    %v10413 = vadd.f32 0.0, %v10412
    %v10414 = vpop.f32.mrb[0].mxu0
    %10415 = vmatprep.mubr.bf16.mxu0 0
    %10416 = vmatmul.mubr.bf16.gmra.mrb[0].mxu0 %v10238
    %v10417 = vpop.f32.mrb[0].mxu0
    %v10418 = vadd.f32 0.0, %v10417
    %v10419 = vpop.f32.mrb[0].mxu0
    %v10420 = vpop.f32.mrb[0].mxu0
    %v10421 = vadd.f32 0.0, %v10420
    %v10422 = vpop.f32.mrb[0].mxu0
    %10423 = vmatprep.mubr.bf16.mxu0 0
    %10424 = vmatmul.mubr.bf16.gmra.mrb[0].mxu0 %v10241
    %v10425 = vpop.f32.mrb[0].mxu0
    %v10426 = vadd.f32 0.0, %v10425
    %v10427 = vpop.f32.mrb[0].mxu0
    %v10428 = vpop.f32.mrb[0].mxu0
    %v10429 = vadd.f32 0.0, %v10428
    %v10430 = vpop.f32.mrb[0].mxu0
    %10431 = vmatprep.mubr.bf16.mxu0 0
    %10432 = vmatmul.mubr.bf16.gmra.mrb[0].mxu0 %v10244
    %v10433 = vpop.f32.mrb[0].mxu0
    %v10434 = vadd.f32 0.0, %v10433
    %v10435 = vpop.f32.mrb[0].mxu0
    %v10436 = vpop.f32.mrb[0].mxu0
    %v10437 = vadd.f32 0.0, %v10436
    %v10438 = vpop.f32.mrb[0].mxu0
    %10439 = vmatprep.mubr.bf16.mxu0 0
    %10440 = vmatmul.mubr.bf16.gmra.mrb[0].mxu0 %v10247
    %v10441 = vpop.f32.mrb[0].mxu0
    %v10442 = vadd.f32 0.0, %v10441
    %v10443 = vpop.f32.mrb[0].mxu0
    %v10444 = vpop.f32.mrb[0].mxu0
    %v10445 = vadd.f32 0.0, %v10444
    %v10446 = vpop.f32.mrb[0].mxu0
    %10447 = vmatprep.mubr.bf16.mxu0 0
    %10448 = vmatmul.mubr.bf16.gmra.mrb[0].mxu0 %v10250
    %v10449 = vpop.f32.mrb[0].mxu0
    %v10450 = vadd.f32 0.0, %v10449
    %v10451 = vpop.f32.mrb[0].mxu0
    %v10452 = vpop.f32.mrb[0].mxu0
    %v10453 = vadd.f32 0.0, %v10452
    %v10454 = vpop.f32.mrb[0].mxu0
    %10455 = vmatprep.mubr.bf16.mxu0 0
    %10456 = vmatmul.mubr.bf16.gmra.mrb[0].mxu0 %v10253
    %v10457 = vpop.f32.mrb[0].mxu0
    %v10458 = vadd.f32 0.0, %v10457
    %v10459 = vpop.f32.mrb[0].mxu0
    %v10460 = vpop.f32.mrb[0].mxu0
    %v10461 = vadd.f32 0.0, %v10460
    %v10462 = vpop.f32.mrb[0].mxu0
    %10463 = vmatprep.mubr.bf16.mxu0 0
    %10464 = vmatmul.mubr.bf16.gmra.mrb[0].mxu0 %v10256
    %v10465 = vpop.f32.mrb[0].mxu0
    %v10466 = vadd.f32 0.0, %v10465
    %v10467 = vpop.f32.mrb[0].mxu0
    %v10468 = vpop.f32.mrb[0].mxu0
    %v10469 = vadd.f32 0.0, %v10468
    %v10470 = vpop.f32.mrb[0].mxu0
    %10471 = vmatprep.mubr.bf16.mxu0 0
    %10472 = vmatmul.mubr.bf16.gmra.mrb[0].mxu0 %v10259
    %v10473 = vpop.f32.mrb[0].mxu0
    %v10474 = vadd.f32 0.0, %v10473
    %v10475 = vpop.f32.mrb[0].mxu0
    %v10476 = vpop.f32.mrb[0].mxu0
    %v10477 = vadd.f32 0.0, %v10476
    %v10478 = vpop.f32.mrb[0].mxu0
    %10479 = vmatprep.mubr.bf16.mxu0 0
    %10480 = vmatmul.mubr.bf16.gmra.mrb[0].mxu0 %v10262
    %v10481 = vpop.f32.mrb[0].mxu0
    %v10482 = vadd.f32 0.0, %v10481
    %v10483 = vpop.f32.mrb[0].mxu0
    %v10484 = vpop.f32.mrb[0].mxu0
    %v10485 = vadd.f32 0.0, %v10484
    %v10486 = vpop.f32.mrb[0].mxu0
    %10487 = vmatprep.mubr.bf16.mxu0 0
    %10488 = vmatmul.mubr.bf16.gmra.mrb[0].mxu0 %v10265
    %v10489 = vpop.f32.mrb[0].mxu0
    %v10490 = vadd.f32 0.0, %v10489
    %v10491 = vpop.f32.mrb[0].mxu0
    %v10492 = vpop.f32.mrb[0].mxu0
    %v10493 = vadd.f32 0.0, %v10492
    %v10494 = vpop.f32.mrb[0].mxu0
    %10495 = vmatprep.mubr.bf16.mxu0 0
    %10496 = vmatmul.mubr.bf16.gmra.mrb[0].mxu0 %v10268
    %v10497 = vpop.f32.mrb[0].mxu0
    %v10498 = vadd.f32 0.0, %v10497
    %v10499 = vpop.f32.mrb[0].mxu0
    %v10500 = vpop.f32.mrb[0].mxu0
    %v10501 = vadd.f32 0.0, %v10500
    %v10502 = vpop.f32.mrb[0].mxu0
    %10503 = vmatprep.mubr.bf16.mxu0 0
    %10504 = vmatmul.mubr.bf16.gmra.mrb[0].mxu0 %v10271
    %v10505 = vpop.f32.mrb[0].mxu0
    %v10506 = vadd.f32 0.0, %v10505
    %v10507 = vpop.f32.mrb[0].mxu0
    %v10508 = vpop.f32.mrb[0].mxu0
    %v10509 = vadd.f32 0.0, %v10508
    %v10510 = vpop.f32.mrb[0].mxu0
    %10511 = vmatprep.mubr.bf16.mxu0 0
    %10512 = vmatmul.mubr.bf16.gmra.mrb[0].mxu0 %v10274
    %v10513 = vpop.f32.mrb[0].mxu0
    %v10514 = vadd.f32 0.0, %v10513
    %v10515 = vpop.f32.mrb[0].mxu0
    %v10516 = vpop.f32.mrb[0].mxu0
    %v10517 = vadd.f32 0.0, %v10516
    %v10518 = vpop.f32.mrb[0].mxu0
    %10519 = vmatprep.mubr.bf16.mxu0 0
    %10520 = vmatmul.mubr.bf16.gmra.mrb[0].mxu0 %v10277
    %v10521 = vpop.f32.mrb[0].mxu0
    %v10522 = vadd.f32 0.0, %v10521
    %v10523 = vpop.f32.mrb[0].mxu0
    %v10524 = vpop.f32.mrb[0].mxu0
    %v10525 = vadd.f32 0.0, %v10524
    %v10526 = vpop.f32.mrb[0].mxu0
    %10527 = vmatprep.mubr.bf16.mxu0 0
    %10528 = vmatmul.mubr.bf16.gmra.mrb[0].mxu0 %v10280
    %v10529 = vpop.f32.mrb[0].mxu0
    %v10530 = vadd.f32 0.0, %v10529
    %v10531 = vpop.f32.mrb[0].mxu0
    %v10532 = vpop.f32.mrb[0].mxu0
    %v10533 = vadd.f32 0.0, %v10532
    %v10534 = vpop.f32.mrb[0].mxu0
    %10535 = vmatprep.mubr.bf16.mxu0 0
    %10536 = vmatmul.mubr.bf16.gmra.mrb[0].mxu0 %v10283
    %v10537 = vpop.f32.mrb[0].mxu0
    %v10538 = vadd.f32 0.0, %v10537
    %v10539 = vpop.f32.mrb[0].mxu0
    %v10540 = vpop.f32.mrb[0].mxu0
    %v10541 = vadd.f32 0.0, %v10540
    %v10542 = vpop.f32.mrb[0].mxu0
    %10543 = vmatprep.mubr.bf16.mxu0 0
    %10544 = vmatmul.mubr.bf16.gmra.mrb[0].mxu0 %v10286
    %v10545 = vpop.f32.mrb[0].mxu0
    %v10546 = vadd.f32 0.0, %v10545
    %v10547 = vpop.f32.mrb[0].mxu0
    %v10548 = vpop.f32.mrb[0].mxu0
    %v10549 = vadd.f32 0.0, %v10548
    %v10550 = vpop.f32.mrb[0].mxu0
    %10551 = vmatprep.mubr.bf16.mxu0 0
    %10552 = vmatmul.mubr.bf16.gmra.mrb[0].mxu0 %v10289
    %v10553 = vpop.f32.mrb[0].mxu0
    %v10554 = vadd.f32 0.0, %v10553
    %v10555 = vpop.f32.mrb[0].mxu0
    %v10556 = vpop.f32.mrb[0].mxu0
    %v10557 = vadd.f32 0.0, %v10556
    %v10558 = vpop.f32.mrb[0].mxu0
    %10559 = vmatprep.mubr.bf16.mxu0 0
    %10560 = vmatmul.mubr.bf16.gmra.mrb[0].mxu0 %v10292
    %v10561 = vpop.f32.mrb[0].mxu0
    %v10562 = vadd.f32 0.0, %v10561
    %v10563 = vpop.f32.mrb[0].mxu0
    %v10564 = vpop.f32.mrb[0].mxu0
    %v10565 = vadd.f32 0.0, %v10564
    %v10566 = vpop.f32.mrb[0].mxu0
    %10567 = vmatprep.mubr.bf16.mxu0 0
    %10568 = vmatmul.mubr.bf16.gmra.mrb[0].mxu0 %v10295
    %v10569 = vpop.f32.mrb[0].mxu0
    %v10570 = vadd.f32 0.0, %v10569
    %v10571 = vpop.f32.mrb[0].mxu0
    %v10572 = vpop.f32.mrb[0].mxu0
    %v10573 = vadd.f32 0.0, %v10572
    %v10574 = vpop.f32.mrb[0].mxu0
    %10575 = vmatprep.mubr.bf16.mxu0 0
    %10576 = vmatmul.mubr.bf16.gmra.mrb[0].mxu0 %v10298
    %v10577 = vpop.f32.mrb[0].mxu0
    %v10578 = vadd.f32 0.0, %v10577
    %v10579 = vpop.f32.mrb[0].mxu0
    %v10580 = vpop.f32.mrb[0].mxu0
    %v10581 = vadd.f32 0.0, %v10580
    %v10582 = vpop.f32.mrb[0].mxu0
    %10583 = vmatprep.mubr.bf16.mxu0 0
    %10584 = vmatmul.mubr.bf16.gmra.mrb[0].mxu0 %v10301
    %v10585 = vpop.f32.mrb[0].mxu0
    %v10586 = vadd.f32 0.0, %v10585
    %v10587 = vpop.f32.mrb[0].mxu0
    %v10588 = vpop.f32.mrb[0].mxu0
    %v10589 = vadd.f32 0.0, %v10588
    %v10590 = vpop.f32.mrb[0].mxu0
    %10591 = vdwg.mxu0
    %v10592 = vadd.f32 %v10031, %v10338
    %v10593 = vadd.f32 %v10032, %v10341
    %v10594 = vadd.f32 %v10033, %v10346
    %v10595 = vadd.f32 %v10034, %v10349
    %v10596 = vadd.f32 %v10035, %v10354
    %v10597 = vadd.f32 %v10036, %v10357
    %v10598 = vadd.f32 %v10037, %v10362
    %v10599 = vadd.f32 %v10038, %v10365
    %v10600 = vadd.f32 %v10039, %v10370
    %v10601 = vadd.f32 %v10040, %v10373
    %v10602 = vadd.f32 %v10041, %v10378
    %v10603 = vadd.f32 %v10042, %v10381
    %v10604 = vadd.f32 %v10043, %v10386
    %v10605 = vadd.f32 %v10044, %v10389
    %v10606 = vadd.f32 %v10045, %v10394
    %v10607 = vadd.f32 %v10046, %v10397
    %v10608 = vadd.f32 %v10047, %v10402
    %v10609 = vadd.f32 %v10048, %v10405
    %v10610 = vadd.f32 %v10049, %v10410
    %v10611 = vadd.f32 %v10050, %v10413
    %v10612 = vadd.f32 %v10051, %v10418
    %v10613 = vadd.f32 %v10052, %v10421
    %v10614 = vadd.f32 %v10053, %v10426
    %v10615 = vadd.f32 %v10054, %v10429
    %v10616 = vadd.f32 %v10055, %v10434
    %v10617 = vadd.f32 %v10056, %v10437
    %v10618 = vadd.f32 %v10057, %v10442
    %v10619 = vadd.f32 %v10058, %v10445
    %v10620 = vadd.f32 %v10059, %v10450
    %v10621 = vadd.f32 %v10060, %v10453
    %v10622 = vadd.f32 %v10061, %v10458
    %v10623 = vadd.f32 %v10062, %v10461
    %v10624 = vadd.f32 %v10063, %v10466
    %v10625 = vadd.f32 %v10064, %v10469
    %v10626 = vadd.f32 %v10065, %v10474
    %v10627 = vadd.f32 %v10066, %v10477
    %v10628 = vadd.f32 %v10067, %v10482
    %v10629 = vadd.f32 %v10068, %v10485
    %v10630 = vadd.f32 %v10069, %v10490
    %v10631 = vadd.f32 %v10070, %v10493
    %v10632 = vadd.f32 %v10071, %v10498
    %v10633 = vadd.f32 %v10072, %v10501
    %v10634 = vadd.f32 %v10073, %v10506
    %v10635 = vadd.f32 %v10074, %v10509
    %v10636 = vadd.f32 %v10075, %v10514
    %v10637 = vadd.f32 %v10076, %v10517
    %v10638 = vadd.f32 %v10077, %v10522
    %v10639 = vadd.f32 %v10078, %v10525
    %v10640 = vadd.f32 %v10079, %v10530
    %v10641 = vadd.f32 %v10080, %v10533
    %v10642 = vadd.f32 %v10081, %v10538
    %v10643 = vadd.f32 %v10082, %v10541
    %v10644 = vadd.f32 %v10083, %v10546
    %v10645 = vadd.f32 %v10084, %v10549
    %v10646 = vadd.f32 %v10085, %v10554
    %v10647 = vadd.f32 %v10086, %v10557
    %v10648 = vadd.f32 %v10087, %v10562
    %v10649 = vadd.f32 %v10088, %v10565
    %v10650 = vadd.f32 %v10089, %v10570
    %v10651 = vadd.f32 %v10090, %v10573
    %v10652 = vadd.f32 %v10091, %v10578
    %v10653 = vadd.f32 %v10092, %v10581
    %v10654 = vadd.f32 %v10093, %v10586
    %v10655 = vadd.f32 %v10094, %v10589
    %v10656 = vsel %vm240, %v10592, 0.0
    %v10657 = vsel %vm240, %v10593, 0.0
    %v10658 = vadd.f32 %v10656, %v10657
    %v10659 = vsel %vm240, %v10594, 0.0
    %v10660 = vadd.f32 %v10658, %v10659
    %v10661 = vsel %vm240, %v10595, 0.0
    %v10662 = vadd.f32 %v10660, %v10661
    %v10663 = vsel %vm240, %v10596, 0.0
    %v10664 = vadd.f32 %v10662, %v10663
    %v10665 = vsel %vm240, %v10597, 0.0
    %v10666 = vadd.f32 %v10664, %v10665
    %v10667 = vsel %vm240, %v10598, 0.0
    %v10668 = vadd.f32 %v10666, %v10667
    %v10669 = vsel %vm240, %v10599, 0.0
    %v10670 = vadd.f32 %v10668, %v10669
    %v10671 = vsel %vm240, %v10600, 0.0
    %v10672 = vadd.f32 %v10670, %v10671
    %v10673 = vsel %vm240, %v10601, 0.0
    %v10674 = vadd.f32 %v10672, %v10673
    %v10675 = vsel %vm240, %v10602, 0.0
    %v10676 = vadd.f32 %v10674, %v10675
    %v10677 = vsel %vm240, %v10603, 0.0
    %v10678 = vadd.f32 %v10676, %v10677
    %v10679 = vsel %vm240, %v10604, 0.0
    %v10680 = vadd.f32 %v10678, %v10679
    %v10681 = vsel %vm240, %v10605, 0.0
    %v10682 = vadd.f32 %v10680, %v10681
    %v10683 = vsel %vm240, %v10606, 0.0
    %v10684 = vadd.f32 %v10682, %v10683
    %v10685 = vsel %vm240, %v10607, 0.0
    %v10686 = vadd.f32 %v10684, %v10685
    %v10687 = vsel %vm240, %v10608, 0.0
    %v10688 = vadd.f32 %v10686, %v10687
    %v10689 = vsel %vm240, %v10609, 0.0
    %v10690 = vadd.f32 %v10688, %v10689
    %v10691 = vsel %vm240, %v10610, 0.0
    %v10692 = vadd.f32 %v10690, %v10691
    %v10693 = vsel %vm240, %v10611, 0.0
    %v10694 = vadd.f32 %v10692, %v10693
    %v10695 = vsel %vm240, %v10612, 0.0
    %v10696 = vadd.f32 %v10694, %v10695
    %v10697 = vsel %vm240, %v10613, 0.0
    %v10698 = vadd.f32 %v10696, %v10697
    %v10699 = vsel %vm240, %v10614, 0.0
    %v10700 = vadd.f32 %v10698, %v10699
    %v10701 = vsel %vm240, %v10615, 0.0
    %v10702 = vadd.f32 %v10700, %v10701
    %v10703 = vsel %vm240, %v10616, 0.0
    %v10704 = vadd.f32 %v10702, %v10703
    %v10705 = vsel %vm240, %v10617, 0.0
    %v10706 = vadd.f32 %v10704, %v10705
    %v10707 = vsel %vm240, %v10618, 0.0
    %v10708 = vadd.f32 %v10706, %v10707
    %v10709 = vsel %vm240, %v10619, 0.0
    %v10710 = vadd.f32 %v10708, %v10709
    %v10711 = vsel %vm240, %v10620, 0.0
    %v10712 = vadd.f32 %v10710, %v10711
    %v10713 = vsel %vm240, %v10621, 0.0
    %v10714 = vadd.f32 %v10712, %v10713
    %v10715 = vsel %vm240, %v10622, 0.0
    %v10716 = vadd.f32 %v10714, %v10715
    %v10717 = vsel %vm240, %v10623, 0.0
    %v10718 = vadd.f32 %v10716, %v10717
    %v10719 = vsel %vm240, %v10624, 0.0
    %v10720 = vadd.f32 %v10718, %v10719
    %v10721 = vsel %vm240, %v10625, 0.0
    %v10722 = vadd.f32 %v10720, %v10721
    %v10723 = vsel %vm240, %v10626, 0.0
    %v10724 = vadd.f32 %v10722, %v10723
    %v10725 = vsel %vm240, %v10627, 0.0
    %v10726 = vadd.f32 %v10724, %v10725
    %v10727 = vsel %vm240, %v10628, 0.0
    %v10728 = vadd.f32 %v10726, %v10727
    %v10729 = vsel %vm240, %v10629, 0.0
    %v10730 = vadd.f32 %v10728, %v10729
    %v10731 = vsel %vm240, %v10630, 0.0
    %v10732 = vadd.f32 %v10730, %v10731
    %v10733 = vsel %vm240, %v10631, 0.0
    %v10734 = vadd.f32 %v10732, %v10733
    %v10735 = vsel %vm240, %v10632, 0.0
    %v10736 = vadd.f32 %v10734, %v10735
    %v10737 = vsel %vm240, %v10633, 0.0
    %v10738 = vadd.f32 %v10736, %v10737
    %v10739 = vsel %vm240, %v10634, 0.0
    %v10740 = vadd.f32 %v10738, %v10739
    %v10741 = vsel %vm240, %v10635, 0.0
    %v10742 = vadd.f32 %v10740, %v10741
    %v10743 = vsel %vm240, %v10636, 0.0
    %v10744 = vadd.f32 %v10742, %v10743
    %v10745 = vsel %vm240, %v10637, 0.0
    %v10746 = vadd.f32 %v10744, %v10745
    %v10747 = vsel %vm240, %v10638, 0.0
    %v10748 = vadd.f32 %v10746, %v10747
    %v10749 = vsel %vm240, %v10639, 0.0
    %v10750 = vadd.f32 %v10748, %v10749
    %v10751 = vsel %vm240, %v10640, 0.0
    %v10752 = vadd.f32 %v10750, %v10751
    %v10753 = vsel %vm240, %v10641, 0.0
    %v10754 = vadd.f32 %v10752, %v10753
    %v10755 = vsel %vm240, %v10642, 0.0
    %v10756 = vadd.f32 %v10754, %v10755
    %v10757 = vsel %vm240, %v10643, 0.0
    %v10758 = vadd.f32 %v10756, %v10757
    %v10759 = vsel %vm240, %v10644, 0.0
    %v10760 = vadd.f32 %v10758, %v10759
    %v10761 = vsel %vm240, %v10645, 0.0
    %v10762 = vadd.f32 %v10760, %v10761
    %v10763 = vsel %vm240, %v10646, 0.0
    %v10764 = vadd.f32 %v10762, %v10763
    %v10765 = vsel %vm240, %v10647, 0.0
    %v10766 = vadd.f32 %v10764, %v10765
    %v10767 = vsel %vm240, %v10648, 0.0
    %v10768 = vadd.f32 %v10766, %v10767
    %v10769 = vsel %vm240, %v10649, 0.0
    %v10770 = vadd.f32 %v10768, %v10769
    %v10771 = vsel %vm240, %v10650, 0.0
    %v10772 = vadd.f32 %v10770, %v10771
    %v10773 = vsel %vm240, %v10651, 0.0
    %v10774 = vadd.f32 %v10772, %v10773
    %v10775 = vsel %vm240, %v10652, 0.0
    %v10776 = vadd.f32 %v10774, %v10775
    %v10777 = vsel %vm240, %v10653, 0.0
    %v10778 = vadd.f32 %v10776, %v10777
    %v10779 = vsel %vm240, %v10654, 0.0
    %v10780 = vadd.f32 %v10778, %v10779
    %v10781 = vsel %vm240, %v10655, 0.0
    %v10782 = vadd.f32 %v10780, %v10781
    %v10783 = vrot.slane %v10782, 4
    %v10784 = vadd.f32 %v10782, %v10783
    %v10785 = vrot.slane %v10784, 2
    %v10786 = vadd.f32 %v10784, %v10785
    %v10787 = vrot.slane %v10786, 1
    %v10788 = vadd.f32 %v10786, %v10787
    %v10789 = vmul.f32 %v10788, %v5085
    %v10790 = vsub.f32 %v10592, %v10789
    %v10791 = vsub.f32 %v10593, %v10789
    %v10792 = vsub.f32 %v10594, %v10789
    %v10793 = vsub.f32 %v10595, %v10789
    %v10794 = vsub.f32 %v10596, %v10789
    %v10795 = vsub.f32 %v10597, %v10789
    %v10796 = vsub.f32 %v10598, %v10789
    %v10797 = vsub.f32 %v10599, %v10789
    %v10798 = vsub.f32 %v10600, %v10789
    %v10799 = vsub.f32 %v10601, %v10789
    %v10800 = vsub.f32 %v10602, %v10789
    %v10801 = vsub.f32 %v10603, %v10789
    %v10802 = vsub.f32 %v10604, %v10789
    %v10803 = vsub.f32 %v10605, %v10789
    %v10804 = vsub.f32 %v10606, %v10789
    %v10805 = vsub.f32 %v10607, %v10789
    %v10806 = vsub.f32 %v10608, %v10789
    %v10807 = vsub.f32 %v10609, %v10789
    %v10808 = vsub.f32 %v10610, %v10789
    %v10809 = vsub.f32 %v10611, %v10789
    %v10810 = vsub.f32 %v10612, %v10789
    %v10811 = vsub.f32 %v10613, %v10789
    %v10812 = vsub.f32 %v10614, %v10789
    %v10813 = vsub.f32 %v10615, %v10789
    %v10814 = vsub.f32 %v10616, %v10789
    %v10815 = vsub.f32 %v10617, %v10789
    %v10816 = vsub.f32 %v10618, %v10789
    %v10817 = vsub.f32 %v10619, %v10789
    %v10818 = vsub.f32 %v10620, %v10789
    %v10819 = vsub.f32 %v10621, %v10789
    %v10820 = vsub.f32 %v10622, %v10789
    %v10821 = vsub.f32 %v10623, %v10789
    %v10822 = vsub.f32 %v10624, %v10789
    %v10823 = vsub.f32 %v10625, %v10789
    %v10824 = vsub.f32 %v10626, %v10789
    %v10825 = vsub.f32 %v10627, %v10789
    %v10826 = vsub.f32 %v10628, %v10789
    %v10827 = vsub.f32 %v10629, %v10789
    %v10828 = vsub.f32 %v10630, %v10789
    %v10829 = vsub.f32 %v10631, %v10789
    %v10830 = vsub.f32 %v10632, %v10789
    %v10831 = vsub.f32 %v10633, %v10789
    %v10832 = vsub.f32 %v10634, %v10789
    %v10833 = vsub.f32 %v10635, %v10789
    %v10834 = vsub.f32 %v10636, %v10789
    %v10835 = vsub.f32 %v10637, %v10789
    %v10836 = vsub.f32 %v10638, %v10789
    %v10837 = vsub.f32 %v10639, %v10789
    %v10838 = vsub.f32 %v10640, %v10789
    %v10839 = vsub.f32 %v10641, %v10789
    %v10840 = vsub.f32 %v10642, %v10789
    %v10841 = vsub.f32 %v10643, %v10789
    %v10842 = vsub.f32 %v10644, %v10789
    %v10843 = vsub.f32 %v10645, %v10789
    %v10844 = vsub.f32 %v10646, %v10789
    %v10845 = vsub.f32 %v10647, %v10789
    %v10846 = vsub.f32 %v10648, %v10789
    %v10847 = vsub.f32 %v10649, %v10789
    %v10848 = vsub.f32 %v10650, %v10789
    %v10849 = vsub.f32 %v10651, %v10789
    %v10850 = vsub.f32 %v10652, %v10789
    %v10851 = vsub.f32 %v10653, %v10789
    %v10852 = vsub.f32 %v10654, %v10789
    %v10853 = vsub.f32 %v10655, %v10789
    %v10854 = vmul.f32 %v10790, %v10790
    %v10855 = vmul.f32 %v10791, %v10791
    %v10856 = vmul.f32 %v10792, %v10792
    %v10857 = vmul.f32 %v10793, %v10793
    %v10858 = vmul.f32 %v10794, %v10794
    %v10859 = vmul.f32 %v10795, %v10795
    %v10860 = vmul.f32 %v10796, %v10796
    %v10861 = vmul.f32 %v10797, %v10797
    %v10862 = vmul.f32 %v10798, %v10798
    %v10863 = vmul.f32 %v10799, %v10799
    %v10864 = vmul.f32 %v10800, %v10800
    %v10865 = vmul.f32 %v10801, %v10801
    %v10866 = vmul.f32 %v10802, %v10802
    %v10867 = vmul.f32 %v10803, %v10803
    %v10868 = vmul.f32 %v10804, %v10804
    %v10869 = vmul.f32 %v10805, %v10805
    %v10870 = vmul.f32 %v10806, %v10806
    %v10871 = vmul.f32 %v10807, %v10807
    %v10872 = vmul.f32 %v10808, %v10808
    %v10873 = vmul.f32 %v10809, %v10809
    %v10874 = vmul.f32 %v10810, %v10810
    %v10875 = vmul.f32 %v10811, %v10811
    %v10876 = vmul.f32 %v10812, %v10812
    %v10877 = vmul.f32 %v10813, %v10813
    %v10878 = vmul.f32 %v10814, %v10814
    %v10879 = vmul.f32 %v10815, %v10815
    %v10880 = vmul.f32 %v10816, %v10816
    %v10881 = vmul.f32 %v10817, %v10817
    %v10882 = vmul.f32 %v10818, %v10818
    %v10883 = vmul.f32 %v10819, %v10819
    %v10884 = vmul.f32 %v10820, %v10820
    %v10885 = vmul.f32 %v10821, %v10821
    %v10886 = vmul.f32 %v10822, %v10822
    %v10887 = vmul.f32 %v10823, %v10823
    %v10888 = vmul.f32 %v10824, %v10824
    %v10889 = vmul.f32 %v10825, %v10825
    %v10890 = vmul.f32 %v10826, %v10826
    %v10891 = vmul.f32 %v10827, %v10827
    %v10892 = vmul.f32 %v10828, %v10828
    %v10893 = vmul.f32 %v10829, %v10829
    %v10894 = vmul.f32 %v10830, %v10830
    %v10895 = vmul.f32 %v10831, %v10831
    %v10896 = vmul.f32 %v10832, %v10832
    %v10897 = vmul.f32 %v10833, %v10833
    %v10898 = vmul.f32 %v10834, %v10834
    %v10899 = vmul.f32 %v10835, %v10835
    %v10900 = vmul.f32 %v10836, %v10836
    %v10901 = vmul.f32 %v10837, %v10837
    %v10902 = vmul.f32 %v10838, %v10838
    %v10903 = vmul.f32 %v10839, %v10839
    %v10904 = vmul.f32 %v10840, %v10840
    %v10905 = vmul.f32 %v10841, %v10841
    %v10906 = vmul.f32 %v10842, %v10842
    %v10907 = vmul.f32 %v10843, %v10843
    %v10908 = vmul.f32 %v10844, %v10844
    %v10909 = vmul.f32 %v10845, %v10845
    %v10910 = vmul.f32 %v10846, %v10846
    %v10911 = vmul.f32 %v10847, %v10847
    %v10912 = vmul.f32 %v10848, %v10848
    %v10913 = vmul.f32 %v10849, %v10849
    %v10914 = vmul.f32 %v10850, %v10850
    %v10915 = vmul.f32 %v10851, %v10851
    %v10916 = vmul.f32 %v10852, %v10852
    %v10917 = vmul.f32 %v10853, %v10853
    %v10918 = vsel %vm240, %v10854, 0.0
    %v10919 = vsel %vm240, %v10855, 0.0
    %v10920 = vadd.f32 %v10918, %v10919
    %v10921 = vsel %vm240, %v10856, 0.0
    %v10922 = vadd.f32 %v10920, %v10921
    %v10923 = vsel %vm240, %v10857, 0.0
    %v10924 = vadd.f32 %v10922, %v10923
    %v10925 = vsel %vm240, %v10858, 0.0
    %v10926 = vadd.f32 %v10924, %v10925
    %v10927 = vsel %vm240, %v10859, 0.0
    %v10928 = vadd.f32 %v10926, %v10927
    %v10929 = vsel %vm240, %v10860, 0.0
    %v10930 = vadd.f32 %v10928, %v10929
    %v10931 = vsel %vm240, %v10861, 0.0
    %v10932 = vadd.f32 %v10930, %v10931
    %v10933 = vsel %vm240, %v10862, 0.0
    %v10934 = vadd.f32 %v10932, %v10933
    %v10935 = vsel %vm240, %v10863, 0.0
    %v10936 = vadd.f32 %v10934, %v10935
    %v10937 = vsel %vm240, %v10864, 0.0
    %v10938 = vadd.f32 %v10936, %v10937
    %v10939 = vsel %vm240, %v10865, 0.0
    %v10940 = vadd.f32 %v10938, %v10939
    %v10941 = vsel %vm240, %v10866, 0.0
    %v10942 = vadd.f32 %v10940, %v10941
    %v10943 = vsel %vm240, %v10867, 0.0
    %v10944 = vadd.f32 %v10942, %v10943
    %v10945 = vsel %vm240, %v10868, 0.0
    %v10946 = vadd.f32 %v10944, %v10945
    %v10947 = vsel %vm240, %v10869, 0.0
    %v10948 = vadd.f32 %v10946, %v10947
    %v10949 = vsel %vm240, %v10870, 0.0
    %v10950 = vadd.f32 %v10948, %v10949
    %v10951 = vsel %vm240, %v10871, 0.0
    %v10952 = vadd.f32 %v10950, %v10951
    %v10953 = vsel %vm240, %v10872, 0.0
    %v10954 = vadd.f32 %v10952, %v10953
    %v10955 = vsel %vm240, %v10873, 0.0
    %v10956 = vadd.f32 %v10954, %v10955
    %v10957 = vsel %vm240, %v10874, 0.0
    %v10958 = vadd.f32 %v10956, %v10957
    %v10959 = vsel %vm240, %v10875, 0.0
    %v10960 = vadd.f32 %v10958, %v10959
    %v10961 = vsel %vm240, %v10876, 0.0
    %v10962 = vadd.f32 %v10960, %v10961
    %v10963 = vsel %vm240, %v10877, 0.0
    %v10964 = vadd.f32 %v10962, %v10963
    %v10965 = vsel %vm240, %v10878, 0.0
    %v10966 = vadd.f32 %v10964, %v10965
    %v10967 = vsel %vm240, %v10879, 0.0
    %v10968 = vadd.f32 %v10966, %v10967
    %v10969 = vsel %vm240, %v10880, 0.0
    %v10970 = vadd.f32 %v10968, %v10969
    %v10971 = vsel %vm240, %v10881, 0.0
    %v10972 = vadd.f32 %v10970, %v10971
    %v10973 = vsel %vm240, %v10882, 0.0
    %v10974 = vadd.f32 %v10972, %v10973
    %v10975 = vsel %vm240, %v10883, 0.0
    %v10976 = vadd.f32 %v10974, %v10975
    %v10977 = vsel %vm240, %v10884, 0.0
    %v10978 = vadd.f32 %v10976, %v10977
    %v10979 = vsel %vm240, %v10885, 0.0
    %v10980 = vadd.f32 %v10978, %v10979
    %v10981 = vsel %vm240, %v10886, 0.0
    %v10982 = vadd.f32 %v10980, %v10981
    %v10983 = vsel %vm240, %v10887, 0.0
    %v10984 = vadd.f32 %v10982, %v10983
    %v10985 = vsel %vm240, %v10888, 0.0
    %v10986 = vadd.f32 %v10984, %v10985
    %v10987 = vsel %vm240, %v10889, 0.0
    %v10988 = vadd.f32 %v10986, %v10987
    %v10989 = vsel %vm240, %v10890, 0.0
    %v10990 = vadd.f32 %v10988, %v10989
    %v10991 = vsel %vm240, %v10891, 0.0
    %v10992 = vadd.f32 %v10990, %v10991
    %v10993 = vsel %vm240, %v10892, 0.0
    %v10994 = vadd.f32 %v10992, %v10993
    %v10995 = vsel %vm240, %v10893, 0.0
    %v10996 = vadd.f32 %v10994, %v10995
    %v10997 = vsel %vm240, %v10894, 0.0
    %v10998 = vadd.f32 %v10996, %v10997
    %v10999 = vsel %vm240, %v10895, 0.0
    %v11000 = vadd.f32 %v10998, %v10999
    %v11001 = vsel %vm240, %v10896, 0.0
    %v11002 = vadd.f32 %v11000, %v11001
    %v11003 = vsel %vm240, %v10897, 0.0
    %v11004 = vadd.f32 %v11002, %v11003
    %v11005 = vsel %vm240, %v10898, 0.0
    %v11006 = vadd.f32 %v11004, %v11005
    %v11007 = vsel %vm240, %v10899, 0.0
    %v11008 = vadd.f32 %v11006, %v11007
    %v11009 = vsel %vm240, %v10900, 0.0
    %v11010 = vadd.f32 %v11008, %v11009
    %v11011 = vsel %vm240, %v10901, 0.0
    %v11012 = vadd.f32 %v11010, %v11011
    %v11013 = vsel %vm240, %v10902, 0.0
    %v11014 = vadd.f32 %v11012, %v11013
    %v11015 = vsel %vm240, %v10903, 0.0
    %v11016 = vadd.f32 %v11014, %v11015
    %v11017 = vsel %vm240, %v10904, 0.0
    %v11018 = vadd.f32 %v11016, %v11017
    %v11019 = vsel %vm240, %v10905, 0.0
    %v11020 = vadd.f32 %v11018, %v11019
    %v11021 = vsel %vm240, %v10906, 0.0
    %v11022 = vadd.f32 %v11020, %v11021
    %v11023 = vsel %vm240, %v10907, 0.0
    %v11024 = vadd.f32 %v11022, %v11023
    %v11025 = vsel %vm240, %v10908, 0.0
    %v11026 = vadd.f32 %v11024, %v11025
    %v11027 = vsel %vm240, %v10909, 0.0
    %v11028 = vadd.f32 %v11026, %v11027
    %v11029 = vsel %vm240, %v10910, 0.0
    %v11030 = vadd.f32 %v11028, %v11029
    %v11031 = vsel %vm240, %v10911, 0.0
    %v11032 = vadd.f32 %v11030, %v11031
    %v11033 = vsel %vm240, %v10912, 0.0
    %v11034 = vadd.f32 %v11032, %v11033
    %v11035 = vsel %vm240, %v10913, 0.0
    %v11036 = vadd.f32 %v11034, %v11035
    %v11037 = vsel %vm240, %v10914, 0.0
    %v11038 = vadd.f32 %v11036, %v11037
    %v11039 = vsel %vm240, %v10915, 0.0
    %v11040 = vadd.f32 %v11038, %v11039
    %v11041 = vsel %vm240, %v10916, 0.0
    %v11042 = vadd.f32 %v11040, %v11041
    %v11043 = vsel %vm240, %v10917, 0.0
    %v11044 = vadd.f32 %v11042, %v11043
    %v11045 = vrot.slane %v11044, 4
    %v11046 = vadd.f32 %v11044, %v11045
    %v11047 = vrot.slane %v11046, 2
    %v11048 = vadd.f32 %v11046, %v11047
    %v11049 = vrot.slane %v11048, 1
    %v11050 = vadd.f32 %v11048, %v11049
    %v11051 = vmul.f32 %v11050, %v5085
    %v11052 = vld [vmem:[%s5] sm:$0x1]
    %v11053 = vadd.f32 %v11051, 1e-05
    %v11054 = vrsqrt.pop %v11053
    %v11055 = vmul.f32 %v11052, %v11054
    %v11056 = vld [vmem:[%s6] sm:$0x1]
    %v11057 = vmul.f32 %v10789, %v11055
    %v11058 = vsub.f32 %v11056, %v11057
    %v11060 = vlaneseq
    %v11061 = vshrl.u32 %v11060, 7
    %v11062 = vsub.s32 0, %v11061
    %v11063 = vrot.slane %v11055, %v11062
    %v11065 = vmul.f32 %v10592, %v11063
    %v11066 = vmul.f32 %v10593, %v11063
    %v11067 = vmul.f32 %v10594, %v11063
    %v11068 = vmul.f32 %v10595, %v11063
    %v11069 = vmul.f32 %v10596, %v11063
    %v11070 = vmul.f32 %v10597, %v11063
    %v11071 = vmul.f32 %v10598, %v11063
    %v11072 = vmul.f32 %v10599, %v11063
    %v11073 = vmul.f32 %v10600, %v11063
    %v11074 = vmul.f32 %v10601, %v11063
    %v11075 = vmul.f32 %v10602, %v11063
    %v11076 = vmul.f32 %v10603, %v11063
    %v11077 = vmul.f32 %v10604, %v11063
    %v11078 = vmul.f32 %v10605, %v11063
    %v11079 = vmul.f32 %v10606, %v11063
    %v11080 = vmul.f32 %v10607, %v11063
    %v11081 = vmul.f32 %v10608, %v11063
    %v11082 = vmul.f32 %v10609, %v11063
    %v11083 = vmul.f32 %v10610, %v11063
    %v11084 = vmul.f32 %v10611, %v11063
    %v11085 = vmul.f32 %v10612, %v11063
    %v11086 = vmul.f32 %v10613, %v11063
    %v11087 = vmul.f32 %v10614, %v11063
    %v11088 = vmul.f32 %v10615, %v11063
    %v11089 = vmul.f32 %v10616, %v11063
    %v11090 = vmul.f32 %v10617, %v11063
    %v11091 = vmul.f32 %v10618, %v11063
    %v11092 = vmul.f32 %v10619, %v11063
    %v11093 = vmul.f32 %v10620, %v11063
    %v11094 = vmul.f32 %v10621, %v11063
    %v11095 = vmul.f32 %v10622, %v11063
    %v11096 = vmul.f32 %v10623, %v11063
    %v11097 = vmul.f32 %v10624, %v11063
    %v11098 = vmul.f32 %v10625, %v11063
    %v11099 = vmul.f32 %v10626, %v11063
    %v11100 = vmul.f32 %v10627, %v11063
    %v11101 = vmul.f32 %v10628, %v11063
    %v11102 = vmul.f32 %v10629, %v11063
    %v11103 = vmul.f32 %v10630, %v11063
    %v11104 = vmul.f32 %v10631, %v11063
    %v11105 = vmul.f32 %v10632, %v11063
    %v11106 = vmul.f32 %v10633, %v11063
    %v11107 = vmul.f32 %v10634, %v11063
    %v11108 = vmul.f32 %v10635, %v11063
    %v11109 = vmul.f32 %v10636, %v11063
    %v11110 = vmul.f32 %v10637, %v11063
    %v11111 = vmul.f32 %v10638, %v11063
    %v11112 = vmul.f32 %v10639, %v11063
    %v11113 = vmul.f32 %v10640, %v11063
    %v11114 = vmul.f32 %v10641, %v11063
    %v11115 = vmul.f32 %v10642, %v11063
    %v11116 = vmul.f32 %v10643, %v11063
    %v11117 = vmul.f32 %v10644, %v11063
    %v11118 = vmul.f32 %v10645, %v11063
    %v11119 = vmul.f32 %v10646, %v11063
    %v11120 = vmul.f32 %v10647, %v11063
    %v11121 = vmul.f32 %v10648, %v11063
    %v11122 = vmul.f32 %v10649, %v11063
    %v11123 = vmul.f32 %v10650, %v11063
    %v11124 = vmul.f32 %v10651, %v11063
    %v11125 = vmul.f32 %v10652, %v11063
    %v11126 = vmul.f32 %v10653, %v11063
    %v11127 = vmul.f32 %v10654, %v11063
    %v11128 = vmul.f32 %v10655, %v11063
    %v11130 = vlaneseq
    %v11131 = vshrl.u32 %v11130, 7
    %v11132 = vsub.s32 0, %v11131
    %v11133 = vrot.slane %v11058, %v11132
    %v11135 = vadd.f32 %v11065, %v11133
    %v11136 = vadd.f32 %v11066, %v11133
    %v11137 = vadd.f32 %v11067, %v11133
    %v11138 = vadd.f32 %v11068, %v11133
    %v11139 = vadd.f32 %v11069, %v11133
    %v11140 = vadd.f32 %v11070, %v11133
    %v11141 = vadd.f32 %v11071, %v11133
    %v11142 = vadd.f32 %v11072, %v11133
    %v11143 = vadd.f32 %v11073, %v11133
    %v11144 = vadd.f32 %v11074, %v11133
    %v11145 = vadd.f32 %v11075, %v11133
    %v11146 = vadd.f32 %v11076, %v11133
    %v11147 = vadd.f32 %v11077, %v11133
    %v11148 = vadd.f32 %v11078, %v11133
    %v11149 = vadd.f32 %v11079, %v11133
    %v11150 = vadd.f32 %v11080, %v11133
    %v11151 = vadd.f32 %v11081, %v11133
    %v11152 = vadd.f32 %v11082, %v11133
    %v11153 = vadd.f32 %v11083, %v11133
    %v11154 = vadd.f32 %v11084, %v11133
    %v11155 = vadd.f32 %v11085, %v11133
    %v11156 = vadd.f32 %v11086, %v11133
    %v11157 = vadd.f32 %v11087, %v11133
    %v11158 = vadd.f32 %v11088, %v11133
    %v11159 = vadd.f32 %v11089, %v11133
    %v11160 = vadd.f32 %v11090, %v11133
    %v11161 = vadd.f32 %v11091, %v11133
    %v11162 = vadd.f32 %v11092, %v11133
    %v11163 = vadd.f32 %v11093, %v11133
    %v11164 = vadd.f32 %v11094, %v11133
    %v11165 = vadd.f32 %v11095, %v11133
    %v11166 = vadd.f32 %v11096, %v11133
    %v11167 = vadd.f32 %v11097, %v11133
    %v11168 = vadd.f32 %v11098, %v11133
    %v11169 = vadd.f32 %v11099, %v11133
    %v11170 = vadd.f32 %v11100, %v11133
    %v11171 = vadd.f32 %v11101, %v11133
    %v11172 = vadd.f32 %v11102, %v11133
    %v11173 = vadd.f32 %v11103, %v11133
    %v11174 = vadd.f32 %v11104, %v11133
    %v11175 = vadd.f32 %v11105, %v11133
    %v11176 = vadd.f32 %v11106, %v11133
    %v11177 = vadd.f32 %v11107, %v11133
    %v11178 = vadd.f32 %v11108, %v11133
    %v11179 = vadd.f32 %v11109, %v11133
    %v11180 = vadd.f32 %v11110, %v11133
    %v11181 = vadd.f32 %v11111, %v11133
    %v11182 = vadd.f32 %v11112, %v11133
    %v11183 = vadd.f32 %v11113, %v11133
    %v11184 = vadd.f32 %v11114, %v11133
    %v11185 = vadd.f32 %v11115, %v11133
    %v11186 = vadd.f32 %v11116, %v11133
    %v11187 = vadd.f32 %v11117, %v11133
    %v11188 = vadd.f32 %v11118, %v11133
    %v11189 = vadd.f32 %v11119, %v11133
    %v11190 = vadd.f32 %v11120, %v11133
    %v11191 = vadd.f32 %v11121, %v11133
    %v11192 = vadd.f32 %v11122, %v11133
    %v11193 = vadd.f32 %v11123, %v11133
    %v11194 = vadd.f32 %v11124, %v11133
    %v11195 = vadd.f32 %v11125, %v11133
    %v11196 = vadd.f32 %v11126, %v11133
    %v11197 = vadd.f32 %v11127, %v11133
    %v11198 = vadd.f32 %v11128, %v11133
    %v11199 = vld [vmem:[%s1584 + $0x1] sm:$0xff]
    %v11200 = vld [vmem:[%s1584 + $0x9] sm:$0xff]
    %v11201 = vld [vmem:[%s1584 + $0x19] sm:$0xff]
    %v11202 = vld [vmem:[%s1584 + $0x21] sm:$0xff]
    %v11203 = vld [vmem:[%s1584 + $0x31] sm:$0xff]
    %v11204 = vld [vmem:[%s1584 + $0x39] sm:$0xff]
    %v11205 = vld [vmem:[%s1584 + $0x49] sm:$0xff]
    %v11206 = vld [vmem:[%s1584 + $0x51] sm:$0xff]
    %v11207 = vld [vmem:[%s1584 + $0x61] sm:$0xff]
    %v11208 = vld [vmem:[%s1584 + $0x69] sm:$0xff]
    %v11209 = vld [vmem:[%s1584 + $0x79] sm:$0xff]
    %v11210 = vld [vmem:[%s1584 + $0x81] sm:$0xff]
    %v11211 = vld [vmem:[%s1584 + $0x91] sm:$0xff]
    %v11212 = vld [vmem:[%s1584 + $0x99] sm:$0xff]
    %v11213 = vld [vmem:[%s1584 + $0xa9] sm:$0xff]
    %v11214 = vld [vmem:[%s1584 + $0xb1] sm:$0xff]
    %v11215 = vld [vmem:[%s1584 + $0xc1] sm:$0xff]
    %v11216 = vld [vmem:[%s1584 + $0xc9] sm:$0xff]
    %v11217 = vld [vmem:[%s1584 + $0xd9] sm:$0xff]
    %v11218 = vld [vmem:[%s1584 + $0xe1] sm:$0xff]
    %v11219 = vld [vmem:[%s1584 + $0xf1] sm:$0xff]
    %v11220 = vld [vmem:[%s1584 + $0xf9] sm:$0xff]
    %v11221 = vld [vmem:[%s1584 + $0x109] sm:$0xff]
    %v11222 = vld [vmem:[%s1584 + $0x111] sm:$0xff]
    %v11223 = vld [vmem:[%s1584 + $0x121] sm:$0xff]
    %v11224 = vld [vmem:[%s1584 + $0x129] sm:$0xff]
    %v11225 = vld [vmem:[%s1584 + $0x139] sm:$0xff]
    %v11226 = vld [vmem:[%s1584 + $0x141] sm:$0xff]
    %v11227 = vld [vmem:[%s1584 + $0x151] sm:$0xff]
    %v11228 = vld [vmem:[%s1584 + $0x159] sm:$0xff]
    %v11229 = vld [vmem:[%s1584 + $0x169] sm:$0xff]
    %v11230 = vld [vmem:[%s1584 + $0x171] sm:$0xff]
    %v11231 = vld [vmem:[%s1584 + $0x1b1] sm:$0xff]
    %v11232 = vld [vmem:[%s1584 + $0x1b9] sm:$0xff]
    %v11233 = vld [vmem:[%s1584 + $0x1c9] sm:$0xff]
    %v11234 = vld [vmem:[%s1584 + $0x1d1] sm:$0xff]
    %v11235 = vld [vmem:[%s1584 + $0x1e1] sm:$0xff]
    %v11236 = vld [vmem:[%s1584 + $0x1e9] sm:$0xff]
    %v11237 = vld [vmem:[%s1584 + $0x1f9] sm:$0xff]
    %v11238 = vld [vmem:[%s1584 + $0x201] sm:$0xff]
    %v11239 = vld [vmem:[%s1584 + $0x211] sm:$0xff]
    %v11240 = vld [vmem:[%s1584 + $0x219] sm:$0xff]
    %v11241 = vld [vmem:[%s1584 + $0x229] sm:$0xff]
    %v11242 = vld [vmem:[%s1584 + $0x231] sm:$0xff]
    %v11243 = vld [vmem:[%s1584 + $0x241] sm:$0xff]
    %v11244 = vld [vmem:[%s1584 + $0x249] sm:$0xff]
    %v11245 = vld [vmem:[%s1584 + $0x259] sm:$0xff]
    %v11246 = vld [vmem:[%s1584 + $0x261] sm:$0xff]
    %v11247 = vld [vmem:[%s1584 + $0x271] sm:$0xff]
    %v11248 = vld [vmem:[%s1584 + $0x279] sm:$0xff]
    %v11249 = vld [vmem:[%s1584 + $0x289] sm:$0xff]
    %v11250 = vld [vmem:[%s1584 + $0x291] sm:$0xff]
    %v11251 = vld [vmem:[%s1584 + $0x2a1] sm:$0xff]
    %v11252 = vld [vmem:[%s1584 + $0x2a9] sm:$0xff]
    %v11253 = vld [vmem:[%s1584 + $0x2b9] sm:$0xff]
    %v11254 = vld [vmem:[%s1584 + $0x2c1] sm:$0xff]
    %v11255 = vld [vmem:[%s1584 + $0x2d1] sm:$0xff]
    %v11256 = vld [vmem:[%s1584 + $0x2d9] sm:$0xff]
    %v11257 = vld [vmem:[%s1584 + $0x2e9] sm:$0xff]
    %v11258 = vld [vmem:[%s1584 + $0x2f1] sm:$0xff]
    %v11259 = vld [vmem:[%s1584 + $0x301] sm:$0xff]
    %v11260 = vld [vmem:[%s1584 + $0x309] sm:$0xff]
    %v11261 = vld [vmem:[%s1584 + $0x319] sm:$0xff]
    %v11262 = vld [vmem:[%s1584 + $0x321] sm:$0xff]
    %v11263 = vadd.f32 %v11135, %v11199
    %v11264 = vadd.f32 %v11136, %v11200
    %v11265 = vadd.f32 %v11137, %v11201
    %v11266 = vadd.f32 %v11138, %v11202
    %v11267 = vadd.f32 %v11139, %v11203
    %v11268 = vadd.f32 %v11140, %v11204
    %v11269 = vadd.f32 %v11141, %v11205
    %v11270 = vadd.f32 %v11142, %v11206
    %v11271 = vadd.f32 %v11143, %v11207
    %v11272 = vadd.f32 %v11144, %v11208
    %v11273 = vadd.f32 %v11145, %v11209
    %v11274 = vadd.f32 %v11146, %v11210
    %v11275 = vadd.f32 %v11147, %v11211
    %v11276 = vadd.f32 %v11148, %v11212
    %v11277 = vadd.f32 %v11149, %v11213
    %v11278 = vadd.f32 %v11150, %v11214
    %v11279 = vadd.f32 %v11151, %v11215
    %v11280 = vadd.f32 %v11152, %v11216
    %v11281 = vadd.f32 %v11153, %v11217
    %v11282 = vadd.f32 %v11154, %v11218
    %v11283 = vadd.f32 %v11155, %v11219
    %v11284 = vadd.f32 %v11156, %v11220
    %v11285 = vadd.f32 %v11157, %v11221
    %v11286 = vadd.f32 %v11158, %v11222
    %v11287 = vadd.f32 %v11159, %v11223
    %v11288 = vadd.f32 %v11160, %v11224
    %v11289 = vadd.f32 %v11161, %v11225
    %v11290 = vadd.f32 %v11162, %v11226
    %v11291 = vadd.f32 %v11163, %v11227
    %v11292 = vadd.f32 %v11164, %v11228
    %v11293 = vadd.f32 %v11165, %v11229
    %v11294 = vadd.f32 %v11166, %v11230
    %v11295 = vadd.f32 %v11167, %v11231
    %v11296 = vadd.f32 %v11168, %v11232
    %v11297 = vadd.f32 %v11169, %v11233
    %v11298 = vadd.f32 %v11170, %v11234
    %v11299 = vadd.f32 %v11171, %v11235
    %v11300 = vadd.f32 %v11172, %v11236
    %v11301 = vadd.f32 %v11173, %v11237
    %v11302 = vadd.f32 %v11174, %v11238
    %v11303 = vadd.f32 %v11175, %v11239
    %v11304 = vadd.f32 %v11176, %v11240
    %v11305 = vadd.f32 %v11177, %v11241
    %v11306 = vadd.f32 %v11178, %v11242
    %v11307 = vadd.f32 %v11179, %v11243
    %v11308 = vadd.f32 %v11180, %v11244
    %v11309 = vadd.f32 %v11181, %v11245
    %v11310 = vadd.f32 %v11182, %v11246
    %v11311 = vadd.f32 %v11183, %v11247
    %v11312 = vadd.f32 %v11184, %v11248
    %v11313 = vadd.f32 %v11185, %v11249
    %v11314 = vadd.f32 %v11186, %v11250
    %v11315 = vadd.f32 %v11187, %v11251
    %v11316 = vadd.f32 %v11188, %v11252
    %v11317 = vadd.f32 %v11189, %v11253
    %v11318 = vadd.f32 %v11190, %v11254
    %v11319 = vadd.f32 %v11191, %v11255
    %v11320 = vadd.f32 %v11192, %v11256
    %v11321 = vadd.f32 %v11193, %v11257
    %v11322 = vadd.f32 %v11194, %v11258
    %v11323 = vadd.f32 %v11195, %v11259
    %v11324 = vadd.f32 %v11196, %v11260
    %v11325 = vadd.f32 %v11197, %v11261
    %v11326 = vadd.f32 %v11198, %v11262
    %v11327 = vmax.f32 %v11263, 0.0
    %v11328 = vmax.f32 %v11264, 0.0
    %v11329 = vmax.f32 %v11265, 0.0
    %v11330 = vmax.f32 %v11266, 0.0
    %v11331 = vmax.f32 %v11267, 0.0
    %v11332 = vmax.f32 %v11268, 0.0
    %v11333 = vmax.f32 %v11269, 0.0
    %v11334 = vmax.f32 %v11270, 0.0
    %v11335 = vmax.f32 %v11271, 0.0
    %v11336 = vmax.f32 %v11272, 0.0
    %v11337 = vmax.f32 %v11273, 0.0
    %v11338 = vmax.f32 %v11274, 0.0
    %v11339 = vmax.f32 %v11275, 0.0
    %v11340 = vmax.f32 %v11276, 0.0
    %v11341 = vmax.f32 %v11277, 0.0
    %v11342 = vmax.f32 %v11278, 0.0
    %v11343 = vmax.f32 %v11279, 0.0
    %v11344 = vmax.f32 %v11280, 0.0
    %v11345 = vmax.f32 %v11281, 0.0
    %v11346 = vmax.f32 %v11282, 0.0
    %v11347 = vmax.f32 %v11283, 0.0
    %v11348 = vmax.f32 %v11284, 0.0
    %v11349 = vmax.f32 %v11285, 0.0
    %v11350 = vmax.f32 %v11286, 0.0
    %v11351 = vmax.f32 %v11287, 0.0
    %v11352 = vmax.f32 %v11288, 0.0
    %v11353 = vmax.f32 %v11289, 0.0
    %v11354 = vmax.f32 %v11290, 0.0
    %v11355 = vmax.f32 %v11291, 0.0
    %v11356 = vmax.f32 %v11292, 0.0
    %v11357 = vmax.f32 %v11293, 0.0
    %v11358 = vmax.f32 %v11294, 0.0
    %v11359 = vmax.f32 %v11295, 0.0
    %v11360 = vmax.f32 %v11296, 0.0
    %v11361 = vmax.f32 %v11297, 0.0
    %v11362 = vmax.f32 %v11298, 0.0
    %v11363 = vmax.f32 %v11299, 0.0
    %v11364 = vmax.f32 %v11300, 0.0
    %v11365 = vmax.f32 %v11301, 0.0
    %v11366 = vmax.f32 %v11302, 0.0
    %v11367 = vmax.f32 %v11303, 0.0
    %v11368 = vmax.f32 %v11304, 0.0
    %v11369 = vmax.f32 %v11305, 0.0
    %v11370 = vmax.f32 %v11306, 0.0
    %v11371 = vmax.f32 %v11307, 0.0
    %v11372 = vmax.f32 %v11308, 0.0
    %v11373 = vmax.f32 %v11309, 0.0
    %v11374 = vmax.f32 %v11310, 0.0
    %v11375 = vmax.f32 %v11311, 0.0
    %v11376 = vmax.f32 %v11312, 0.0
    %v11377 = vmax.f32 %v11313, 0.0
    %v11378 = vmax.f32 %v11314, 0.0
    %v11379 = vmax.f32 %v11315, 0.0
    %v11380 = vmax.f32 %v11316, 0.0
    %v11381 = vmax.f32 %v11317, 0.0
    %v11382 = vmax.f32 %v11318, 0.0
    %v11383 = vmax.f32 %v11319, 0.0
    %v11384 = vmax.f32 %v11320, 0.0
    %v11385 = vmax.f32 %v11321, 0.0
    %v11386 = vmax.f32 %v11322, 0.0
    %v11387 = vmax.f32 %v11323, 0.0
    %v11388 = vmax.f32 %v11324, 0.0
    %v11389 = vmax.f32 %v11325, 0.0
    %v11390 = vmax.f32 %v11326, 0.0
    %11391 = vst.msk [vmem:[#allocation3] sm:$0xff] %vm240, %v11327
    %11392 = vst.msk [vmem:[#allocation3 + $0x8] sm:$0xff] %vm240, %v11328
    %11393 = vst.msk [vmem:[#allocation3 + $0x10] sm:$0xff] %vm240, %v11329
    %11394 = vst.msk [vmem:[#allocation3 + $0x18] sm:$0xff] %vm240, %v11330
    %11395 = vst.msk [vmem:[#allocation3 + $0x20] sm:$0xff] %vm240, %v11331
    %11396 = vst.msk [vmem:[#allocation3 + $0x28] sm:$0xff] %vm240, %v11332
    %11397 = vst.msk [vmem:[#allocation3 + $0x30] sm:$0xff] %vm240, %v11333
    %11398 = vst.msk [vmem:[#allocation3 + $0x38] sm:$0xff] %vm240, %v11334
    %11399 = vst.msk [vmem:[#allocation3 + $0x40] sm:$0xff] %vm240, %v11335
    %11400 = vst.msk [vmem:[#allocation3 + $0x48] sm:$0xff] %vm240, %v11336
    %11401 = vst.msk [vmem:[#allocation3 + $0x50] sm:$0xff] %vm240, %v11337
    %11402 = vst.msk [vmem:[#allocation3 + $0x58] sm:$0xff] %vm240, %v11338
    %11403 = vst.msk [vmem:[#allocation3 + $0x60] sm:$0xff] %vm240, %v11339
    %11404 = vst.msk [vmem:[#allocation3 + $0x68] sm:$0xff] %vm240, %v11340
    %11405 = vst.msk [vmem:[#allocation3 + $0x70] sm:$0xff] %vm240, %v11341
    %11406 = vst.msk [vmem:[#allocation3 + $0x78] sm:$0xff] %vm240, %v11342
    %11407 = vst.msk [vmem:[#allocation3 + $0x80] sm:$0xff] %vm240, %v11343
    %11408 = vst.msk [vmem:[#allocation3 + $0x88] sm:$0xff] %vm240, %v11344
    %11409 = vst.msk [vmem:[#allocation3 + $0x90] sm:$0xff] %vm240, %v11345
    %11410 = vst.msk [vmem:[#allocation3 + $0x98] sm:$0xff] %vm240, %v11346
    %11411 = vst.msk [vmem:[#allocation3 + $0xa0] sm:$0xff] %vm240, %v11347
    %11412 = vst.msk [vmem:[#allocation3 + $0xa8] sm:$0xff] %vm240, %v11348
    %11413 = vst.msk [vmem:[#allocation3 + $0xb0] sm:$0xff] %vm240, %v11349
    %11414 = vst.msk [vmem:[#allocation3 + $0xb8] sm:$0xff] %vm240, %v11350
    %11415 = vst.msk [vmem:[#allocation3 + $0xc0] sm:$0xff] %vm240, %v11351
    %11416 = vst.msk [vmem:[#allocation3 + $0xc8] sm:$0xff] %vm240, %v11352
    %11417 = vst.msk [vmem:[#allocation3 + $0xd0] sm:$0xff] %vm240, %v11353
    %11418 = vst.msk [vmem:[#allocation3 + $0xd8] sm:$0xff] %vm240, %v11354
    %11419 = vst.msk [vmem:[#allocation3 + $0xe0] sm:$0xff] %vm240, %v11355
    %11420 = vst.msk [vmem:[#allocation3 + $0xe8] sm:$0xff] %vm240, %v11356
    %11421 = vst.msk [vmem:[#allocation3 + $0xf0] sm:$0xff] %vm240, %v11357
    %11422 = vst.msk [vmem:[#allocation3 + $0xf8] sm:$0xff] %vm240, %v11358
    %11423 = vst.msk [vmem:[#allocation3 + $0x100] sm:$0xff] %vm240, %v11359
    %11424 = vst.msk [vmem:[#allocation3 + $0x108] sm:$0xff] %vm240, %v11360
    %11425 = vst.msk [vmem:[#allocation3 + $0x110] sm:$0xff] %vm240, %v11361
    %11426 = vst.msk [vmem:[#allocation3 + $0x118] sm:$0xff] %vm240, %v11362
    %11427 = vst.msk [vmem:[#allocation3 + $0x120] sm:$0xff] %vm240, %v11363
    %11428 = vst.msk [vmem:[#allocation3 + $0x128] sm:$0xff] %vm240, %v11364
    %11429 = vst.msk [vmem:[#allocation3 + $0x130] sm:$0xff] %vm240, %v11365
    %11430 = vst.msk [vmem:[#allocation3 + $0x138] sm:$0xff] %vm240, %v11366
    %11431 = vst.msk [vmem:[#allocation3 + $0x140] sm:$0xff] %vm240, %v11367
    %11432 = vst.msk [vmem:[#allocation3 + $0x148] sm:$0xff] %vm240, %v11368
    %11433 = vst.msk [vmem:[#allocation3 + $0x150] sm:$0xff] %vm240, %v11369
    %11434 = vst.msk [vmem:[#allocation3 + $0x158] sm:$0xff] %vm240, %v11370
    %11435 = vst.msk [vmem:[#allocation3 + $0x160] sm:$0xff] %vm240, %v11371
    %11436 = vst.msk [vmem:[#allocation3 + $0x168] sm:$0xff] %vm240, %v11372
    %11437 = vst.msk [vmem:[#allocation3 + $0x170] sm:$0xff] %vm240, %v11373
    %11438 = vst.msk [vmem:[#allocation3 + $0x178] sm:$0xff] %vm240, %v11374
    %11439 = vst.msk [vmem:[#allocation3 + $0x180] sm:$0xff] %vm240, %v11375
    %11440 = vst.msk [vmem:[#allocation3 + $0x188] sm:$0xff] %vm240, %v11376
    %11441 = vst.msk [vmem:[#allocation3 + $0x190] sm:$0xff] %vm240, %v11377
    %11442 = vst.msk [vmem:[#allocation3 + $0x198] sm:$0xff] %vm240, %v11378
    %11443 = vst.msk [vmem:[#allocation3 + $0x1a0] sm:$0xff] %vm240, %v11379
    %11444 = vst.msk [vmem:[#allocation3 + $0x1a8] sm:$0xff] %vm240, %v11380
    %11445 = vst.msk [vmem:[#allocation3 + $0x1b0] sm:$0xff] %vm240, %v11381
    %11446 = vst.msk [vmem:[#allocation3 + $0x1b8] sm:$0xff] %vm240, %v11382
    %11447 = vst.msk [vmem:[#allocation3 + $0x1c0] sm:$0xff] %vm240, %v11383
    %11448 = vst.msk [vmem:[#allocation3 + $0x1c8] sm:$0xff] %vm240, %v11384
    %11449 = vst.msk [vmem:[#allocation3 + $0x1d0] sm:$0xff] %vm240, %v11385
    %11450 = vst.msk [vmem:[#allocation3 + $0x1d8] sm:$0xff] %vm240, %v11386
    %11451 = vst.msk [vmem:[#allocation3 + $0x1e0] sm:$0xff] %vm240, %v11387
    %11452 = vst.msk [vmem:[#allocation3 + $0x1e8] sm:$0xff] %vm240, %v11388
    %11453 = vst.msk [vmem:[#allocation3 + $0x1f0] sm:$0xff] %vm240, %v11389
    %11454 = vst.msk [vmem:[#allocation3 + $0x1f8] sm:$0xff] %vm240, %v11390
    // Predicated region
    $region30: #{resblock_forward.1} parent=1 // pred_check
      _
    $region31: #{resblock_forward.1} parent=1 // pred_check_branch
      %11456 = sbr.rel (0) target = $region33
    $region32: #{resblock_forward.1} parent=1 // pred_region
      %s11458 = ssub.s32 8192, 8192
      %11459 = vsyncadd [#allocation4], %s11458
      %s11460 = sshll.u32 [#allocation3], 4
      %s11461 = int_to_ptr.vmem [resolvable:$true] %s11460
      %11466 = dma.vmem_to_hbm [thread:$0]  %s11461, 8192, %s7, [#allocation4], 128, 128, 8
    $region33: #{resblock_forward.1} parent=1 // pred_fallthru
      _
    // Predicated region
    $region34: #{resblock_forward.1} parent=1 // pred_check
      _
    $region35: #{resblock_forward.1} parent=1 // pred_check_branch
      %11468 = sbr.rel (0) target = $region37
    $region36: #{resblock_forward.1} parent=1 // pred_region
      %11469 = dma.done [#allocation4], 8192
    $region37: #{resblock_forward.1} parent=1 // pred_fallthru
      _
    %11470 = vsyncpa [#allocation4], 1

</llo_original>
